<compile_context>
chip_gen: v7x
topology: tpu7x:2x2x1
jax: 0.10.0
libtpu: 0.0.40
codegen_flags: <defaults>
</compile_context>

<pallas_src>
import functools

import jax
import jax.numpy as jnp
from jax.experimental import pallas as pl
from jax.experimental.pallas import tpu as pltpu

_EPS = 1e-5
_LANES = 128
_VMEM_LIMIT = 32 * 1024 * 1024


def _round_up(x, m):
    return (x + m - 1) // m * m


def _cdiv(a, b):
    return (a + b - 1) // b


# --------------------------------------------------------------------------
# Pallas kernels
# --------------------------------------------------------------------------
def _conv_stats_kernel(a_ref, w_ref, o_ref):
    """Per-tile partial BN statistics of the conv output.

    a_ref: (4, TP, K) bf16  im2col patches, 4 pooling corners stacked on axis 0
    w_ref: (K, 128)   bf16  lane-padded conv weights
    o_ref: (8, 128)   f32   row 0 = sum, row 1 = sum of squares (per channel)
    """
    tp = a_ref.shape[1]
    a = a_ref[...].reshape(4 * tp, a_ref.shape[2])            # one long MXU run
    y = jnp.dot(a, w_ref[...], preferred_element_type=jnp.float32)
    s = jnp.sum(y, axis=0, keepdims=True)
    s2 = jnp.sum(y * y, axis=0, keepdims=True)
    # single unmasked (8,128) store — no masked partial stores, no zero-fill pass
    o_ref[...] = jnp.concatenate(
        [s, s2, jnp.zeros((6, _LANES), jnp.float32)], axis=0)


def _conv_bn_relu_pool_kernel(a_ref, w_ref, ss_ref, o_ref):
    """Fused conv(matmul) + BN affine + ReLU + 2x2 max-pool epilogue.

    a_ref: (4, TP, K) bf16   4 pooling corners of im2col patches
    w_ref: (K, 128)   bf16   lane-padded conv weights
    ss_ref: (2, 128)  f32    row 0 = gamma*rsqrt(var+eps), row 1 = beta - mean*scale
    o_ref: (TP, 128)  f32    pooled, lane-dense output
    """
    tp = a_ref.shape[1]
    a = a_ref[...].reshape(4 * tp, a_ref.shape[2])
    y = jnp.dot(a, w_ref[...], preferred_element_type=jnp.float32)
    y = jnp.maximum(y * ss_ref[0:1, :] + ss_ref[1:2, :], 0.0)  # BN affine + ReLU (f32)
    y = y.reshape(4, tp, _LANES)
    o_ref[...] = jnp.maximum(jnp.maximum(y[0], y[1]), jnp.maximum(y[2], y[3]))


def _fc_fused_kernel(x_ref, w1_ref, b1_ref, w2_ref, b2_ref, w3_ref, b3_ref, o_ref):
    """fc1+relu -> fc2+relu -> fc3, all resident in VMEM/vregs (bf16 in, f32 acc)."""
    h = jnp.dot(x_ref[...], w1_ref[...], preferred_element_type=jnp.float32) + b1_ref[...]
    h = jnp.maximum(h, 0.0).astype(jnp.bfloat16)
    h = jnp.dot(h, w2_ref[...], preferred_element_type=jnp.float32) + b2_ref[...]
    h = jnp.maximum(h, 0.0).astype(jnp.bfloat16)
    o_ref[...] = jnp.dot(h, w3_ref[...], preferred_element_type=jnp.float32) + b3_ref[...]


# --------------------------------------------------------------------------
# Pallas wrappers
# --------------------------------------------------------------------------
def _conv_stage(a_corners, w_pad, gamma_pad, beta_pad, m_real, tile_p):
    """a_corners: (4, P, K) bf16 corner-stacked im2col; returns pooled (P, 128) f32."""
    _, p_rows, k = a_corners.shape
    # >= 2 tiles so both v7x TensorCores are used and DMAs pipeline; 16-row
    # alignment keeps bf16 sublane packing / reshapes vreg-aligned.
    n_tiles = max(2, _cdiv(p_rows, tile_p))
    tp = _round_up(_cdiv(p_rows, n_tiles), 16)
    p_pad = n_tiles * tp
    if p_pad != p_rows:
        a_corners = jnp.pad(a_corners, ((0, 0), (0, p_pad - p_rows), (0, 0)))
    cparams = pltpu.CompilerParams(dimension_semantics=("parallel",),
                                   vmem_limit_bytes=_VMEM_LIMIT)

    # Pass 1: per-tile partial sums (batch-correct BN stats under M-tiling).
    stats = pl.pallas_call(
        _conv_stats_kernel,
        grid=(n_tiles,),
        in_specs=[pl.BlockSpec((4, tp, k), lambda i: (0, i, 0)),
                  pl.BlockSpec((k, _LANES), lambda i: (0, 0))],
        out_specs=pl.BlockSpec((8, _LANES), lambda i: (i, 0)),
        out_shape=jax.ShapeDtypeStruct((n_tiles * 8, _LANES), jnp.float32),
        compiler_params=cparams,
    )(a_corners, w_pad)

    # Tiny cross-tile reduce + fold BN into a per-channel affine (XLA, f32).
    part = stats.reshape(n_tiles, 8, _LANES)
    tot = jnp.sum(part[:, 0, :], axis=0)
    tot2 = jnp.sum(part[:, 1, :], axis=0)
    mean = tot / m_real
    var = jnp.maximum(tot2 / m_real - mean * mean, 0.0)   # biased, like torch BN
    scale = gamma_pad.astype(jnp.float32) * jax.lax.rsqrt(var + _EPS)
    shift = beta_pad.astype(jnp.float32) - mean * scale
    ss = jnp.stack([scale, shift], axis=0)                # (2, 128) f32

    # Pass 2: recompute conv + BN affine + ReLU + fused 2x2 max-pool.
    pooled = pl.pallas_call(
        _conv_bn_relu_pool_kernel,
        grid=(n_tiles,),
        in_specs=[pl.BlockSpec((4, tp, k), lambda i: (0, i, 0)),
                  pl.BlockSpec((k, _LANES), lambda i: (0, 0)),
                  pl.BlockSpec((2, _LANES), lambda i: (0, 0))],
        out_specs=pl.BlockSpec((tp, _LANES), lambda i: (i, 0)),
        out_shape=jax.ShapeDtypeStruct((p_pad, _LANES), jnp.float32),
        compiler_params=cparams,
    )(a_corners, w_pad, ss)
    return pooled[:p_rows]


def _fc_head(flat, p, tile_b=1024):
    n, k = flat.shape
    n_tiles = max(2, _cdiv(n, tile_b))
    tb = _round_up(_cdiv(n, n_tiles), 16)
    n_pad = n_tiles * tb
    if n_pad != n:
        flat = jnp.pad(flat, ((0, n_pad - n), (0, 0)))
    cparams = pltpu.CompilerParams(dimension_semantics=("parallel",),
                                   vmem_limit_bytes=_VMEM_LIMIT)
    out = pl.pallas_call(
        _fc_fused_kernel,
        grid=(n_tiles,),
        in_specs=[pl.BlockSpec((tb, k), lambda i: (i, 0)),
                  pl.BlockSpec((k, _LANES), lambda i: (0, 0)),
                  pl.BlockSpec((1, _LANES), lambda i: (0, 0)),
                  pl.BlockSpec((_LANES, _LANES), lambda i: (0, 0)),
                  pl.BlockSpec((1, _LANES), lambda i: (0, 0)),
                  pl.BlockSpec((_LANES, _LANES), lambda i: (0, 0)),
                  pl.BlockSpec((1, _LANES), lambda i: (0, 0))],
        out_specs=pl.BlockSpec((tb, _LANES), lambda i: (i, 0)),
        out_shape=jax.ShapeDtypeStruct((n_pad, _LANES), jnp.float32),
        compiler_params=cparams,
    )(flat, p["fc1_w"], p["fc1_b"], p["fc2_w"], p["fc2_b"], p["fc3_w"], p["fc3_b"])
    return out[:n]


# --------------------------------------------------------------------------
# XLA glue: im2col fused with pool-corner extraction, parameter packing
# --------------------------------------------------------------------------
def _im2col_pool_corners(x, k, pad):
    """x: (N, H, W, Cin) -> (4, N*Ho/2*Wo/2, k*k*Cin), corner = 2*dh + dw.

    Uses stride-2 slices per pool corner so no 6-D transpose / giant concat is
    needed between XLA and the Pallas kernels.  Patch order is (kh, kw, Cin).
    """
    if pad:
        x = jnp.pad(x, ((0, 0), (pad, pad), (pad, pad), (0, 0)))
    n, h, w, cin = x.shape
    ho, wo = h - k + 1, w - k + 1
    ho2, wo2 = ho // 2, wo // 2
    corners = []
    for dh in range(2):
        for dw in range(2):
            cols = []
            for i in range(k):
                for j in range(k):
                    cols.append(x[:, dh + i: dh + i + 2 * ho2: 2,
                                  dw + j: dw + j + 2 * wo2: 2, :])
            c = jnp.concatenate(cols, axis=-1)               # (N, ho2, wo2, k*k*Cin)
            corners.append(c.reshape(n * ho2 * wo2, k * k * cin))
    return jnp.stack(corners, axis=0)                        # (4, P, K)


def _conv_weight_to_matrix(w_oihw):
    # torch conv weight (Cout, Cin, kh, kw) -> (kh*kw*Cin, 128) lane-padded bf16
    cout, cin, kh, kw = w_oihw.shape
    m = jnp.transpose(w_oihw, (2, 3, 1, 0)).reshape(kh * kw * cin, cout)
    return jnp.pad(m, ((0, 0), (0, _LANES - cout))).astype(jnp.bfloat16)


def _pad_vec(v):
    return jnp.pad(v, (0, _LANES - v.shape[0]))


def init_params(key, num_classes=10, num_ch1=6, num_ch2=16):
    ks = jax.random.split(key, 12)
    s = 0.1
    raw = {
        "conv1_w": s * jax.random.normal(ks[0], (num_ch1, 1, 5, 5), jnp.float32),
        "bn1_g": 1.0 + s * jax.random.normal(ks[1], (num_ch1,), jnp.float32),
        "bn1_b": s * jax.random.normal(ks[2], (num_ch1,), jnp.float32),
        "conv2_w": s * jax.random.normal(ks[3], (num_ch2, num_ch1, 5, 5), jnp.float32),
        "bn2_g": 1.0 + s * jax.random.normal(ks[4], (num_ch2,), jnp.float32),
        "bn2_b": s * jax.random.normal(ks[5], (num_ch2,), jnp.float32),
        "fc1_w": s * jax.random.normal(ks[6], (120, num_ch2 * 5 * 5), jnp.float32),
        "fc1_b": s * jax.random.normal(ks[7], (120,), jnp.float32),
        "fc2_w": s * jax.random.normal(ks[8], (84, 120), jnp.float32),
        "fc2_b": s * jax.random.normal(ks[9], (84,), jnp.float32),
        "fc3_w": s * jax.random.normal(ks[10], (num_classes, 84), jnp.float32),
        "fc3_b": s * jax.random.normal(ks[11], (num_classes,), jnp.float32),
    }
    # NOTE: conv biases are intentionally omitted — a per-channel bias before
    # BatchNorm is exactly cancelled by the mean subtraction (no output effect).

    # fc1: torch flatten order is (c, h, w) on the num_ch2 x 5 x 5 map; the Pallas
    # path feeds an (h, w, c) flatten of the REAL channels, zero-padded to 512
    # columns.  Fold permutation + padding into the weight.
    kfc_real = num_ch2 * 5 * 5
    kfc = _round_up(kfc_real, _LANES)
    w1 = raw["fc1_w"].reshape(120, num_ch2, 5, 5)            # (o, c, h, w)
    w1 = jnp.transpose(w1, (2, 3, 1, 0)).reshape(kfc_real, 120)   # rows = (h, w, c)
    fc1_w = jnp.zeros((kfc, _LANES), jnp.float32).at[:kfc_real, :120].set(w1)

    fc2_w = jnp.zeros((_LANES, _LANES), jnp.float32).at[:120, :84].set(raw["fc2_w"].T)
    fc3_w = jnp.zeros((_LANES, _LANES), jnp.float32).at[:84, :num_classes].set(raw["fc3_w"].T)

    params = {
        "conv1_w": _conv_weight_to_matrix(raw["conv1_w"]),          # bf16
        "bn1_g": _pad_vec(raw["bn1_g"]),                             # f32
        "bn1_b": _pad_vec(raw["bn1_b"]),
        "conv2_w": _conv_weight_to_matrix(raw["conv2_w"]),           # bf16
        "bn2_g": _pad_vec(raw["bn2_g"]),
        "bn2_b": _pad_vec(raw["bn2_b"]),
        "fc1_w": fc1_w.astype(jnp.bfloat16),
        "fc1_b": _pad_vec(raw["fc1_b"]).reshape(1, _LANES),          # f32
        "fc2_w": fc2_w.astype(jnp.bfloat16),
        "fc2_b": _pad_vec(raw["fc2_b"]).reshape(1, _LANES),
        "fc3_w": fc3_w.astype(jnp.bfloat16),
        "fc3_b": _pad_vec(raw["fc3_b"]).reshape(1, _LANES),
    }
    return params, raw


# --------------------------------------------------------------------------
# Forward pass (LeNet5_bn)
# --------------------------------------------------------------------------
@functools.partial(jax.jit, static_argnums=(2, 3, 4))
def lenet5_bn_forward(x_nchw, params, num_classes=10, num_ch1=6, num_ch2=16):
    # x_nchw: (N, 1, 28, 28) — MNIST-sized input implied by fc1 = 16*5*5
    x = jnp.transpose(x_nchw, (0, 2, 3, 1)).astype(jnp.float32)   # NHWC
    n = x.shape[0]

    # stage 1: conv1(5x5, pad=2) + bn1 + relu + maxpool 2x2 (fused in Pallas)
    a1 = _im2col_pool_corners(x, 5, pad=2).astype(jnp.bfloat16)   # (4, N*196, 25)
    pooled1 = _conv_stage(a1, params["conv1_w"], params["bn1_g"], params["bn1_b"],
                          m_real=float(n * 28 * 28), tile_p=4096)
    y1 = pooled1.reshape(n, 14, 14, _LANES)[..., :num_ch1]        # (N, 14, 14, 6)

    # stage 2: conv2(5x5, pad=0) + bn2 + relu + maxpool 2x2 (fused in Pallas)
    a2 = _im2col_pool_corners(y1, 5, pad=0).astype(jnp.bfloat16)  # (4, N*25, 150)
    pooled2 = _conv_stage(a2, params["conv2_w"], params["bn2_g"], params["bn2_b"],
                          m_real=float(n * 10 * 10), tile_p=2048)

    # real-channel (h, w, c) flatten, padded to 512 lanes — matches fc1_w fold
    kfc_real = num_ch2 * 5 * 5
    kfc = _round_up(kfc_real, _LANES)
    flat = pooled2.reshape(n, 5, 5, _LANES)[..., :num_ch2].reshape(n, kfc_real)
    flat = jnp.pad(flat, ((0, 0), (0, kfc - kfc_real))).astype(jnp.bfloat16)

    # fused fc1 + fc2 + fc3 head
    out = _fc_head(flat, params)
    return out[:, :num_classes]


# --------------------------------------------------------------------------
# Pure-JAX reference (torch semantics, f32 HIGHEST) for validation
# --------------------------------------------------------------------------
def _reference_forward(x_nchw, raw):
    x = x_nchw.astype(jnp.float32)
    hi = jax.lax.Precision.HIGHEST

    def conv(z, w, pad):
        return jax.lax.conv_general_dilated(
            z, w, window_strides=(1, 1), padding=[(pad, pad), (pad, pad)],
            dimension_numbers=("NCHW", "OIHW", "NCHW"), precision=hi)

    def bn(z, g, b):
        mean = jnp.mean(z, axis=(0, 2, 3), keepdims=True)
        var = jnp.mean((z - mean) ** 2, axis=(0, 2, 3), keepdims=True)
        zh = (z - mean) * jax.lax.rsqrt(var + _EPS)
        return zh * g.reshape(1, -1, 1, 1) + b.reshape(1, -1, 1, 1)

    def pool(z):
        return jax.lax.reduce_window(z, -jnp.inf, jax.lax.max,
                                     (1, 1, 2, 2), (1, 1, 2, 2), "VALID")

    y = pool(jnp.maximum(bn(conv(x, raw["conv1_w"], 2), raw["bn1_g"], raw["bn1_b"]), 0.0))
    y = pool(jnp.maximum(bn(conv(y, raw["conv2_w"], 0), raw["bn2_g"], raw["bn2_b"]), 0.0))
    flat = y.reshape(y.shape[0], -1)                            # torch (C,H,W) flatten
    h = jnp.maximum(jnp.dot(flat, raw["fc1_w"].T, precision=hi) + raw["fc1_b"], 0.0)
    h = jnp.maximum(jnp.dot(h, raw["fc2_w"].T, precision=hi) + raw["fc2_b"], 0.0)
    return jnp.dot(h, raw["fc3_w"].T, precision=hi) + raw["fc3_b"]


if __name__ == "__main__":
    key = jax.random.PRNGKey(0)
    k_x, k_p = jax.random.split(key)
    x = jax.random.normal(k_x, (2, 1, 28, 28), dtype=jnp.float32)
    params, raw = init_params(k_p, num_classes=10)

    out = jax.block_until_ready(lenet5_bn_forward(x, params, 10, 6, 16))
    assert out.shape == (2, 10), out.shape
    assert bool(jnp.all(jnp.isfinite(out)))

    ref = jax.block_until_ready(_reference_forward(x, raw))
    max_err = float(jnp.max(jnp.abs(out - ref)))
    # bf16 activations/weights in the Pallas path vs the f32 HIGHEST reference:
    # tolerance is loosened accordingly (accumulation and BN fold stay f32).
    assert max_err < 1e-1, f"max abs error vs reference: {max_err}"
    print("KERNEL_OK")
</pallas_src>

<mosaic_0001>
module attributes {stable_mosaic.version = 11 : i64} {
  func.func @_conv_stats_kernel(%arg0: i32, %arg1: memref<4x208x25xbf16, #tpu.memory_space<vmem>>, %arg2: memref<25x128xbf16, #tpu.memory_space<vmem>>, %arg3: memref<8x128xf32, #tpu.memory_space<vmem>>) attributes {dimension_semantics = [#tpu.dimension_semantics<parallel>], iteration_bounds = array<i64: 2>, scalar_prefetch = 0 : i64, scratch_operands = 0 : i64, tpu.core_type = #tpu.core_type<tc>, window_params = [{transform_indices = @transform_0, window_bounds = array<i64: 4, 208, 25>}, {pipeline_mode = #tpu.pipeline_mode<synchronous>, transform_indices = @transform_1, window_bounds = array<i64: 25, 128>}, {transform_indices = @transform_2, window_bounds = array<i64: 8, 128>}]} {
    %c0 = arith.constant 0 : index
    %c0_0 = arith.constant 0 : index
    %c0_1 = arith.constant 0 : index
    %0 = vector.load %arg1[%c0, %c0_0, %c0_1] : memref<4x208x25xbf16, #tpu.memory_space<vmem>>, vector<4x208x25xbf16>
    %1 = vector.shape_cast %0 : vector<4x208x25xbf16> to vector<832x25xbf16>
    %c0_2 = arith.constant 0 : index
    %c0_3 = arith.constant 0 : index
    %2 = vector.load %arg2[%c0_2, %c0_3] : memref<25x128xbf16, #tpu.memory_space<vmem>>, vector<25x128xbf16>
    %cst = arith.constant dense<0.000000e+00> : vector<832x128xf32>
    %3 = tpu.matmul %1, %2, %cst {dimension_numbers = #tpu.dot_dimension_numbers<[1], [0], [0], [1], [0, 0, 1, 1], [], []>} : vector<832x25xbf16>, vector<25x128xbf16>, vector<832x128xf32> -> vector<832x128xf32>
    %cst_4 = arith.constant dense<0.000000e+00> : vector<128xf32>
    %4 = vector.multi_reduction <add>, %3, %cst_4 [0] : vector<832x128xf32> to vector<128xf32>
    %5 = vector.shape_cast %4 : vector<128xf32> to vector<1x128xf32>
    %6 = arith.mulf %3, %3 : vector<832x128xf32>
    %cst_5 = arith.constant dense<0.000000e+00> : vector<128xf32>
    %7 = vector.multi_reduction <add>, %6, %cst_5 [0] : vector<832x128xf32> to vector<128xf32>
    %8 = vector.shape_cast %7 : vector<128xf32> to vector<1x128xf32>
    %cst_6 = arith.constant 0.000000e+00 : f32
    %9 = vector.broadcast %cst_6 : f32 to vector<6x128xf32>
    %10 = tpu.concatenate %5, %8, %9 in 0 : vector<1x128xf32>, vector<1x128xf32>, vector<6x128xf32> -> vector<8x128xf32>
    %c0_7 = arith.constant 0 : index
    %c0_8 = arith.constant 0 : index
    %11 = vector.load %arg3[%c0_7, %c0_8] : memref<8x128xf32, #tpu.memory_space<vmem>>, vector<8x128xf32>
    tpu.vector_store %arg3[%c0_7, %c0_8], %10 {strides = array<i32>} : memref<8x128xf32, #tpu.memory_space<vmem>>, vector<8x128xf32>,
    return
  }
  func.func @transform_0(%arg0: i32) -> (i32, i32, i32) {
    %c0_i32 = arith.constant 0 : i32
    %c0_i32_0 = arith.constant 0 : i32
    %c0_i32_1 = arith.constant 0 : i32
    return %c0_i32, %arg0, %c0_i32_0 : i32, i32, i32
  }
  func.func @transform_1(%arg0: i32) -> (i32, i32) {
    %c0_i32 = arith.constant 0 : i32
    %c0_i32_0 = arith.constant 0 : i32
    %c0_i32_1 = arith.constant 0 : i32
    return %c0_i32, %c0_i32_0 : i32, i32
  }
  func.func @transform_2(%arg0: i32) -> (i32, i32) {
    %c0_i32 = arith.constant 0 : i32
    %c0_i32_0 = arith.constant 0 : i32
    return %arg0, %c0_i32 : i32, i32
  }
}

module attributes {stable_mosaic.version = 11 : i64} {
  func.func @_conv_bn_relu_pool_kernel(%arg0: i32, %arg1: memref<4x208x25xbf16, #tpu.memory_space<vmem>>, %arg2: memref<25x128xbf16, #tpu.memory_space<vmem>>, %arg3: memref<2x128xf32, #tpu.memory_space<vmem>>, %arg4: memref<208x128xf32, #tpu.memory_space<vmem>>) attributes {dimension_semantics = [#tpu.dimension_semantics<parallel>], iteration_bounds = array<i64: 2>, scalar_prefetch = 0 : i64, scratch_operands = 0 : i64, tpu.core_type = #tpu.core_type<tc>, window_params = [{transform_indices = @transform_0, window_bounds = array<i64: 4, 208, 25>}, {pipeline_mode = #tpu.pipeline_mode<synchronous>, transform_indices = @transform_1, window_bounds = array<i64: 25, 128>}, {pipeline_mode = #tpu.pipeline_mode<synchronous>, transform_indices = @transform_2, window_bounds = array<i64: 2, 128>}, {transform_indices = @transform_3, window_bounds = array<i64: 208, 128>}]} {
    %c0 = arith.constant 0 : index
    %c0_0 = arith.constant 0 : index
    %c0_1 = arith.constant 0 : index
    %0 = vector.load %arg1[%c0, %c0_0, %c0_1] : memref<4x208x25xbf16, #tpu.memory_space<vmem>>, vector<4x208x25xbf16>
    %1 = vector.shape_cast %0 : vector<4x208x25xbf16> to vector<832x25xbf16>
    %c0_2 = arith.constant 0 : index
    %c0_3 = arith.constant 0 : index
    %2 = vector.load %arg2[%c0_2, %c0_3] : memref<25x128xbf16, #tpu.memory_space<vmem>>, vector<25x128xbf16>
    %cst = arith.constant dense<0.000000e+00> : vector<832x128xf32>
    %3 = tpu.matmul %1, %2, %cst {dimension_numbers = #tpu.dot_dimension_numbers<[1], [0], [0], [1], [0, 0, 1, 1], [], []>} : vector<832x25xbf16>, vector<25x128xbf16>, vector<832x128xf32> -> vector<832x128xf32>
    %c0_4 = arith.constant 0 : index
    %c0_5 = arith.constant 0 : index
    %4 = vector.load %arg3[%c0_4, %c0_5] : memref<2x128xf32, #tpu.memory_space<vmem>>, vector<1x128xf32>
    %5 = vector.broadcast %4 : vector<1x128xf32> to vector<832x128xf32>
    %6 = arith.mulf %3, %5 : vector<832x128xf32>
    %c1 = arith.constant 1 : index
    %c0_6 = arith.constant 0 : index
    %7 = vector.load %arg3[%c1, %c0_6] : memref<2x128xf32, #tpu.memory_space<vmem>>, vector<1x128xf32>
    %8 = vector.broadcast %7 : vector<1x128xf32> to vector<832x128xf32>
    %9 = arith.addf %6, %8 : vector<832x128xf32>
    %cst_7 = arith.constant 0.000000e+00 : f32
    %10 = vector.broadcast %cst_7 : f32 to vector<832x128xf32>
    %11 = arith.maximumf %9, %10 : vector<832x128xf32>
    %12 = vector.shape_cast %11 : vector<832x128xf32> to vector<4x208x128xf32>
    %13 = vector.extract_strided_slice %12 {offsets = [0, 0, 0], sizes = [1, 208, 128], strides = [1, 1, 1]} : vector<4x208x128xf32> to vector<1x208x128xf32>
    %14 = vector.shape_cast %13 : vector<1x208x128xf32> to vector<208x128xf32>
    %15 = vector.extract_strided_slice %12 {offsets = [1, 0, 0], sizes = [1, 208, 128], strides = [1, 1, 1]} : vector<4x208x128xf32> to vector<1x208x128xf32>
    %16 = vector.shape_cast %15 : vector<1x208x128xf32> to vector<208x128xf32>
    %17 = arith.maximumf %14, %16 : vector<208x128xf32>
    %18 = vector.extract_strided_slice %12 {offsets = [2, 0, 0], sizes = [1, 208, 128], strides = [1, 1, 1]} : vector<4x208x128xf32> to vector<1x208x128xf32>
    %19 = vector.shape_cast %18 : vector<1x208x128xf32> to vector<208x128xf32>
    %20 = vector.extract_strided_slice %12 {offsets = [3, 0, 0], sizes = [1, 208, 128], strides = [1, 1, 1]} : vector<4x208x128xf32> to vector<1x208x128xf32>
    %21 = vector.shape_cast %20 : vector<1x208x128xf32> to vector<208x128xf32>
    %22 = arith.maximumf %19, %21 : vector<208x128xf32>
    %23 = arith.maximumf %17, %22 : vector<208x128xf32>
    %c0_8 = arith.constant 0 : index
    %c0_9 = arith.constant 0 : index
    %24 = vector.load %arg4[%c0_8, %c0_9] : memref<208x128xf32, #tpu.memory_space<vmem>>, vector<208x128xf32>
    tpu.vector_store %arg4[%c0_8, %c0_9], %23 {strides = array<i32>} : memref<208x128xf32, #tpu.memory_space<vmem>>, vector<208x128xf32>,
    return
  }
  func.func @transform_0(%arg0: i32) -> (i32, i32, i32) {
    %c0_i32 = arith.constant 0 : i32
    %c0_i32_0 = arith.constant 0 : i32
    %c0_i32_1 = arith.constant 0 : i32
    return %c0_i32, %arg0, %c0_i32_0 : i32, i32, i32
  }
  func.func @transform_1(%arg0: i32) -> (i32, i32) {
    %c0_i32 = arith.constant 0 : i32
    %c0_i32_0 = arith.constant 0 : i32
    %c0_i32_1 = arith.constant 0 : i32
    return %c0_i32, %c0_i32_0 : i32, i32
  }
  func.func @transform_2(%arg0: i32) -> (i32, i32) {
    %c0_i32 = arith.constant 0 : i32
    %c0_i32_0 = arith.constant 0 : i32
    %c0_i32_1 = arith.constant 0 : i32
    return %c0_i32, %c0_i32_0 : i32, i32
  }
  func.func @transform_3(%arg0: i32) -> (i32, i32) {
    %c0_i32 = arith.constant 0 : i32
    %c0_i32_0 = arith.constant 0 : i32
    return %arg0, %c0_i32 : i32, i32
  }
}

module attributes {stable_mosaic.version = 11 : i64} {
  func.func @_conv_stats_kernel(%arg0: i32, %arg1: memref<4x32x150xbf16, #tpu.memory_space<vmem>>, %arg2: memref<150x128xbf16, #tpu.memory_space<vmem>>, %arg3: memref<8x128xf32, #tpu.memory_space<vmem>>) attributes {dimension_semantics = [#tpu.dimension_semantics<parallel>], iteration_bounds = array<i64: 2>, scalar_prefetch = 0 : i64, scratch_operands = 0 : i64, tpu.core_type = #tpu.core_type<tc>, window_params = [{transform_indices = @transform_0, window_bounds = array<i64: 4, 32, 150>}, {pipeline_mode = #tpu.pipeline_mode<synchronous>, transform_indices = @transform_1, window_bounds = array<i64: 150, 128>}, {transform_indices = @transform_2, window_bounds = array<i64: 8, 128>}]} {
    %c0 = arith.constant 0 : index
    %c0_0 = arith.constant 0 : index
    %c0_1 = arith.constant 0 : index
    %0 = vector.load %arg1[%c0, %c0_0, %c0_1] : memref<4x32x150xbf16, #tpu.memory_space<vmem>>, vector<4x32x150xbf16>
    %1 = vector.shape_cast %0 : vector<4x32x150xbf16> to vector<128x150xbf16>
    %c0_2 = arith.constant 0 : index
    %c0_3 = arith.constant 0 : index
    %2 = vector.load %arg2[%c0_2, %c0_3] : memref<150x128xbf16, #tpu.memory_space<vmem>>, vector<150x128xbf16>
    %cst = arith.constant dense<0.000000e+00> : vector<128x128xf32>
    %3 = tpu.matmul %1, %2, %cst {dimension_numbers = #tpu.dot_dimension_numbers<[1], [0], [0], [1], [0, 0, 1, 1], [], []>} : vector<128x150xbf16>, vector<150x128xbf16>, vector<128x128xf32> -> vector<128x128xf32>
    %cst_4 = arith.constant dense<0.000000e+00> : vector<128xf32>
    %4 = vector.multi_reduction <add>, %3, %cst_4 [0] : vector<128x128xf32> to vector<128xf32>
    %5 = vector.shape_cast %4 : vector<128xf32> to vector<1x128xf32>
    %6 = arith.mulf %3, %3 : vector<128x128xf32>
    %cst_5 = arith.constant dense<0.000000e+00> : vector<128xf32>
    %7 = vector.multi_reduction <add>, %6, %cst_5 [0] : vector<128x128xf32> to vector<128xf32>
    %8 = vector.shape_cast %7 : vector<128xf32> to vector<1x128xf32>
    %cst_6 = arith.constant 0.000000e+00 : f32
    %9 = vector.broadcast %cst_6 : f32 to vector<6x128xf32>
    %10 = tpu.concatenate %5, %8, %9 in 0 : vector<1x128xf32>, vector<1x128xf32>, vector<6x128xf32> -> vector<8x128xf32>
    %c0_7 = arith.constant 0 : index
    %c0_8 = arith.constant 0 : index
    %11 = vector.load %arg3[%c0_7, %c0_8] : memref<8x128xf32, #tpu.memory_space<vmem>>, vector<8x128xf32>
    tpu.vector_store %arg3[%c0_7, %c0_8], %10 {strides = array<i32>} : memref<8x128xf32, #tpu.memory_space<vmem>>, vector<8x128xf32>,
    return
  }
  func.func @transform_0(%arg0: i32) -> (i32, i32, i32) {
    %c0_i32 = arith.constant 0 : i32
    %c0_i32_0 = arith.constant 0 : i32
    %c0_i32_1 = arith.constant 0 : i32
    return %c0_i32, %arg0, %c0_i32_0 : i32, i32, i32
  }
  func.func @transform_1(%arg0: i32) -> (i32, i32) {
    %c0_i32 = arith.constant 0 : i32
    %c0_i32_0 = arith.constant 0 : i32
    %c0_i32_1 = arith.constant 0 : i32
    return %c0_i32, %c0_i32_0 : i32, i32
  }
  func.func @transform_2(%arg0: i32) -> (i32, i32) {
    %c0_i32 = arith.constant 0 : i32
    %c0_i32_0 = arith.constant 0 : i32
    return %arg0, %c0_i32 : i32, i32
  }
}

module attributes {stable_mosaic.version = 11 : i64} {
  func.func @_conv_bn_relu_pool_kernel(%arg0: i32, %arg1: memref<4x32x150xbf16, #tpu.memory_space<vmem>>, %arg2: memref<150x128xbf16, #tpu.memory_space<vmem>>, %arg3: memref<2x128xf32, #tpu.memory_space<vmem>>, %arg4: memref<32x128xf32, #tpu.memory_space<vmem>>) attributes {dimension_semantics = [#tpu.dimension_semantics<parallel>], iteration_bounds = array<i64: 2>, scalar_prefetch = 0 : i64, scratch_operands = 0 : i64, tpu.core_type = #tpu.core_type<tc>, window_params = [{transform_indices = @transform_0, window_bounds = array<i64: 4, 32, 150>}, {pipeline_mode = #tpu.pipeline_mode<synchronous>, transform_indices = @transform_1, window_bounds = array<i64: 150, 128>}, {pipeline_mode = #tpu.pipeline_mode<synchronous>, transform_indices = @transform_2, window_bounds = array<i64: 2, 128>}, {transform_indices = @transform_3, window_bounds = array<i64: 32, 128>}]} {
    %c0 = arith.constant 0 : index
    %c0_0 = arith.constant 0 : index
    %c0_1 = arith.constant 0 : index
    %0 = vector.load %arg1[%c0, %c0_0, %c0_1] : memref<4x32x150xbf16, #tpu.memory_space<vmem>>, vector<4x32x150xbf16>
    %1 = vector.shape_cast %0 : vector<4x32x150xbf16> to vector<128x150xbf16>
    %c0_2 = arith.constant 0 : index
    %c0_3 = arith.constant 0 : index
    %2 = vector.load %arg2[%c0_2, %c0_3] : memref<150x128xbf16, #tpu.memory_space<vmem>>, vector<150x128xbf16>
    %cst = arith.constant dense<0.000000e+00> : vector<128x128xf32>
    %3 = tpu.matmul %1, %2, %cst {dimension_numbers = #tpu.dot_dimension_numbers<[1], [0], [0], [1], [0, 0, 1, 1], [], []>} : vector<128x150xbf16>, vector<150x128xbf16>, vector<128x128xf32> -> vector<128x128xf32>
    %c0_4 = arith.constant 0 : index
    %c0_5 = arith.constant 0 : index
    %4 = vector.load %arg3[%c0_4, %c0_5] : memref<2x128xf32, #tpu.memory_space<vmem>>, vector<1x128xf32>
    %5 = vector.broadcast %4 : vector<1x128xf32> to vector<128x128xf32>
    %6 = arith.mulf %3, %5 : vector<128x128xf32>
    %c1 = arith.constant 1 : index
    %c0_6 = arith.constant 0 : index
    %7 = vector.load %arg3[%c1, %c0_6] : memref<2x128xf32, #tpu.memory_space<vmem>>, vector<1x128xf32>
    %8 = vector.broadcast %7 : vector<1x128xf32> to vector<128x128xf32>
    %9 = arith.addf %6, %8 : vector<128x128xf32>
    %cst_7 = arith.constant 0.000000e+00 : f32
    %10 = vector.broadcast %cst_7 : f32 to vector<128x128xf32>
    %11 = arith.maximumf %9, %10 : vector<128x128xf32>
    %12 = vector.shape_cast %11 : vector<128x128xf32> to vector<4x32x128xf32>
    %13 = vector.extract_strided_slice %12 {offsets = [0, 0, 0], sizes = [1, 32, 128], strides = [1, 1, 1]} : vector<4x32x128xf32> to vector<1x32x128xf32>
    %14 = vector.shape_cast %13 : vector<1x32x128xf32> to vector<32x128xf32>
    %15 = vector.extract_strided_slice %12 {offsets = [1, 0, 0], sizes = [1, 32, 128], strides = [1, 1, 1]} : vector<4x32x128xf32> to vector<1x32x128xf32>
    %16 = vector.shape_cast %15 : vector<1x32x128xf32> to vector<32x128xf32>
    %17 = arith.maximumf %14, %16 : vector<32x128xf32>
    %18 = vector.extract_strided_slice %12 {offsets = [2, 0, 0], sizes = [1, 32, 128], strides = [1, 1, 1]} : vector<4x32x128xf32> to vector<1x32x128xf32>
    %19 = vector.shape_cast %18 : vector<1x32x128xf32> to vector<32x128xf32>
    %20 = vector.extract_strided_slice %12 {offsets = [3, 0, 0], sizes = [1, 32, 128], strides = [1, 1, 1]} : vector<4x32x128xf32> to vector<1x32x128xf32>
    %21 = vector.shape_cast %20 : vector<1x32x128xf32> to vector<32x128xf32>
    %22 = arith.maximumf %19, %21 : vector<32x128xf32>
    %23 = arith.maximumf %17, %22 : vector<32x128xf32>
    %c0_8 = arith.constant 0 : index
    %c0_9 = arith.constant 0 : index
    %24 = vector.load %arg4[%c0_8, %c0_9] : memref<32x128xf32, #tpu.memory_space<vmem>>, vector<32x128xf32>
    tpu.vector_store %arg4[%c0_8, %c0_9], %23 {strides = array<i32>} : memref<32x128xf32, #tpu.memory_space<vmem>>, vector<32x128xf32>,
    return
  }
  func.func @transform_0(%arg0: i32) -> (i32, i32, i32) {
    %c0_i32 = arith.constant 0 : i32
    %c0_i32_0 = arith.constant 0 : i32
    %c0_i32_1 = arith.constant 0 : i32
    return %c0_i32, %arg0, %c0_i32_0 : i32, i32, i32
  }
  func.func @transform_1(%arg0: i32) -> (i32, i32) {
    %c0_i32 = arith.constant 0 : i32
    %c0_i32_0 = arith.constant 0 : i32
    %c0_i32_1 = arith.constant 0 : i32
    return %c0_i32, %c0_i32_0 : i32, i32
  }
  func.func @transform_2(%arg0: i32) -> (i32, i32) {
    %c0_i32 = arith.constant 0 : i32
    %c0_i32_0 = arith.constant 0 : i32
    %c0_i32_1 = arith.constant 0 : i32
    return %c0_i32, %c0_i32_0 : i32, i32
  }
  func.func @transform_3(%arg0: i32) -> (i32, i32) {
    %c0_i32 = arith.constant 0 : i32
    %c0_i32_0 = arith.constant 0 : i32
    return %arg0, %c0_i32 : i32, i32
  }
}

module attributes {stable_mosaic.version = 11 : i64} {
  func.func @_fc_fused_kernel(%arg0: i32, %arg1: memref<16x512xbf16, #tpu.memory_space<vmem>>, %arg2: memref<512x128xbf16, #tpu.memory_space<vmem>>, %arg3: memref<1x128xf32, #tpu.memory_space<vmem>>, %arg4: memref<128x128xbf16, #tpu.memory_space<vmem>>, %arg5: memref<1x128xf32, #tpu.memory_space<vmem>>, %arg6: memref<128x128xbf16, #tpu.memory_space<vmem>>, %arg7: memref<1x128xf32, #tpu.memory_space<vmem>>, %arg8: memref<16x128xf32, #tpu.memory_space<vmem>>) attributes {dimension_semantics = [#tpu.dimension_semantics<parallel>], iteration_bounds = array<i64: 2>, scalar_prefetch = 0 : i64, scratch_operands = 0 : i64, tpu.core_type = #tpu.core_type<tc>, window_params = [{transform_indices = @transform_0, window_bounds = array<i64: 16, 512>}, {pipeline_mode = #tpu.pipeline_mode<synchronous>, transform_indices = @transform_1, window_bounds = array<i64: 512, 128>}, {pipeline_mode = #tpu.pipeline_mode<synchronous>, transform_indices = @transform_2, window_bounds = array<i64: 1, 128>}, {pipeline_mode = #tpu.pipeline_mode<synchronous>, transform_indices = @transform_3, window_bounds = array<i64: 128, 128>}, {pipeline_mode = #tpu.pipeline_mode<synchronous>, transform_indices = @transform_4, window_bounds = array<i64: 1, 128>}, {pipeline_mode = #tpu.pipeline_mode<synchronous>, transform_indices = @transform_5, window_bounds = array<i64: 128, 128>}, {pipeline_mode = #tpu.pipeline_mode<synchronous>, transform_indices = @transform_6, window_bounds = array<i64: 1, 128>}, {transform_indices = @transform_7, window_bounds = array<i64: 16, 128>}]} {
    %c0 = arith.constant 0 : index
    %c0_0 = arith.constant 0 : index
    %0 = vector.load %arg1[%c0, %c0_0] : memref<16x512xbf16, #tpu.memory_space<vmem>>, vector<16x512xbf16>
    %c0_1 = arith.constant 0 : index
    %c0_2 = arith.constant 0 : index
    %1 = vector.load %arg2[%c0_1, %c0_2] : memref<512x128xbf16, #tpu.memory_space<vmem>>, vector<512x128xbf16>
    %cst = arith.constant dense<0.000000e+00> : vector<16x128xf32>
    %2 = tpu.matmul %0, %1, %cst {dimension_numbers = #tpu.dot_dimension_numbers<[1], [0], [0], [1], [0, 0, 1, 1], [], []>} : vector<16x512xbf16>, vector<512x128xbf16>, vector<16x128xf32> -> vector<16x128xf32>
    %c0_3 = arith.constant 0 : index
    %c0_4 = arith.constant 0 : index
    %3 = vector.load %arg3[%c0_3, %c0_4] : memref<1x128xf32, #tpu.memory_space<vmem>>, vector<1x128xf32>
    %4 = vector.broadcast %3 : vector<1x128xf32> to vector<16x128xf32>
    %5 = arith.addf %2, %4 : vector<16x128xf32>
    %cst_5 = arith.constant 0.000000e+00 : f32
    %6 = vector.broadcast %cst_5 : f32 to vector<16x128xf32>
    %7 = arith.maximumf %5, %6 : vector<16x128xf32>
    %8 = arith.truncf %7 : vector<16x128xf32> to vector<16x128xbf16>
    %c0_6 = arith.constant 0 : index
    %c0_7 = arith.constant 0 : index
    %9 = vector.load %arg4[%c0_6, %c0_7] : memref<128x128xbf16, #tpu.memory_space<vmem>>, vector<128x128xbf16>
    %cst_8 = arith.constant dense<0.000000e+00> : vector<16x128xf32>
    %10 = tpu.matmul %8, %9, %cst_8 {dimension_numbers = #tpu.dot_dimension_numbers<[1], [0], [0], [1], [0, 0, 1, 1], [], []>} : vector<16x128xbf16>, vector<128x128xbf16>, vector<16x128xf32> -> vector<16x128xf32>
    %c0_9 = arith.constant 0 : index
    %c0_10 = arith.constant 0 : index
    %11 = vector.load %arg5[%c0_9, %c0_10] : memref<1x128xf32, #tpu.memory_space<vmem>>, vector<1x128xf32>
    %12 = vector.broadcast %11 : vector<1x128xf32> to vector<16x128xf32>
    %13 = arith.addf %10, %12 : vector<16x128xf32>
    %cst_11 = arith.constant 0.000000e+00 : f32
    %14 = vector.broadcast %cst_11 : f32 to vector<16x128xf32>
    %15 = arith.maximumf %13, %14 : vector<16x128xf32>
    %16 = arith.truncf %15 : vector<16x128xf32> to vector<16x128xbf16>
    %c0_12 = arith.constant 0 : index
    %c0_13 = arith.constant 0 : index
    %17 = vector.load %arg6[%c0_12, %c0_13] : memref<128x128xbf16, #tpu.memory_space<vmem>>, vector<128x128xbf16>
    %cst_14 = arith.constant dense<0.000000e+00> : vector<16x128xf32>
    %18 = tpu.matmul %16, %17, %cst_14 {dimension_numbers = #tpu.dot_dimension_numbers<[1], [0], [0], [1], [0, 0, 1, 1], [], []>} : vector<16x128xbf16>, vector<128x128xbf16>, vector<16x128xf32> -> vector<16x128xf32>
    %c0_15 = arith.constant 0 : index
    %c0_16 = arith.constant 0 : index
    %19 = vector.load %arg7[%c0_15, %c0_16] : memref<1x128xf32, #tpu.memory_space<vmem>>, vector<1x128xf32>
    %20 = vector.broadcast %19 : vector<1x128xf32> to vector<16x128xf32>
    %21 = arith.addf %18, %20 : vector<16x128xf32>
    %c0_17 = arith.constant 0 : index
    %c0_18 = arith.constant 0 : index
    %22 = vector.load %arg8[%c0_17, %c0_18] : memref<16x128xf32, #tpu.memory_space<vmem>>, vector<16x128xf32>
    tpu.vector_store %arg8[%c0_17, %c0_18], %21 {strides = array<i32>} : memref<16x128xf32, #tpu.memory_space<vmem>>, vector<16x128xf32>,
    return
  }
  func.func @transform_0(%arg0: i32) -> (i32, i32) {
    %c0_i32 = arith.constant 0 : i32
    %c0_i32_0 = arith.constant 0 : i32
    return %arg0, %c0_i32 : i32, i32
  }
  func.func @transform_1(%arg0: i32) -> (i32, i32) {
    %c0_i32 = arith.constant 0 : i32
    %c0_i32_0 = arith.constant 0 : i32
    %c0_i32_1 = arith.constant 0 : i32
    return %c0_i32, %c0_i32_0 : i32, i32
  }
  func.func @transform_2(%arg0: i32) -> (i32, i32) {
    %c0_i32 = arith.constant 0 : i32
    %c0_i32_0 = arith.constant 0 : i32
    %c0_i32_1 = arith.constant 0 : i32
    return %c0_i32, %c0_i32_0 : i32, i32
  }
  func.func @transform_3(%arg0: i32) -> (i32, i32) {
    %c0_i32 = arith.constant 0 : i32
    %c0_i32_0 = arith.constant 0 : i32
    %c0_i32_1 = arith.constant 0 : i32
    return %c0_i32, %c0_i32_0 : i32, i32
  }
  func.func @transform_4(%arg0: i32) -> (i32, i32) {
    %c0_i32 = arith.constant 0 : i32
    %c0_i32_0 = arith.constant 0 : i32
    %c0_i32_1 = arith.constant 0 : i32
    return %c0_i32, %c0_i32_0 : i32, i32
  }
  func.func @transform_5(%arg0: i32) -> (i32, i32) {
    %c0_i32 = arith.constant 0 : i32
    %c0_i32_0 = arith.constant 0 : i32
    %c0_i32_1 = arith.constant 0 : i32
    return %c0_i32, %c0_i32_0 : i32, i32
  }
  func.func @transform_6(%arg0: i32) -> (i32, i32) {
    %c0_i32 = arith.constant 0 : i32
    %c0_i32_0 = arith.constant 0 : i32
    %c0_i32_1 = arith.constant 0 : i32
    return %c0_i32, %c0_i32_0 : i32, i32
  }
  func.func @transform_7(%arg0: i32) -> (i32, i32) {
    %c0_i32 = arith.constant 0 : i32
    %c0_i32_0 = arith.constant 0 : i32
    return %arg0, %c0_i32 : i32, i32
  }
}

</mosaic_0001>

<llo_original>
// kernel: lenet5_bn_forward.5
$region0: #{lenet5_bn_forward.5}
  #allocation0 [shape = 'u32[]', space=smem, size = 0x4, offset = 0x4, fixed_abs, tag = 'smem constant byte address 0x4 - core index']
  #allocation1 [shape = 'u32[144,128]{1,0:T(1,128)}', space=vmem, size = 0x12000, scoped, tag = 'internal scratch']
  %s0 = inlined_call_operand.vmem [shape: bf16[4,416,25], index: 0, kind: input, shape index: {}]
  %s1 = inlined_call_operand.vmem [shape: bf16[25,128], index: 1, kind: input, shape index: {}]
  %s2 = inlined_call_operand.vmem [shape: f32[16,128], index: 2, kind: output, shape index: {}]
  %s3 = sld [smem:[#allocation0]]
  $region82: #{lenet5_bn_forward.5} parent=0
    _
  %s5 = ssub.s32 1, %s3
  %s6 = scalar_select 0, %s5, %s3
  $region1: #{lenet5_bn_forward.5} parent=0
    #allocation2 [shape = 'u8[425984]{0}', space=vmem, size = 0x68000, scoped, tag = 'input window, operand 0']
    loop: start=0, step=1, limit=4
    $region2: #{lenet5_bn_forward.5} parent=1 // loop_pre_header
      _
    $region3: #{lenet5_bn_forward.5} parent=1 // loop_header
      %s8 = sphi 0, %s12
      %p9 = scmp.ge.s32.totalorder %s8, 4
      %s18 = sphi 0, %s20
      %s21 = sphi 0, %s18
      %s22 = sphi 0, %s21
      %s38 = sphi 0, %s22
      %s42 = sphi 0, %s42
      %s44 = sphi 0, %s42
      %s45 = sphi 0, %s44
      %s59 = sphi 0, %s45
      %s65 = sphi 0, %s67
      %s68 = sphi 0, %s65
      %s69 = sphi 0, %s68
      %s85 = sphi 0, %s69
    $region4: #{lenet5_bn_forward.5} parent=1 // loop_header_branch
      %11 = sbr.rel (%p9) target = $region8
    $region5: #{lenet5_bn_forward.5} parent=1 // loop_body
      %s13 = ssub.s32 %s8, 1
      %s14 = ssub.s32 %s8, 2
      %s15 = sadd.s32 %s8, 1
      %s16 = ssub.s32 %s8, %s15
      %p17 = scmp.eq.s32.totalorder %s16, 0
      %s19 = sadd.s32 %s18, 1
      %s20 = scalar_select %p17, %s18, %s19
      %p23 = pneg %p17
      %p24 = scmp.eq.s32.totalorder %s8, 1
      %p25 = por %p23, %p24
      %p26 = scmp.ne.s32.totalorder %s18, %s21
      %p27 = scmp.eq.s32.totalorder %s8, 0
      %p28 = por %p26, %p27
      %p29 = scmp.ne.s32.totalorder %s18, %s21
      %p30 = scmp.eq.s32.totalorder %s13, 1
      %p31 = por %p29, %p30
      %p32 = scmp.ne.s32.totalorder %s21, %s22
      %p33 = scmp.eq.s32.totalorder %s13, 0
      %p34 = por %p32, %p33
      %p35 = scmp.ne.s32.totalorder %s21, %s22
      %p36 = scmp.eq.s32.totalorder %s14, 1
      %p37 = por %p35, %p36
      %p39 = scmp.ne.s32.totalorder %s22, %s38
      %p40 = scmp.eq.s32.totalorder %s14, 0
      %p41 = por %p39, %p40
      %s43 = sadd.s32 %s42, 1
      %p46 = scmp.eq.s32.totalorder %s8, 1
      %p47 = scmp.ne.s32.totalorder %s42, %s44
      %p48 = scmp.eq.s32.totalorder %s8, 0
      %p49 = por %p47, %p48
      %p50 = scmp.ne.s32.totalorder %s42, %s44
      %p51 = scmp.eq.s32.totalorder %s13, 1
      %p52 = por %p50, %p51
      %p53 = scmp.ne.s32.totalorder %s44, %s45
      %p54 = scmp.eq.s32.totalorder %s13, 0
      %p55 = por %p53, %p54
      %p56 = scmp.ne.s32.totalorder %s44, %s45
      %p57 = scmp.eq.s32.totalorder %s14, 1
      %p58 = por %p56, %p57
      %p60 = scmp.ne.s32.totalorder %s45, %s59
      %p61 = scmp.eq.s32.totalorder %s14, 0
      %p62 = por %p60, %p61
      %s63 = ssub.s32 %s8, %s15
      %p64 = scmp.eq.s32.totalorder %s63, 0
      %s66 = sadd.s32 %s65, 1
      %s67 = scalar_select %p64, %s65, %s66
      %p70 = pneg %p64
      %p71 = scmp.eq.s32.totalorder %s8, 1
      %p72 = por %p70, %p71
      %p73 = scmp.ne.s32.totalorder %s65, %s68
      %p74 = scmp.eq.s32.totalorder %s8, 0
      %p75 = por %p73, %p74
      %p76 = scmp.ne.s32.totalorder %s65, %s68
      %p77 = scmp.eq.s32.totalorder %s13, 1
      %p78 = por %p76, %p77
      %p79 = scmp.ne.s32.totalorder %s68, %s69
      %p80 = scmp.eq.s32.totalorder %s13, 0
      %p81 = por %p79, %p80
      %p82 = scmp.ne.s32.totalorder %s68, %s69
      %p83 = scmp.eq.s32.totalorder %s14, 1
      %p84 = por %p82, %p83
      %p86 = scmp.ne.s32.totalorder %s69, %s85
      %p87 = scmp.eq.s32.totalorder %s14, 0
      %p88 = por %p86, %p87
      %p89 = scmp.le.s32.totalorder 1, %s8
      %p90 = scmp.lt.s32.totalorder %s8, 3
      %p91 = pnand %p89, %p90
      %p92 = pneg %p91
      // Predicated region
      $region9: #{lenet5_bn_forward.5} parent=5 // pred_check
        _
      $region10: #{lenet5_bn_forward.5} parent=5 // pred_check_branch
        %94 = sbr.rel (%p91) target = $region12
      $region11: #{lenet5_bn_forward.5} parent=5 // pred_region
        %s95 = ssub.s32 %s8, 1
        // Predicated region
        $region13: #{lenet5_bn_forward.5} parent=11 // pred_check
          %p96 = pneg %p55
        $region14: #{lenet5_bn_forward.5} parent=11 // pred_check_branch
          %98 = sbr.rel (%p96) target = $region16
        $region15: #{lenet5_bn_forward.5} parent=11 // pred_region
          _
        $region16: #{lenet5_bn_forward.5} parent=11 // pred_fallthru
          _
      $region12: #{lenet5_bn_forward.5} parent=5 // pred_fallthru
        _
      %p99 = scmp.lt.s32.totalorder %s8, 2
      // Predicated region
      $region17: #{lenet5_bn_forward.5} parent=5 // pred_check
        %p100 = pneg %p99
      $region18: #{lenet5_bn_forward.5} parent=5 // pred_check_branch
        %102 = sbr.rel (%p100) target = $region20
      $region19: #{lenet5_bn_forward.5} parent=5 // pred_region
        // Predicated region
        $region21: #{lenet5_bn_forward.5} parent=19 // pred_check
          %p103 = pneg %p28
        $region22: #{lenet5_bn_forward.5} parent=19 // pred_check_branch
          %105 = sbr.rel (%p103) target = $region24
        $region23: #{lenet5_bn_forward.5} parent=19 // pred_region
          %s106 = sand.u32 %s18, 1
          %s107 = sand.u32 %s18, 1
          %s108 = smul.addr %s107, 416
          %s109 = scalar_lea.vmem [#allocation2], %s108
          %s110 = smul.u32 26, %s8
          %s111 = smul.addr %s110, 4
          %s112 = scalar_lea.vmem %s0, %s111
          // Predicated region
          $region25: #{lenet5_bn_forward.5} parent=23 // pred_check
            _
          $region26: #{lenet5_bn_forward.5} parent=23 // pred_check_branch
            %114 = sbr.rel (0) target = $region28
          $region27: #{lenet5_bn_forward.5} parent=23 // pred_region
            // Predicated region
            $region29: #{lenet5_bn_forward.5} parent=27 // pred_check
              _
            $region30: #{lenet5_bn_forward.5} parent=27 // pred_check_branch
              %116 = sbr.rel target = $region32
            $region31: #{lenet5_bn_forward.5} parent=27 // pred_region
              // Predicated region
              $region44: #{lenet5_bn_forward.5} parent=31 // pred_check
                _
              $region45: #{lenet5_bn_forward.5} parent=31 // pred_check_branch
                %337 = sbr.rel (0) target = $region47
              $region46: #{lenet5_bn_forward.5} parent=31 // pred_region
                loop: start=0, step=1, limit=1
                $region48: #{lenet5_bn_forward.5} parent=46 // loop_pre_header
                  _
                $region49: #{lenet5_bn_forward.5} parent=46 // loop_header
                  %s339 = sphi 0, %s343
                  %p340 = scmp.ge.s32.totalorder %s339, 1
                  %s344 = sphi %s112, %s112
                  %s345 = sphi %s109, %s109
                $region50: #{lenet5_bn_forward.5} parent=46 // loop_header_branch
                  %342 = sbr.rel (%p340) target = $region54
                $region51: #{lenet5_bn_forward.5} parent=46 // loop_body
                  _
                $region52: #{lenet5_bn_forward.5} parent=46 // loop_footer
                  %s343 = sadd.s32 1, %s339
                $region53: #{lenet5_bn_forward.5} parent=46 // loop_footer_branch
                  %338 = sbr.rel target = $region49
                $region54: #{lenet5_bn_forward.5} parent=46 // loop_exit
                  _
                loop: start=0, step=1, limit=1
                $region55: #{lenet5_bn_forward.5} parent=46 // loop_pre_header
                  _
                $region56: #{lenet5_bn_forward.5} parent=46 // loop_header
                  %s348 = sphi 0, %s352
                  %p349 = scmp.ge.s32.totalorder %s348, 1
                  %s353 = sphi %s112, %s112
                  %s354 = sphi %s109, %s109
                $region57: #{lenet5_bn_forward.5} parent=46 // loop_header_branch
                  %351 = sbr.rel (%p349) target = $region61
                $region58: #{lenet5_bn_forward.5} parent=46 // loop_body
                  %v355 = vld [vmem:[%s353] sm:$0xf]
                  %356 = vst [vmem:[%s354] sm:$0xf] %v355
                  %v357 = vld [vmem:[%s353 + $0x4] sm:$0xf]
                  %358 = vst [vmem:[%s354 + $0x4] sm:$0xf] %v357
                  %v359 = vld [vmem:[%s353 + $0x8] sm:$0xf]
                  %360 = vst [vmem:[%s354 + $0x8] sm:$0xf] %v359
                  %v361 = vld [vmem:[%s353 + $0xc] sm:$0xf]
                  %362 = vst [vmem:[%s354 + $0xc] sm:$0xf] %v361
                  %v363 = vld [vmem:[%s353 + $0x10] sm:$0xf]
                  %364 = vst [vmem:[%s354 + $0x10] sm:$0xf] %v363
                  %v365 = vld [vmem:[%s353 + $0x14] sm:$0xf]
                  %366 = vst [vmem:[%s354 + $0x14] sm:$0xf] %v365
                  %v367 = vld [vmem:[%s353 + $0x18] sm:$0xf]
                  %368 = vst [vmem:[%s354 + $0x18] sm:$0xf] %v367
                  %v369 = vld [vmem:[%s353 + $0x1c] sm:$0xf]
                  %370 = vst [vmem:[%s354 + $0x1c] sm:$0xf] %v369
                  %v371 = vld [vmem:[%s353 + $0x20] sm:$0xf]
                  %372 = vst [vmem:[%s354 + $0x20] sm:$0xf] %v371
                  %v373 = vld [vmem:[%s353 + $0x24] sm:$0xf]
                  %374 = vst [vmem:[%s354 + $0x24] sm:$0xf] %v373
                  %v375 = vld [vmem:[%s353 + $0x28] sm:$0xf]
                  %376 = vst [vmem:[%s354 + $0x28] sm:$0xf] %v375
                  %v377 = vld [vmem:[%s353 + $0x2c] sm:$0xf]
                  %378 = vst [vmem:[%s354 + $0x2c] sm:$0xf] %v377
                  %v379 = vld [vmem:[%s353 + $0x30] sm:$0xf]
                  %380 = vst [vmem:[%s354 + $0x30] sm:$0xf] %v379
                  %v381 = vld [vmem:[%s353 + $0x34] sm:$0xf]
                  %382 = vst [vmem:[%s354 + $0x34] sm:$0xf] %v381
                  %v383 = vld [vmem:[%s353 + $0x38] sm:$0xf]
                  %384 = vst [vmem:[%s354 + $0x38] sm:$0xf] %v383
                  %v385 = vld [vmem:[%s353 + $0x3c] sm:$0xf]
                  %386 = vst [vmem:[%s354 + $0x3c] sm:$0xf] %v385
                  %v387 = vld [vmem:[%s353 + $0x40] sm:$0xf]
                  %388 = vst [vmem:[%s354 + $0x40] sm:$0xf] %v387
                  %v389 = vld [vmem:[%s353 + $0x44] sm:$0xf]
                  %390 = vst [vmem:[%s354 + $0x44] sm:$0xf] %v389
                  %v391 = vld [vmem:[%s353 + $0x48] sm:$0xf]
                  %392 = vst [vmem:[%s354 + $0x48] sm:$0xf] %v391
                  %v393 = vld [vmem:[%s353 + $0x4c] sm:$0xf]
                  %394 = vst [vmem:[%s354 + $0x4c] sm:$0xf] %v393
                  %v395 = vld [vmem:[%s353 + $0x50] sm:$0xf]
                  %396 = vst [vmem:[%s354 + $0x50] sm:$0xf] %v395
                  %v397 = vld [vmem:[%s353 + $0x54] sm:$0xf]
                  %398 = vst [vmem:[%s354 + $0x54] sm:$0xf] %v397
                  %v399 = vld [vmem:[%s353 + $0x58] sm:$0xf]
                  %400 = vst [vmem:[%s354 + $0x58] sm:$0xf] %v399
                  %v401 = vld [vmem:[%s353 + $0x5c] sm:$0xf]
                  %402 = vst [vmem:[%s354 + $0x5c] sm:$0xf] %v401
                  %v403 = vld [vmem:[%s353 + $0x60] sm:$0xf]
                  %404 = vst [vmem:[%s354 + $0x60] sm:$0xf] %v403
                  %v405 = vld [vmem:[%s353 + $0x64] sm:$0xf]
                  %406 = vst [vmem:[%s354 + $0x64] sm:$0xf] %v405
                  %v407 = vld [vmem:[%s353 + $0xd0] sm:$0xf]
                  %408 = vst [vmem:[%s354 + $0x68] sm:$0xf] %v407
                  %v409 = vld [vmem:[%s353 + $0xd4] sm:$0xf]
                  %410 = vst [vmem:[%s354 + $0x6c] sm:$0xf] %v409
                  %v411 = vld [vmem:[%s353 + $0xd8] sm:$0xf]
                  %412 = vst [vmem:[%s354 + $0x70] sm:$0xf] %v411
                  %v413 = vld [vmem:[%s353 + $0xdc] sm:$0xf]
                  %414 = vst [vmem:[%s354 + $0x74] sm:$0xf] %v413
                  %v415 = vld [vmem:[%s353 + $0xe0] sm:$0xf]
                  %416 = vst [vmem:[%s354 + $0x78] sm:$0xf] %v415
                  %v417 = vld [vmem:[%s353 + $0xe4] sm:$0xf]
                  %418 = vst [vmem:[%s354 + $0x7c] sm:$0xf] %v417
                  %v419 = vld [vmem:[%s353 + $0xe8] sm:$0xf]
                  %420 = vst [vmem:[%s354 + $0x80] sm:$0xf] %v419
                  %v421 = vld [vmem:[%s353 + $0xec] sm:$0xf]
                  %422 = vst [vmem:[%s354 + $0x84] sm:$0xf] %v421
                  %v423 = vld [vmem:[%s353 + $0xf0] sm:$0xf]
                  %424 = vst [vmem:[%s354 + $0x88] sm:$0xf] %v423
                  %v425 = vld [vmem:[%s353 + $0xf4] sm:$0xf]
                  %426 = vst [vmem:[%s354 + $0x8c] sm:$0xf] %v425
                  %v427 = vld [vmem:[%s353 + $0xf8] sm:$0xf]
                  %428 = vst [vmem:[%s354 + $0x90] sm:$0xf] %v427
                  %v429 = vld [vmem:[%s353 + $0xfc] sm:$0xf]
                  %430 = vst [vmem:[%s354 + $0x94] sm:$0xf] %v429
                  %v431 = vld [vmem:[%s353 + $0x100] sm:$0xf]
                  %432 = vst [vmem:[%s354 + $0x98] sm:$0xf] %v431
                  %v433 = vld [vmem:[%s353 + $0x104] sm:$0xf]
                  %434 = vst [vmem:[%s354 + $0x9c] sm:$0xf] %v433
                  %v435 = vld [vmem:[%s353 + $0x108] sm:$0xf]
                  %436 = vst [vmem:[%s354 + $0xa0] sm:$0xf] %v435
                  %v437 = vld [vmem:[%s353 + $0x10c] sm:$0xf]
                  %438 = vst [vmem:[%s354 + $0xa4] sm:$0xf] %v437
                  %v439 = vld [vmem:[%s353 + $0x110] sm:$0xf]
                  %440 = vst [vmem:[%s354 + $0xa8] sm:$0xf] %v439
                  %v441 = vld [vmem:[%s353 + $0x114] sm:$0xf]
                  %442 = vst [vmem:[%s354 + $0xac] sm:$0xf] %v441
                  %v443 = vld [vmem:[%s353 + $0x118] sm:$0xf]
                  %444 = vst [vmem:[%s354 + $0xb0] sm:$0xf] %v443
                  %v445 = vld [vmem:[%s353 + $0x11c] sm:$0xf]
                  %446 = vst [vmem:[%s354 + $0xb4] sm:$0xf] %v445
                  %v447 = vld [vmem:[%s353 + $0x120] sm:$0xf]
                  %448 = vst [vmem:[%s354 + $0xb8] sm:$0xf] %v447
                  %v449 = vld [vmem:[%s353 + $0x124] sm:$0xf]
                  %450 = vst [vmem:[%s354 + $0xbc] sm:$0xf] %v449
                  %v451 = vld [vmem:[%s353 + $0x128] sm:$0xf]
                  %452 = vst [vmem:[%s354 + $0xc0] sm:$0xf] %v451
                  %v453 = vld [vmem:[%s353 + $0x12c] sm:$0xf]
                  %454 = vst [vmem:[%s354 + $0xc4] sm:$0xf] %v453
                  %v455 = vld [vmem:[%s353 + $0x130] sm:$0xf]
                  %456 = vst [vmem:[%s354 + $0xc8] sm:$0xf] %v455
                  %v457 = vld [vmem:[%s353 + $0x134] sm:$0xf]
                  %458 = vst [vmem:[%s354 + $0xcc] sm:$0xf] %v457
                  %v459 = vld [vmem:[%s353 + $0x1a0] sm:$0xf]
                  %460 = vst [vmem:[%s354 + $0xd0] sm:$0xf] %v459
                  %v461 = vld [vmem:[%s353 + $0x1a4] sm:$0xf]
                  %462 = vst [vmem:[%s354 + $0xd4] sm:$0xf] %v461
                  %v463 = vld [vmem:[%s353 + $0x1a8] sm:$0xf]
                  %464 = vst [vmem:[%s354 + $0xd8] sm:$0xf] %v463
                  %v465 = vld [vmem:[%s353 + $0x1ac] sm:$0xf]
                  %466 = vst [vmem:[%s354 + $0xdc] sm:$0xf] %v465
                  %v467 = vld [vmem:[%s353 + $0x1b0] sm:$0xf]
                  %468 = vst [vmem:[%s354 + $0xe0] sm:$0xf] %v467
                  %v469 = vld [vmem:[%s353 + $0x1b4] sm:$0xf]
                  %470 = vst [vmem:[%s354 + $0xe4] sm:$0xf] %v469
                  %v471 = vld [vmem:[%s353 + $0x1b8] sm:$0xf]
                  %472 = vst [vmem:[%s354 + $0xe8] sm:$0xf] %v471
                  %v473 = vld [vmem:[%s353 + $0x1bc] sm:$0xf]
                  %474 = vst [vmem:[%s354 + $0xec] sm:$0xf] %v473
                  %v475 = vld [vmem:[%s353 + $0x1c0] sm:$0xf]
                  %476 = vst [vmem:[%s354 + $0xf0] sm:$0xf] %v475
                  %v477 = vld [vmem:[%s353 + $0x1c4] sm:$0xf]
                  %478 = vst [vmem:[%s354 + $0xf4] sm:$0xf] %v477
                  %v479 = vld [vmem:[%s353 + $0x1c8] sm:$0xf]
                  %480 = vst [vmem:[%s354 + $0xf8] sm:$0xf] %v479
                  %v481 = vld [vmem:[%s353 + $0x1cc] sm:$0xf]
                  %482 = vst [vmem:[%s354 + $0xfc] sm:$0xf] %v481
                  %v483 = vld [vmem:[%s353 + $0x1d0] sm:$0xf]
                  %484 = vst [vmem:[%s354 + $0x100] sm:$0xf] %v483
                  %v485 = vld [vmem:[%s353 + $0x1d4] sm:$0xf]
                  %486 = vst [vmem:[%s354 + $0x104] sm:$0xf] %v485
                  %v487 = vld [vmem:[%s353 + $0x1d8] sm:$0xf]
                  %488 = vst [vmem:[%s354 + $0x108] sm:$0xf] %v487
                  %v489 = vld [vmem:[%s353 + $0x1dc] sm:$0xf]
                  %490 = vst [vmem:[%s354 + $0x10c] sm:$0xf] %v489
                  %v491 = vld [vmem:[%s353 + $0x1e0] sm:$0xf]
                  %492 = vst [vmem:[%s354 + $0x110] sm:$0xf] %v491
                  %v493 = vld [vmem:[%s353 + $0x1e4] sm:$0xf]
                  %494 = vst [vmem:[%s354 + $0x114] sm:$0xf] %v493
                  %v495 = vld [vmem:[%s353 + $0x1e8] sm:$0xf]
                  %496 = vst [vmem:[%s354 + $0x118] sm:$0xf] %v495
                  %v497 = vld [vmem:[%s353 + $0x1ec] sm:$0xf]
                  %498 = vst [vmem:[%s354 + $0x11c] sm:$0xf] %v497
                  %v499 = vld [vmem:[%s353 + $0x1f0] sm:$0xf]
                  %500 = vst [vmem:[%s354 + $0x120] sm:$0xf] %v499
                  %v501 = vld [vmem:[%s353 + $0x1f4] sm:$0xf]
                  %502 = vst [vmem:[%s354 + $0x124] sm:$0xf] %v501
                  %v503 = vld [vmem:[%s353 + $0x1f8] sm:$0xf]
                  %504 = vst [vmem:[%s354 + $0x128] sm:$0xf] %v503
                  %v505 = vld [vmem:[%s353 + $0x1fc] sm:$0xf]
                  %506 = vst [vmem:[%s354 + $0x12c] sm:$0xf] %v505
                  %v507 = vld [vmem:[%s353 + $0x200] sm:$0xf]
                  %508 = vst [vmem:[%s354 + $0x130] sm:$0xf] %v507
                  %v509 = vld [vmem:[%s353 + $0x204] sm:$0xf]
                  %510 = vst [vmem:[%s354 + $0x134] sm:$0xf] %v509
                  %v511 = vld [vmem:[%s353 + $0x270] sm:$0xf]
                  %512 = vst [vmem:[%s354 + $0x138] sm:$0xf] %v511
                  %v513 = vld [vmem:[%s353 + $0x274] sm:$0xf]
                  %514 = vst [vmem:[%s354 + $0x13c] sm:$0xf] %v513
                  %v515 = vld [vmem:[%s353 + $0x278] sm:$0xf]
                  %516 = vst [vmem:[%s354 + $0x140] sm:$0xf] %v515
                  %v517 = vld [vmem:[%s353 + $0x27c] sm:$0xf]
                  %518 = vst [vmem:[%s354 + $0x144] sm:$0xf] %v517
                  %v519 = vld [vmem:[%s353 + $0x280] sm:$0xf]
                  %520 = vst [vmem:[%s354 + $0x148] sm:$0xf] %v519
                  %v521 = vld [vmem:[%s353 + $0x284] sm:$0xf]
                  %522 = vst [vmem:[%s354 + $0x14c] sm:$0xf] %v521
                  %v523 = vld [vmem:[%s353 + $0x288] sm:$0xf]
                  %524 = vst [vmem:[%s354 + $0x150] sm:$0xf] %v523
                  %v525 = vld [vmem:[%s353 + $0x28c] sm:$0xf]
                  %526 = vst [vmem:[%s354 + $0x154] sm:$0xf] %v525
                  %v527 = vld [vmem:[%s353 + $0x290] sm:$0xf]
                  %528 = vst [vmem:[%s354 + $0x158] sm:$0xf] %v527
                  %v529 = vld [vmem:[%s353 + $0x294] sm:$0xf]
                  %530 = vst [vmem:[%s354 + $0x15c] sm:$0xf] %v529
                  %v531 = vld [vmem:[%s353 + $0x298] sm:$0xf]
                  %532 = vst [vmem:[%s354 + $0x160] sm:$0xf] %v531
                  %v533 = vld [vmem:[%s353 + $0x29c] sm:$0xf]
                  %534 = vst [vmem:[%s354 + $0x164] sm:$0xf] %v533
                  %v535 = vld [vmem:[%s353 + $0x2a0] sm:$0xf]
                  %536 = vst [vmem:[%s354 + $0x168] sm:$0xf] %v535
                  %v537 = vld [vmem:[%s353 + $0x2a4] sm:$0xf]
                  %538 = vst [vmem:[%s354 + $0x16c] sm:$0xf] %v537
                  %v539 = vld [vmem:[%s353 + $0x2a8] sm:$0xf]
                  %540 = vst [vmem:[%s354 + $0x170] sm:$0xf] %v539
                  %v541 = vld [vmem:[%s353 + $0x2ac] sm:$0xf]
                  %542 = vst [vmem:[%s354 + $0x174] sm:$0xf] %v541
                  %v543 = vld [vmem:[%s353 + $0x2b0] sm:$0xf]
                  %544 = vst [vmem:[%s354 + $0x178] sm:$0xf] %v543
                  %v545 = vld [vmem:[%s353 + $0x2b4] sm:$0xf]
                  %546 = vst [vmem:[%s354 + $0x17c] sm:$0xf] %v545
                  %v547 = vld [vmem:[%s353 + $0x2b8] sm:$0xf]
                  %548 = vst [vmem:[%s354 + $0x180] sm:$0xf] %v547
                  %v549 = vld [vmem:[%s353 + $0x2bc] sm:$0xf]
                  %550 = vst [vmem:[%s354 + $0x184] sm:$0xf] %v549
                  %v551 = vld [vmem:[%s353 + $0x2c0] sm:$0xf]
                  %552 = vst [vmem:[%s354 + $0x188] sm:$0xf] %v551
                  %v553 = vld [vmem:[%s353 + $0x2c4] sm:$0xf]
                  %554 = vst [vmem:[%s354 + $0x18c] sm:$0xf] %v553
                  %v555 = vld [vmem:[%s353 + $0x2c8] sm:$0xf]
                  %556 = vst [vmem:[%s354 + $0x190] sm:$0xf] %v555
                  %v557 = vld [vmem:[%s353 + $0x2cc] sm:$0xf]
                  %558 = vst [vmem:[%s354 + $0x194] sm:$0xf] %v557
                  %v559 = vld [vmem:[%s353 + $0x2d0] sm:$0xf]
                  %560 = vst [vmem:[%s354 + $0x198] sm:$0xf] %v559
                  %v561 = vld [vmem:[%s353 + $0x2d4] sm:$0xf]
                  %562 = vst [vmem:[%s354 + $0x19c] sm:$0xf] %v561
                $region59: #{lenet5_bn_forward.5} parent=46 // loop_footer
                  %s352 = sadd.s32 1, %s348
                $region60: #{lenet5_bn_forward.5} parent=46 // loop_footer_branch
                  %347 = sbr.rel target = $region56
                $region61: #{lenet5_bn_forward.5} parent=46 // loop_exit
                  _
              $region47: #{lenet5_bn_forward.5} parent=31 // pred_fallthru
                _
            $region32: #{lenet5_bn_forward.5} parent=27 // pred_fallthru
              _
            // Predicated region
            $region33: #{lenet5_bn_forward.5} parent=27 // pred_check
              _
            $region34: #{lenet5_bn_forward.5} parent=27 // pred_check_branch
              %118 = sbr.rel (0) target = $region36
            $region35: #{lenet5_bn_forward.5} parent=27 // pred_region
              loop: start=0, step=1, limit=1
              $region37: #{lenet5_bn_forward.5} parent=35 // loop_pre_header
                _
              $region38: #{lenet5_bn_forward.5} parent=35 // loop_header
                %s121 = sphi 0, %s125
                %p122 = scmp.ge.s32.totalorder %s121, 1
                %s126 = sphi %s112, %s112
                %s127 = sphi %s109, %s109
              $region39: #{lenet5_bn_forward.5} parent=35 // loop_header_branch
                %124 = sbr.rel (%p122) target = $region43
              $region40: #{lenet5_bn_forward.5} parent=35 // loop_body
                %v128 = vld [vmem:[%s126] sm:$0xf]
                %129 = vst [vmem:[%s127] sm:$0xf] %v128
                %v130 = vld [vmem:[%s126 + $0x4] sm:$0xf]
                %131 = vst [vmem:[%s127 + $0x4] sm:$0xf] %v130
                %v132 = vld [vmem:[%s126 + $0x8] sm:$0xf]
                %133 = vst [vmem:[%s127 + $0x8] sm:$0xf] %v132
                %v134 = vld [vmem:[%s126 + $0xc] sm:$0xf]
                %135 = vst [vmem:[%s127 + $0xc] sm:$0xf] %v134
                %v136 = vld [vmem:[%s126 + $0x10] sm:$0xf]
                %137 = vst [vmem:[%s127 + $0x10] sm:$0xf] %v136
                %v138 = vld [vmem:[%s126 + $0x14] sm:$0xf]
                %139 = vst [vmem:[%s127 + $0x14] sm:$0xf] %v138
                %v140 = vld [vmem:[%s126 + $0x18] sm:$0xf]
                %141 = vst [vmem:[%s127 + $0x18] sm:$0xf] %v140
                %v142 = vld [vmem:[%s126 + $0x1c] sm:$0xf]
                %143 = vst [vmem:[%s127 + $0x1c] sm:$0xf] %v142
                %v144 = vld [vmem:[%s126 + $0x20] sm:$0xf]
                %145 = vst [vmem:[%s127 + $0x20] sm:$0xf] %v144
                %v146 = vld [vmem:[%s126 + $0x24] sm:$0xf]
                %147 = vst [vmem:[%s127 + $0x24] sm:$0xf] %v146
                %v148 = vld [vmem:[%s126 + $0x28] sm:$0xf]
                %149 = vst [vmem:[%s127 + $0x28] sm:$0xf] %v148
                %v150 = vld [vmem:[%s126 + $0x2c] sm:$0xf]
                %151 = vst [vmem:[%s127 + $0x2c] sm:$0xf] %v150
                %v152 = vld [vmem:[%s126 + $0x30] sm:$0xf]
                %153 = vst [vmem:[%s127 + $0x30] sm:$0xf] %v152
                %v154 = vld [vmem:[%s126 + $0x34] sm:$0xf]
                %155 = vst [vmem:[%s127 + $0x34] sm:$0xf] %v154
                %v156 = vld [vmem:[%s126 + $0x38] sm:$0xf]
                %157 = vst [vmem:[%s127 + $0x38] sm:$0xf] %v156
                %v158 = vld [vmem:[%s126 + $0x3c] sm:$0xf]
                %159 = vst [vmem:[%s127 + $0x3c] sm:$0xf] %v158
                %v160 = vld [vmem:[%s126 + $0x40] sm:$0xf]
                %161 = vst [vmem:[%s127 + $0x40] sm:$0xf] %v160
                %v162 = vld [vmem:[%s126 + $0x44] sm:$0xf]
                %163 = vst [vmem:[%s127 + $0x44] sm:$0xf] %v162
                %v164 = vld [vmem:[%s126 + $0x48] sm:$0xf]
                %165 = vst [vmem:[%s127 + $0x48] sm:$0xf] %v164
                %v166 = vld [vmem:[%s126 + $0x4c] sm:$0xf]
                %167 = vst [vmem:[%s127 + $0x4c] sm:$0xf] %v166
                %v168 = vld [vmem:[%s126 + $0x50] sm:$0xf]
                %169 = vst [vmem:[%s127 + $0x50] sm:$0xf] %v168
                %v170 = vld [vmem:[%s126 + $0x54] sm:$0xf]
                %171 = vst [vmem:[%s127 + $0x54] sm:$0xf] %v170
                %v172 = vld [vmem:[%s126 + $0x58] sm:$0xf]
                %173 = vst [vmem:[%s127 + $0x58] sm:$0xf] %v172
                %v174 = vld [vmem:[%s126 + $0x5c] sm:$0xf]
                %175 = vst [vmem:[%s127 + $0x5c] sm:$0xf] %v174
                %v176 = vld [vmem:[%s126 + $0x60] sm:$0xf]
                %177 = vst [vmem:[%s127 + $0x60] sm:$0xf] %v176
                %v178 = vld [vmem:[%s126 + $0x64] sm:$0xf]
                %179 = vst [vmem:[%s127 + $0x64] sm:$0xf] %v178
                %v180 = vld [vmem:[%s126 + $0xd0] sm:$0xf]
                %181 = vst [vmem:[%s127 + $0x68] sm:$0xf] %v180
                %v182 = vld [vmem:[%s126 + $0xd4] sm:$0xf]
                %183 = vst [vmem:[%s127 + $0x6c] sm:$0xf] %v182
                %v184 = vld [vmem:[%s126 + $0xd8] sm:$0xf]
                %185 = vst [vmem:[%s127 + $0x70] sm:$0xf] %v184
                %v186 = vld [vmem:[%s126 + $0xdc] sm:$0xf]
                %187 = vst [vmem:[%s127 + $0x74] sm:$0xf] %v186
                %v188 = vld [vmem:[%s126 + $0xe0] sm:$0xf]
                %189 = vst [vmem:[%s127 + $0x78] sm:$0xf] %v188
                %v190 = vld [vmem:[%s126 + $0xe4] sm:$0xf]
                %191 = vst [vmem:[%s127 + $0x7c] sm:$0xf] %v190
                %v192 = vld [vmem:[%s126 + $0xe8] sm:$0xf]
                %193 = vst [vmem:[%s127 + $0x80] sm:$0xf] %v192
                %v194 = vld [vmem:[%s126 + $0xec] sm:$0xf]
                %195 = vst [vmem:[%s127 + $0x84] sm:$0xf] %v194
                %v196 = vld [vmem:[%s126 + $0xf0] sm:$0xf]
                %197 = vst [vmem:[%s127 + $0x88] sm:$0xf] %v196
                %v198 = vld [vmem:[%s126 + $0xf4] sm:$0xf]
                %199 = vst [vmem:[%s127 + $0x8c] sm:$0xf] %v198
                %v200 = vld [vmem:[%s126 + $0xf8] sm:$0xf]
                %201 = vst [vmem:[%s127 + $0x90] sm:$0xf] %v200
                %v202 = vld [vmem:[%s126 + $0xfc] sm:$0xf]
                %203 = vst [vmem:[%s127 + $0x94] sm:$0xf] %v202
                %v204 = vld [vmem:[%s126 + $0x100] sm:$0xf]
                %205 = vst [vmem:[%s127 + $0x98] sm:$0xf] %v204
                %v206 = vld [vmem:[%s126 + $0x104] sm:$0xf]
                %207 = vst [vmem:[%s127 + $0x9c] sm:$0xf] %v206
                %v208 = vld [vmem:[%s126 + $0x108] sm:$0xf]
                %209 = vst [vmem:[%s127 + $0xa0] sm:$0xf] %v208
                %v210 = vld [vmem:[%s126 + $0x10c] sm:$0xf]
                %211 = vst [vmem:[%s127 + $0xa4] sm:$0xf] %v210
                %v212 = vld [vmem:[%s126 + $0x110] sm:$0xf]
                %213 = vst [vmem:[%s127 + $0xa8] sm:$0xf] %v212
                %v214 = vld [vmem:[%s126 + $0x114] sm:$0xf]
                %215 = vst [vmem:[%s127 + $0xac] sm:$0xf] %v214
                %v216 = vld [vmem:[%s126 + $0x118] sm:$0xf]
                %217 = vst [vmem:[%s127 + $0xb0] sm:$0xf] %v216
                %v218 = vld [vmem:[%s126 + $0x11c] sm:$0xf]
                %219 = vst [vmem:[%s127 + $0xb4] sm:$0xf] %v218
                %v220 = vld [vmem:[%s126 + $0x120] sm:$0xf]
                %221 = vst [vmem:[%s127 + $0xb8] sm:$0xf] %v220
                %v222 = vld [vmem:[%s126 + $0x124] sm:$0xf]
                %223 = vst [vmem:[%s127 + $0xbc] sm:$0xf] %v222
                %v224 = vld [vmem:[%s126 + $0x128] sm:$0xf]
                %225 = vst [vmem:[%s127 + $0xc0] sm:$0xf] %v224
                %v226 = vld [vmem:[%s126 + $0x12c] sm:$0xf]
                %227 = vst [vmem:[%s127 + $0xc4] sm:$0xf] %v226
                %v228 = vld [vmem:[%s126 + $0x130] sm:$0xf]
                %229 = vst [vmem:[%s127 + $0xc8] sm:$0xf] %v228
                %v230 = vld [vmem:[%s126 + $0x134] sm:$0xf]
                %231 = vst [vmem:[%s127 + $0xcc] sm:$0xf] %v230
                %v232 = vld [vmem:[%s126 + $0x1a0] sm:$0xf]
                %233 = vst [vmem:[%s127 + $0xd0] sm:$0xf] %v232
                %v234 = vld [vmem:[%s126 + $0x1a4] sm:$0xf]
                %235 = vst [vmem:[%s127 + $0xd4] sm:$0xf] %v234
                %v236 = vld [vmem:[%s126 + $0x1a8] sm:$0xf]
                %237 = vst [vmem:[%s127 + $0xd8] sm:$0xf] %v236
                %v238 = vld [vmem:[%s126 + $0x1ac] sm:$0xf]
                %239 = vst [vmem:[%s127 + $0xdc] sm:$0xf] %v238
                %v240 = vld [vmem:[%s126 + $0x1b0] sm:$0xf]
                %241 = vst [vmem:[%s127 + $0xe0] sm:$0xf] %v240
                %v242 = vld [vmem:[%s126 + $0x1b4] sm:$0xf]
                %243 = vst [vmem:[%s127 + $0xe4] sm:$0xf] %v242
                %v244 = vld [vmem:[%s126 + $0x1b8] sm:$0xf]
                %245 = vst [vmem:[%s127 + $0xe8] sm:$0xf] %v244
                %v246 = vld [vmem:[%s126 + $0x1bc] sm:$0xf]
                %247 = vst [vmem:[%s127 + $0xec] sm:$0xf] %v246
                %v248 = vld [vmem:[%s126 + $0x1c0] sm:$0xf]
                %249 = vst [vmem:[%s127 + $0xf0] sm:$0xf] %v248
                %v250 = vld [vmem:[%s126 + $0x1c4] sm:$0xf]
                %251 = vst [vmem:[%s127 + $0xf4] sm:$0xf] %v250
                %v252 = vld [vmem:[%s126 + $0x1c8] sm:$0xf]
                %253 = vst [vmem:[%s127 + $0xf8] sm:$0xf] %v252
                %v254 = vld [vmem:[%s126 + $0x1cc] sm:$0xf]
                %255 = vst [vmem:[%s127 + $0xfc] sm:$0xf] %v254
                %v256 = vld [vmem:[%s126 + $0x1d0] sm:$0xf]
                %257 = vst [vmem:[%s127 + $0x100] sm:$0xf] %v256
                %v258 = vld [vmem:[%s126 + $0x1d4] sm:$0xf]
                %259 = vst [vmem:[%s127 + $0x104] sm:$0xf] %v258
                %v260 = vld [vmem:[%s126 + $0x1d8] sm:$0xf]
                %261 = vst [vmem:[%s127 + $0x108] sm:$0xf] %v260
                %v262 = vld [vmem:[%s126 + $0x1dc] sm:$0xf]
                %263 = vst [vmem:[%s127 + $0x10c] sm:$0xf] %v262
                %v264 = vld [vmem:[%s126 + $0x1e0] sm:$0xf]
                %265 = vst [vmem:[%s127 + $0x110] sm:$0xf] %v264
                %v266 = vld [vmem:[%s126 + $0x1e4] sm:$0xf]
                %267 = vst [vmem:[%s127 + $0x114] sm:$0xf] %v266
                %v268 = vld [vmem:[%s126 + $0x1e8] sm:$0xf]
                %269 = vst [vmem:[%s127 + $0x118] sm:$0xf] %v268
                %v270 = vld [vmem:[%s126 + $0x1ec] sm:$0xf]
                %271 = vst [vmem:[%s127 + $0x11c] sm:$0xf] %v270
                %v272 = vld [vmem:[%s126 + $0x1f0] sm:$0xf]
                %273 = vst [vmem:[%s127 + $0x120] sm:$0xf] %v272
                %v274 = vld [vmem:[%s126 + $0x1f4] sm:$0xf]
                %275 = vst [vmem:[%s127 + $0x124] sm:$0xf] %v274
                %v276 = vld [vmem:[%s126 + $0x1f8] sm:$0xf]
                %277 = vst [vmem:[%s127 + $0x128] sm:$0xf] %v276
                %v278 = vld [vmem:[%s126 + $0x1fc] sm:$0xf]
                %279 = vst [vmem:[%s127 + $0x12c] sm:$0xf] %v278
                %v280 = vld [vmem:[%s126 + $0x200] sm:$0xf]
                %281 = vst [vmem:[%s127 + $0x130] sm:$0xf] %v280
                %v282 = vld [vmem:[%s126 + $0x204] sm:$0xf]
                %283 = vst [vmem:[%s127 + $0x134] sm:$0xf] %v282
                %v284 = vld [vmem:[%s126 + $0x270] sm:$0xf]
                %285 = vst [vmem:[%s127 + $0x138] sm:$0xf] %v284
                %v286 = vld [vmem:[%s126 + $0x274] sm:$0xf]
                %287 = vst [vmem:[%s127 + $0x13c] sm:$0xf] %v286
                %v288 = vld [vmem:[%s126 + $0x278] sm:$0xf]
                %289 = vst [vmem:[%s127 + $0x140] sm:$0xf] %v288
                %v290 = vld [vmem:[%s126 + $0x27c] sm:$0xf]
                %291 = vst [vmem:[%s127 + $0x144] sm:$0xf] %v290
                %v292 = vld [vmem:[%s126 + $0x280] sm:$0xf]
                %293 = vst [vmem:[%s127 + $0x148] sm:$0xf] %v292
                %v294 = vld [vmem:[%s126 + $0x284] sm:$0xf]
                %295 = vst [vmem:[%s127 + $0x14c] sm:$0xf] %v294
                %v296 = vld [vmem:[%s126 + $0x288] sm:$0xf]
                %297 = vst [vmem:[%s127 + $0x150] sm:$0xf] %v296
                %v298 = vld [vmem:[%s126 + $0x28c] sm:$0xf]
                %299 = vst [vmem:[%s127 + $0x154] sm:$0xf] %v298
                %v300 = vld [vmem:[%s126 + $0x290] sm:$0xf]
                %301 = vst [vmem:[%s127 + $0x158] sm:$0xf] %v300
                %v302 = vld [vmem:[%s126 + $0x294] sm:$0xf]
                %303 = vst [vmem:[%s127 + $0x15c] sm:$0xf] %v302
                %v304 = vld [vmem:[%s126 + $0x298] sm:$0xf]
                %305 = vst [vmem:[%s127 + $0x160] sm:$0xf] %v304
                %v306 = vld [vmem:[%s126 + $0x29c] sm:$0xf]
                %307 = vst [vmem:[%s127 + $0x164] sm:$0xf] %v306
                %v308 = vld [vmem:[%s126 + $0x2a0] sm:$0xf]
                %309 = vst [vmem:[%s127 + $0x168] sm:$0xf] %v308
                %v310 = vld [vmem:[%s126 + $0x2a4] sm:$0xf]
                %311 = vst [vmem:[%s127 + $0x16c] sm:$0xf] %v310
                %v312 = vld [vmem:[%s126 + $0x2a8] sm:$0xf]
                %313 = vst [vmem:[%s127 + $0x170] sm:$0xf] %v312
                %v314 = vld [vmem:[%s126 + $0x2ac] sm:$0xf]
                %315 = vst [vmem:[%s127 + $0x174] sm:$0xf] %v314
                %v316 = vld [vmem:[%s126 + $0x2b0] sm:$0xf]
                %317 = vst [vmem:[%s127 + $0x178] sm:$0xf] %v316
                %v318 = vld [vmem:[%s126 + $0x2b4] sm:$0xf]
                %319 = vst [vmem:[%s127 + $0x17c] sm:$0xf] %v318
                %v320 = vld [vmem:[%s126 + $0x2b8] sm:$0xf]
                %321 = vst [vmem:[%s127 + $0x180] sm:$0xf] %v320
                %v322 = vld [vmem:[%s126 + $0x2bc] sm:$0xf]
                %323 = vst [vmem:[%s127 + $0x184] sm:$0xf] %v322
                %v324 = vld [vmem:[%s126 + $0x2c0] sm:$0xf]
                %325 = vst [vmem:[%s127 + $0x188] sm:$0xf] %v324
                %v326 = vld [vmem:[%s126 + $0x2c4] sm:$0xf]
                %327 = vst [vmem:[%s127 + $0x18c] sm:$0xf] %v326
                %v328 = vld [vmem:[%s126 + $0x2c8] sm:$0xf]
                %329 = vst [vmem:[%s127 + $0x190] sm:$0xf] %v328
                %v330 = vld [vmem:[%s126 + $0x2cc] sm:$0xf]
                %331 = vst [vmem:[%s127 + $0x194] sm:$0xf] %v330
                %v332 = vld [vmem:[%s126 + $0x2d0] sm:$0xf]
                %333 = vst [vmem:[%s127 + $0x198] sm:$0xf] %v332
                %v334 = vld [vmem:[%s126 + $0x2d4] sm:$0xf]
                %335 = vst [vmem:[%s127 + $0x19c] sm:$0xf] %v334
              $region41: #{lenet5_bn_forward.5} parent=35 // loop_footer
                %s125 = sadd.s32 1, %s121
              $region42: #{lenet5_bn_forward.5} parent=35 // loop_footer_branch
                %120 = sbr.rel target = $region38
              $region43: #{lenet5_bn_forward.5} parent=35 // loop_exit
                _
            $region36: #{lenet5_bn_forward.5} parent=27 // pred_fallthru
              _
          $region28: #{lenet5_bn_forward.5} parent=23 // pred_fallthru
            _
          %563 = vnop
        $region24: #{lenet5_bn_forward.5} parent=19 // pred_fallthru
          _
      $region20: #{lenet5_bn_forward.5} parent=5 // pred_fallthru
        _
      %p564 = scmp.le.s32.totalorder 1, %s8
      %p565 = scmp.lt.s32.totalorder %s8, 3
      %p566 = pnand %p564, %p565
      %p567 = pneg %p566
      // Predicated region
      $region62: #{lenet5_bn_forward.5} parent=5 // pred_check
        _
      $region63: #{lenet5_bn_forward.5} parent=5 // pred_check_branch
        %569 = sbr.rel (%p566) target = $region65
      $region64: #{lenet5_bn_forward.5} parent=5 // pred_region
        %s570 = ssub.s32 %s8, 1
        %s571 = sand.u32 %s21, 1
        %s572 = sand.u32 %s21, 1
        %s573 = smul.addr %s572, 416
        %s574 = scalar_lea.vmem [#allocation2], %s573
        // Predicated region
        $region66: #{lenet5_bn_forward.5} parent=64 // pred_check
          %p575 = pneg %p34
        $region67: #{lenet5_bn_forward.5} parent=64 // pred_check_branch
          %577 = sbr.rel (%p575) target = $region69
        $region68: #{lenet5_bn_forward.5} parent=64 // pred_region
          _
        $region69: #{lenet5_bn_forward.5} parent=64 // pred_fallthru
          _
        %s578 = sand.u32 %s21, 1
        %s579 = sand.u32 %s21, 1
        %s580 = smul.addr %s579, 416
        %s581 = scalar_lea.vmem [#allocation2], %s580
        %p582 = pneg %p34
        %p583 = pneg %p31
        %p584 = pneg %p55
        %p585 = pneg %p52
        %p586 = pneg %p81
        %p587 = pneg %p78
        %p588 = scmp.lt.s32.totalorder %s13, 1
        %s589 = scalar_select %p588, %s13, 1
        %s590 = smul.addr %s589, 8
        %s591 = scalar_lea.vmem %s2, %s590
        %s592 = smul.u32 26, %s13
        %p593 = scmp.lt.s32.totalorder %s13, 1
        %s594 = scalar_select %p593, %s13, 1
        %s595 = smul.addr %s594, 8
        %s596 = scalar_lea.vmem %s2, %s595
        %v598 = vld [vmem:[%s574] sm:$0xf]
        %v599 = vld [vmem:[%s574 + $0x4] sm:$0xf]
        %v600 = vld [vmem:[%s574 + $0x8] sm:$0xf]
        %v601 = vld [vmem:[%s574 + $0xc] sm:$0xf]
        %v602 = vld [vmem:[%s574 + $0x10] sm:$0xf]
        %v603 = vld [vmem:[%s574 + $0x14] sm:$0xf]
        %v604 = vld [vmem:[%s574 + $0x18] sm:$0xf]
        %v605 = vld [vmem:[%s574 + $0x1c] sm:$0xf]
        %v606 = vld [vmem:[%s574 + $0x20] sm:$0xf]
        %v607 = vld [vmem:[%s574 + $0x24] sm:$0xf]
        %v608 = vld [vmem:[%s574 + $0x28] sm:$0xf]
        %v609 = vld [vmem:[%s574 + $0x2c] sm:$0xf]
        %v610 = vld [vmem:[%s574 + $0x30] sm:$0xf]
        %v611 = vld [vmem:[%s574 + $0x34] sm:$0xf]
        %v612 = vld [vmem:[%s574 + $0x38] sm:$0xf]
        %v613 = vld [vmem:[%s574 + $0x3c] sm:$0xf]
        %v614 = vld [vmem:[%s574 + $0x40] sm:$0xf]
        %v615 = vld [vmem:[%s574 + $0x44] sm:$0xf]
        %v616 = vld [vmem:[%s574 + $0x48] sm:$0xf]
        %v617 = vld [vmem:[%s574 + $0x4c] sm:$0xf]
        %v618 = vld [vmem:[%s574 + $0x50] sm:$0xf]
        %v619 = vld [vmem:[%s574 + $0x54] sm:$0xf]
        %v620 = vld [vmem:[%s574 + $0x58] sm:$0xf]
        %v621 = vld [vmem:[%s574 + $0x5c] sm:$0xf]
        %v622 = vld [vmem:[%s574 + $0x60] sm:$0xf]
        %v623 = vld [vmem:[%s574 + $0x64] sm:$0xf]
        %v624 = vld [vmem:[%s574 + $0x68] sm:$0xf]
        %v625 = vld [vmem:[%s574 + $0x6c] sm:$0xf]
        %v626 = vld [vmem:[%s574 + $0x70] sm:$0xf]
        %v627 = vld [vmem:[%s574 + $0x74] sm:$0xf]
        %v628 = vld [vmem:[%s574 + $0x78] sm:$0xf]
        %v629 = vld [vmem:[%s574 + $0x7c] sm:$0xf]
        %v630 = vld [vmem:[%s574 + $0x80] sm:$0xf]
        %v631 = vld [vmem:[%s574 + $0x84] sm:$0xf]
        %v632 = vld [vmem:[%s574 + $0x88] sm:$0xf]
        %v633 = vld [vmem:[%s574 + $0x8c] sm:$0xf]
        %v634 = vld [vmem:[%s574 + $0x90] sm:$0xf]
        %v635 = vld [vmem:[%s574 + $0x94] sm:$0xf]
        %v636 = vld [vmem:[%s574 + $0x98] sm:$0xf]
        %v637 = vld [vmem:[%s574 + $0x9c] sm:$0xf]
        %v638 = vld [vmem:[%s574 + $0xa0] sm:$0xf]
        %v639 = vld [vmem:[%s574 + $0xa4] sm:$0xf]
        %v640 = vld [vmem:[%s574 + $0xa8] sm:$0xf]
        %v641 = vld [vmem:[%s574 + $0xac] sm:$0xf]
        %v642 = vld [vmem:[%s574 + $0xb0] sm:$0xf]
        %v643 = vld [vmem:[%s574 + $0xb4] sm:$0xf]
        %v644 = vld [vmem:[%s574 + $0xb8] sm:$0xf]
        %v645 = vld [vmem:[%s574 + $0xbc] sm:$0xf]
        %v646 = vld [vmem:[%s574 + $0xc0] sm:$0xf]
        %v647 = vld [vmem:[%s574 + $0xc4] sm:$0xf]
        %v648 = vld [vmem:[%s574 + $0xc8] sm:$0xf]
        %v649 = vld [vmem:[%s574 + $0xcc] sm:$0xf]
        %v650 = vld [vmem:[%s574 + $0xd0] sm:$0xf]
        %v651 = vld [vmem:[%s574 + $0xd4] sm:$0xf]
        %v652 = vld [vmem:[%s574 + $0xd8] sm:$0xf]
        %v653 = vld [vmem:[%s574 + $0xdc] sm:$0xf]
        %v654 = vld [vmem:[%s574 + $0xe0] sm:$0xf]
        %v655 = vld [vmem:[%s574 + $0xe4] sm:$0xf]
        %v656 = vld [vmem:[%s574 + $0xe8] sm:$0xf]
        %v657 = vld [vmem:[%s574 + $0xec] sm:$0xf]
        %v658 = vld [vmem:[%s574 + $0xf0] sm:$0xf]
        %v659 = vld [vmem:[%s574 + $0xf4] sm:$0xf]
        %v660 = vld [vmem:[%s574 + $0xf8] sm:$0xf]
        %v661 = vld [vmem:[%s574 + $0xfc] sm:$0xf]
        %v662 = vld [vmem:[%s574 + $0x100] sm:$0xf]
        %v663 = vld [vmem:[%s574 + $0x104] sm:$0xf]
        %v664 = vld [vmem:[%s574 + $0x108] sm:$0xf]
        %v665 = vld [vmem:[%s574 + $0x10c] sm:$0xf]
        %v666 = vld [vmem:[%s574 + $0x110] sm:$0xf]
        %v667 = vld [vmem:[%s574 + $0x114] sm:$0xf]
        %v668 = vld [vmem:[%s574 + $0x118] sm:$0xf]
        %v669 = vld [vmem:[%s574 + $0x11c] sm:$0xf]
        %v670 = vld [vmem:[%s574 + $0x120] sm:$0xf]
        %v671 = vld [vmem:[%s574 + $0x124] sm:$0xf]
        %v672 = vld [vmem:[%s574 + $0x128] sm:$0xf]
        %v673 = vld [vmem:[%s574 + $0x12c] sm:$0xf]
        %v674 = vld [vmem:[%s574 + $0x130] sm:$0xf]
        %v675 = vld [vmem:[%s574 + $0x134] sm:$0xf]
        %v676 = vld [vmem:[%s574 + $0x138] sm:$0xf]
        %v677 = vld [vmem:[%s574 + $0x13c] sm:$0xf]
        %v678 = vld [vmem:[%s574 + $0x140] sm:$0xf]
        %v679 = vld [vmem:[%s574 + $0x144] sm:$0xf]
        %v680 = vld [vmem:[%s574 + $0x148] sm:$0xf]
        %v681 = vld [vmem:[%s574 + $0x14c] sm:$0xf]
        %v682 = vld [vmem:[%s574 + $0x150] sm:$0xf]
        %v683 = vld [vmem:[%s574 + $0x154] sm:$0xf]
        %v684 = vld [vmem:[%s574 + $0x158] sm:$0xf]
        %v685 = vld [vmem:[%s574 + $0x15c] sm:$0xf]
        %v686 = vld [vmem:[%s574 + $0x160] sm:$0xf]
        %v687 = vld [vmem:[%s574 + $0x164] sm:$0xf]
        %v688 = vld [vmem:[%s574 + $0x168] sm:$0xf]
        %v689 = vld [vmem:[%s574 + $0x16c] sm:$0xf]
        %v690 = vld [vmem:[%s574 + $0x170] sm:$0xf]
        %v691 = vld [vmem:[%s574 + $0x174] sm:$0xf]
        %v692 = vld [vmem:[%s574 + $0x178] sm:$0xf]
        %v693 = vld [vmem:[%s574 + $0x17c] sm:$0xf]
        %v694 = vld [vmem:[%s574 + $0x180] sm:$0xf]
        %v695 = vld [vmem:[%s574 + $0x184] sm:$0xf]
        %v696 = vld [vmem:[%s574 + $0x188] sm:$0xf]
        %v697 = vld [vmem:[%s574 + $0x18c] sm:$0xf]
        %v698 = vld [vmem:[%s574 + $0x190] sm:$0xf]
        %v699 = vld [vmem:[%s574 + $0x194] sm:$0xf]
        %v700 = vld [vmem:[%s574 + $0x198] sm:$0xf]
        %v701 = vld [vmem:[%s574 + $0x19c] sm:$0xf]
        %v702 = vld [vmem:[%s1] sm:$0xf]
        %v703 = vld [vmem:[%s1 + $0x4] sm:$0xf]
        %v704 = vld [vmem:[%s1 + $0x8] sm:$0xf]
        %v705 = vld [vmem:[%s1 + $0xc] sm:$0x1]
        %v810 = vunpack.c.l.b16 %v598
        %v811 = vunpack.c.l.b16 %v599
        %v812 = vunpack.c.l.b16 %v600
        %v813 = vunpack.c.l.b16 %v601
        %v814 = vunpack.c.l.b16 %v602
        %v815 = vunpack.c.l.b16 %v603
        %v816 = vunpack.c.l.b16 %v604
        %v817 = vunpack.c.l.b16 %v605
        %v818 = vunpack.c.l.b16 %v606
        %v819 = vunpack.c.l.b16 %v607
        %v820 = vunpack.c.l.b16 %v608
        %v821 = vunpack.c.l.b16 %v609
        %v822 = vunpack.c.l.b16 %v610
        %v823 = vunpack.c.l.b16 %v611
        %v824 = vunpack.c.l.b16 %v612
        %v825 = vunpack.c.l.b16 %v613
        %v826 = vunpack.c.l.b16 %v614
        %v827 = vunpack.c.l.b16 %v615
        %v828 = vunpack.c.l.b16 %v616
        %v829 = vunpack.c.l.b16 %v617
        %v830 = vunpack.c.l.b16 %v618
        %v831 = vunpack.c.l.b16 %v619
        %v832 = vunpack.c.l.b16 %v620
        %v833 = vunpack.c.l.b16 %v621
        %v834 = vunpack.c.l.b16 %v622
        %v835 = vunpack.c.l.b16 %v623
        %v836 = vunpack.c.l.b16 %v624
        %v837 = vunpack.c.l.b16 %v625
        %v838 = vunpack.c.l.b16 %v626
        %v839 = vunpack.c.l.b16 %v627
        %v840 = vunpack.c.l.b16 %v628
        %v841 = vunpack.c.l.b16 %v629
        %v842 = vunpack.c.l.b16 %v630
        %v843 = vunpack.c.l.b16 %v631
        %v844 = vunpack.c.l.b16 %v632
        %v845 = vunpack.c.l.b16 %v633
        %v846 = vunpack.c.l.b16 %v634
        %v847 = vunpack.c.l.b16 %v635
        %v848 = vunpack.c.l.b16 %v636
        %v849 = vunpack.c.l.b16 %v637
        %v850 = vunpack.c.l.b16 %v638
        %v851 = vunpack.c.l.b16 %v639
        %v852 = vunpack.c.l.b16 %v640
        %v853 = vunpack.c.l.b16 %v641
        %v854 = vunpack.c.l.b16 %v642
        %v855 = vunpack.c.l.b16 %v643
        %v856 = vunpack.c.l.b16 %v644
        %v857 = vunpack.c.l.b16 %v645
        %v858 = vunpack.c.l.b16 %v646
        %v859 = vunpack.c.l.b16 %v647
        %v860 = vunpack.c.l.b16 %v648
        %v861 = vunpack.c.l.b16 %v649
        %v862 = vunpack.c.l.b16 %v650
        %v863 = vunpack.c.l.b16 %v651
        %v864 = vunpack.c.l.b16 %v652
        %v865 = vunpack.c.l.b16 %v653
        %v866 = vunpack.c.l.b16 %v654
        %v867 = vunpack.c.l.b16 %v655
        %v868 = vunpack.c.l.b16 %v656
        %v869 = vunpack.c.l.b16 %v657
        %v870 = vunpack.c.l.b16 %v658
        %v871 = vunpack.c.l.b16 %v659
        %v872 = vunpack.c.l.b16 %v660
        %v873 = vunpack.c.l.b16 %v661
        %v874 = vunpack.c.l.b16 %v662
        %v875 = vunpack.c.l.b16 %v663
        %v876 = vunpack.c.l.b16 %v664
        %v877 = vunpack.c.l.b16 %v665
        %v878 = vunpack.c.l.b16 %v666
        %v879 = vunpack.c.l.b16 %v667
        %v880 = vunpack.c.l.b16 %v668
        %v881 = vunpack.c.l.b16 %v669
        %v882 = vunpack.c.l.b16 %v670
        %v883 = vunpack.c.l.b16 %v671
        %v884 = vunpack.c.l.b16 %v672
        %v885 = vunpack.c.l.b16 %v673
        %v886 = vunpack.c.l.b16 %v674
        %v887 = vunpack.c.l.b16 %v675
        %v888 = vunpack.c.l.b16 %v676
        %v889 = vunpack.c.l.b16 %v677
        %v890 = vunpack.c.l.b16 %v678
        %v891 = vunpack.c.l.b16 %v679
        %v892 = vunpack.c.l.b16 %v680
        %v893 = vunpack.c.l.b16 %v681
        %v894 = vunpack.c.l.b16 %v682
        %v895 = vunpack.c.l.b16 %v683
        %v896 = vunpack.c.l.b16 %v684
        %v897 = vunpack.c.l.b16 %v685
        %v898 = vunpack.c.l.b16 %v686
        %v899 = vunpack.c.l.b16 %v687
        %v900 = vunpack.c.l.b16 %v688
        %v901 = vunpack.c.l.b16 %v689
        %v902 = vunpack.c.l.b16 %v690
        %v903 = vunpack.c.l.b16 %v691
        %v904 = vunpack.c.l.b16 %v692
        %v905 = vunpack.c.l.b16 %v693
        %v906 = vunpack.c.l.b16 %v694
        %v907 = vunpack.c.l.b16 %v695
        %v908 = vunpack.c.l.b16 %v696
        %v909 = vunpack.c.l.b16 %v697
        %v910 = vunpack.c.l.b16 %v698
        %v911 = vunpack.c.l.b16 %v699
        %v912 = vunpack.c.l.b16 %v700
        %v913 = vunpack.c.l.b16 %v701
        %v914 = vpack.c.b16 %v811, %v810
        %v915 = vpack.c.b16 %v813, %v812
        %v916 = vpack.c.b16 %v815, %v814
        %v917 = vpack.c.b16 %v817, %v816
        %v918 = vpack.c.b16 %v819, %v818
        %v919 = vpack.c.b16 %v821, %v820
        %v920 = vpack.c.b16 %v823, %v822
        %v921 = vpack.c.b16 %v825, %v824
        %v922 = vpack.c.b16 %v827, %v826
        %v923 = vpack.c.b16 %v829, %v828
        %v924 = vpack.c.b16 %v831, %v830
        %v925 = vpack.c.b16 %v833, %v832
        %v926 = vpack.c.b16 %v835, %v834
        %v927 = vpack.c.b16 %v837, %v836
        %v928 = vpack.c.b16 %v839, %v838
        %v929 = vpack.c.b16 %v841, %v840
        %v930 = vpack.c.b16 %v843, %v842
        %v931 = vpack.c.b16 %v845, %v844
        %v932 = vpack.c.b16 %v847, %v846
        %v933 = vpack.c.b16 %v849, %v848
        %v934 = vpack.c.b16 %v851, %v850
        %v935 = vpack.c.b16 %v853, %v852
        %v936 = vpack.c.b16 %v855, %v854
        %v937 = vpack.c.b16 %v857, %v856
        %v938 = vpack.c.b16 %v859, %v858
        %v939 = vpack.c.b16 %v861, %v860
        %v940 = vpack.c.b16 %v863, %v862
        %v941 = vpack.c.b16 %v865, %v864
        %v942 = vpack.c.b16 %v867, %v866
        %v943 = vpack.c.b16 %v869, %v868
        %v944 = vpack.c.b16 %v871, %v870
        %v945 = vpack.c.b16 %v873, %v872
        %v946 = vpack.c.b16 %v875, %v874
        %v947 = vpack.c.b16 %v877, %v876
        %v948 = vpack.c.b16 %v879, %v878
        %v949 = vpack.c.b16 %v881, %v880
        %v950 = vpack.c.b16 %v883, %v882
        %v951 = vpack.c.b16 %v885, %v884
        %v952 = vpack.c.b16 %v887, %v886
        %v953 = vpack.c.b16 %v889, %v888
        %v954 = vpack.c.b16 %v891, %v890
        %v955 = vpack.c.b16 %v893, %v892
        %v956 = vpack.c.b16 %v895, %v894
        %v957 = vpack.c.b16 %v897, %v896
        %v958 = vpack.c.b16 %v899, %v898
        %v959 = vpack.c.b16 %v901, %v900
        %v960 = vpack.c.b16 %v903, %v902
        %v961 = vpack.c.b16 %v905, %v904
        %v962 = vpack.c.b16 %v907, %v906
        %v963 = vpack.c.b16 %v909, %v908
        %v964 = vpack.c.b16 %v911, %v910
        %v965 = vpack.c.b16 %v913, %v912
        %v970 = vunpack.c.l.b16 %v702
        %v971 = vunpack.c.l.b16 %v703
        %v972 = vunpack.c.l.b16 %v704
        %v973 = vunpack.c.l.b16 %v705
        %v974 = vpack.c.b16 %v971, %v970
        %v975 = vpack.c.b16 %v973, %v972
        %vm977 = vcmask 203776
        %v979 = vsel %vm977, %v914, 0
        %v982 = vsel %vm977, %v915, 0
        %v985 = vsel %vm977, %v916, 0
        %v988 = vsel %vm977, %v917, 0
        %v991 = vsel %vm977, %v918, 0
        %v994 = vsel %vm977, %v919, 0
        %v997 = vsel %vm977, %v920, 0
        %v1000 = vsel %vm977, %v921, 0
        %v1003 = vsel %vm977, %v922, 0
        %v1006 = vsel %vm977, %v923, 0
        %v1009 = vsel %vm977, %v924, 0
        %v1012 = vsel %vm977, %v925, 0
        %v1015 = vsel %vm977, %v926, 0
        %v1018 = vsel %vm977, %v927, 0
        %v1021 = vsel %vm977, %v928, 0
        %v1024 = vsel %vm977, %v929, 0
        %v1027 = vsel %vm977, %v930, 0
        %v1030 = vsel %vm977, %v931, 0
        %v1033 = vsel %vm977, %v932, 0
        %v1036 = vsel %vm977, %v933, 0
        %v1039 = vsel %vm977, %v934, 0
        %v1042 = vsel %vm977, %v935, 0
        %v1045 = vsel %vm977, %v936, 0
        %v1048 = vsel %vm977, %v937, 0
        %v1051 = vsel %vm977, %v938, 0
        %v1054 = vsel %vm977, %v939, 0
        %v1057 = vsel %vm977, %v940, 0
        %v1060 = vsel %vm977, %v941, 0
        %v1063 = vsel %vm977, %v942, 0
        %v1066 = vsel %vm977, %v943, 0
        %v1069 = vsel %vm977, %v944, 0
        %v1072 = vsel %vm977, %v945, 0
        %v1075 = vsel %vm977, %v946, 0
        %v1078 = vsel %vm977, %v947, 0
        %v1081 = vsel %vm977, %v948, 0
        %v1084 = vsel %vm977, %v949, 0
        %v1087 = vsel %vm977, %v950, 0
        %v1090 = vsel %vm977, %v951, 0
        %v1093 = vsel %vm977, %v952, 0
        %v1096 = vsel %vm977, %v953, 0
        %v1099 = vsel %vm977, %v954, 0
        %v1102 = vsel %vm977, %v955, 0
        %v1105 = vsel %vm977, %v956, 0
        %v1108 = vsel %vm977, %v957, 0
        %v1111 = vsel %vm977, %v958, 0
        %v1114 = vsel %vm977, %v959, 0
        %v1117 = vsel %vm977, %v960, 0
        %v1120 = vsel %vm977, %v961, 0
        %v1123 = vsel %vm977, %v962, 0
        %v1126 = vsel %vm977, %v963, 0
        %v1129 = vsel %vm977, %v964, 0
        %v1132 = vsel %vm977, %v965, 0
        %vm1134 = vcmask 1043456
        %vm1135 = vcmask 1044480
        %v1136 = vsel %vm1134, 4294967295, 65535
        %v1137 = vsel %vm1135, %v1136, 0
        %v1139 = vand.u32 %v975, %v1137
        %1141 = vmatprep.subr.bf16.mxu0 0
        %1142 = vmatpush1.bf16.msra.mxu0 %v974
        %1143 = vmatprep.subr.bf16.mxu0 0
        %1144 = vmatpush1.bf16.msra.mxu0 %v1139
        %1145 = vmatprep.subr.bf16.mxu0 0
        %1146 = vmatpush1.bf16.msra.mxu0 0
        %1147 = vmatprep.subr.bf16.mxu0 0
        %1148 = vmatpush1.bf16.msra.mxu0 0
        %1149 = vmatprep.subr.bf16.mxu0 0
        %1150 = vmatpush1.bf16.msra.mxu0 0
        %1151 = vmatprep.subr.bf16.mxu0 0
        %1152 = vmatpush1.bf16.msra.mxu0 0
        %1153 = vmatprep.subr.bf16.mxu0 0
        %1154 = vmatpush1.bf16.msra.mxu0 0
        %1155 = vmatprep.subr.bf16.mxu0 0
        %1156 = vmatpush1.bf16.msra.mxu0 0
        %1157 = vmatprep.subr.bf16.mxu0 0
        %1158 = vmatpush1.bf16.msra.mxu0 0
        %1159 = vmatprep.subr.bf16.mxu0 0
        %1160 = vmatpush1.bf16.msra.mxu0 0
        %1161 = vmatprep.subr.bf16.mxu0 0
        %1162 = vmatpush1.bf16.msra.mxu0 0
        %1163 = vmatprep.subr.bf16.mxu0 0
        %1164 = vmatpush1.bf16.msra.mxu0 0
        %1165 = vmatprep.subr.bf16.mxu0 0
        %1166 = vmatpush1.bf16.msra.mxu0 0
        %1167 = vmatprep.subr.bf16.mxu0 0
        %1168 = vmatpush1.bf16.msra.mxu0 0
        %1169 = vmatprep.subr.bf16.mxu0 0
        %1170 = vmatpush1.bf16.msra.mxu0 0
        %1171 = vmatprep.subr.bf16.mxu0 0
        %1172 = vmatpush1.bf16.msra.mxu0 0
        %1173 = vmatprep.mubr.bf16.mxu0 0
        %1174 = vmatmul.mubr.bf16.gmra.mrb[0].mxu0 %v979
        %v1175 = vpop.f32.mrb[0].mxu0
        %v1176 = vadd.f32 0.0, %v1175
        %v1177 = vpop.f32.mrb[0].mxu0
        %v1178 = vpop.f32.mrb[0].mxu0
        %v1179 = vadd.f32 0.0, %v1178
        %v1180 = vpop.f32.mrb[0].mxu0
        %1181 = vmatprep.mubr.bf16.mxu0 0
        %1182 = vmatmul.mubr.bf16.gmra.mrb[0].mxu0 %v982
        %v1183 = vpop.f32.mrb[0].mxu0
        %v1184 = vadd.f32 0.0, %v1183
        %v1185 = vpop.f32.mrb[0].mxu0
        %v1186 = vpop.f32.mrb[0].mxu0
        %v1187 = vadd.f32 0.0, %v1186
        %v1188 = vpop.f32.mrb[0].mxu0
        %1189 = vmatprep.mubr.bf16.mxu0 0
        %1190 = vmatmul.mubr.bf16.gmra.mrb[0].mxu0 %v985
        %v1191 = vpop.f32.mrb[0].mxu0
        %v1192 = vadd.f32 0.0, %v1191
        %v1193 = vpop.f32.mrb[0].mxu0
        %v1194 = vpop.f32.mrb[0].mxu0
        %v1195 = vadd.f32 0.0, %v1194
        %v1196 = vpop.f32.mrb[0].mxu0
        %1197 = vmatprep.mubr.bf16.mxu0 0
        %1198 = vmatmul.mubr.bf16.gmra.mrb[0].mxu0 %v988
        %v1199 = vpop.f32.mrb[0].mxu0
        %v1200 = vadd.f32 0.0, %v1199
        %v1201 = vpop.f32.mrb[0].mxu0
        %v1202 = vpop.f32.mrb[0].mxu0
        %v1203 = vadd.f32 0.0, %v1202
        %v1204 = vpop.f32.mrb[0].mxu0
        %1205 = vmatprep.mubr.bf16.mxu0 0
        %1206 = vmatmul.mubr.bf16.gmra.mrb[0].mxu0 %v991
        %v1207 = vpop.f32.mrb[0].mxu0
        %v1208 = vadd.f32 0.0, %v1207
        %v1209 = vpop.f32.mrb[0].mxu0
        %v1210 = vpop.f32.mrb[0].mxu0
        %v1211 = vadd.f32 0.0, %v1210
        %v1212 = vpop.f32.mrb[0].mxu0
        %1213 = vmatprep.mubr.bf16.mxu0 0
        %1214 = vmatmul.mubr.bf16.gmra.mrb[0].mxu0 %v994
        %v1215 = vpop.f32.mrb[0].mxu0
        %v1216 = vadd.f32 0.0, %v1215
        %v1217 = vpop.f32.mrb[0].mxu0
        %v1218 = vpop.f32.mrb[0].mxu0
        %v1219 = vadd.f32 0.0, %v1218
        %v1220 = vpop.f32.mrb[0].mxu0
        %1221 = vmatprep.mubr.bf16.mxu0 0
        %1222 = vmatmul.mubr.bf16.gmra.mrb[0].mxu0 %v997
        %v1223 = vpop.f32.mrb[0].mxu0
        %v1224 = vadd.f32 0.0, %v1223
        %v1225 = vpop.f32.mrb[0].mxu0
        %v1226 = vpop.f32.mrb[0].mxu0
        %v1227 = vadd.f32 0.0, %v1226
        %v1228 = vpop.f32.mrb[0].mxu0
        %1229 = vmatprep.mubr.bf16.mxu0 0
        %1230 = vmatmul.mubr.bf16.gmra.mrb[0].mxu0 %v1000
        %v1231 = vpop.f32.mrb[0].mxu0
        %v1232 = vadd.f32 0.0, %v1231
        %v1233 = vpop.f32.mrb[0].mxu0
        %v1234 = vpop.f32.mrb[0].mxu0
        %v1235 = vadd.f32 0.0, %v1234
        %v1236 = vpop.f32.mrb[0].mxu0
        %1237 = vmatprep.mubr.bf16.mxu0 0
        %1238 = vmatmul.mubr.bf16.gmra.mrb[0].mxu0 %v1003
        %v1239 = vpop.f32.mrb[0].mxu0
        %v1240 = vadd.f32 0.0, %v1239
        %v1241 = vpop.f32.mrb[0].mxu0
        %v1242 = vpop.f32.mrb[0].mxu0
        %v1243 = vadd.f32 0.0, %v1242
        %v1244 = vpop.f32.mrb[0].mxu0
        %1245 = vmatprep.mubr.bf16.mxu0 0
        %1246 = vmatmul.mubr.bf16.gmra.mrb[0].mxu0 %v1006
        %v1247 = vpop.f32.mrb[0].mxu0
        %v1248 = vadd.f32 0.0, %v1247
        %v1249 = vpop.f32.mrb[0].mxu0
        %v1250 = vpop.f32.mrb[0].mxu0
        %v1251 = vadd.f32 0.0, %v1250
        %v1252 = vpop.f32.mrb[0].mxu0
        %1253 = vmatprep.mubr.bf16.mxu0 0
        %1254 = vmatmul.mubr.bf16.gmra.mrb[0].mxu0 %v1009
        %v1255 = vpop.f32.mrb[0].mxu0
        %v1256 = vadd.f32 0.0, %v1255
        %v1257 = vpop.f32.mrb[0].mxu0
        %v1258 = vpop.f32.mrb[0].mxu0
        %v1259 = vadd.f32 0.0, %v1258
        %v1260 = vpop.f32.mrb[0].mxu0
        %1261 = vmatprep.mubr.bf16.mxu0 0
        %1262 = vmatmul.mubr.bf16.gmra.mrb[0].mxu0 %v1012
        %v1263 = vpop.f32.mrb[0].mxu0
        %v1264 = vadd.f32 0.0, %v1263
        %v1265 = vpop.f32.mrb[0].mxu0
        %v1266 = vpop.f32.mrb[0].mxu0
        %v1267 = vadd.f32 0.0, %v1266
        %v1268 = vpop.f32.mrb[0].mxu0
        %1269 = vmatprep.mubr.bf16.mxu0 0
        %1270 = vmatmul.mubr.bf16.gmra.mrb[0].mxu0 %v1015
        %v1271 = vpop.f32.mrb[0].mxu0
        %v1272 = vadd.f32 0.0, %v1271
        %v1273 = vpop.f32.mrb[0].mxu0
        %v1274 = vpop.f32.mrb[0].mxu0
        %v1275 = vadd.f32 0.0, %v1274
        %v1276 = vpop.f32.mrb[0].mxu0
        %1277 = vmatprep.mubr.bf16.mxu0 0
        %1278 = vmatmul.mubr.bf16.gmra.mrb[0].mxu0 %v1018
        %v1279 = vpop.f32.mrb[0].mxu0
        %v1280 = vadd.f32 0.0, %v1279
        %v1281 = vpop.f32.mrb[0].mxu0
        %v1282 = vpop.f32.mrb[0].mxu0
        %v1283 = vadd.f32 0.0, %v1282
        %v1284 = vpop.f32.mrb[0].mxu0
        %1285 = vmatprep.mubr.bf16.mxu0 0
        %1286 = vmatmul.mubr.bf16.gmra.mrb[0].mxu0 %v1021
        %v1287 = vpop.f32.mrb[0].mxu0
        %v1288 = vadd.f32 0.0, %v1287
        %v1289 = vpop.f32.mrb[0].mxu0
        %v1290 = vpop.f32.mrb[0].mxu0
        %v1291 = vadd.f32 0.0, %v1290
        %v1292 = vpop.f32.mrb[0].mxu0
        %1293 = vmatprep.mubr.bf16.mxu0 0
        %1294 = vmatmul.mubr.bf16.gmra.mrb[0].mxu0 %v1024
        %v1295 = vpop.f32.mrb[0].mxu0
        %v1296 = vadd.f32 0.0, %v1295
        %v1297 = vpop.f32.mrb[0].mxu0
        %v1298 = vpop.f32.mrb[0].mxu0
        %v1299 = vadd.f32 0.0, %v1298
        %v1300 = vpop.f32.mrb[0].mxu0
        %1301 = vmatprep.mubr.bf16.mxu0 0
        %1302 = vmatmul.mubr.bf16.gmra.mrb[0].mxu0 %v1027
        %v1303 = vpop.f32.mrb[0].mxu0
        %v1304 = vadd.f32 0.0, %v1303
        %v1305 = vpop.f32.mrb[0].mxu0
        %v1306 = vpop.f32.mrb[0].mxu0
        %v1307 = vadd.f32 0.0, %v1306
        %v1308 = vpop.f32.mrb[0].mxu0
        %1309 = vmatprep.mubr.bf16.mxu0 0
        %1310 = vmatmul.mubr.bf16.gmra.mrb[0].mxu0 %v1030
        %v1311 = vpop.f32.mrb[0].mxu0
        %v1312 = vadd.f32 0.0, %v1311
        %v1313 = vpop.f32.mrb[0].mxu0
        %v1314 = vpop.f32.mrb[0].mxu0
        %v1315 = vadd.f32 0.0, %v1314
        %v1316 = vpop.f32.mrb[0].mxu0
        %1317 = vmatprep.mubr.bf16.mxu0 0
        %1318 = vmatmul.mubr.bf16.gmra.mrb[0].mxu0 %v1033
        %v1319 = vpop.f32.mrb[0].mxu0
        %v1320 = vadd.f32 0.0, %v1319
        %v1321 = vpop.f32.mrb[0].mxu0
        %v1322 = vpop.f32.mrb[0].mxu0
        %v1323 = vadd.f32 0.0, %v1322
        %v1324 = vpop.f32.mrb[0].mxu0
        %1325 = vmatprep.mubr.bf16.mxu0 0
        %1326 = vmatmul.mubr.bf16.gmra.mrb[0].mxu0 %v1036
        %v1327 = vpop.f32.mrb[0].mxu0
        %v1328 = vadd.f32 0.0, %v1327
        %v1329 = vpop.f32.mrb[0].mxu0
        %v1330 = vpop.f32.mrb[0].mxu0
        %v1331 = vadd.f32 0.0, %v1330
        %v1332 = vpop.f32.mrb[0].mxu0
        %1333 = vmatprep.mubr.bf16.mxu0 0
        %1334 = vmatmul.mubr.bf16.gmra.mrb[0].mxu0 %v1039
        %v1335 = vpop.f32.mrb[0].mxu0
        %v1336 = vadd.f32 0.0, %v1335
        %v1337 = vpop.f32.mrb[0].mxu0
        %v1338 = vpop.f32.mrb[0].mxu0
        %v1339 = vadd.f32 0.0, %v1338
        %v1340 = vpop.f32.mrb[0].mxu0
        %1341 = vmatprep.mubr.bf16.mxu0 0
        %1342 = vmatmul.mubr.bf16.gmra.mrb[0].mxu0 %v1042
        %v1343 = vpop.f32.mrb[0].mxu0
        %v1344 = vadd.f32 0.0, %v1343
        %v1345 = vpop.f32.mrb[0].mxu0
        %v1346 = vpop.f32.mrb[0].mxu0
        %v1347 = vadd.f32 0.0, %v1346
        %v1348 = vpop.f32.mrb[0].mxu0
        %1349 = vmatprep.mubr.bf16.mxu0 0
        %1350 = vmatmul.mubr.bf16.gmra.mrb[0].mxu0 %v1045
        %v1351 = vpop.f32.mrb[0].mxu0
        %v1352 = vadd.f32 0.0, %v1351
        %v1353 = vpop.f32.mrb[0].mxu0
        %v1354 = vpop.f32.mrb[0].mxu0
        %v1355 = vadd.f32 0.0, %v1354
        %v1356 = vpop.f32.mrb[0].mxu0
        %1357 = vmatprep.mubr.bf16.mxu0 0
        %1358 = vmatmul.mubr.bf16.gmra.mrb[0].mxu0 %v1048
        %v1359 = vpop.f32.mrb[0].mxu0
        %v1360 = vadd.f32 0.0, %v1359
        %v1361 = vpop.f32.mrb[0].mxu0
        %v1362 = vpop.f32.mrb[0].mxu0
        %v1363 = vadd.f32 0.0, %v1362
        %v1364 = vpop.f32.mrb[0].mxu0
        %1365 = vmatprep.mubr.bf16.mxu0 0
        %1366 = vmatmul.mubr.bf16.gmra.mrb[0].mxu0 %v1051
        %v1367 = vpop.f32.mrb[0].mxu0
        %v1368 = vadd.f32 0.0, %v1367
        %v1369 = vpop.f32.mrb[0].mxu0
        %v1370 = vpop.f32.mrb[0].mxu0
        %v1371 = vadd.f32 0.0, %v1370
        %v1372 = vpop.f32.mrb[0].mxu0
        %1373 = vmatprep.mubr.bf16.mxu0 0
        %1374 = vmatmul.mubr.bf16.gmra.mrb[0].mxu0 %v1054
        %v1375 = vpop.f32.mrb[0].mxu0
        %v1376 = vadd.f32 0.0, %v1375
        %v1377 = vpop.f32.mrb[0].mxu0
        %v1378 = vpop.f32.mrb[0].mxu0
        %v1379 = vadd.f32 0.0, %v1378
        %v1380 = vpop.f32.mrb[0].mxu0
        %1381 = vmatprep.mubr.bf16.mxu0 0
        %1382 = vmatmul.mubr.bf16.gmra.mrb[0].mxu0 %v1057
        %v1383 = vpop.f32.mrb[0].mxu0
        %v1384 = vadd.f32 0.0, %v1383
        %v1385 = vpop.f32.mrb[0].mxu0
        %v1386 = vpop.f32.mrb[0].mxu0
        %v1387 = vadd.f32 0.0, %v1386
        %v1388 = vpop.f32.mrb[0].mxu0
        %1389 = vmatprep.mubr.bf16.mxu0 0
        %1390 = vmatmul.mubr.bf16.gmra.mrb[0].mxu0 %v1060
        %v1391 = vpop.f32.mrb[0].mxu0
        %v1392 = vadd.f32 0.0, %v1391
        %v1393 = vpop.f32.mrb[0].mxu0
        %v1394 = vpop.f32.mrb[0].mxu0
        %v1395 = vadd.f32 0.0, %v1394
        %v1396 = vpop.f32.mrb[0].mxu0
        %1397 = vmatprep.mubr.bf16.mxu0 0
        %1398 = vmatmul.mubr.bf16.gmra.mrb[0].mxu0 %v1063
        %v1399 = vpop.f32.mrb[0].mxu0
        %v1400 = vadd.f32 0.0, %v1399
        %v1401 = vpop.f32.mrb[0].mxu0
        %v1402 = vpop.f32.mrb[0].mxu0
        %v1403 = vadd.f32 0.0, %v1402
        %v1404 = vpop.f32.mrb[0].mxu0
        %1405 = vmatprep.mubr.bf16.mxu0 0
        %1406 = vmatmul.mubr.bf16.gmra.mrb[0].mxu0 %v1066
        %v1407 = vpop.f32.mrb[0].mxu0
        %v1408 = vadd.f32 0.0, %v1407
        %v1409 = vpop.f32.mrb[0].mxu0
        %v1410 = vpop.f32.mrb[0].mxu0
        %v1411 = vadd.f32 0.0, %v1410
        %v1412 = vpop.f32.mrb[0].mxu0
        %1413 = vmatprep.mubr.bf16.mxu0 0
        %1414 = vmatmul.mubr.bf16.gmra.mrb[0].mxu0 %v1069
        %v1415 = vpop.f32.mrb[0].mxu0
        %v1416 = vadd.f32 0.0, %v1415
        %v1417 = vpop.f32.mrb[0].mxu0
        %v1418 = vpop.f32.mrb[0].mxu0
        %v1419 = vadd.f32 0.0, %v1418
        %v1420 = vpop.f32.mrb[0].mxu0
        %1421 = vmatprep.mubr.bf16.mxu0 0
        %1422 = vmatmul.mubr.bf16.gmra.mrb[0].mxu0 %v1072
        %v1423 = vpop.f32.mrb[0].mxu0
        %v1424 = vadd.f32 0.0, %v1423
        %v1425 = vpop.f32.mrb[0].mxu0
        %v1426 = vpop.f32.mrb[0].mxu0
        %v1427 = vadd.f32 0.0, %v1426
        %v1428 = vpop.f32.mrb[0].mxu0
        %1429 = vmatprep.mubr.bf16.mxu0 0
        %1430 = vmatmul.mubr.bf16.gmra.mrb[0].mxu0 %v1075
        %v1431 = vpop.f32.mrb[0].mxu0
        %v1432 = vadd.f32 0.0, %v1431
        %v1433 = vpop.f32.mrb[0].mxu0
        %v1434 = vpop.f32.mrb[0].mxu0
        %v1435 = vadd.f32 0.0, %v1434
        %v1436 = vpop.f32.mrb[0].mxu0
        %1437 = vmatprep.mubr.bf16.mxu0 0
        %1438 = vmatmul.mubr.bf16.gmra.mrb[0].mxu0 %v1078
        %v1439 = vpop.f32.mrb[0].mxu0
        %v1440 = vadd.f32 0.0, %v1439
        %v1441 = vpop.f32.mrb[0].mxu0
        %v1442 = vpop.f32.mrb[0].mxu0
        %v1443 = vadd.f32 0.0, %v1442
        %v1444 = vpop.f32.mrb[0].mxu0
        %1445 = vmatprep.mubr.bf16.mxu0 0
        %1446 = vmatmul.mubr.bf16.gmra.mrb[0].mxu0 %v1081
        %v1447 = vpop.f32.mrb[0].mxu0
        %v1448 = vadd.f32 0.0, %v1447
        %v1449 = vpop.f32.mrb[0].mxu0
        %v1450 = vpop.f32.mrb[0].mxu0
        %v1451 = vadd.f32 0.0, %v1450
        %v1452 = vpop.f32.mrb[0].mxu0
        %1453 = vmatprep.mubr.bf16.mxu0 0
        %1454 = vmatmul.mubr.bf16.gmra.mrb[0].mxu0 %v1084
        %v1455 = vpop.f32.mrb[0].mxu0
        %v1456 = vadd.f32 0.0, %v1455
        %v1457 = vpop.f32.mrb[0].mxu0
        %v1458 = vpop.f32.mrb[0].mxu0
        %v1459 = vadd.f32 0.0, %v1458
        %v1460 = vpop.f32.mrb[0].mxu0
        %1461 = vmatprep.mubr.bf16.mxu0 0
        %1462 = vmatmul.mubr.bf16.gmra.mrb[0].mxu0 %v1087
        %v1463 = vpop.f32.mrb[0].mxu0
        %v1464 = vadd.f32 0.0, %v1463
        %v1465 = vpop.f32.mrb[0].mxu0
        %v1466 = vpop.f32.mrb[0].mxu0
        %v1467 = vadd.f32 0.0, %v1466
        %v1468 = vpop.f32.mrb[0].mxu0
        %1469 = vmatprep.mubr.bf16.mxu0 0
        %1470 = vmatmul.mubr.bf16.gmra.mrb[0].mxu0 %v1090
        %v1471 = vpop.f32.mrb[0].mxu0
        %v1472 = vadd.f32 0.0, %v1471
        %v1473 = vpop.f32.mrb[0].mxu0
        %v1474 = vpop.f32.mrb[0].mxu0
        %v1475 = vadd.f32 0.0, %v1474
        %v1476 = vpop.f32.mrb[0].mxu0
        %1477 = vmatprep.mubr.bf16.mxu0 0
        %1478 = vmatmul.mubr.bf16.gmra.mrb[0].mxu0 %v1093
        %v1479 = vpop.f32.mrb[0].mxu0
        %v1480 = vadd.f32 0.0, %v1479
        %v1481 = vpop.f32.mrb[0].mxu0
        %v1482 = vpop.f32.mrb[0].mxu0
        %v1483 = vadd.f32 0.0, %v1482
        %v1484 = vpop.f32.mrb[0].mxu0
        %1485 = vmatprep.mubr.bf16.mxu0 0
        %1486 = vmatmul.mubr.bf16.gmra.mrb[0].mxu0 %v1096
        %v1487 = vpop.f32.mrb[0].mxu0
        %v1488 = vadd.f32 0.0, %v1487
        %v1489 = vpop.f32.mrb[0].mxu0
        %v1490 = vpop.f32.mrb[0].mxu0
        %v1491 = vadd.f32 0.0, %v1490
        %v1492 = vpop.f32.mrb[0].mxu0
        %1493 = vmatprep.mubr.bf16.mxu0 0
        %1494 = vmatmul.mubr.bf16.gmra.mrb[0].mxu0 %v1099
        %v1495 = vpop.f32.mrb[0].mxu0
        %v1496 = vadd.f32 0.0, %v1495
        %v1497 = vpop.f32.mrb[0].mxu0
        %v1498 = vpop.f32.mrb[0].mxu0
        %v1499 = vadd.f32 0.0, %v1498
        %v1500 = vpop.f32.mrb[0].mxu0
        %1501 = vmatprep.mubr.bf16.mxu0 0
        %1502 = vmatmul.mubr.bf16.gmra.mrb[0].mxu0 %v1102
        %v1503 = vpop.f32.mrb[0].mxu0
        %v1504 = vadd.f32 0.0, %v1503
        %v1505 = vpop.f32.mrb[0].mxu0
        %v1506 = vpop.f32.mrb[0].mxu0
        %v1507 = vadd.f32 0.0, %v1506
        %v1508 = vpop.f32.mrb[0].mxu0
        %1509 = vmatprep.mubr.bf16.mxu0 0
        %1510 = vmatmul.mubr.bf16.gmra.mrb[0].mxu0 %v1105
        %v1511 = vpop.f32.mrb[0].mxu0
        %v1512 = vadd.f32 0.0, %v1511
        %v1513 = vpop.f32.mrb[0].mxu0
        %v1514 = vpop.f32.mrb[0].mxu0
        %v1515 = vadd.f32 0.0, %v1514
        %v1516 = vpop.f32.mrb[0].mxu0
        %1517 = vmatprep.mubr.bf16.mxu0 0
        %1518 = vmatmul.mubr.bf16.gmra.mrb[0].mxu0 %v1108
        %v1519 = vpop.f32.mrb[0].mxu0
        %v1520 = vadd.f32 0.0, %v1519
        %v1521 = vpop.f32.mrb[0].mxu0
        %v1522 = vpop.f32.mrb[0].mxu0
        %v1523 = vadd.f32 0.0, %v1522
        %v1524 = vpop.f32.mrb[0].mxu0
        %1525 = vmatprep.mubr.bf16.mxu0 0
        %1526 = vmatmul.mubr.bf16.gmra.mrb[0].mxu0 %v1111
        %v1527 = vpop.f32.mrb[0].mxu0
        %v1528 = vadd.f32 0.0, %v1527
        %v1529 = vpop.f32.mrb[0].mxu0
        %v1530 = vpop.f32.mrb[0].mxu0
        %v1531 = vadd.f32 0.0, %v1530
        %v1532 = vpop.f32.mrb[0].mxu0
        %1533 = vmatprep.mubr.bf16.mxu0 0
        %1534 = vmatmul.mubr.bf16.gmra.mrb[0].mxu0 %v1114
        %v1535 = vpop.f32.mrb[0].mxu0
        %v1536 = vadd.f32 0.0, %v1535
        %v1537 = vpop.f32.mrb[0].mxu0
        %v1538 = vpop.f32.mrb[0].mxu0
        %v1539 = vadd.f32 0.0, %v1538
        %v1540 = vpop.f32.mrb[0].mxu0
        %1541 = vmatprep.mubr.bf16.mxu0 0
        %1542 = vmatmul.mubr.bf16.gmra.mrb[0].mxu0 %v1117
        %v1543 = vpop.f32.mrb[0].mxu0
        %v1544 = vadd.f32 0.0, %v1543
        %v1545 = vpop.f32.mrb[0].mxu0
        %v1546 = vpop.f32.mrb[0].mxu0
        %v1547 = vadd.f32 0.0, %v1546
        %v1548 = vpop.f32.mrb[0].mxu0
        %1549 = vmatprep.mubr.bf16.mxu0 0
        %1550 = vmatmul.mubr.bf16.gmra.mrb[0].mxu0 %v1120
        %v1551 = vpop.f32.mrb[0].mxu0
        %v1552 = vadd.f32 0.0, %v1551
        %v1553 = vpop.f32.mrb[0].mxu0
        %v1554 = vpop.f32.mrb[0].mxu0
        %v1555 = vadd.f32 0.0, %v1554
        %v1556 = vpop.f32.mrb[0].mxu0
        %1557 = vmatprep.mubr.bf16.mxu0 0
        %1558 = vmatmul.mubr.bf16.gmra.mrb[0].mxu0 %v1123
        %v1559 = vpop.f32.mrb[0].mxu0
        %v1560 = vadd.f32 0.0, %v1559
        %v1561 = vpop.f32.mrb[0].mxu0
        %v1562 = vpop.f32.mrb[0].mxu0
        %v1563 = vadd.f32 0.0, %v1562
        %v1564 = vpop.f32.mrb[0].mxu0
        %1565 = vmatprep.mubr.bf16.mxu0 0
        %1566 = vmatmul.mubr.bf16.gmra.mrb[0].mxu0 %v1126
        %v1567 = vpop.f32.mrb[0].mxu0
        %v1568 = vadd.f32 0.0, %v1567
        %v1569 = vpop.f32.mrb[0].mxu0
        %v1570 = vpop.f32.mrb[0].mxu0
        %v1571 = vadd.f32 0.0, %v1570
        %v1572 = vpop.f32.mrb[0].mxu0
        %1573 = vmatprep.mubr.bf16.mxu0 0
        %1574 = vmatmul.mubr.bf16.gmra.mrb[0].mxu0 %v1129
        %v1575 = vpop.f32.mrb[0].mxu0
        %v1576 = vadd.f32 0.0, %v1575
        %v1577 = vpop.f32.mrb[0].mxu0
        %v1578 = vpop.f32.mrb[0].mxu0
        %v1579 = vadd.f32 0.0, %v1578
        %v1580 = vpop.f32.mrb[0].mxu0
        %1581 = vmatprep.mubr.bf16.mxu0 0
        %1582 = vmatmul.mubr.bf16.gmra.mrb[0].mxu0 %v1132
        %v1583 = vpop.f32.mrb[0].mxu0
        %v1584 = vadd.f32 0.0, %v1583
        %v1585 = vpop.f32.mrb[0].mxu0
        %v1586 = vpop.f32.mrb[0].mxu0
        %v1587 = vadd.f32 0.0, %v1586
        %v1588 = vpop.f32.mrb[0].mxu0
        %1589 = vdwg.mxu0
        %v1590 = vadd.f32 %v1176, %v1179
        %v1591 = vadd.f32 %v1590, %v1184
        %v1592 = vadd.f32 %v1591, %v1187
        %v1593 = vadd.f32 %v1592, %v1192
        %v1594 = vadd.f32 %v1593, %v1195
        %v1595 = vadd.f32 %v1594, %v1200
        %v1596 = vadd.f32 %v1595, %v1203
        %v1597 = vadd.f32 %v1596, %v1208
        %v1598 = vadd.f32 %v1597, %v1211
        %v1599 = vadd.f32 %v1598, %v1216
        %v1600 = vadd.f32 %v1599, %v1219
        %v1601 = vadd.f32 %v1600, %v1224
        %v1602 = vadd.f32 %v1601, %v1227
        %v1603 = vadd.f32 %v1602, %v1232
        %v1604 = vadd.f32 %v1603, %v1235
        %v1605 = vadd.f32 %v1604, %v1240
        %v1606 = vadd.f32 %v1605, %v1243
        %v1607 = vadd.f32 %v1606, %v1248
        %v1608 = vadd.f32 %v1607, %v1251
        %v1609 = vadd.f32 %v1608, %v1256
        %v1610 = vadd.f32 %v1609, %v1259
        %v1611 = vadd.f32 %v1610, %v1264
        %v1612 = vadd.f32 %v1611, %v1267
        %v1613 = vadd.f32 %v1612, %v1272
        %v1614 = vadd.f32 %v1613, %v1275
        %v1615 = vadd.f32 %v1614, %v1280
        %v1616 = vadd.f32 %v1615, %v1283
        %v1617 = vadd.f32 %v1616, %v1288
        %v1618 = vadd.f32 %v1617, %v1291
        %v1619 = vadd.f32 %v1618, %v1296
        %v1620 = vadd.f32 %v1619, %v1299
        %v1621 = vadd.f32 %v1620, %v1304
        %v1622 = vadd.f32 %v1621, %v1307
        %v1623 = vadd.f32 %v1622, %v1312
        %v1624 = vadd.f32 %v1623, %v1315
        %v1625 = vadd.f32 %v1624, %v1320
        %v1626 = vadd.f32 %v1625, %v1323
        %v1627 = vadd.f32 %v1626, %v1328
        %v1628 = vadd.f32 %v1627, %v1331
        %v1629 = vadd.f32 %v1628, %v1336
        %v1630 = vadd.f32 %v1629, %v1339
        %v1631 = vadd.f32 %v1630, %v1344
        %v1632 = vadd.f32 %v1631, %v1347
        %v1633 = vadd.f32 %v1632, %v1352
        %v1634 = vadd.f32 %v1633, %v1355
        %v1635 = vadd.f32 %v1634, %v1360
        %v1636 = vadd.f32 %v1635, %v1363
        %v1637 = vadd.f32 %v1636, %v1368
        %v1638 = vadd.f32 %v1637, %v1371
        %v1639 = vadd.f32 %v1638, %v1376
        %v1640 = vadd.f32 %v1639, %v1379
        %v1641 = vadd.f32 %v1640, %v1384
        %v1642 = vadd.f32 %v1641, %v1387
        %v1643 = vadd.f32 %v1642, %v1392
        %v1644 = vadd.f32 %v1643, %v1395
        %v1645 = vadd.f32 %v1644, %v1400
        %v1646 = vadd.f32 %v1645, %v1403
        %v1647 = vadd.f32 %v1646, %v1408
        %v1648 = vadd.f32 %v1647, %v1411
        %v1649 = vadd.f32 %v1648, %v1416
        %v1650 = vadd.f32 %v1649, %v1419
        %v1651 = vadd.f32 %v1650, %v1424
        %v1652 = vadd.f32 %v1651, %v1427
        %v1653 = vadd.f32 %v1652, %v1432
        %v1654 = vadd.f32 %v1653, %v1435
        %v1655 = vadd.f32 %v1654, %v1440
        %v1656 = vadd.f32 %v1655, %v1443
        %v1657 = vadd.f32 %v1656, %v1448
        %v1658 = vadd.f32 %v1657, %v1451
        %v1659 = vadd.f32 %v1658, %v1456
        %v1660 = vadd.f32 %v1659, %v1459
        %v1661 = vadd.f32 %v1660, %v1464
        %v1662 = vadd.f32 %v1661, %v1467
        %v1663 = vadd.f32 %v1662, %v1472
        %v1664 = vadd.f32 %v1663, %v1475
        %v1665 = vadd.f32 %v1664, %v1480
        %v1666 = vadd.f32 %v1665, %v1483
        %v1667 = vadd.f32 %v1666, %v1488
        %v1668 = vadd.f32 %v1667, %v1491
        %v1669 = vadd.f32 %v1668, %v1496
        %v1670 = vadd.f32 %v1669, %v1499
        %v1671 = vadd.f32 %v1670, %v1504
        %v1672 = vadd.f32 %v1671, %v1507
        %v1673 = vadd.f32 %v1672, %v1512
        %v1674 = vadd.f32 %v1673, %v1515
        %v1675 = vadd.f32 %v1674, %v1520
        %v1676 = vadd.f32 %v1675, %v1523
        %v1677 = vadd.f32 %v1676, %v1528
        %v1678 = vadd.f32 %v1677, %v1531
        %v1679 = vadd.f32 %v1678, %v1536
        %v1680 = vadd.f32 %v1679, %v1539
        %v1681 = vadd.f32 %v1680, %v1544
        %v1682 = vadd.f32 %v1681, %v1547
        %v1683 = vadd.f32 %v1682, %v1552
        %v1684 = vadd.f32 %v1683, %v1555
        %v1685 = vadd.f32 %v1684, %v1560
        %v1686 = vadd.f32 %v1685, %v1563
        %v1687 = vadd.f32 %v1686, %v1568
        %v1688 = vadd.f32 %v1687, %v1571
        %v1689 = vadd.f32 %v1688, %v1576
        %v1690 = vadd.f32 %v1689, %v1579
        %v1691 = vadd.f32 %v1690, %v1584
        %v1692 = vadd.f32 %v1691, %v1587
        %v1693 = vrot.slane %v1692, 4
        %v1694 = vadd.f32 %v1692, %v1693
        %v1695 = vrot.slane %v1694, 2
        %v1696 = vadd.f32 %v1694, %v1695
        %v1697 = vrot.slane %v1696, 1
        %v1698 = vadd.f32 %v1696, %v1697
        %v1699 = vmul.f32 %v1176, %v1176
        %v1700 = vmul.f32 %v1179, %v1179
        %v1701 = vmul.f32 %v1184, %v1184
        %v1702 = vmul.f32 %v1187, %v1187
        %v1703 = vmul.f32 %v1192, %v1192
        %v1704 = vmul.f32 %v1195, %v1195
        %v1705 = vmul.f32 %v1200, %v1200
        %v1706 = vmul.f32 %v1203, %v1203
        %v1707 = vmul.f32 %v1208, %v1208
        %v1708 = vmul.f32 %v1211, %v1211
        %v1709 = vmul.f32 %v1216, %v1216
        %v1710 = vmul.f32 %v1219, %v1219
        %v1711 = vmul.f32 %v1224, %v1224
        %v1712 = vmul.f32 %v1227, %v1227
        %v1713 = vmul.f32 %v1232, %v1232
        %v1714 = vmul.f32 %v1235, %v1235
        %v1715 = vmul.f32 %v1240, %v1240
        %v1716 = vmul.f32 %v1243, %v1243
        %v1717 = vmul.f32 %v1248, %v1248
        %v1718 = vmul.f32 %v1251, %v1251
        %v1719 = vmul.f32 %v1256, %v1256
        %v1720 = vmul.f32 %v1259, %v1259
        %v1721 = vmul.f32 %v1264, %v1264
        %v1722 = vmul.f32 %v1267, %v1267
        %v1723 = vmul.f32 %v1272, %v1272
        %v1724 = vmul.f32 %v1275, %v1275
        %v1725 = vmul.f32 %v1280, %v1280
        %v1726 = vmul.f32 %v1283, %v1283
        %v1727 = vmul.f32 %v1288, %v1288
        %v1728 = vmul.f32 %v1291, %v1291
        %v1729 = vmul.f32 %v1296, %v1296
        %v1730 = vmul.f32 %v1299, %v1299
        %v1731 = vmul.f32 %v1304, %v1304
        %v1732 = vmul.f32 %v1307, %v1307
        %v1733 = vmul.f32 %v1312, %v1312
        %v1734 = vmul.f32 %v1315, %v1315
        %v1735 = vmul.f32 %v1320, %v1320
        %v1736 = vmul.f32 %v1323, %v1323
        %v1737 = vmul.f32 %v1328, %v1328
        %v1738 = vmul.f32 %v1331, %v1331
        %v1739 = vmul.f32 %v1336, %v1336
        %v1740 = vmul.f32 %v1339, %v1339
        %v1741 = vmul.f32 %v1344, %v1344
        %v1742 = vmul.f32 %v1347, %v1347
        %v1743 = vmul.f32 %v1352, %v1352
        %v1744 = vmul.f32 %v1355, %v1355
        %v1745 = vmul.f32 %v1360, %v1360
        %v1746 = vmul.f32 %v1363, %v1363
        %v1747 = vmul.f32 %v1368, %v1368
        %v1748 = vmul.f32 %v1371, %v1371
        %v1749 = vmul.f32 %v1376, %v1376
        %v1750 = vmul.f32 %v1379, %v1379
        %v1751 = vmul.f32 %v1384, %v1384
        %v1752 = vmul.f32 %v1387, %v1387
        %v1753 = vmul.f32 %v1392, %v1392
        %v1754 = vmul.f32 %v1395, %v1395
        %v1755 = vmul.f32 %v1400, %v1400
        %v1756 = vmul.f32 %v1403, %v1403
        %v1757 = vmul.f32 %v1408, %v1408
        %v1758 = vmul.f32 %v1411, %v1411
        %v1759 = vmul.f32 %v1416, %v1416
        %v1760 = vmul.f32 %v1419, %v1419
        %v1761 = vmul.f32 %v1424, %v1424
        %v1762 = vmul.f32 %v1427, %v1427
        %v1763 = vmul.f32 %v1432, %v1432
        %v1764 = vmul.f32 %v1435, %v1435
        %v1765 = vmul.f32 %v1440, %v1440
        %v1766 = vmul.f32 %v1443, %v1443
        %v1767 = vmul.f32 %v1448, %v1448
        %v1768 = vmul.f32 %v1451, %v1451
        %v1769 = vmul.f32 %v1456, %v1456
        %v1770 = vmul.f32 %v1459, %v1459
        %v1771 = vmul.f32 %v1464, %v1464
        %v1772 = vmul.f32 %v1467, %v1467
        %v1773 = vmul.f32 %v1472, %v1472
        %v1774 = vmul.f32 %v1475, %v1475
        %v1775 = vmul.f32 %v1480, %v1480
        %v1776 = vmul.f32 %v1483, %v1483
        %v1777 = vmul.f32 %v1488, %v1488
        %v1778 = vmul.f32 %v1491, %v1491
        %v1779 = vmul.f32 %v1496, %v1496
        %v1780 = vmul.f32 %v1499, %v1499
        %v1781 = vmul.f32 %v1504, %v1504
        %v1782 = vmul.f32 %v1507, %v1507
        %v1783 = vmul.f32 %v1512, %v1512
        %v1784 = vmul.f32 %v1515, %v1515
        %v1785 = vmul.f32 %v1520, %v1520
        %v1786 = vmul.f32 %v1523, %v1523
        %v1787 = vmul.f32 %v1528, %v1528
        %v1788 = vmul.f32 %v1531, %v1531
        %v1789 = vmul.f32 %v1536, %v1536
        %v1790 = vmul.f32 %v1539, %v1539
        %v1791 = vmul.f32 %v1544, %v1544
        %v1792 = vmul.f32 %v1547, %v1547
        %v1793 = vmul.f32 %v1552, %v1552
        %v1794 = vmul.f32 %v1555, %v1555
        %v1795 = vmul.f32 %v1560, %v1560
        %v1796 = vmul.f32 %v1563, %v1563
        %v1797 = vmul.f32 %v1568, %v1568
        %v1798 = vmul.f32 %v1571, %v1571
        %v1799 = vmul.f32 %v1576, %v1576
        %v1800 = vmul.f32 %v1579, %v1579
        %v1801 = vmul.f32 %v1584, %v1584
        %v1802 = vmul.f32 %v1587, %v1587
        %v1803 = vadd.f32 %v1699, %v1700
        %v1804 = vadd.f32 %v1803, %v1701
        %v1805 = vadd.f32 %v1804, %v1702
        %v1806 = vadd.f32 %v1805, %v1703
        %v1807 = vadd.f32 %v1806, %v1704
        %v1808 = vadd.f32 %v1807, %v1705
        %v1809 = vadd.f32 %v1808, %v1706
        %v1810 = vadd.f32 %v1809, %v1707
        %v1811 = vadd.f32 %v1810, %v1708
        %v1812 = vadd.f32 %v1811, %v1709
        %v1813 = vadd.f32 %v1812, %v1710
        %v1814 = vadd.f32 %v1813, %v1711
        %v1815 = vadd.f32 %v1814, %v1712
        %v1816 = vadd.f32 %v1815, %v1713
        %v1817 = vadd.f32 %v1816, %v1714
        %v1818 = vadd.f32 %v1817, %v1715
        %v1819 = vadd.f32 %v1818, %v1716
        %v1820 = vadd.f32 %v1819, %v1717
        %v1821 = vadd.f32 %v1820, %v1718
        %v1822 = vadd.f32 %v1821, %v1719
        %v1823 = vadd.f32 %v1822, %v1720
        %v1824 = vadd.f32 %v1823, %v1721
        %v1825 = vadd.f32 %v1824, %v1722
        %v1826 = vadd.f32 %v1825, %v1723
        %v1827 = vadd.f32 %v1826, %v1724
        %v1828 = vadd.f32 %v1827, %v1725
        %v1829 = vadd.f32 %v1828, %v1726
        %v1830 = vadd.f32 %v1829, %v1727
        %v1831 = vadd.f32 %v1830, %v1728
        %v1832 = vadd.f32 %v1831, %v1729
        %v1833 = vadd.f32 %v1832, %v1730
        %v1834 = vadd.f32 %v1833, %v1731
        %v1835 = vadd.f32 %v1834, %v1732
        %v1836 = vadd.f32 %v1835, %v1733
        %v1837 = vadd.f32 %v1836, %v1734
        %v1838 = vadd.f32 %v1837, %v1735
        %v1839 = vadd.f32 %v1838, %v1736
        %v1840 = vadd.f32 %v1839, %v1737
        %v1841 = vadd.f32 %v1840, %v1738
        %v1842 = vadd.f32 %v1841, %v1739
        %v1843 = vadd.f32 %v1842, %v1740
        %v1844 = vadd.f32 %v1843, %v1741
        %v1845 = vadd.f32 %v1844, %v1742
        %v1846 = vadd.f32 %v1845, %v1743
        %v1847 = vadd.f32 %v1846, %v1744
        %v1848 = vadd.f32 %v1847, %v1745
        %v1849 = vadd.f32 %v1848, %v1746
        %v1850 = vadd.f32 %v1849, %v1747
        %v1851 = vadd.f32 %v1850, %v1748
        %v1852 = vadd.f32 %v1851, %v1749
        %v1853 = vadd.f32 %v1852, %v1750
        %v1854 = vadd.f32 %v1853, %v1751
        %v1855 = vadd.f32 %v1854, %v1752
        %v1856 = vadd.f32 %v1855, %v1753
        %v1857 = vadd.f32 %v1856, %v1754
        %v1858 = vadd.f32 %v1857, %v1755
        %v1859 = vadd.f32 %v1858, %v1756
        %v1860 = vadd.f32 %v1859, %v1757
        %v1861 = vadd.f32 %v1860, %v1758
        %v1862 = vadd.f32 %v1861, %v1759
        %v1863 = vadd.f32 %v1862, %v1760
        %v1864 = vadd.f32 %v1863, %v1761
        %v1865 = vadd.f32 %v1864, %v1762
        %v1866 = vadd.f32 %v1865, %v1763
        %v1867 = vadd.f32 %v1866, %v1764
        %v1868 = vadd.f32 %v1867, %v1765
        %v1869 = vadd.f32 %v1868, %v1766
        %v1870 = vadd.f32 %v1869, %v1767
        %v1871 = vadd.f32 %v1870, %v1768
        %v1872 = vadd.f32 %v1871, %v1769
        %v1873 = vadd.f32 %v1872, %v1770
        %v1874 = vadd.f32 %v1873, %v1771
        %v1875 = vadd.f32 %v1874, %v1772
        %v1876 = vadd.f32 %v1875, %v1773
        %v1877 = vadd.f32 %v1876, %v1774
        %v1878 = vadd.f32 %v1877, %v1775
        %v1879 = vadd.f32 %v1878, %v1776
        %v1880 = vadd.f32 %v1879, %v1777
        %v1881 = vadd.f32 %v1880, %v1778
        %v1882 = vadd.f32 %v1881, %v1779
        %v1883 = vadd.f32 %v1882, %v1780
        %v1884 = vadd.f32 %v1883, %v1781
        %v1885 = vadd.f32 %v1884, %v1782
        %v1886 = vadd.f32 %v1885, %v1783
        %v1887 = vadd.f32 %v1886, %v1784
        %v1888 = vadd.f32 %v1887, %v1785
        %v1889 = vadd.f32 %v1888, %v1786
        %v1890 = vadd.f32 %v1889, %v1787
        %v1891 = vadd.f32 %v1890, %v1788
        %v1892 = vadd.f32 %v1891, %v1789
        %v1893 = vadd.f32 %v1892, %v1790
        %v1894 = vadd.f32 %v1893, %v1791
        %v1895 = vadd.f32 %v1894, %v1792
        %v1896 = vadd.f32 %v1895, %v1793
        %v1897 = vadd.f32 %v1896, %v1794
        %v1898 = vadd.f32 %v1897, %v1795
        %v1899 = vadd.f32 %v1898, %v1796
        %v1900 = vadd.f32 %v1899, %v1797
        %v1901 = vadd.f32 %v1900, %v1798
        %v1902 = vadd.f32 %v1901, %v1799
        %v1903 = vadd.f32 %v1902, %v1800
        %v1904 = vadd.f32 %v1903, %v1801
        %v1905 = vadd.f32 %v1904, %v1802
        %v1906 = vrot.slane %v1905, 4
        %v1907 = vadd.f32 %v1905, %v1906
        %v1908 = vrot.slane %v1907, 2
        %v1909 = vadd.f32 %v1907, %v1908
        %v1910 = vrot.slane %v1909, 1
        %v1911 = vadd.f32 %v1909, %v1910
        %vm1912 = vcmask 1040384
        %v1913 = vsel %vm1912, %v1698, %v1911
        %vm1914 = vcmask 1041408
        %v1915 = vsel %vm1914, %v1913, 0.0
        %1916 = vst [vmem:[%s596] sm:$0xff] %v1915
        %p1917 = scmp.lt.s32.totalorder %s13, 1
        %s1918 = scalar_select %p1917, %s13, 1
        %s1919 = smul.addr %s1918, 8
        %s1920 = scalar_lea.vmem %s2, %s1919
        // Predicated region
        $region70: #{lenet5_bn_forward.5} parent=64 // pred_check
          %p1921 = pneg %p78
        $region71: #{lenet5_bn_forward.5} parent=64 // pred_check_branch
          %1923 = sbr.rel (%p1921) target = $region73
        $region72: #{lenet5_bn_forward.5} parent=64 // pred_region
          _
        $region73: #{lenet5_bn_forward.5} parent=64 // pred_fallthru
          _
      $region65: #{lenet5_bn_forward.5} parent=5 // pred_fallthru
        _
      %p1924 = scmp.le.s32.totalorder 2, %s8
      // Predicated region
      $region74: #{lenet5_bn_forward.5} parent=5 // pred_check
        %p1925 = pneg %p1924
      $region75: #{lenet5_bn_forward.5} parent=5 // pred_check_branch
        %1927 = sbr.rel (%p1925) target = $region77
      $region76: #{lenet5_bn_forward.5} parent=5 // pred_region
        %s1928 = ssub.s32 %s8, 2
        // Predicated region
        $region78: #{lenet5_bn_forward.5} parent=76 // pred_check
          %p1929 = pneg %p84
        $region79: #{lenet5_bn_forward.5} parent=76 // pred_check_branch
          %1931 = sbr.rel (%p1929) target = $region81
        $region80: #{lenet5_bn_forward.5} parent=76 // pred_region
          %p1932 = scmp.lt.s32.totalorder %s14, 1
          %s1933 = scalar_select %p1932, %s14, 1
          %s1934 = smul.addr %s1933, 8
          %s1935 = scalar_lea.vmem %s2, %s1934
        $region81: #{lenet5_bn_forward.5} parent=76 // pred_fallthru
          _
      $region77: #{lenet5_bn_forward.5} parent=5 // pred_fallthru
        _
    $region6: #{lenet5_bn_forward.5} parent=1 // loop_footer
      %s12 = sadd.s32 1, %s8
    $region7: #{lenet5_bn_forward.5} parent=1 // loop_footer_branch
      %7 = sbr.rel target = $region3
    $region8: #{lenet5_bn_forward.5} parent=1 // loop_exit
      _

// kernel: lenet5_bn_forward.6
$region0: #{lenet5_bn_forward.6}
  #allocation0 [shape = 'u32[]', space=smem, size = 0x4, offset = 0x4, fixed_abs, tag = 'smem constant byte address 0x4 - core index']
  #allocation1 [shape = 'u32[144,128]{1,0:T(1,128)}', space=vmem, size = 0x12000, scoped, tag = 'internal scratch']
  %s0 = inlined_call_operand.vmem [shape: bf16[4,416,25], index: 0, kind: input, shape index: {}]
  %s1 = inlined_call_operand.vmem [shape: bf16[25,128], index: 1, kind: input, shape index: {}]
  %s2 = inlined_call_operand.vmem [shape: f32[2,128], index: 2, kind: input, shape index: {}]
  %s3 = inlined_call_operand.vmem [shape: f32[416,128], index: 3, kind: output, shape index: {}]
  %s4 = sld [smem:[#allocation0]]
  $region86: #{lenet5_bn_forward.6} parent=0
    _
  %s6 = ssub.s32 1, %s4
  %s7 = scalar_select 0, %s6, %s4
  $region1: #{lenet5_bn_forward.6} parent=0
    #allocation2 [shape = 'u8[425984]{0}', space=vmem, size = 0x68000, scoped, tag = 'input window, operand 0']
    loop: start=0, step=1, limit=4
    $region2: #{lenet5_bn_forward.6} parent=1 // loop_pre_header
      _
    $region3: #{lenet5_bn_forward.6} parent=1 // loop_header
      %s9 = sphi 0, %s13
      %p10 = scmp.ge.s32.totalorder %s9, 4
      %s19 = sphi 0, %s21
      %s22 = sphi 0, %s19
      %s23 = sphi 0, %s22
      %s39 = sphi 0, %s23
      %s43 = sphi 0, %s43
      %s45 = sphi 0, %s43
      %s46 = sphi 0, %s45
      %s60 = sphi 0, %s46
      %s64 = sphi 0, %s64
      %s66 = sphi 0, %s64
      %s67 = sphi 0, %s66
      %s81 = sphi 0, %s67
      %s87 = sphi 0, %s89
      %s90 = sphi 0, %s87
      %s91 = sphi 0, %s90
      %s107 = sphi 0, %s91
    $region4: #{lenet5_bn_forward.6} parent=1 // loop_header_branch
      %12 = sbr.rel (%p10) target = $region8
    $region5: #{lenet5_bn_forward.6} parent=1 // loop_body
      %s14 = ssub.s32 %s9, 1
      %s15 = ssub.s32 %s9, 2
      %s16 = sadd.s32 %s9, 1
      %s17 = ssub.s32 %s9, %s16
      %p18 = scmp.eq.s32.totalorder %s17, 0
      %s20 = sadd.s32 %s19, 1
      %s21 = scalar_select %p18, %s19, %s20
      %p24 = pneg %p18
      %p25 = scmp.eq.s32.totalorder %s9, 1
      %p26 = por %p24, %p25
      %p27 = scmp.ne.s32.totalorder %s19, %s22
      %p28 = scmp.eq.s32.totalorder %s9, 0
      %p29 = por %p27, %p28
      %p30 = scmp.ne.s32.totalorder %s19, %s22
      %p31 = scmp.eq.s32.totalorder %s14, 1
      %p32 = por %p30, %p31
      %p33 = scmp.ne.s32.totalorder %s22, %s23
      %p34 = scmp.eq.s32.totalorder %s14, 0
      %p35 = por %p33, %p34
      %p36 = scmp.ne.s32.totalorder %s22, %s23
      %p37 = scmp.eq.s32.totalorder %s15, 1
      %p38 = por %p36, %p37
      %p40 = scmp.ne.s32.totalorder %s23, %s39
      %p41 = scmp.eq.s32.totalorder %s15, 0
      %p42 = por %p40, %p41
      %s44 = sadd.s32 %s43, 1
      %p47 = scmp.eq.s32.totalorder %s9, 1
      %p48 = scmp.ne.s32.totalorder %s43, %s45
      %p49 = scmp.eq.s32.totalorder %s9, 0
      %p50 = por %p48, %p49
      %p51 = scmp.ne.s32.totalorder %s43, %s45
      %p52 = scmp.eq.s32.totalorder %s14, 1
      %p53 = por %p51, %p52
      %p54 = scmp.ne.s32.totalorder %s45, %s46
      %p55 = scmp.eq.s32.totalorder %s14, 0
      %p56 = por %p54, %p55
      %p57 = scmp.ne.s32.totalorder %s45, %s46
      %p58 = scmp.eq.s32.totalorder %s15, 1
      %p59 = por %p57, %p58
      %p61 = scmp.ne.s32.totalorder %s46, %s60
      %p62 = scmp.eq.s32.totalorder %s15, 0
      %p63 = por %p61, %p62
      %s65 = sadd.s32 %s64, 1
      %p68 = scmp.eq.s32.totalorder %s9, 1
      %p69 = scmp.ne.s32.totalorder %s64, %s66
      %p70 = scmp.eq.s32.totalorder %s9, 0
      %p71 = por %p69, %p70
      %p72 = scmp.ne.s32.totalorder %s64, %s66
      %p73 = scmp.eq.s32.totalorder %s14, 1
      %p74 = por %p72, %p73
      %p75 = scmp.ne.s32.totalorder %s66, %s67
      %p76 = scmp.eq.s32.totalorder %s14, 0
      %p77 = por %p75, %p76
      %p78 = scmp.ne.s32.totalorder %s66, %s67
      %p79 = scmp.eq.s32.totalorder %s15, 1
      %p80 = por %p78, %p79
      %p82 = scmp.ne.s32.totalorder %s67, %s81
      %p83 = scmp.eq.s32.totalorder %s15, 0
      %p84 = por %p82, %p83
      %s85 = ssub.s32 %s9, %s16
      %p86 = scmp.eq.s32.totalorder %s85, 0
      %s88 = sadd.s32 %s87, 1
      %s89 = scalar_select %p86, %s87, %s88
      %p92 = pneg %p86
      %p93 = scmp.eq.s32.totalorder %s9, 1
      %p94 = por %p92, %p93
      %p95 = scmp.ne.s32.totalorder %s87, %s90
      %p96 = scmp.eq.s32.totalorder %s9, 0
      %p97 = por %p95, %p96
      %p98 = scmp.ne.s32.totalorder %s87, %s90
      %p99 = scmp.eq.s32.totalorder %s14, 1
      %p100 = por %p98, %p99
      %p101 = scmp.ne.s32.totalorder %s90, %s91
      %p102 = scmp.eq.s32.totalorder %s14, 0
      %p103 = por %p101, %p102
      %p104 = scmp.ne.s32.totalorder %s90, %s91
      %p105 = scmp.eq.s32.totalorder %s15, 1
      %p106 = por %p104, %p105
      %p108 = scmp.ne.s32.totalorder %s91, %s107
      %p109 = scmp.eq.s32.totalorder %s15, 0
      %p110 = por %p108, %p109
      %p111 = scmp.le.s32.totalorder 1, %s9
      %p112 = scmp.lt.s32.totalorder %s9, 3
      %p113 = pnand %p111, %p112
      %p114 = pneg %p113
      // Predicated region
      $region9: #{lenet5_bn_forward.6} parent=5 // pred_check
        _
      $region10: #{lenet5_bn_forward.6} parent=5 // pred_check_branch
        %116 = sbr.rel (%p113) target = $region12
      $region11: #{lenet5_bn_forward.6} parent=5 // pred_region
        %s117 = ssub.s32 %s9, 1
        // Predicated region
        $region13: #{lenet5_bn_forward.6} parent=11 // pred_check
          %p118 = pneg %p56
        $region14: #{lenet5_bn_forward.6} parent=11 // pred_check_branch
          %120 = sbr.rel (%p118) target = $region16
        $region15: #{lenet5_bn_forward.6} parent=11 // pred_region
          _
        $region16: #{lenet5_bn_forward.6} parent=11 // pred_fallthru
          _
        // Predicated region
        $region17: #{lenet5_bn_forward.6} parent=11 // pred_check
          %p121 = pneg %p77
        $region18: #{lenet5_bn_forward.6} parent=11 // pred_check_branch
          %123 = sbr.rel (%p121) target = $region20
        $region19: #{lenet5_bn_forward.6} parent=11 // pred_region
          _
        $region20: #{lenet5_bn_forward.6} parent=11 // pred_fallthru
          _
      $region12: #{lenet5_bn_forward.6} parent=5 // pred_fallthru
        _
      %p124 = scmp.lt.s32.totalorder %s9, 2
      // Predicated region
      $region21: #{lenet5_bn_forward.6} parent=5 // pred_check
        %p125 = pneg %p124
      $region22: #{lenet5_bn_forward.6} parent=5 // pred_check_branch
        %127 = sbr.rel (%p125) target = $region24
      $region23: #{lenet5_bn_forward.6} parent=5 // pred_region
        // Predicated region
        $region25: #{lenet5_bn_forward.6} parent=23 // pred_check
          %p128 = pneg %p29
        $region26: #{lenet5_bn_forward.6} parent=23 // pred_check_branch
          %130 = sbr.rel (%p128) target = $region28
        $region27: #{lenet5_bn_forward.6} parent=23 // pred_region
          %s131 = sand.u32 %s19, 1
          %s132 = sand.u32 %s19, 1
          %s133 = smul.addr %s132, 416
          %s134 = scalar_lea.vmem [#allocation2], %s133
          %s135 = smul.u32 26, %s9
          %s136 = smul.addr %s135, 4
          %s137 = scalar_lea.vmem %s0, %s136
          // Predicated region
          $region29: #{lenet5_bn_forward.6} parent=27 // pred_check
            _
          $region30: #{lenet5_bn_forward.6} parent=27 // pred_check_branch
            %139 = sbr.rel (0) target = $region32
          $region31: #{lenet5_bn_forward.6} parent=27 // pred_region
            // Predicated region
            $region33: #{lenet5_bn_forward.6} parent=31 // pred_check
              _
            $region34: #{lenet5_bn_forward.6} parent=31 // pred_check_branch
              %141 = sbr.rel target = $region36
            $region35: #{lenet5_bn_forward.6} parent=31 // pred_region
              // Predicated region
              $region48: #{lenet5_bn_forward.6} parent=35 // pred_check
                _
              $region49: #{lenet5_bn_forward.6} parent=35 // pred_check_branch
                %362 = sbr.rel (0) target = $region51
              $region50: #{lenet5_bn_forward.6} parent=35 // pred_region
                loop: start=0, step=1, limit=1
                $region52: #{lenet5_bn_forward.6} parent=50 // loop_pre_header
                  _
                $region53: #{lenet5_bn_forward.6} parent=50 // loop_header
                  %s364 = sphi 0, %s368
                  %p365 = scmp.ge.s32.totalorder %s364, 1
                  %s369 = sphi %s137, %s137
                  %s370 = sphi %s134, %s134
                $region54: #{lenet5_bn_forward.6} parent=50 // loop_header_branch
                  %367 = sbr.rel (%p365) target = $region58
                $region55: #{lenet5_bn_forward.6} parent=50 // loop_body
                  _
                $region56: #{lenet5_bn_forward.6} parent=50 // loop_footer
                  %s368 = sadd.s32 1, %s364
                $region57: #{lenet5_bn_forward.6} parent=50 // loop_footer_branch
                  %363 = sbr.rel target = $region53
                $region58: #{lenet5_bn_forward.6} parent=50 // loop_exit
                  _
                loop: start=0, step=1, limit=1
                $region59: #{lenet5_bn_forward.6} parent=50 // loop_pre_header
                  _
                $region60: #{lenet5_bn_forward.6} parent=50 // loop_header
                  %s373 = sphi 0, %s377
                  %p374 = scmp.ge.s32.totalorder %s373, 1
                  %s378 = sphi %s137, %s137
                  %s379 = sphi %s134, %s134
                $region61: #{lenet5_bn_forward.6} parent=50 // loop_header_branch
                  %376 = sbr.rel (%p374) target = $region65
                $region62: #{lenet5_bn_forward.6} parent=50 // loop_body
                  %v380 = vld [vmem:[%s378] sm:$0xf]
                  %381 = vst [vmem:[%s379] sm:$0xf] %v380
                  %v382 = vld [vmem:[%s378 + $0x4] sm:$0xf]
                  %383 = vst [vmem:[%s379 + $0x4] sm:$0xf] %v382
                  %v384 = vld [vmem:[%s378 + $0x8] sm:$0xf]
                  %385 = vst [vmem:[%s379 + $0x8] sm:$0xf] %v384
                  %v386 = vld [vmem:[%s378 + $0xc] sm:$0xf]
                  %387 = vst [vmem:[%s379 + $0xc] sm:$0xf] %v386
                  %v388 = vld [vmem:[%s378 + $0x10] sm:$0xf]
                  %389 = vst [vmem:[%s379 + $0x10] sm:$0xf] %v388
                  %v390 = vld [vmem:[%s378 + $0x14] sm:$0xf]
                  %391 = vst [vmem:[%s379 + $0x14] sm:$0xf] %v390
                  %v392 = vld [vmem:[%s378 + $0x18] sm:$0xf]
                  %393 = vst [vmem:[%s379 + $0x18] sm:$0xf] %v392
                  %v394 = vld [vmem:[%s378 + $0x1c] sm:$0xf]
                  %395 = vst [vmem:[%s379 + $0x1c] sm:$0xf] %v394
                  %v396 = vld [vmem:[%s378 + $0x20] sm:$0xf]
                  %397 = vst [vmem:[%s379 + $0x20] sm:$0xf] %v396
                  %v398 = vld [vmem:[%s378 + $0x24] sm:$0xf]
                  %399 = vst [vmem:[%s379 + $0x24] sm:$0xf] %v398
                  %v400 = vld [vmem:[%s378 + $0x28] sm:$0xf]
                  %401 = vst [vmem:[%s379 + $0x28] sm:$0xf] %v400
                  %v402 = vld [vmem:[%s378 + $0x2c] sm:$0xf]
                  %403 = vst [vmem:[%s379 + $0x2c] sm:$0xf] %v402
                  %v404 = vld [vmem:[%s378 + $0x30] sm:$0xf]
                  %405 = vst [vmem:[%s379 + $0x30] sm:$0xf] %v404
                  %v406 = vld [vmem:[%s378 + $0x34] sm:$0xf]
                  %407 = vst [vmem:[%s379 + $0x34] sm:$0xf] %v406
                  %v408 = vld [vmem:[%s378 + $0x38] sm:$0xf]
                  %409 = vst [vmem:[%s379 + $0x38] sm:$0xf] %v408
                  %v410 = vld [vmem:[%s378 + $0x3c] sm:$0xf]
                  %411 = vst [vmem:[%s379 + $0x3c] sm:$0xf] %v410
                  %v412 = vld [vmem:[%s378 + $0x40] sm:$0xf]
                  %413 = vst [vmem:[%s379 + $0x40] sm:$0xf] %v412
                  %v414 = vld [vmem:[%s378 + $0x44] sm:$0xf]
                  %415 = vst [vmem:[%s379 + $0x44] sm:$0xf] %v414
                  %v416 = vld [vmem:[%s378 + $0x48] sm:$0xf]
                  %417 = vst [vmem:[%s379 + $0x48] sm:$0xf] %v416
                  %v418 = vld [vmem:[%s378 + $0x4c] sm:$0xf]
                  %419 = vst [vmem:[%s379 + $0x4c] sm:$0xf] %v418
                  %v420 = vld [vmem:[%s378 + $0x50] sm:$0xf]
                  %421 = vst [vmem:[%s379 + $0x50] sm:$0xf] %v420
                  %v422 = vld [vmem:[%s378 + $0x54] sm:$0xf]
                  %423 = vst [vmem:[%s379 + $0x54] sm:$0xf] %v422
                  %v424 = vld [vmem:[%s378 + $0x58] sm:$0xf]
                  %425 = vst [vmem:[%s379 + $0x58] sm:$0xf] %v424
                  %v426 = vld [vmem:[%s378 + $0x5c] sm:$0xf]
                  %427 = vst [vmem:[%s379 + $0x5c] sm:$0xf] %v426
                  %v428 = vld [vmem:[%s378 + $0x60] sm:$0xf]
                  %429 = vst [vmem:[%s379 + $0x60] sm:$0xf] %v428
                  %v430 = vld [vmem:[%s378 + $0x64] sm:$0xf]
                  %431 = vst [vmem:[%s379 + $0x64] sm:$0xf] %v430
                  %v432 = vld [vmem:[%s378 + $0xd0] sm:$0xf]
                  %433 = vst [vmem:[%s379 + $0x68] sm:$0xf] %v432
                  %v434 = vld [vmem:[%s378 + $0xd4] sm:$0xf]
                  %435 = vst [vmem:[%s379 + $0x6c] sm:$0xf] %v434
                  %v436 = vld [vmem:[%s378 + $0xd8] sm:$0xf]
                  %437 = vst [vmem:[%s379 + $0x70] sm:$0xf] %v436
                  %v438 = vld [vmem:[%s378 + $0xdc] sm:$0xf]
                  %439 = vst [vmem:[%s379 + $0x74] sm:$0xf] %v438
                  %v440 = vld [vmem:[%s378 + $0xe0] sm:$0xf]
                  %441 = vst [vmem:[%s379 + $0x78] sm:$0xf] %v440
                  %v442 = vld [vmem:[%s378 + $0xe4] sm:$0xf]
                  %443 = vst [vmem:[%s379 + $0x7c] sm:$0xf] %v442
                  %v444 = vld [vmem:[%s378 + $0xe8] sm:$0xf]
                  %445 = vst [vmem:[%s379 + $0x80] sm:$0xf] %v444
                  %v446 = vld [vmem:[%s378 + $0xec] sm:$0xf]
                  %447 = vst [vmem:[%s379 + $0x84] sm:$0xf] %v446
                  %v448 = vld [vmem:[%s378 + $0xf0] sm:$0xf]
                  %449 = vst [vmem:[%s379 + $0x88] sm:$0xf] %v448
                  %v450 = vld [vmem:[%s378 + $0xf4] sm:$0xf]
                  %451 = vst [vmem:[%s379 + $0x8c] sm:$0xf] %v450
                  %v452 = vld [vmem:[%s378 + $0xf8] sm:$0xf]
                  %453 = vst [vmem:[%s379 + $0x90] sm:$0xf] %v452
                  %v454 = vld [vmem:[%s378 + $0xfc] sm:$0xf]
                  %455 = vst [vmem:[%s379 + $0x94] sm:$0xf] %v454
                  %v456 = vld [vmem:[%s378 + $0x100] sm:$0xf]
                  %457 = vst [vmem:[%s379 + $0x98] sm:$0xf] %v456
                  %v458 = vld [vmem:[%s378 + $0x104] sm:$0xf]
                  %459 = vst [vmem:[%s379 + $0x9c] sm:$0xf] %v458
                  %v460 = vld [vmem:[%s378 + $0x108] sm:$0xf]
                  %461 = vst [vmem:[%s379 + $0xa0] sm:$0xf] %v460
                  %v462 = vld [vmem:[%s378 + $0x10c] sm:$0xf]
                  %463 = vst [vmem:[%s379 + $0xa4] sm:$0xf] %v462
                  %v464 = vld [vmem:[%s378 + $0x110] sm:$0xf]
                  %465 = vst [vmem:[%s379 + $0xa8] sm:$0xf] %v464
                  %v466 = vld [vmem:[%s378 + $0x114] sm:$0xf]
                  %467 = vst [vmem:[%s379 + $0xac] sm:$0xf] %v466
                  %v468 = vld [vmem:[%s378 + $0x118] sm:$0xf]
                  %469 = vst [vmem:[%s379 + $0xb0] sm:$0xf] %v468
                  %v470 = vld [vmem:[%s378 + $0x11c] sm:$0xf]
                  %471 = vst [vmem:[%s379 + $0xb4] sm:$0xf] %v470
                  %v472 = vld [vmem:[%s378 + $0x120] sm:$0xf]
                  %473 = vst [vmem:[%s379 + $0xb8] sm:$0xf] %v472
                  %v474 = vld [vmem:[%s378 + $0x124] sm:$0xf]
                  %475 = vst [vmem:[%s379 + $0xbc] sm:$0xf] %v474
                  %v476 = vld [vmem:[%s378 + $0x128] sm:$0xf]
                  %477 = vst [vmem:[%s379 + $0xc0] sm:$0xf] %v476
                  %v478 = vld [vmem:[%s378 + $0x12c] sm:$0xf]
                  %479 = vst [vmem:[%s379 + $0xc4] sm:$0xf] %v478
                  %v480 = vld [vmem:[%s378 + $0x130] sm:$0xf]
                  %481 = vst [vmem:[%s379 + $0xc8] sm:$0xf] %v480
                  %v482 = vld [vmem:[%s378 + $0x134] sm:$0xf]
                  %483 = vst [vmem:[%s379 + $0xcc] sm:$0xf] %v482
                  %v484 = vld [vmem:[%s378 + $0x1a0] sm:$0xf]
                  %485 = vst [vmem:[%s379 + $0xd0] sm:$0xf] %v484
                  %v486 = vld [vmem:[%s378 + $0x1a4] sm:$0xf]
                  %487 = vst [vmem:[%s379 + $0xd4] sm:$0xf] %v486
                  %v488 = vld [vmem:[%s378 + $0x1a8] sm:$0xf]
                  %489 = vst [vmem:[%s379 + $0xd8] sm:$0xf] %v488
                  %v490 = vld [vmem:[%s378 + $0x1ac] sm:$0xf]
                  %491 = vst [vmem:[%s379 + $0xdc] sm:$0xf] %v490
                  %v492 = vld [vmem:[%s378 + $0x1b0] sm:$0xf]
                  %493 = vst [vmem:[%s379 + $0xe0] sm:$0xf] %v492
                  %v494 = vld [vmem:[%s378 + $0x1b4] sm:$0xf]
                  %495 = vst [vmem:[%s379 + $0xe4] sm:$0xf] %v494
                  %v496 = vld [vmem:[%s378 + $0x1b8] sm:$0xf]
                  %497 = vst [vmem:[%s379 + $0xe8] sm:$0xf] %v496
                  %v498 = vld [vmem:[%s378 + $0x1bc] sm:$0xf]
                  %499 = vst [vmem:[%s379 + $0xec] sm:$0xf] %v498
                  %v500 = vld [vmem:[%s378 + $0x1c0] sm:$0xf]
                  %501 = vst [vmem:[%s379 + $0xf0] sm:$0xf] %v500
                  %v502 = vld [vmem:[%s378 + $0x1c4] sm:$0xf]
                  %503 = vst [vmem:[%s379 + $0xf4] sm:$0xf] %v502
                  %v504 = vld [vmem:[%s378 + $0x1c8] sm:$0xf]
                  %505 = vst [vmem:[%s379 + $0xf8] sm:$0xf] %v504
                  %v506 = vld [vmem:[%s378 + $0x1cc] sm:$0xf]
                  %507 = vst [vmem:[%s379 + $0xfc] sm:$0xf] %v506
                  %v508 = vld [vmem:[%s378 + $0x1d0] sm:$0xf]
                  %509 = vst [vmem:[%s379 + $0x100] sm:$0xf] %v508
                  %v510 = vld [vmem:[%s378 + $0x1d4] sm:$0xf]
                  %511 = vst [vmem:[%s379 + $0x104] sm:$0xf] %v510
                  %v512 = vld [vmem:[%s378 + $0x1d8] sm:$0xf]
                  %513 = vst [vmem:[%s379 + $0x108] sm:$0xf] %v512
                  %v514 = vld [vmem:[%s378 + $0x1dc] sm:$0xf]
                  %515 = vst [vmem:[%s379 + $0x10c] sm:$0xf] %v514
                  %v516 = vld [vmem:[%s378 + $0x1e0] sm:$0xf]
                  %517 = vst [vmem:[%s379 + $0x110] sm:$0xf] %v516
                  %v518 = vld [vmem:[%s378 + $0x1e4] sm:$0xf]
                  %519 = vst [vmem:[%s379 + $0x114] sm:$0xf] %v518
                  %v520 = vld [vmem:[%s378 + $0x1e8] sm:$0xf]
                  %521 = vst [vmem:[%s379 + $0x118] sm:$0xf] %v520
                  %v522 = vld [vmem:[%s378 + $0x1ec] sm:$0xf]
                  %523 = vst [vmem:[%s379 + $0x11c] sm:$0xf] %v522
                  %v524 = vld [vmem:[%s378 + $0x1f0] sm:$0xf]
                  %525 = vst [vmem:[%s379 + $0x120] sm:$0xf] %v524
                  %v526 = vld [vmem:[%s378 + $0x1f4] sm:$0xf]
                  %527 = vst [vmem:[%s379 + $0x124] sm:$0xf] %v526
                  %v528 = vld [vmem:[%s378 + $0x1f8] sm:$0xf]
                  %529 = vst [vmem:[%s379 + $0x128] sm:$0xf] %v528
                  %v530 = vld [vmem:[%s378 + $0x1fc] sm:$0xf]
                  %531 = vst [vmem:[%s379 + $0x12c] sm:$0xf] %v530
                  %v532 = vld [vmem:[%s378 + $0x200] sm:$0xf]
                  %533 = vst [vmem:[%s379 + $0x130] sm:$0xf] %v532
                  %v534 = vld [vmem:[%s378 + $0x204] sm:$0xf]
                  %535 = vst [vmem:[%s379 + $0x134] sm:$0xf] %v534
                  %v536 = vld [vmem:[%s378 + $0x270] sm:$0xf]
                  %537 = vst [vmem:[%s379 + $0x138] sm:$0xf] %v536
                  %v538 = vld [vmem:[%s378 + $0x274] sm:$0xf]
                  %539 = vst [vmem:[%s379 + $0x13c] sm:$0xf] %v538
                  %v540 = vld [vmem:[%s378 + $0x278] sm:$0xf]
                  %541 = vst [vmem:[%s379 + $0x140] sm:$0xf] %v540
                  %v542 = vld [vmem:[%s378 + $0x27c] sm:$0xf]
                  %543 = vst [vmem:[%s379 + $0x144] sm:$0xf] %v542
                  %v544 = vld [vmem:[%s378 + $0x280] sm:$0xf]
                  %545 = vst [vmem:[%s379 + $0x148] sm:$0xf] %v544
                  %v546 = vld [vmem:[%s378 + $0x284] sm:$0xf]
                  %547 = vst [vmem:[%s379 + $0x14c] sm:$0xf] %v546
                  %v548 = vld [vmem:[%s378 + $0x288] sm:$0xf]
                  %549 = vst [vmem:[%s379 + $0x150] sm:$0xf] %v548
                  %v550 = vld [vmem:[%s378 + $0x28c] sm:$0xf]
                  %551 = vst [vmem:[%s379 + $0x154] sm:$0xf] %v550
                  %v552 = vld [vmem:[%s378 + $0x290] sm:$0xf]
                  %553 = vst [vmem:[%s379 + $0x158] sm:$0xf] %v552
                  %v554 = vld [vmem:[%s378 + $0x294] sm:$0xf]
                  %555 = vst [vmem:[%s379 + $0x15c] sm:$0xf] %v554
                  %v556 = vld [vmem:[%s378 + $0x298] sm:$0xf]
                  %557 = vst [vmem:[%s379 + $0x160] sm:$0xf] %v556
                  %v558 = vld [vmem:[%s378 + $0x29c] sm:$0xf]
                  %559 = vst [vmem:[%s379 + $0x164] sm:$0xf] %v558
                  %v560 = vld [vmem:[%s378 + $0x2a0] sm:$0xf]
                  %561 = vst [vmem:[%s379 + $0x168] sm:$0xf] %v560
                  %v562 = vld [vmem:[%s378 + $0x2a4] sm:$0xf]
                  %563 = vst [vmem:[%s379 + $0x16c] sm:$0xf] %v562
                  %v564 = vld [vmem:[%s378 + $0x2a8] sm:$0xf]
                  %565 = vst [vmem:[%s379 + $0x170] sm:$0xf] %v564
                  %v566 = vld [vmem:[%s378 + $0x2ac] sm:$0xf]
                  %567 = vst [vmem:[%s379 + $0x174] sm:$0xf] %v566
                  %v568 = vld [vmem:[%s378 + $0x2b0] sm:$0xf]
                  %569 = vst [vmem:[%s379 + $0x178] sm:$0xf] %v568
                  %v570 = vld [vmem:[%s378 + $0x2b4] sm:$0xf]
                  %571 = vst [vmem:[%s379 + $0x17c] sm:$0xf] %v570
                  %v572 = vld [vmem:[%s378 + $0x2b8] sm:$0xf]
                  %573 = vst [vmem:[%s379 + $0x180] sm:$0xf] %v572
                  %v574 = vld [vmem:[%s378 + $0x2bc] sm:$0xf]
                  %575 = vst [vmem:[%s379 + $0x184] sm:$0xf] %v574
                  %v576 = vld [vmem:[%s378 + $0x2c0] sm:$0xf]
                  %577 = vst [vmem:[%s379 + $0x188] sm:$0xf] %v576
                  %v578 = vld [vmem:[%s378 + $0x2c4] sm:$0xf]
                  %579 = vst [vmem:[%s379 + $0x18c] sm:$0xf] %v578
                  %v580 = vld [vmem:[%s378 + $0x2c8] sm:$0xf]
                  %581 = vst [vmem:[%s379 + $0x190] sm:$0xf] %v580
                  %v582 = vld [vmem:[%s378 + $0x2cc] sm:$0xf]
                  %583 = vst [vmem:[%s379 + $0x194] sm:$0xf] %v582
                  %v584 = vld [vmem:[%s378 + $0x2d0] sm:$0xf]
                  %585 = vst [vmem:[%s379 + $0x198] sm:$0xf] %v584
                  %v586 = vld [vmem:[%s378 + $0x2d4] sm:$0xf]
                  %587 = vst [vmem:[%s379 + $0x19c] sm:$0xf] %v586
                $region63: #{lenet5_bn_forward.6} parent=50 // loop_footer
                  %s377 = sadd.s32 1, %s373
                $region64: #{lenet5_bn_forward.6} parent=50 // loop_footer_branch
                  %372 = sbr.rel target = $region60
                $region65: #{lenet5_bn_forward.6} parent=50 // loop_exit
                  _
              $region51: #{lenet5_bn_forward.6} parent=35 // pred_fallthru
                _
            $region36: #{lenet5_bn_forward.6} parent=31 // pred_fallthru
              _
            // Predicated region
            $region37: #{lenet5_bn_forward.6} parent=31 // pred_check
              _
            $region38: #{lenet5_bn_forward.6} parent=31 // pred_check_branch
              %143 = sbr.rel (0) target = $region40
            $region39: #{lenet5_bn_forward.6} parent=31 // pred_region
              loop: start=0, step=1, limit=1
              $region41: #{lenet5_bn_forward.6} parent=39 // loop_pre_header
                _
              $region42: #{lenet5_bn_forward.6} parent=39 // loop_header
                %s146 = sphi 0, %s150
                %p147 = scmp.ge.s32.totalorder %s146, 1
                %s151 = sphi %s137, %s137
                %s152 = sphi %s134, %s134
              $region43: #{lenet5_bn_forward.6} parent=39 // loop_header_branch
                %149 = sbr.rel (%p147) target = $region47
              $region44: #{lenet5_bn_forward.6} parent=39 // loop_body
                %v153 = vld [vmem:[%s151] sm:$0xf]
                %154 = vst [vmem:[%s152] sm:$0xf] %v153
                %v155 = vld [vmem:[%s151 + $0x4] sm:$0xf]
                %156 = vst [vmem:[%s152 + $0x4] sm:$0xf] %v155
                %v157 = vld [vmem:[%s151 + $0x8] sm:$0xf]
                %158 = vst [vmem:[%s152 + $0x8] sm:$0xf] %v157
                %v159 = vld [vmem:[%s151 + $0xc] sm:$0xf]
                %160 = vst [vmem:[%s152 + $0xc] sm:$0xf] %v159
                %v161 = vld [vmem:[%s151 + $0x10] sm:$0xf]
                %162 = vst [vmem:[%s152 + $0x10] sm:$0xf] %v161
                %v163 = vld [vmem:[%s151 + $0x14] sm:$0xf]
                %164 = vst [vmem:[%s152 + $0x14] sm:$0xf] %v163
                %v165 = vld [vmem:[%s151 + $0x18] sm:$0xf]
                %166 = vst [vmem:[%s152 + $0x18] sm:$0xf] %v165
                %v167 = vld [vmem:[%s151 + $0x1c] sm:$0xf]
                %168 = vst [vmem:[%s152 + $0x1c] sm:$0xf] %v167
                %v169 = vld [vmem:[%s151 + $0x20] sm:$0xf]
                %170 = vst [vmem:[%s152 + $0x20] sm:$0xf] %v169
                %v171 = vld [vmem:[%s151 + $0x24] sm:$0xf]
                %172 = vst [vmem:[%s152 + $0x24] sm:$0xf] %v171
                %v173 = vld [vmem:[%s151 + $0x28] sm:$0xf]
                %174 = vst [vmem:[%s152 + $0x28] sm:$0xf] %v173
                %v175 = vld [vmem:[%s151 + $0x2c] sm:$0xf]
                %176 = vst [vmem:[%s152 + $0x2c] sm:$0xf] %v175
                %v177 = vld [vmem:[%s151 + $0x30] sm:$0xf]
                %178 = vst [vmem:[%s152 + $0x30] sm:$0xf] %v177
                %v179 = vld [vmem:[%s151 + $0x34] sm:$0xf]
                %180 = vst [vmem:[%s152 + $0x34] sm:$0xf] %v179
                %v181 = vld [vmem:[%s151 + $0x38] sm:$0xf]
                %182 = vst [vmem:[%s152 + $0x38] sm:$0xf] %v181
                %v183 = vld [vmem:[%s151 + $0x3c] sm:$0xf]
                %184 = vst [vmem:[%s152 + $0x3c] sm:$0xf] %v183
                %v185 = vld [vmem:[%s151 + $0x40] sm:$0xf]
                %186 = vst [vmem:[%s152 + $0x40] sm:$0xf] %v185
                %v187 = vld [vmem:[%s151 + $0x44] sm:$0xf]
                %188 = vst [vmem:[%s152 + $0x44] sm:$0xf] %v187
                %v189 = vld [vmem:[%s151 + $0x48] sm:$0xf]
                %190 = vst [vmem:[%s152 + $0x48] sm:$0xf] %v189
                %v191 = vld [vmem:[%s151 + $0x4c] sm:$0xf]
                %192 = vst [vmem:[%s152 + $0x4c] sm:$0xf] %v191
                %v193 = vld [vmem:[%s151 + $0x50] sm:$0xf]
                %194 = vst [vmem:[%s152 + $0x50] sm:$0xf] %v193
                %v195 = vld [vmem:[%s151 + $0x54] sm:$0xf]
                %196 = vst [vmem:[%s152 + $0x54] sm:$0xf] %v195
                %v197 = vld [vmem:[%s151 + $0x58] sm:$0xf]
                %198 = vst [vmem:[%s152 + $0x58] sm:$0xf] %v197
                %v199 = vld [vmem:[%s151 + $0x5c] sm:$0xf]
                %200 = vst [vmem:[%s152 + $0x5c] sm:$0xf] %v199
                %v201 = vld [vmem:[%s151 + $0x60] sm:$0xf]
                %202 = vst [vmem:[%s152 + $0x60] sm:$0xf] %v201
                %v203 = vld [vmem:[%s151 + $0x64] sm:$0xf]
                %204 = vst [vmem:[%s152 + $0x64] sm:$0xf] %v203
                %v205 = vld [vmem:[%s151 + $0xd0] sm:$0xf]
                %206 = vst [vmem:[%s152 + $0x68] sm:$0xf] %v205
                %v207 = vld [vmem:[%s151 + $0xd4] sm:$0xf]
                %208 = vst [vmem:[%s152 + $0x6c] sm:$0xf] %v207
                %v209 = vld [vmem:[%s151 + $0xd8] sm:$0xf]
                %210 = vst [vmem:[%s152 + $0x70] sm:$0xf] %v209
                %v211 = vld [vmem:[%s151 + $0xdc] sm:$0xf]
                %212 = vst [vmem:[%s152 + $0x74] sm:$0xf] %v211
                %v213 = vld [vmem:[%s151 + $0xe0] sm:$0xf]
                %214 = vst [vmem:[%s152 + $0x78] sm:$0xf] %v213
                %v215 = vld [vmem:[%s151 + $0xe4] sm:$0xf]
                %216 = vst [vmem:[%s152 + $0x7c] sm:$0xf] %v215
                %v217 = vld [vmem:[%s151 + $0xe8] sm:$0xf]
                %218 = vst [vmem:[%s152 + $0x80] sm:$0xf] %v217
                %v219 = vld [vmem:[%s151 + $0xec] sm:$0xf]
                %220 = vst [vmem:[%s152 + $0x84] sm:$0xf] %v219
                %v221 = vld [vmem:[%s151 + $0xf0] sm:$0xf]
                %222 = vst [vmem:[%s152 + $0x88] sm:$0xf] %v221
                %v223 = vld [vmem:[%s151 + $0xf4] sm:$0xf]
                %224 = vst [vmem:[%s152 + $0x8c] sm:$0xf] %v223
                %v225 = vld [vmem:[%s151 + $0xf8] sm:$0xf]
                %226 = vst [vmem:[%s152 + $0x90] sm:$0xf] %v225
                %v227 = vld [vmem:[%s151 + $0xfc] sm:$0xf]
                %228 = vst [vmem:[%s152 + $0x94] sm:$0xf] %v227
                %v229 = vld [vmem:[%s151 + $0x100] sm:$0xf]
                %230 = vst [vmem:[%s152 + $0x98] sm:$0xf] %v229
                %v231 = vld [vmem:[%s151 + $0x104] sm:$0xf]
                %232 = vst [vmem:[%s152 + $0x9c] sm:$0xf] %v231
                %v233 = vld [vmem:[%s151 + $0x108] sm:$0xf]
                %234 = vst [vmem:[%s152 + $0xa0] sm:$0xf] %v233
                %v235 = vld [vmem:[%s151 + $0x10c] sm:$0xf]
                %236 = vst [vmem:[%s152 + $0xa4] sm:$0xf] %v235
                %v237 = vld [vmem:[%s151 + $0x110] sm:$0xf]
                %238 = vst [vmem:[%s152 + $0xa8] sm:$0xf] %v237
                %v239 = vld [vmem:[%s151 + $0x114] sm:$0xf]
                %240 = vst [vmem:[%s152 + $0xac] sm:$0xf] %v239
                %v241 = vld [vmem:[%s151 + $0x118] sm:$0xf]
                %242 = vst [vmem:[%s152 + $0xb0] sm:$0xf] %v241
                %v243 = vld [vmem:[%s151 + $0x11c] sm:$0xf]
                %244 = vst [vmem:[%s152 + $0xb4] sm:$0xf] %v243
                %v245 = vld [vmem:[%s151 + $0x120] sm:$0xf]
                %246 = vst [vmem:[%s152 + $0xb8] sm:$0xf] %v245
                %v247 = vld [vmem:[%s151 + $0x124] sm:$0xf]
                %248 = vst [vmem:[%s152 + $0xbc] sm:$0xf] %v247
                %v249 = vld [vmem:[%s151 + $0x128] sm:$0xf]
                %250 = vst [vmem:[%s152 + $0xc0] sm:$0xf] %v249
                %v251 = vld [vmem:[%s151 + $0x12c] sm:$0xf]
                %252 = vst [vmem:[%s152 + $0xc4] sm:$0xf] %v251
                %v253 = vld [vmem:[%s151 + $0x130] sm:$0xf]
                %254 = vst [vmem:[%s152 + $0xc8] sm:$0xf] %v253
                %v255 = vld [vmem:[%s151 + $0x134] sm:$0xf]
                %256 = vst [vmem:[%s152 + $0xcc] sm:$0xf] %v255
                %v257 = vld [vmem:[%s151 + $0x1a0] sm:$0xf]
                %258 = vst [vmem:[%s152 + $0xd0] sm:$0xf] %v257
                %v259 = vld [vmem:[%s151 + $0x1a4] sm:$0xf]
                %260 = vst [vmem:[%s152 + $0xd4] sm:$0xf] %v259
                %v261 = vld [vmem:[%s151 + $0x1a8] sm:$0xf]
                %262 = vst [vmem:[%s152 + $0xd8] sm:$0xf] %v261
                %v263 = vld [vmem:[%s151 + $0x1ac] sm:$0xf]
                %264 = vst [vmem:[%s152 + $0xdc] sm:$0xf] %v263
                %v265 = vld [vmem:[%s151 + $0x1b0] sm:$0xf]
                %266 = vst [vmem:[%s152 + $0xe0] sm:$0xf] %v265
                %v267 = vld [vmem:[%s151 + $0x1b4] sm:$0xf]
                %268 = vst [vmem:[%s152 + $0xe4] sm:$0xf] %v267
                %v269 = vld [vmem:[%s151 + $0x1b8] sm:$0xf]
                %270 = vst [vmem:[%s152 + $0xe8] sm:$0xf] %v269
                %v271 = vld [vmem:[%s151 + $0x1bc] sm:$0xf]
                %272 = vst [vmem:[%s152 + $0xec] sm:$0xf] %v271
                %v273 = vld [vmem:[%s151 + $0x1c0] sm:$0xf]
                %274 = vst [vmem:[%s152 + $0xf0] sm:$0xf] %v273
                %v275 = vld [vmem:[%s151 + $0x1c4] sm:$0xf]
                %276 = vst [vmem:[%s152 + $0xf4] sm:$0xf] %v275
                %v277 = vld [vmem:[%s151 + $0x1c8] sm:$0xf]
                %278 = vst [vmem:[%s152 + $0xf8] sm:$0xf] %v277
                %v279 = vld [vmem:[%s151 + $0x1cc] sm:$0xf]
                %280 = vst [vmem:[%s152 + $0xfc] sm:$0xf] %v279
                %v281 = vld [vmem:[%s151 + $0x1d0] sm:$0xf]
                %282 = vst [vmem:[%s152 + $0x100] sm:$0xf] %v281
                %v283 = vld [vmem:[%s151 + $0x1d4] sm:$0xf]
                %284 = vst [vmem:[%s152 + $0x104] sm:$0xf] %v283
                %v285 = vld [vmem:[%s151 + $0x1d8] sm:$0xf]
                %286 = vst [vmem:[%s152 + $0x108] sm:$0xf] %v285
                %v287 = vld [vmem:[%s151 + $0x1dc] sm:$0xf]
                %288 = vst [vmem:[%s152 + $0x10c] sm:$0xf] %v287
                %v289 = vld [vmem:[%s151 + $0x1e0] sm:$0xf]
                %290 = vst [vmem:[%s152 + $0x110] sm:$0xf] %v289
                %v291 = vld [vmem:[%s151 + $0x1e4] sm:$0xf]
                %292 = vst [vmem:[%s152 + $0x114] sm:$0xf] %v291
                %v293 = vld [vmem:[%s151 + $0x1e8] sm:$0xf]
                %294 = vst [vmem:[%s152 + $0x118] sm:$0xf] %v293
                %v295 = vld [vmem:[%s151 + $0x1ec] sm:$0xf]
                %296 = vst [vmem:[%s152 + $0x11c] sm:$0xf] %v295
                %v297 = vld [vmem:[%s151 + $0x1f0] sm:$0xf]
                %298 = vst [vmem:[%s152 + $0x120] sm:$0xf] %v297
                %v299 = vld [vmem:[%s151 + $0x1f4] sm:$0xf]
                %300 = vst [vmem:[%s152 + $0x124] sm:$0xf] %v299
                %v301 = vld [vmem:[%s151 + $0x1f8] sm:$0xf]
                %302 = vst [vmem:[%s152 + $0x128] sm:$0xf] %v301
                %v303 = vld [vmem:[%s151 + $0x1fc] sm:$0xf]
                %304 = vst [vmem:[%s152 + $0x12c] sm:$0xf] %v303
                %v305 = vld [vmem:[%s151 + $0x200] sm:$0xf]
                %306 = vst [vmem:[%s152 + $0x130] sm:$0xf] %v305
                %v307 = vld [vmem:[%s151 + $0x204] sm:$0xf]
                %308 = vst [vmem:[%s152 + $0x134] sm:$0xf] %v307
                %v309 = vld [vmem:[%s151 + $0x270] sm:$0xf]
                %310 = vst [vmem:[%s152 + $0x138] sm:$0xf] %v309
                %v311 = vld [vmem:[%s151 + $0x274] sm:$0xf]
                %312 = vst [vmem:[%s152 + $0x13c] sm:$0xf] %v311
                %v313 = vld [vmem:[%s151 + $0x278] sm:$0xf]
                %314 = vst [vmem:[%s152 + $0x140] sm:$0xf] %v313
                %v315 = vld [vmem:[%s151 + $0x27c] sm:$0xf]
                %316 = vst [vmem:[%s152 + $0x144] sm:$0xf] %v315
                %v317 = vld [vmem:[%s151 + $0x280] sm:$0xf]
                %318 = vst [vmem:[%s152 + $0x148] sm:$0xf] %v317
                %v319 = vld [vmem:[%s151 + $0x284] sm:$0xf]
                %320 = vst [vmem:[%s152 + $0x14c] sm:$0xf] %v319
                %v321 = vld [vmem:[%s151 + $0x288] sm:$0xf]
                %322 = vst [vmem:[%s152 + $0x150] sm:$0xf] %v321
                %v323 = vld [vmem:[%s151 + $0x28c] sm:$0xf]
                %324 = vst [vmem:[%s152 + $0x154] sm:$0xf] %v323
                %v325 = vld [vmem:[%s151 + $0x290] sm:$0xf]
                %326 = vst [vmem:[%s152 + $0x158] sm:$0xf] %v325
                %v327 = vld [vmem:[%s151 + $0x294] sm:$0xf]
                %328 = vst [vmem:[%s152 + $0x15c] sm:$0xf] %v327
                %v329 = vld [vmem:[%s151 + $0x298] sm:$0xf]
                %330 = vst [vmem:[%s152 + $0x160] sm:$0xf] %v329
                %v331 = vld [vmem:[%s151 + $0x29c] sm:$0xf]
                %332 = vst [vmem:[%s152 + $0x164] sm:$0xf] %v331
                %v333 = vld [vmem:[%s151 + $0x2a0] sm:$0xf]
                %334 = vst [vmem:[%s152 + $0x168] sm:$0xf] %v333
                %v335 = vld [vmem:[%s151 + $0x2a4] sm:$0xf]
                %336 = vst [vmem:[%s152 + $0x16c] sm:$0xf] %v335
                %v337 = vld [vmem:[%s151 + $0x2a8] sm:$0xf]
                %338 = vst [vmem:[%s152 + $0x170] sm:$0xf] %v337
                %v339 = vld [vmem:[%s151 + $0x2ac] sm:$0xf]
                %340 = vst [vmem:[%s152 + $0x174] sm:$0xf] %v339
                %v341 = vld [vmem:[%s151 + $0x2b0] sm:$0xf]
                %342 = vst [vmem:[%s152 + $0x178] sm:$0xf] %v341
                %v343 = vld [vmem:[%s151 + $0x2b4] sm:$0xf]
                %344 = vst [vmem:[%s152 + $0x17c] sm:$0xf] %v343
                %v345 = vld [vmem:[%s151 + $0x2b8] sm:$0xf]
                %346 = vst [vmem:[%s152 + $0x180] sm:$0xf] %v345
                %v347 = vld [vmem:[%s151 + $0x2bc] sm:$0xf]
                %348 = vst [vmem:[%s152 + $0x184] sm:$0xf] %v347
                %v349 = vld [vmem:[%s151 + $0x2c0] sm:$0xf]
                %350 = vst [vmem:[%s152 + $0x188] sm:$0xf] %v349
                %v351 = vld [vmem:[%s151 + $0x2c4] sm:$0xf]
                %352 = vst [vmem:[%s152 + $0x18c] sm:$0xf] %v351
                %v353 = vld [vmem:[%s151 + $0x2c8] sm:$0xf]
                %354 = vst [vmem:[%s152 + $0x190] sm:$0xf] %v353
                %v355 = vld [vmem:[%s151 + $0x2cc] sm:$0xf]
                %356 = vst [vmem:[%s152 + $0x194] sm:$0xf] %v355
                %v357 = vld [vmem:[%s151 + $0x2d0] sm:$0xf]
                %358 = vst [vmem:[%s152 + $0x198] sm:$0xf] %v357
                %v359 = vld [vmem:[%s151 + $0x2d4] sm:$0xf]
                %360 = vst [vmem:[%s152 + $0x19c] sm:$0xf] %v359
              $region45: #{lenet5_bn_forward.6} parent=39 // loop_footer
                %s150 = sadd.s32 1, %s146
              $region46: #{lenet5_bn_forward.6} parent=39 // loop_footer_branch
                %145 = sbr.rel target = $region42
              $region47: #{lenet5_bn_forward.6} parent=39 // loop_exit
                _
            $region40: #{lenet5_bn_forward.6} parent=31 // pred_fallthru
              _
          $region32: #{lenet5_bn_forward.6} parent=27 // pred_fallthru
            _
          %588 = vnop
        $region28: #{lenet5_bn_forward.6} parent=23 // pred_fallthru
          _
      $region24: #{lenet5_bn_forward.6} parent=5 // pred_fallthru
        _
      %p589 = scmp.le.s32.totalorder 1, %s9
      %p590 = scmp.lt.s32.totalorder %s9, 3
      %p591 = pnand %p589, %p590
      %p592 = pneg %p591
      // Predicated region
      $region66: #{lenet5_bn_forward.6} parent=5 // pred_check
        _
      $region67: #{lenet5_bn_forward.6} parent=5 // pred_check_branch
        %594 = sbr.rel (%p591) target = $region69
      $region68: #{lenet5_bn_forward.6} parent=5 // pred_region
        %s595 = ssub.s32 %s9, 1
        %s596 = sand.u32 %s22, 1
        %s597 = sand.u32 %s22, 1
        %s598 = smul.addr %s597, 416
        %s599 = scalar_lea.vmem [#allocation2], %s598
        // Predicated region
        $region70: #{lenet5_bn_forward.6} parent=68 // pred_check
          %p600 = pneg %p35
        $region71: #{lenet5_bn_forward.6} parent=68 // pred_check_branch
          %602 = sbr.rel (%p600) target = $region73
        $region72: #{lenet5_bn_forward.6} parent=68 // pred_region
          _
        $region73: #{lenet5_bn_forward.6} parent=68 // pred_fallthru
          _
        %s603 = sand.u32 %s22, 1
        %s604 = sand.u32 %s22, 1
        %s605 = smul.addr %s604, 416
        %s606 = scalar_lea.vmem [#allocation2], %s605
        %p607 = pneg %p35
        %p608 = pneg %p32
        %p609 = pneg %p56
        %p610 = pneg %p53
        %p611 = pneg %p77
        %p612 = pneg %p74
        %p613 = pneg %p103
        %p614 = pneg %p100
        %s615 = smul.u32 26, %s14
        %p616 = scmp.lt.s32.totalorder %s615, 51
        %s617 = scalar_select %p616, %s615, 51
        %s618 = smul.addr %s617, 8
        %s619 = scalar_lea.vmem %s3, %s618
        %s620 = smul.u32 26, %s14
        %s621 = smul.u32 26, %s14
        %p622 = scmp.lt.s32.totalorder %s621, 51
        %s623 = scalar_select %p622, %s621, 51
        %s624 = smul.addr %s623, 8
        %s625 = scalar_lea.vmem %s3, %s624
        %s626 = smul.u32 26, %s14
        %v628 = vld [vmem:[%s599] sm:$0xf]
        %v629 = vld [vmem:[%s599 + $0x4] sm:$0xf]
        %v630 = vld [vmem:[%s599 + $0x8] sm:$0xf]
        %v631 = vld [vmem:[%s599 + $0xc] sm:$0xf]
        %v632 = vld [vmem:[%s599 + $0x10] sm:$0xf]
        %v633 = vld [vmem:[%s599 + $0x14] sm:$0xf]
        %v634 = vld [vmem:[%s599 + $0x18] sm:$0xf]
        %v635 = vld [vmem:[%s599 + $0x1c] sm:$0xf]
        %v636 = vld [vmem:[%s599 + $0x20] sm:$0xf]
        %v637 = vld [vmem:[%s599 + $0x24] sm:$0xf]
        %v638 = vld [vmem:[%s599 + $0x28] sm:$0xf]
        %v639 = vld [vmem:[%s599 + $0x2c] sm:$0xf]
        %v640 = vld [vmem:[%s599 + $0x30] sm:$0xf]
        %v641 = vld [vmem:[%s599 + $0x34] sm:$0xf]
        %v642 = vld [vmem:[%s599 + $0x38] sm:$0xf]
        %v643 = vld [vmem:[%s599 + $0x3c] sm:$0xf]
        %v644 = vld [vmem:[%s599 + $0x40] sm:$0xf]
        %v645 = vld [vmem:[%s599 + $0x44] sm:$0xf]
        %v646 = vld [vmem:[%s599 + $0x48] sm:$0xf]
        %v647 = vld [vmem:[%s599 + $0x4c] sm:$0xf]
        %v648 = vld [vmem:[%s599 + $0x50] sm:$0xf]
        %v649 = vld [vmem:[%s599 + $0x54] sm:$0xf]
        %v650 = vld [vmem:[%s599 + $0x58] sm:$0xf]
        %v651 = vld [vmem:[%s599 + $0x5c] sm:$0xf]
        %v652 = vld [vmem:[%s599 + $0x60] sm:$0xf]
        %v653 = vld [vmem:[%s599 + $0x64] sm:$0xf]
        %v654 = vld [vmem:[%s599 + $0x68] sm:$0xf]
        %v655 = vld [vmem:[%s599 + $0x6c] sm:$0xf]
        %v656 = vld [vmem:[%s599 + $0x70] sm:$0xf]
        %v657 = vld [vmem:[%s599 + $0x74] sm:$0xf]
        %v658 = vld [vmem:[%s599 + $0x78] sm:$0xf]
        %v659 = vld [vmem:[%s599 + $0x7c] sm:$0xf]
        %v660 = vld [vmem:[%s599 + $0x80] sm:$0xf]
        %v661 = vld [vmem:[%s599 + $0x84] sm:$0xf]
        %v662 = vld [vmem:[%s599 + $0x88] sm:$0xf]
        %v663 = vld [vmem:[%s599 + $0x8c] sm:$0xf]
        %v664 = vld [vmem:[%s599 + $0x90] sm:$0xf]
        %v665 = vld [vmem:[%s599 + $0x94] sm:$0xf]
        %v666 = vld [vmem:[%s599 + $0x98] sm:$0xf]
        %v667 = vld [vmem:[%s599 + $0x9c] sm:$0xf]
        %v668 = vld [vmem:[%s599 + $0xa0] sm:$0xf]
        %v669 = vld [vmem:[%s599 + $0xa4] sm:$0xf]
        %v670 = vld [vmem:[%s599 + $0xa8] sm:$0xf]
        %v671 = vld [vmem:[%s599 + $0xac] sm:$0xf]
        %v672 = vld [vmem:[%s599 + $0xb0] sm:$0xf]
        %v673 = vld [vmem:[%s599 + $0xb4] sm:$0xf]
        %v674 = vld [vmem:[%s599 + $0xb8] sm:$0xf]
        %v675 = vld [vmem:[%s599 + $0xbc] sm:$0xf]
        %v676 = vld [vmem:[%s599 + $0xc0] sm:$0xf]
        %v677 = vld [vmem:[%s599 + $0xc4] sm:$0xf]
        %v678 = vld [vmem:[%s599 + $0xc8] sm:$0xf]
        %v679 = vld [vmem:[%s599 + $0xcc] sm:$0xf]
        %v680 = vld [vmem:[%s599 + $0xd0] sm:$0xf]
        %v681 = vld [vmem:[%s599 + $0xd4] sm:$0xf]
        %v682 = vld [vmem:[%s599 + $0xd8] sm:$0xf]
        %v683 = vld [vmem:[%s599 + $0xdc] sm:$0xf]
        %v684 = vld [vmem:[%s599 + $0xe0] sm:$0xf]
        %v685 = vld [vmem:[%s599 + $0xe4] sm:$0xf]
        %v686 = vld [vmem:[%s599 + $0xe8] sm:$0xf]
        %v687 = vld [vmem:[%s599 + $0xec] sm:$0xf]
        %v688 = vld [vmem:[%s599 + $0xf0] sm:$0xf]
        %v689 = vld [vmem:[%s599 + $0xf4] sm:$0xf]
        %v690 = vld [vmem:[%s599 + $0xf8] sm:$0xf]
        %v691 = vld [vmem:[%s599 + $0xfc] sm:$0xf]
        %v692 = vld [vmem:[%s599 + $0x100] sm:$0xf]
        %v693 = vld [vmem:[%s599 + $0x104] sm:$0xf]
        %v694 = vld [vmem:[%s599 + $0x108] sm:$0xf]
        %v695 = vld [vmem:[%s599 + $0x10c] sm:$0xf]
        %v696 = vld [vmem:[%s599 + $0x110] sm:$0xf]
        %v697 = vld [vmem:[%s599 + $0x114] sm:$0xf]
        %v698 = vld [vmem:[%s599 + $0x118] sm:$0xf]
        %v699 = vld [vmem:[%s599 + $0x11c] sm:$0xf]
        %v700 = vld [vmem:[%s599 + $0x120] sm:$0xf]
        %v701 = vld [vmem:[%s599 + $0x124] sm:$0xf]
        %v702 = vld [vmem:[%s599 + $0x128] sm:$0xf]
        %v703 = vld [vmem:[%s599 + $0x12c] sm:$0xf]
        %v704 = vld [vmem:[%s599 + $0x130] sm:$0xf]
        %v705 = vld [vmem:[%s599 + $0x134] sm:$0xf]
        %v706 = vld [vmem:[%s599 + $0x138] sm:$0xf]
        %v707 = vld [vmem:[%s599 + $0x13c] sm:$0xf]
        %v708 = vld [vmem:[%s599 + $0x140] sm:$0xf]
        %v709 = vld [vmem:[%s599 + $0x144] sm:$0xf]
        %v710 = vld [vmem:[%s599 + $0x148] sm:$0xf]
        %v711 = vld [vmem:[%s599 + $0x14c] sm:$0xf]
        %v712 = vld [vmem:[%s599 + $0x150] sm:$0xf]
        %v713 = vld [vmem:[%s599 + $0x154] sm:$0xf]
        %v714 = vld [vmem:[%s599 + $0x158] sm:$0xf]
        %v715 = vld [vmem:[%s599 + $0x15c] sm:$0xf]
        %v716 = vld [vmem:[%s599 + $0x160] sm:$0xf]
        %v717 = vld [vmem:[%s599 + $0x164] sm:$0xf]
        %v718 = vld [vmem:[%s599 + $0x168] sm:$0xf]
        %v719 = vld [vmem:[%s599 + $0x16c] sm:$0xf]
        %v720 = vld [vmem:[%s599 + $0x170] sm:$0xf]
        %v721 = vld [vmem:[%s599 + $0x174] sm:$0xf]
        %v722 = vld [vmem:[%s599 + $0x178] sm:$0xf]
        %v723 = vld [vmem:[%s599 + $0x17c] sm:$0xf]
        %v724 = vld [vmem:[%s599 + $0x180] sm:$0xf]
        %v725 = vld [vmem:[%s599 + $0x184] sm:$0xf]
        %v726 = vld [vmem:[%s599 + $0x188] sm:$0xf]
        %v727 = vld [vmem:[%s599 + $0x18c] sm:$0xf]
        %v728 = vld [vmem:[%s599 + $0x190] sm:$0xf]
        %v729 = vld [vmem:[%s599 + $0x194] sm:$0xf]
        %v730 = vld [vmem:[%s599 + $0x198] sm:$0xf]
        %v731 = vld [vmem:[%s599 + $0x19c] sm:$0xf]
        %v732 = vld [vmem:[%s1] sm:$0xf]
        %v733 = vld [vmem:[%s1 + $0x4] sm:$0xf]
        %v734 = vld [vmem:[%s1 + $0x8] sm:$0xf]
        %v735 = vld [vmem:[%s1 + $0xc] sm:$0x1]
        %v840 = vunpack.c.l.b16 %v628
        %v841 = vunpack.c.l.b16 %v629
        %v842 = vunpack.c.l.b16 %v630
        %v843 = vunpack.c.l.b16 %v631
        %v844 = vunpack.c.l.b16 %v632
        %v845 = vunpack.c.l.b16 %v633
        %v846 = vunpack.c.l.b16 %v634
        %v847 = vunpack.c.l.b16 %v635
        %v848 = vunpack.c.l.b16 %v636
        %v849 = vunpack.c.l.b16 %v637
        %v850 = vunpack.c.l.b16 %v638
        %v851 = vunpack.c.l.b16 %v639
        %v852 = vunpack.c.l.b16 %v640
        %v853 = vunpack.c.l.b16 %v641
        %v854 = vunpack.c.l.b16 %v642
        %v855 = vunpack.c.l.b16 %v643
        %v856 = vunpack.c.l.b16 %v644
        %v857 = vunpack.c.l.b16 %v645
        %v858 = vunpack.c.l.b16 %v646
        %v859 = vunpack.c.l.b16 %v647
        %v860 = vunpack.c.l.b16 %v648
        %v861 = vunpack.c.l.b16 %v649
        %v862 = vunpack.c.l.b16 %v650
        %v863 = vunpack.c.l.b16 %v651
        %v864 = vunpack.c.l.b16 %v652
        %v865 = vunpack.c.l.b16 %v653
        %v866 = vunpack.c.l.b16 %v654
        %v867 = vunpack.c.l.b16 %v655
        %v868 = vunpack.c.l.b16 %v656
        %v869 = vunpack.c.l.b16 %v657
        %v870 = vunpack.c.l.b16 %v658
        %v871 = vunpack.c.l.b16 %v659
        %v872 = vunpack.c.l.b16 %v660
        %v873 = vunpack.c.l.b16 %v661
        %v874 = vunpack.c.l.b16 %v662
        %v875 = vunpack.c.l.b16 %v663
        %v876 = vunpack.c.l.b16 %v664
        %v877 = vunpack.c.l.b16 %v665
        %v878 = vunpack.c.l.b16 %v666
        %v879 = vunpack.c.l.b16 %v667
        %v880 = vunpack.c.l.b16 %v668
        %v881 = vunpack.c.l.b16 %v669
        %v882 = vunpack.c.l.b16 %v670
        %v883 = vunpack.c.l.b16 %v671
        %v884 = vunpack.c.l.b16 %v672
        %v885 = vunpack.c.l.b16 %v673
        %v886 = vunpack.c.l.b16 %v674
        %v887 = vunpack.c.l.b16 %v675
        %v888 = vunpack.c.l.b16 %v676
        %v889 = vunpack.c.l.b16 %v677
        %v890 = vunpack.c.l.b16 %v678
        %v891 = vunpack.c.l.b16 %v679
        %v892 = vunpack.c.l.b16 %v680
        %v893 = vunpack.c.l.b16 %v681
        %v894 = vunpack.c.l.b16 %v682
        %v895 = vunpack.c.l.b16 %v683
        %v896 = vunpack.c.l.b16 %v684
        %v897 = vunpack.c.l.b16 %v685
        %v898 = vunpack.c.l.b16 %v686
        %v899 = vunpack.c.l.b16 %v687
        %v900 = vunpack.c.l.b16 %v688
        %v901 = vunpack.c.l.b16 %v689
        %v902 = vunpack.c.l.b16 %v690
        %v903 = vunpack.c.l.b16 %v691
        %v904 = vunpack.c.l.b16 %v692
        %v905 = vunpack.c.l.b16 %v693
        %v906 = vunpack.c.l.b16 %v694
        %v907 = vunpack.c.l.b16 %v695
        %v908 = vunpack.c.l.b16 %v696
        %v909 = vunpack.c.l.b16 %v697
        %v910 = vunpack.c.l.b16 %v698
        %v911 = vunpack.c.l.b16 %v699
        %v912 = vunpack.c.l.b16 %v700
        %v913 = vunpack.c.l.b16 %v701
        %v914 = vunpack.c.l.b16 %v702
        %v915 = vunpack.c.l.b16 %v703
        %v916 = vunpack.c.l.b16 %v704
        %v917 = vunpack.c.l.b16 %v705
        %v918 = vunpack.c.l.b16 %v706
        %v919 = vunpack.c.l.b16 %v707
        %v920 = vunpack.c.l.b16 %v708
        %v921 = vunpack.c.l.b16 %v709
        %v922 = vunpack.c.l.b16 %v710
        %v923 = vunpack.c.l.b16 %v711
        %v924 = vunpack.c.l.b16 %v712
        %v925 = vunpack.c.l.b16 %v713
        %v926 = vunpack.c.l.b16 %v714
        %v927 = vunpack.c.l.b16 %v715
        %v928 = vunpack.c.l.b16 %v716
        %v929 = vunpack.c.l.b16 %v717
        %v930 = vunpack.c.l.b16 %v718
        %v931 = vunpack.c.l.b16 %v719
        %v932 = vunpack.c.l.b16 %v720
        %v933 = vunpack.c.l.b16 %v721
        %v934 = vunpack.c.l.b16 %v722
        %v935 = vunpack.c.l.b16 %v723
        %v936 = vunpack.c.l.b16 %v724
        %v937 = vunpack.c.l.b16 %v725
        %v938 = vunpack.c.l.b16 %v726
        %v939 = vunpack.c.l.b16 %v727
        %v940 = vunpack.c.l.b16 %v728
        %v941 = vunpack.c.l.b16 %v729
        %v942 = vunpack.c.l.b16 %v730
        %v943 = vunpack.c.l.b16 %v731
        %v944 = vpack.c.b16 %v841, %v840
        %v945 = vpack.c.b16 %v843, %v842
        %v946 = vpack.c.b16 %v845, %v844
        %v947 = vpack.c.b16 %v847, %v846
        %v948 = vpack.c.b16 %v849, %v848
        %v949 = vpack.c.b16 %v851, %v850
        %v950 = vpack.c.b16 %v853, %v852
        %v951 = vpack.c.b16 %v855, %v854
        %v952 = vpack.c.b16 %v857, %v856
        %v953 = vpack.c.b16 %v859, %v858
        %v954 = vpack.c.b16 %v861, %v860
        %v955 = vpack.c.b16 %v863, %v862
        %v956 = vpack.c.b16 %v865, %v864
        %v957 = vpack.c.b16 %v867, %v866
        %v958 = vpack.c.b16 %v869, %v868
        %v959 = vpack.c.b16 %v871, %v870
        %v960 = vpack.c.b16 %v873, %v872
        %v961 = vpack.c.b16 %v875, %v874
        %v962 = vpack.c.b16 %v877, %v876
        %v963 = vpack.c.b16 %v879, %v878
        %v964 = vpack.c.b16 %v881, %v880
        %v965 = vpack.c.b16 %v883, %v882
        %v966 = vpack.c.b16 %v885, %v884
        %v967 = vpack.c.b16 %v887, %v886
        %v968 = vpack.c.b16 %v889, %v888
        %v969 = vpack.c.b16 %v891, %v890
        %v970 = vpack.c.b16 %v893, %v892
        %v971 = vpack.c.b16 %v895, %v894
        %v972 = vpack.c.b16 %v897, %v896
        %v973 = vpack.c.b16 %v899, %v898
        %v974 = vpack.c.b16 %v901, %v900
        %v975 = vpack.c.b16 %v903, %v902
        %v976 = vpack.c.b16 %v905, %v904
        %v977 = vpack.c.b16 %v907, %v906
        %v978 = vpack.c.b16 %v909, %v908
        %v979 = vpack.c.b16 %v911, %v910
        %v980 = vpack.c.b16 %v913, %v912
        %v981 = vpack.c.b16 %v915, %v914
        %v982 = vpack.c.b16 %v917, %v916
        %v983 = vpack.c.b16 %v919, %v918
        %v984 = vpack.c.b16 %v921, %v920
        %v985 = vpack.c.b16 %v923, %v922
        %v986 = vpack.c.b16 %v925, %v924
        %v987 = vpack.c.b16 %v927, %v926
        %v988 = vpack.c.b16 %v929, %v928
        %v989 = vpack.c.b16 %v931, %v930
        %v990 = vpack.c.b16 %v933, %v932
        %v991 = vpack.c.b16 %v935, %v934
        %v992 = vpack.c.b16 %v937, %v936
        %v993 = vpack.c.b16 %v939, %v938
        %v994 = vpack.c.b16 %v941, %v940
        %v995 = vpack.c.b16 %v943, %v942
        %v1000 = vunpack.c.l.b16 %v732
        %v1001 = vunpack.c.l.b16 %v733
        %v1002 = vunpack.c.l.b16 %v734
        %v1003 = vunpack.c.l.b16 %v735
        %v1004 = vpack.c.b16 %v1001, %v1000
        %v1005 = vpack.c.b16 %v1003, %v1002
        %vm1007 = vcmask 203776
        %v1009 = vsel %vm1007, %v944, 0
        %v1012 = vsel %vm1007, %v945, 0
        %v1015 = vsel %vm1007, %v946, 0
        %v1018 = vsel %vm1007, %v947, 0
        %v1021 = vsel %vm1007, %v948, 0
        %v1024 = vsel %vm1007, %v949, 0
        %v1027 = vsel %vm1007, %v950, 0
        %v1030 = vsel %vm1007, %v951, 0
        %v1033 = vsel %vm1007, %v952, 0
        %v1036 = vsel %vm1007, %v953, 0
        %v1039 = vsel %vm1007, %v954, 0
        %v1042 = vsel %vm1007, %v955, 0
        %v1045 = vsel %vm1007, %v956, 0
        %v1048 = vsel %vm1007, %v957, 0
        %v1051 = vsel %vm1007, %v958, 0
        %v1054 = vsel %vm1007, %v959, 0
        %v1057 = vsel %vm1007, %v960, 0
        %v1060 = vsel %vm1007, %v961, 0
        %v1063 = vsel %vm1007, %v962, 0
        %v1066 = vsel %vm1007, %v963, 0
        %v1069 = vsel %vm1007, %v964, 0
        %v1072 = vsel %vm1007, %v965, 0
        %v1075 = vsel %vm1007, %v966, 0
        %v1078 = vsel %vm1007, %v967, 0
        %v1081 = vsel %vm1007, %v968, 0
        %v1084 = vsel %vm1007, %v969, 0
        %v1087 = vsel %vm1007, %v970, 0
        %v1090 = vsel %vm1007, %v971, 0
        %v1093 = vsel %vm1007, %v972, 0
        %v1096 = vsel %vm1007, %v973, 0
        %v1099 = vsel %vm1007, %v974, 0
        %v1102 = vsel %vm1007, %v975, 0
        %v1105 = vsel %vm1007, %v976, 0
        %v1108 = vsel %vm1007, %v977, 0
        %v1111 = vsel %vm1007, %v978, 0
        %v1114 = vsel %vm1007, %v979, 0
        %v1117 = vsel %vm1007, %v980, 0
        %v1120 = vsel %vm1007, %v981, 0
        %v1123 = vsel %vm1007, %v982, 0
        %v1126 = vsel %vm1007, %v983, 0
        %v1129 = vsel %vm1007, %v984, 0
        %v1132 = vsel %vm1007, %v985, 0
        %v1135 = vsel %vm1007, %v986, 0
        %v1138 = vsel %vm1007, %v987, 0
        %v1141 = vsel %vm1007, %v988, 0
        %v1144 = vsel %vm1007, %v989, 0
        %v1147 = vsel %vm1007, %v990, 0
        %v1150 = vsel %vm1007, %v991, 0
        %v1153 = vsel %vm1007, %v992, 0
        %v1156 = vsel %vm1007, %v993, 0
        %v1159 = vsel %vm1007, %v994, 0
        %v1162 = vsel %vm1007, %v995, 0
        %vm1164 = vcmask 1043456
        %vm1165 = vcmask 1044480
        %v1166 = vsel %vm1164, 4294967295, 65535
        %v1167 = vsel %vm1165, %v1166, 0
        %v1169 = vand.u32 %v1005, %v1167
        %1171 = vmatprep.subr.bf16.mxu0 0
        %1172 = vmatpush1.bf16.msra.mxu0 %v1004
        %1173 = vmatprep.subr.bf16.mxu0 0
        %1174 = vmatpush1.bf16.msra.mxu0 %v1169
        %1175 = vmatprep.subr.bf16.mxu0 0
        %1176 = vmatpush1.bf16.msra.mxu0 0
        %1177 = vmatprep.subr.bf16.mxu0 0
        %1178 = vmatpush1.bf16.msra.mxu0 0
        %1179 = vmatprep.subr.bf16.mxu0 0
        %1180 = vmatpush1.bf16.msra.mxu0 0
        %1181 = vmatprep.subr.bf16.mxu0 0
        %1182 = vmatpush1.bf16.msra.mxu0 0
        %1183 = vmatprep.subr.bf16.mxu0 0
        %1184 = vmatpush1.bf16.msra.mxu0 0
        %1185 = vmatprep.subr.bf16.mxu0 0
        %1186 = vmatpush1.bf16.msra.mxu0 0
        %1187 = vmatprep.subr.bf16.mxu0 0
        %1188 = vmatpush1.bf16.msra.mxu0 0
        %1189 = vmatprep.subr.bf16.mxu0 0
        %1190 = vmatpush1.bf16.msra.mxu0 0
        %1191 = vmatprep.subr.bf16.mxu0 0
        %1192 = vmatpush1.bf16.msra.mxu0 0
        %1193 = vmatprep.subr.bf16.mxu0 0
        %1194 = vmatpush1.bf16.msra.mxu0 0
        %1195 = vmatprep.subr.bf16.mxu0 0
        %1196 = vmatpush1.bf16.msra.mxu0 0
        %1197 = vmatprep.subr.bf16.mxu0 0
        %1198 = vmatpush1.bf16.msra.mxu0 0
        %1199 = vmatprep.subr.bf16.mxu0 0
        %1200 = vmatpush1.bf16.msra.mxu0 0
        %1201 = vmatprep.subr.bf16.mxu0 0
        %1202 = vmatpush1.bf16.msra.mxu0 0
        %1203 = vmatprep.mubr.bf16.mxu0 0
        %1204 = vmatmul.mubr.bf16.gmra.mrb[0].mxu0 %v1009
        %v1205 = vpop.f32.mrb[0].mxu0
        %v1206 = vadd.f32 0.0, %v1205
        %v1207 = vpop.f32.mrb[0].mxu0
        %v1208 = vpop.f32.mrb[0].mxu0
        %v1209 = vadd.f32 0.0, %v1208
        %v1210 = vpop.f32.mrb[0].mxu0
        %1211 = vmatprep.mubr.bf16.mxu0 0
        %1212 = vmatmul.mubr.bf16.gmra.mrb[0].mxu0 %v1012
        %v1213 = vpop.f32.mrb[0].mxu0
        %v1214 = vadd.f32 0.0, %v1213
        %v1215 = vpop.f32.mrb[0].mxu0
        %v1216 = vpop.f32.mrb[0].mxu0
        %v1217 = vadd.f32 0.0, %v1216
        %v1218 = vpop.f32.mrb[0].mxu0
        %1219 = vmatprep.mubr.bf16.mxu0 0
        %1220 = vmatmul.mubr.bf16.gmra.mrb[0].mxu0 %v1015
        %v1221 = vpop.f32.mrb[0].mxu0
        %v1222 = vadd.f32 0.0, %v1221
        %v1223 = vpop.f32.mrb[0].mxu0
        %v1224 = vpop.f32.mrb[0].mxu0
        %v1225 = vadd.f32 0.0, %v1224
        %v1226 = vpop.f32.mrb[0].mxu0
        %1227 = vmatprep.mubr.bf16.mxu0 0
        %1228 = vmatmul.mubr.bf16.gmra.mrb[0].mxu0 %v1018
        %v1229 = vpop.f32.mrb[0].mxu0
        %v1230 = vadd.f32 0.0, %v1229
        %v1231 = vpop.f32.mrb[0].mxu0
        %v1232 = vpop.f32.mrb[0].mxu0
        %v1233 = vadd.f32 0.0, %v1232
        %v1234 = vpop.f32.mrb[0].mxu0
        %1235 = vmatprep.mubr.bf16.mxu0 0
        %1236 = vmatmul.mubr.bf16.gmra.mrb[0].mxu0 %v1021
        %v1237 = vpop.f32.mrb[0].mxu0
        %v1238 = vadd.f32 0.0, %v1237
        %v1239 = vpop.f32.mrb[0].mxu0
        %v1240 = vpop.f32.mrb[0].mxu0
        %v1241 = vadd.f32 0.0, %v1240
        %v1242 = vpop.f32.mrb[0].mxu0
        %1243 = vmatprep.mubr.bf16.mxu0 0
        %1244 = vmatmul.mubr.bf16.gmra.mrb[0].mxu0 %v1024
        %v1245 = vpop.f32.mrb[0].mxu0
        %v1246 = vadd.f32 0.0, %v1245
        %v1247 = vpop.f32.mrb[0].mxu0
        %v1248 = vpop.f32.mrb[0].mxu0
        %v1249 = vadd.f32 0.0, %v1248
        %v1250 = vpop.f32.mrb[0].mxu0
        %1251 = vmatprep.mubr.bf16.mxu0 0
        %1252 = vmatmul.mubr.bf16.gmra.mrb[0].mxu0 %v1027
        %v1253 = vpop.f32.mrb[0].mxu0
        %v1254 = vadd.f32 0.0, %v1253
        %v1255 = vpop.f32.mrb[0].mxu0
        %v1256 = vpop.f32.mrb[0].mxu0
        %v1257 = vadd.f32 0.0, %v1256
        %v1258 = vpop.f32.mrb[0].mxu0
        %1259 = vmatprep.mubr.bf16.mxu0 0
        %1260 = vmatmul.mubr.bf16.gmra.mrb[0].mxu0 %v1030
        %v1261 = vpop.f32.mrb[0].mxu0
        %v1262 = vadd.f32 0.0, %v1261
        %v1263 = vpop.f32.mrb[0].mxu0
        %v1264 = vpop.f32.mrb[0].mxu0
        %v1265 = vadd.f32 0.0, %v1264
        %v1266 = vpop.f32.mrb[0].mxu0
        %1267 = vmatprep.mubr.bf16.mxu0 0
        %1268 = vmatmul.mubr.bf16.gmra.mrb[0].mxu0 %v1033
        %v1269 = vpop.f32.mrb[0].mxu0
        %v1270 = vadd.f32 0.0, %v1269
        %v1271 = vpop.f32.mrb[0].mxu0
        %v1272 = vpop.f32.mrb[0].mxu0
        %v1273 = vadd.f32 0.0, %v1272
        %v1274 = vpop.f32.mrb[0].mxu0
        %1275 = vmatprep.mubr.bf16.mxu0 0
        %1276 = vmatmul.mubr.bf16.gmra.mrb[0].mxu0 %v1036
        %v1277 = vpop.f32.mrb[0].mxu0
        %v1278 = vadd.f32 0.0, %v1277
        %v1279 = vpop.f32.mrb[0].mxu0
        %v1280 = vpop.f32.mrb[0].mxu0
        %v1281 = vadd.f32 0.0, %v1280
        %v1282 = vpop.f32.mrb[0].mxu0
        %1283 = vmatprep.mubr.bf16.mxu0 0
        %1284 = vmatmul.mubr.bf16.gmra.mrb[0].mxu0 %v1039
        %v1285 = vpop.f32.mrb[0].mxu0
        %v1286 = vadd.f32 0.0, %v1285
        %v1287 = vpop.f32.mrb[0].mxu0
        %v1288 = vpop.f32.mrb[0].mxu0
        %v1289 = vadd.f32 0.0, %v1288
        %v1290 = vpop.f32.mrb[0].mxu0
        %1291 = vmatprep.mubr.bf16.mxu0 0
        %1292 = vmatmul.mubr.bf16.gmra.mrb[0].mxu0 %v1042
        %v1293 = vpop.f32.mrb[0].mxu0
        %v1294 = vadd.f32 0.0, %v1293
        %v1295 = vpop.f32.mrb[0].mxu0
        %v1296 = vpop.f32.mrb[0].mxu0
        %v1297 = vadd.f32 0.0, %v1296
        %v1298 = vpop.f32.mrb[0].mxu0
        %1299 = vmatprep.mubr.bf16.mxu0 0
        %1300 = vmatmul.mubr.bf16.gmra.mrb[0].mxu0 %v1045
        %v1301 = vpop.f32.mrb[0].mxu0
        %v1302 = vadd.f32 0.0, %v1301
        %v1303 = vpop.f32.mrb[0].mxu0
        %v1304 = vpop.f32.mrb[0].mxu0
        %v1305 = vadd.f32 0.0, %v1304
        %v1306 = vpop.f32.mrb[0].mxu0
        %1307 = vmatprep.mubr.bf16.mxu0 0
        %1308 = vmatmul.mubr.bf16.gmra.mrb[0].mxu0 %v1048
        %v1309 = vpop.f32.mrb[0].mxu0
        %v1310 = vadd.f32 0.0, %v1309
        %v1311 = vpop.f32.mrb[0].mxu0
        %v1312 = vpop.f32.mrb[0].mxu0
        %v1313 = vadd.f32 0.0, %v1312
        %v1314 = vpop.f32.mrb[0].mxu0
        %1315 = vmatprep.mubr.bf16.mxu0 0
        %1316 = vmatmul.mubr.bf16.gmra.mrb[0].mxu0 %v1051
        %v1317 = vpop.f32.mrb[0].mxu0
        %v1318 = vadd.f32 0.0, %v1317
        %v1319 = vpop.f32.mrb[0].mxu0
        %v1320 = vpop.f32.mrb[0].mxu0
        %v1321 = vadd.f32 0.0, %v1320
        %v1322 = vpop.f32.mrb[0].mxu0
        %1323 = vmatprep.mubr.bf16.mxu0 0
        %1324 = vmatmul.mubr.bf16.gmra.mrb[0].mxu0 %v1054
        %v1325 = vpop.f32.mrb[0].mxu0
        %v1326 = vadd.f32 0.0, %v1325
        %v1327 = vpop.f32.mrb[0].mxu0
        %v1328 = vpop.f32.mrb[0].mxu0
        %v1329 = vadd.f32 0.0, %v1328
        %v1330 = vpop.f32.mrb[0].mxu0
        %1331 = vmatprep.mubr.bf16.mxu0 0
        %1332 = vmatmul.mubr.bf16.gmra.mrb[0].mxu0 %v1057
        %v1333 = vpop.f32.mrb[0].mxu0
        %v1334 = vadd.f32 0.0, %v1333
        %v1335 = vpop.f32.mrb[0].mxu0
        %v1336 = vpop.f32.mrb[0].mxu0
        %v1337 = vadd.f32 0.0, %v1336
        %v1338 = vpop.f32.mrb[0].mxu0
        %1339 = vmatprep.mubr.bf16.mxu0 0
        %1340 = vmatmul.mubr.bf16.gmra.mrb[0].mxu0 %v1060
        %v1341 = vpop.f32.mrb[0].mxu0
        %v1342 = vadd.f32 0.0, %v1341
        %v1343 = vpop.f32.mrb[0].mxu0
        %v1344 = vpop.f32.mrb[0].mxu0
        %v1345 = vadd.f32 0.0, %v1344
        %v1346 = vpop.f32.mrb[0].mxu0
        %1347 = vmatprep.mubr.bf16.mxu0 0
        %1348 = vmatmul.mubr.bf16.gmra.mrb[0].mxu0 %v1063
        %v1349 = vpop.f32.mrb[0].mxu0
        %v1350 = vadd.f32 0.0, %v1349
        %v1351 = vpop.f32.mrb[0].mxu0
        %v1352 = vpop.f32.mrb[0].mxu0
        %v1353 = vadd.f32 0.0, %v1352
        %v1354 = vpop.f32.mrb[0].mxu0
        %1355 = vmatprep.mubr.bf16.mxu0 0
        %1356 = vmatmul.mubr.bf16.gmra.mrb[0].mxu0 %v1066
        %v1357 = vpop.f32.mrb[0].mxu0
        %v1358 = vadd.f32 0.0, %v1357
        %v1359 = vpop.f32.mrb[0].mxu0
        %v1360 = vpop.f32.mrb[0].mxu0
        %v1361 = vadd.f32 0.0, %v1360
        %v1362 = vpop.f32.mrb[0].mxu0
        %1363 = vmatprep.mubr.bf16.mxu0 0
        %1364 = vmatmul.mubr.bf16.gmra.mrb[0].mxu0 %v1069
        %v1365 = vpop.f32.mrb[0].mxu0
        %v1366 = vadd.f32 0.0, %v1365
        %v1367 = vpop.f32.mrb[0].mxu0
        %v1368 = vpop.f32.mrb[0].mxu0
        %v1369 = vadd.f32 0.0, %v1368
        %v1370 = vpop.f32.mrb[0].mxu0
        %1371 = vmatprep.mubr.bf16.mxu0 0
        %1372 = vmatmul.mubr.bf16.gmra.mrb[0].mxu0 %v1072
        %v1373 = vpop.f32.mrb[0].mxu0
        %v1374 = vadd.f32 0.0, %v1373
        %v1375 = vpop.f32.mrb[0].mxu0
        %v1376 = vpop.f32.mrb[0].mxu0
        %v1377 = vadd.f32 0.0, %v1376
        %v1378 = vpop.f32.mrb[0].mxu0
        %1379 = vmatprep.mubr.bf16.mxu0 0
        %1380 = vmatmul.mubr.bf16.gmra.mrb[0].mxu0 %v1075
        %v1381 = vpop.f32.mrb[0].mxu0
        %v1382 = vadd.f32 0.0, %v1381
        %v1383 = vpop.f32.mrb[0].mxu0
        %v1384 = vpop.f32.mrb[0].mxu0
        %v1385 = vadd.f32 0.0, %v1384
        %v1386 = vpop.f32.mrb[0].mxu0
        %1387 = vmatprep.mubr.bf16.mxu0 0
        %1388 = vmatmul.mubr.bf16.gmra.mrb[0].mxu0 %v1078
        %v1389 = vpop.f32.mrb[0].mxu0
        %v1390 = vadd.f32 0.0, %v1389
        %v1391 = vpop.f32.mrb[0].mxu0
        %v1392 = vpop.f32.mrb[0].mxu0
        %v1393 = vadd.f32 0.0, %v1392
        %v1394 = vpop.f32.mrb[0].mxu0
        %1395 = vmatprep.mubr.bf16.mxu0 0
        %1396 = vmatmul.mubr.bf16.gmra.mrb[0].mxu0 %v1081
        %v1397 = vpop.f32.mrb[0].mxu0
        %v1398 = vadd.f32 0.0, %v1397
        %v1399 = vpop.f32.mrb[0].mxu0
        %v1400 = vpop.f32.mrb[0].mxu0
        %v1401 = vadd.f32 0.0, %v1400
        %v1402 = vpop.f32.mrb[0].mxu0
        %1403 = vmatprep.mubr.bf16.mxu0 0
        %1404 = vmatmul.mubr.bf16.gmra.mrb[0].mxu0 %v1084
        %v1405 = vpop.f32.mrb[0].mxu0
        %v1406 = vadd.f32 0.0, %v1405
        %v1407 = vpop.f32.mrb[0].mxu0
        %v1408 = vpop.f32.mrb[0].mxu0
        %v1409 = vadd.f32 0.0, %v1408
        %v1410 = vpop.f32.mrb[0].mxu0
        %1411 = vmatprep.mubr.bf16.mxu0 0
        %1412 = vmatmul.mubr.bf16.gmra.mrb[0].mxu0 %v1087
        %v1413 = vpop.f32.mrb[0].mxu0
        %v1414 = vadd.f32 0.0, %v1413
        %v1415 = vpop.f32.mrb[0].mxu0
        %v1416 = vpop.f32.mrb[0].mxu0
        %v1417 = vadd.f32 0.0, %v1416
        %v1418 = vpop.f32.mrb[0].mxu0
        %1419 = vmatprep.mubr.bf16.mxu0 0
        %1420 = vmatmul.mubr.bf16.gmra.mrb[0].mxu0 %v1090
        %v1421 = vpop.f32.mrb[0].mxu0
        %v1422 = vadd.f32 0.0, %v1421
        %v1423 = vpop.f32.mrb[0].mxu0
        %v1424 = vpop.f32.mrb[0].mxu0
        %v1425 = vadd.f32 0.0, %v1424
        %v1426 = vpop.f32.mrb[0].mxu0
        %1427 = vmatprep.mubr.bf16.mxu0 0
        %1428 = vmatmul.mubr.bf16.gmra.mrb[0].mxu0 %v1093
        %v1429 = vpop.f32.mrb[0].mxu0
        %v1430 = vadd.f32 0.0, %v1429
        %v1431 = vpop.f32.mrb[0].mxu0
        %v1432 = vpop.f32.mrb[0].mxu0
        %v1433 = vadd.f32 0.0, %v1432
        %v1434 = vpop.f32.mrb[0].mxu0
        %1435 = vmatprep.mubr.bf16.mxu0 0
        %1436 = vmatmul.mubr.bf16.gmra.mrb[0].mxu0 %v1096
        %v1437 = vpop.f32.mrb[0].mxu0
        %v1438 = vadd.f32 0.0, %v1437
        %v1439 = vpop.f32.mrb[0].mxu0
        %v1440 = vpop.f32.mrb[0].mxu0
        %v1441 = vadd.f32 0.0, %v1440
        %v1442 = vpop.f32.mrb[0].mxu0
        %1443 = vmatprep.mubr.bf16.mxu0 0
        %1444 = vmatmul.mubr.bf16.gmra.mrb[0].mxu0 %v1099
        %v1445 = vpop.f32.mrb[0].mxu0
        %v1446 = vadd.f32 0.0, %v1445
        %v1447 = vpop.f32.mrb[0].mxu0
        %v1448 = vpop.f32.mrb[0].mxu0
        %v1449 = vadd.f32 0.0, %v1448
        %v1450 = vpop.f32.mrb[0].mxu0
        %1451 = vmatprep.mubr.bf16.mxu0 0
        %1452 = vmatmul.mubr.bf16.gmra.mrb[0].mxu0 %v1102
        %v1453 = vpop.f32.mrb[0].mxu0
        %v1454 = vadd.f32 0.0, %v1453
        %v1455 = vpop.f32.mrb[0].mxu0
        %v1456 = vpop.f32.mrb[0].mxu0
        %v1457 = vadd.f32 0.0, %v1456
        %v1458 = vpop.f32.mrb[0].mxu0
        %1459 = vmatprep.mubr.bf16.mxu0 0
        %1460 = vmatmul.mubr.bf16.gmra.mrb[0].mxu0 %v1105
        %v1461 = vpop.f32.mrb[0].mxu0
        %v1462 = vadd.f32 0.0, %v1461
        %v1463 = vpop.f32.mrb[0].mxu0
        %v1464 = vpop.f32.mrb[0].mxu0
        %v1465 = vadd.f32 0.0, %v1464
        %v1466 = vpop.f32.mrb[0].mxu0
        %1467 = vmatprep.mubr.bf16.mxu0 0
        %1468 = vmatmul.mubr.bf16.gmra.mrb[0].mxu0 %v1108
        %v1469 = vpop.f32.mrb[0].mxu0
        %v1470 = vadd.f32 0.0, %v1469
        %v1471 = vpop.f32.mrb[0].mxu0
        %v1472 = vpop.f32.mrb[0].mxu0
        %v1473 = vadd.f32 0.0, %v1472
        %v1474 = vpop.f32.mrb[0].mxu0
        %1475 = vmatprep.mubr.bf16.mxu0 0
        %1476 = vmatmul.mubr.bf16.gmra.mrb[0].mxu0 %v1111
        %v1477 = vpop.f32.mrb[0].mxu0
        %v1478 = vadd.f32 0.0, %v1477
        %v1479 = vpop.f32.mrb[0].mxu0
        %v1480 = vpop.f32.mrb[0].mxu0
        %v1481 = vadd.f32 0.0, %v1480
        %v1482 = vpop.f32.mrb[0].mxu0
        %1483 = vmatprep.mubr.bf16.mxu0 0
        %1484 = vmatmul.mubr.bf16.gmra.mrb[0].mxu0 %v1114
        %v1485 = vpop.f32.mrb[0].mxu0
        %v1486 = vadd.f32 0.0, %v1485
        %v1487 = vpop.f32.mrb[0].mxu0
        %v1488 = vpop.f32.mrb[0].mxu0
        %v1489 = vadd.f32 0.0, %v1488
        %v1490 = vpop.f32.mrb[0].mxu0
        %1491 = vmatprep.mubr.bf16.mxu0 0
        %1492 = vmatmul.mubr.bf16.gmra.mrb[0].mxu0 %v1117
        %v1493 = vpop.f32.mrb[0].mxu0
        %v1494 = vadd.f32 0.0, %v1493
        %v1495 = vpop.f32.mrb[0].mxu0
        %v1496 = vpop.f32.mrb[0].mxu0
        %v1497 = vadd.f32 0.0, %v1496
        %v1498 = vpop.f32.mrb[0].mxu0
        %1499 = vmatprep.mubr.bf16.mxu0 0
        %1500 = vmatmul.mubr.bf16.gmra.mrb[0].mxu0 %v1120
        %v1501 = vpop.f32.mrb[0].mxu0
        %v1502 = vadd.f32 0.0, %v1501
        %v1503 = vpop.f32.mrb[0].mxu0
        %v1504 = vpop.f32.mrb[0].mxu0
        %v1505 = vadd.f32 0.0, %v1504
        %v1506 = vpop.f32.mrb[0].mxu0
        %1507 = vmatprep.mubr.bf16.mxu0 0
        %1508 = vmatmul.mubr.bf16.gmra.mrb[0].mxu0 %v1123
        %v1509 = vpop.f32.mrb[0].mxu0
        %v1510 = vadd.f32 0.0, %v1509
        %v1511 = vpop.f32.mrb[0].mxu0
        %v1512 = vpop.f32.mrb[0].mxu0
        %v1513 = vadd.f32 0.0, %v1512
        %v1514 = vpop.f32.mrb[0].mxu0
        %1515 = vmatprep.mubr.bf16.mxu0 0
        %1516 = vmatmul.mubr.bf16.gmra.mrb[0].mxu0 %v1126
        %v1517 = vpop.f32.mrb[0].mxu0
        %v1518 = vadd.f32 0.0, %v1517
        %v1519 = vpop.f32.mrb[0].mxu0
        %v1520 = vpop.f32.mrb[0].mxu0
        %v1521 = vadd.f32 0.0, %v1520
        %v1522 = vpop.f32.mrb[0].mxu0
        %1523 = vmatprep.mubr.bf16.mxu0 0
        %1524 = vmatmul.mubr.bf16.gmra.mrb[0].mxu0 %v1129
        %v1525 = vpop.f32.mrb[0].mxu0
        %v1526 = vadd.f32 0.0, %v1525
        %v1527 = vpop.f32.mrb[0].mxu0
        %v1528 = vpop.f32.mrb[0].mxu0
        %v1529 = vadd.f32 0.0, %v1528
        %v1530 = vpop.f32.mrb[0].mxu0
        %1531 = vmatprep.mubr.bf16.mxu0 0
        %1532 = vmatmul.mubr.bf16.gmra.mrb[0].mxu0 %v1132
        %v1533 = vpop.f32.mrb[0].mxu0
        %v1534 = vadd.f32 0.0, %v1533
        %v1535 = vpop.f32.mrb[0].mxu0
        %v1536 = vpop.f32.mrb[0].mxu0
        %v1537 = vadd.f32 0.0, %v1536
        %v1538 = vpop.f32.mrb[0].mxu0
        %1539 = vmatprep.mubr.bf16.mxu0 0
        %1540 = vmatmul.mubr.bf16.gmra.mrb[0].mxu0 %v1135
        %v1541 = vpop.f32.mrb[0].mxu0
        %v1542 = vadd.f32 0.0, %v1541
        %v1543 = vpop.f32.mrb[0].mxu0
        %v1544 = vpop.f32.mrb[0].mxu0
        %v1545 = vadd.f32 0.0, %v1544
        %v1546 = vpop.f32.mrb[0].mxu0
        %1547 = vmatprep.mubr.bf16.mxu0 0
        %1548 = vmatmul.mubr.bf16.gmra.mrb[0].mxu0 %v1138
        %v1549 = vpop.f32.mrb[0].mxu0
        %v1550 = vadd.f32 0.0, %v1549
        %v1551 = vpop.f32.mrb[0].mxu0
        %v1552 = vpop.f32.mrb[0].mxu0
        %v1553 = vadd.f32 0.0, %v1552
        %v1554 = vpop.f32.mrb[0].mxu0
        %1555 = vmatprep.mubr.bf16.mxu0 0
        %1556 = vmatmul.mubr.bf16.gmra.mrb[0].mxu0 %v1141
        %v1557 = vpop.f32.mrb[0].mxu0
        %v1558 = vadd.f32 0.0, %v1557
        %v1559 = vpop.f32.mrb[0].mxu0
        %v1560 = vpop.f32.mrb[0].mxu0
        %v1561 = vadd.f32 0.0, %v1560
        %v1562 = vpop.f32.mrb[0].mxu0
        %1563 = vmatprep.mubr.bf16.mxu0 0
        %1564 = vmatmul.mubr.bf16.gmra.mrb[0].mxu0 %v1144
        %v1565 = vpop.f32.mrb[0].mxu0
        %v1566 = vadd.f32 0.0, %v1565
        %v1567 = vpop.f32.mrb[0].mxu0
        %v1568 = vpop.f32.mrb[0].mxu0
        %v1569 = vadd.f32 0.0, %v1568
        %v1570 = vpop.f32.mrb[0].mxu0
        %1571 = vmatprep.mubr.bf16.mxu0 0
        %1572 = vmatmul.mubr.bf16.gmra.mrb[0].mxu0 %v1147
        %v1573 = vpop.f32.mrb[0].mxu0
        %v1574 = vadd.f32 0.0, %v1573
        %v1575 = vpop.f32.mrb[0].mxu0
        %v1576 = vpop.f32.mrb[0].mxu0
        %v1577 = vadd.f32 0.0, %v1576
        %v1578 = vpop.f32.mrb[0].mxu0
        %1579 = vmatprep.mubr.bf16.mxu0 0
        %1580 = vmatmul.mubr.bf16.gmra.mrb[0].mxu0 %v1150
        %v1581 = vpop.f32.mrb[0].mxu0
        %v1582 = vadd.f32 0.0, %v1581
        %v1583 = vpop.f32.mrb[0].mxu0
        %v1584 = vpop.f32.mrb[0].mxu0
        %v1585 = vadd.f32 0.0, %v1584
        %v1586 = vpop.f32.mrb[0].mxu0
        %1587 = vmatprep.mubr.bf16.mxu0 0
        %1588 = vmatmul.mubr.bf16.gmra.mrb[0].mxu0 %v1153
        %v1589 = vpop.f32.mrb[0].mxu0
        %v1590 = vadd.f32 0.0, %v1589
        %v1591 = vpop.f32.mrb[0].mxu0
        %v1592 = vpop.f32.mrb[0].mxu0
        %v1593 = vadd.f32 0.0, %v1592
        %v1594 = vpop.f32.mrb[0].mxu0
        %1595 = vmatprep.mubr.bf16.mxu0 0
        %1596 = vmatmul.mubr.bf16.gmra.mrb[0].mxu0 %v1156
        %v1597 = vpop.f32.mrb[0].mxu0
        %v1598 = vadd.f32 0.0, %v1597
        %v1599 = vpop.f32.mrb[0].mxu0
        %v1600 = vpop.f32.mrb[0].mxu0
        %v1601 = vadd.f32 0.0, %v1600
        %v1602 = vpop.f32.mrb[0].mxu0
        %1603 = vmatprep.mubr.bf16.mxu0 0
        %1604 = vmatmul.mubr.bf16.gmra.mrb[0].mxu0 %v1159
        %v1605 = vpop.f32.mrb[0].mxu0
        %v1606 = vadd.f32 0.0, %v1605
        %v1607 = vpop.f32.mrb[0].mxu0
        %v1608 = vpop.f32.mrb[0].mxu0
        %v1609 = vadd.f32 0.0, %v1608
        %v1610 = vpop.f32.mrb[0].mxu0
        %1611 = vmatprep.mubr.bf16.mxu0 0
        %1612 = vmatmul.mubr.bf16.gmra.mrb[0].mxu0 %v1162
        %v1613 = vpop.f32.mrb[0].mxu0
        %v1614 = vadd.f32 0.0, %v1613
        %v1615 = vpop.f32.mrb[0].mxu0
        %v1616 = vpop.f32.mrb[0].mxu0
        %v1617 = vadd.f32 0.0, %v1616
        %v1618 = vpop.f32.mrb[0].mxu0
        %1619 = vdwg.mxu0
        %v1620 = vld [vmem:[%s2] sm:$0x1]
        %v1621 = vlaneseq
        %v1622 = vshrl.u32 %v1621, 7
        %v1623 = vsub.s32 0, %v1622
        %v1624 = vrot.slane %v1620, %v1623
        %v1625 = vmul.f32 %v1206, %v1624
        %v1626 = vmul.f32 %v1209, %v1624
        %v1627 = vmul.f32 %v1214, %v1624
        %v1628 = vmul.f32 %v1217, %v1624
        %v1629 = vmul.f32 %v1222, %v1624
        %v1630 = vmul.f32 %v1225, %v1624
        %v1631 = vmul.f32 %v1230, %v1624
        %v1632 = vmul.f32 %v1233, %v1624
        %v1633 = vmul.f32 %v1238, %v1624
        %v1634 = vmul.f32 %v1241, %v1624
        %v1635 = vmul.f32 %v1246, %v1624
        %v1636 = vmul.f32 %v1249, %v1624
        %v1637 = vmul.f32 %v1254, %v1624
        %v1638 = vmul.f32 %v1257, %v1624
        %v1639 = vmul.f32 %v1262, %v1624
        %v1640 = vmul.f32 %v1265, %v1624
        %v1641 = vmul.f32 %v1270, %v1624
        %v1642 = vmul.f32 %v1273, %v1624
        %v1643 = vmul.f32 %v1278, %v1624
        %v1644 = vmul.f32 %v1281, %v1624
        %v1645 = vmul.f32 %v1286, %v1624
        %v1646 = vmul.f32 %v1289, %v1624
        %v1647 = vmul.f32 %v1294, %v1624
        %v1648 = vmul.f32 %v1297, %v1624
        %v1649 = vmul.f32 %v1302, %v1624
        %v1650 = vmul.f32 %v1305, %v1624
        %v1651 = vmul.f32 %v1310, %v1624
        %v1652 = vmul.f32 %v1313, %v1624
        %v1653 = vmul.f32 %v1318, %v1624
        %v1654 = vmul.f32 %v1321, %v1624
        %v1655 = vmul.f32 %v1326, %v1624
        %v1656 = vmul.f32 %v1329, %v1624
        %v1657 = vmul.f32 %v1334, %v1624
        %v1658 = vmul.f32 %v1337, %v1624
        %v1659 = vmul.f32 %v1342, %v1624
        %v1660 = vmul.f32 %v1345, %v1624
        %v1661 = vmul.f32 %v1350, %v1624
        %v1662 = vmul.f32 %v1353, %v1624
        %v1663 = vmul.f32 %v1358, %v1624
        %v1664 = vmul.f32 %v1361, %v1624
        %v1665 = vmul.f32 %v1366, %v1624
        %v1666 = vmul.f32 %v1369, %v1624
        %v1667 = vmul.f32 %v1374, %v1624
        %v1668 = vmul.f32 %v1377, %v1624
        %v1669 = vmul.f32 %v1382, %v1624
        %v1670 = vmul.f32 %v1385, %v1624
        %v1671 = vmul.f32 %v1390, %v1624
        %v1672 = vmul.f32 %v1393, %v1624
        %v1673 = vmul.f32 %v1398, %v1624
        %v1674 = vmul.f32 %v1401, %v1624
        %v1675 = vmul.f32 %v1406, %v1624
        %v1676 = vmul.f32 %v1409, %v1624
        %v1677 = vmul.f32 %v1414, %v1624
        %v1678 = vmul.f32 %v1417, %v1624
        %v1679 = vmul.f32 %v1422, %v1624
        %v1680 = vmul.f32 %v1425, %v1624
        %v1681 = vmul.f32 %v1430, %v1624
        %v1682 = vmul.f32 %v1433, %v1624
        %v1683 = vmul.f32 %v1438, %v1624
        %v1684 = vmul.f32 %v1441, %v1624
        %v1685 = vmul.f32 %v1446, %v1624
        %v1686 = vmul.f32 %v1449, %v1624
        %v1687 = vmul.f32 %v1454, %v1624
        %v1688 = vmul.f32 %v1457, %v1624
        %v1689 = vmul.f32 %v1462, %v1624
        %v1690 = vmul.f32 %v1465, %v1624
        %v1691 = vmul.f32 %v1470, %v1624
        %v1692 = vmul.f32 %v1473, %v1624
        %v1693 = vmul.f32 %v1478, %v1624
        %v1694 = vmul.f32 %v1481, %v1624
        %v1695 = vmul.f32 %v1486, %v1624
        %v1696 = vmul.f32 %v1489, %v1624
        %v1697 = vmul.f32 %v1494, %v1624
        %v1698 = vmul.f32 %v1497, %v1624
        %v1699 = vmul.f32 %v1502, %v1624
        %v1700 = vmul.f32 %v1505, %v1624
        %v1701 = vmul.f32 %v1510, %v1624
        %v1702 = vmul.f32 %v1513, %v1624
        %v1703 = vmul.f32 %v1518, %v1624
        %v1704 = vmul.f32 %v1521, %v1624
        %v1705 = vmul.f32 %v1526, %v1624
        %v1706 = vmul.f32 %v1529, %v1624
        %v1707 = vmul.f32 %v1534, %v1624
        %v1708 = vmul.f32 %v1537, %v1624
        %v1709 = vmul.f32 %v1542, %v1624
        %v1710 = vmul.f32 %v1545, %v1624
        %v1711 = vmul.f32 %v1550, %v1624
        %v1712 = vmul.f32 %v1553, %v1624
        %v1713 = vmul.f32 %v1558, %v1624
        %v1714 = vmul.f32 %v1561, %v1624
        %v1715 = vmul.f32 %v1566, %v1624
        %v1716 = vmul.f32 %v1569, %v1624
        %v1717 = vmul.f32 %v1574, %v1624
        %v1718 = vmul.f32 %v1577, %v1624
        %v1719 = vmul.f32 %v1582, %v1624
        %v1720 = vmul.f32 %v1585, %v1624
        %v1721 = vmul.f32 %v1590, %v1624
        %v1722 = vmul.f32 %v1593, %v1624
        %v1723 = vmul.f32 %v1598, %v1624
        %v1724 = vmul.f32 %v1601, %v1624
        %v1725 = vmul.f32 %v1606, %v1624
        %v1726 = vmul.f32 %v1609, %v1624
        %v1727 = vmul.f32 %v1614, %v1624
        %v1728 = vmul.f32 %v1617, %v1624
        %v1729 = vld [vmem:[%s2 + $0x1] sm:$0x1]
        %v1730 = vlaneseq
        %v1731 = vshrl.u32 %v1730, 7
        %v1732 = vsub.s32 0, %v1731
        %v1733 = vrot.slane %v1729, %v1732
        %v1734 = vadd.f32 %v1625, %v1733
        %v1735 = vadd.f32 %v1626, %v1733
        %v1736 = vadd.f32 %v1627, %v1733
        %v1737 = vadd.f32 %v1628, %v1733
        %v1738 = vadd.f32 %v1629, %v1733
        %v1739 = vadd.f32 %v1630, %v1733
        %v1740 = vadd.f32 %v1631, %v1733
        %v1741 = vadd.f32 %v1632, %v1733
        %v1742 = vadd.f32 %v1633, %v1733
        %v1743 = vadd.f32 %v1634, %v1733
        %v1744 = vadd.f32 %v1635, %v1733
        %v1745 = vadd.f32 %v1636, %v1733
        %v1746 = vadd.f32 %v1637, %v1733
        %v1747 = vadd.f32 %v1638, %v1733
        %v1748 = vadd.f32 %v1639, %v1733
        %v1749 = vadd.f32 %v1640, %v1733
        %v1750 = vadd.f32 %v1641, %v1733
        %v1751 = vadd.f32 %v1642, %v1733
        %v1752 = vadd.f32 %v1643, %v1733
        %v1753 = vadd.f32 %v1644, %v1733
        %v1754 = vadd.f32 %v1645, %v1733
        %v1755 = vadd.f32 %v1646, %v1733
        %v1756 = vadd.f32 %v1647, %v1733
        %v1757 = vadd.f32 %v1648, %v1733
        %v1758 = vadd.f32 %v1649, %v1733
        %v1759 = vadd.f32 %v1650, %v1733
        %v1760 = vadd.f32 %v1651, %v1733
        %v1761 = vadd.f32 %v1652, %v1733
        %v1762 = vadd.f32 %v1653, %v1733
        %v1763 = vadd.f32 %v1654, %v1733
        %v1764 = vadd.f32 %v1655, %v1733
        %v1765 = vadd.f32 %v1656, %v1733
        %v1766 = vadd.f32 %v1657, %v1733
        %v1767 = vadd.f32 %v1658, %v1733
        %v1768 = vadd.f32 %v1659, %v1733
        %v1769 = vadd.f32 %v1660, %v1733
        %v1770 = vadd.f32 %v1661, %v1733
        %v1771 = vadd.f32 %v1662, %v1733
        %v1772 = vadd.f32 %v1663, %v1733
        %v1773 = vadd.f32 %v1664, %v1733
        %v1774 = vadd.f32 %v1665, %v1733
        %v1775 = vadd.f32 %v1666, %v1733
        %v1776 = vadd.f32 %v1667, %v1733
        %v1777 = vadd.f32 %v1668, %v1733
        %v1778 = vadd.f32 %v1669, %v1733
        %v1779 = vadd.f32 %v1670, %v1733
        %v1780 = vadd.f32 %v1671, %v1733
        %v1781 = vadd.f32 %v1672, %v1733
        %v1782 = vadd.f32 %v1673, %v1733
        %v1783 = vadd.f32 %v1674, %v1733
        %v1784 = vadd.f32 %v1675, %v1733
        %v1785 = vadd.f32 %v1676, %v1733
        %v1786 = vadd.f32 %v1677, %v1733
        %v1787 = vadd.f32 %v1678, %v1733
        %v1788 = vadd.f32 %v1679, %v1733
        %v1789 = vadd.f32 %v1680, %v1733
        %v1790 = vadd.f32 %v1681, %v1733
        %v1791 = vadd.f32 %v1682, %v1733
        %v1792 = vadd.f32 %v1683, %v1733
        %v1793 = vadd.f32 %v1684, %v1733
        %v1794 = vadd.f32 %v1685, %v1733
        %v1795 = vadd.f32 %v1686, %v1733
        %v1796 = vadd.f32 %v1687, %v1733
        %v1797 = vadd.f32 %v1688, %v1733
        %v1798 = vadd.f32 %v1689, %v1733
        %v1799 = vadd.f32 %v1690, %v1733
        %v1800 = vadd.f32 %v1691, %v1733
        %v1801 = vadd.f32 %v1692, %v1733
        %v1802 = vadd.f32 %v1693, %v1733
        %v1803 = vadd.f32 %v1694, %v1733
        %v1804 = vadd.f32 %v1695, %v1733
        %v1805 = vadd.f32 %v1696, %v1733
        %v1806 = vadd.f32 %v1697, %v1733
        %v1807 = vadd.f32 %v1698, %v1733
        %v1808 = vadd.f32 %v1699, %v1733
        %v1809 = vadd.f32 %v1700, %v1733
        %v1810 = vadd.f32 %v1701, %v1733
        %v1811 = vadd.f32 %v1702, %v1733
        %v1812 = vadd.f32 %v1703, %v1733
        %v1813 = vadd.f32 %v1704, %v1733
        %v1814 = vadd.f32 %v1705, %v1733
        %v1815 = vadd.f32 %v1706, %v1733
        %v1816 = vadd.f32 %v1707, %v1733
        %v1817 = vadd.f32 %v1708, %v1733
        %v1818 = vadd.f32 %v1709, %v1733
        %v1819 = vadd.f32 %v1710, %v1733
        %v1820 = vadd.f32 %v1711, %v1733
        %v1821 = vadd.f32 %v1712, %v1733
        %v1822 = vadd.f32 %v1713, %v1733
        %v1823 = vadd.f32 %v1714, %v1733
        %v1824 = vadd.f32 %v1715, %v1733
        %v1825 = vadd.f32 %v1716, %v1733
        %v1826 = vadd.f32 %v1717, %v1733
        %v1827 = vadd.f32 %v1718, %v1733
        %v1828 = vadd.f32 %v1719, %v1733
        %v1829 = vadd.f32 %v1720, %v1733
        %v1830 = vadd.f32 %v1721, %v1733
        %v1831 = vadd.f32 %v1722, %v1733
        %v1832 = vadd.f32 %v1723, %v1733
        %v1833 = vadd.f32 %v1724, %v1733
        %v1834 = vadd.f32 %v1725, %v1733
        %v1835 = vadd.f32 %v1726, %v1733
        %v1836 = vadd.f32 %v1727, %v1733
        %v1837 = vadd.f32 %v1728, %v1733
        %v1838 = vmax.f32 %v1734, 0.0
        %v1839 = vmax.f32 %v1735, 0.0
        %v1840 = vmax.f32 %v1736, 0.0
        %v1841 = vmax.f32 %v1737, 0.0
        %v1842 = vmax.f32 %v1738, 0.0
        %v1843 = vmax.f32 %v1739, 0.0
        %v1844 = vmax.f32 %v1740, 0.0
        %v1845 = vmax.f32 %v1741, 0.0
        %v1846 = vmax.f32 %v1742, 0.0
        %v1847 = vmax.f32 %v1743, 0.0
        %v1848 = vmax.f32 %v1744, 0.0
        %v1849 = vmax.f32 %v1745, 0.0
        %v1850 = vmax.f32 %v1746, 0.0
        %v1851 = vmax.f32 %v1747, 0.0
        %v1852 = vmax.f32 %v1748, 0.0
        %v1853 = vmax.f32 %v1749, 0.0
        %v1854 = vmax.f32 %v1750, 0.0
        %v1855 = vmax.f32 %v1751, 0.0
        %v1856 = vmax.f32 %v1752, 0.0
        %v1857 = vmax.f32 %v1753, 0.0
        %v1858 = vmax.f32 %v1754, 0.0
        %v1859 = vmax.f32 %v1755, 0.0
        %v1860 = vmax.f32 %v1756, 0.0
        %v1861 = vmax.f32 %v1757, 0.0
        %v1862 = vmax.f32 %v1758, 0.0
        %v1863 = vmax.f32 %v1759, 0.0
        %v1864 = vmax.f32 %v1760, 0.0
        %v1865 = vmax.f32 %v1761, 0.0
        %v1866 = vmax.f32 %v1762, 0.0
        %v1867 = vmax.f32 %v1763, 0.0
        %v1868 = vmax.f32 %v1764, 0.0
        %v1869 = vmax.f32 %v1765, 0.0
        %v1870 = vmax.f32 %v1766, 0.0
        %v1871 = vmax.f32 %v1767, 0.0
        %v1872 = vmax.f32 %v1768, 0.0
        %v1873 = vmax.f32 %v1769, 0.0
        %v1874 = vmax.f32 %v1770, 0.0
        %v1875 = vmax.f32 %v1771, 0.0
        %v1876 = vmax.f32 %v1772, 0.0
        %v1877 = vmax.f32 %v1773, 0.0
        %v1878 = vmax.f32 %v1774, 0.0
        %v1879 = vmax.f32 %v1775, 0.0
        %v1880 = vmax.f32 %v1776, 0.0
        %v1881 = vmax.f32 %v1777, 0.0
        %v1882 = vmax.f32 %v1778, 0.0
        %v1883 = vmax.f32 %v1779, 0.0
        %v1884 = vmax.f32 %v1780, 0.0
        %v1885 = vmax.f32 %v1781, 0.0
        %v1886 = vmax.f32 %v1782, 0.0
        %v1887 = vmax.f32 %v1783, 0.0
        %v1888 = vmax.f32 %v1784, 0.0
        %v1889 = vmax.f32 %v1785, 0.0
        %v1890 = vmax.f32 %v1786, 0.0
        %v1891 = vmax.f32 %v1787, 0.0
        %v1892 = vmax.f32 %v1788, 0.0
        %v1893 = vmax.f32 %v1789, 0.0
        %v1894 = vmax.f32 %v1790, 0.0
        %v1895 = vmax.f32 %v1791, 0.0
        %v1896 = vmax.f32 %v1792, 0.0
        %v1897 = vmax.f32 %v1793, 0.0
        %v1898 = vmax.f32 %v1794, 0.0
        %v1899 = vmax.f32 %v1795, 0.0
        %v1900 = vmax.f32 %v1796, 0.0
        %v1901 = vmax.f32 %v1797, 0.0
        %v1902 = vmax.f32 %v1798, 0.0
        %v1903 = vmax.f32 %v1799, 0.0
        %v1904 = vmax.f32 %v1800, 0.0
        %v1905 = vmax.f32 %v1801, 0.0
        %v1906 = vmax.f32 %v1802, 0.0
        %v1907 = vmax.f32 %v1803, 0.0
        %v1908 = vmax.f32 %v1804, 0.0
        %v1909 = vmax.f32 %v1805, 0.0
        %v1910 = vmax.f32 %v1806, 0.0
        %v1911 = vmax.f32 %v1807, 0.0
        %v1912 = vmax.f32 %v1808, 0.0
        %v1913 = vmax.f32 %v1809, 0.0
        %v1914 = vmax.f32 %v1810, 0.0
        %v1915 = vmax.f32 %v1811, 0.0
        %v1916 = vmax.f32 %v1812, 0.0
        %v1917 = vmax.f32 %v1813, 0.0
        %v1918 = vmax.f32 %v1814, 0.0
        %v1919 = vmax.f32 %v1815, 0.0
        %v1920 = vmax.f32 %v1816, 0.0
        %v1921 = vmax.f32 %v1817, 0.0
        %v1922 = vmax.f32 %v1818, 0.0
        %v1923 = vmax.f32 %v1819, 0.0
        %v1924 = vmax.f32 %v1820, 0.0
        %v1925 = vmax.f32 %v1821, 0.0
        %v1926 = vmax.f32 %v1822, 0.0
        %v1927 = vmax.f32 %v1823, 0.0
        %v1928 = vmax.f32 %v1824, 0.0
        %v1929 = vmax.f32 %v1825, 0.0
        %v1930 = vmax.f32 %v1826, 0.0
        %v1931 = vmax.f32 %v1827, 0.0
        %v1932 = vmax.f32 %v1828, 0.0
        %v1933 = vmax.f32 %v1829, 0.0
        %v1934 = vmax.f32 %v1830, 0.0
        %v1935 = vmax.f32 %v1831, 0.0
        %v1936 = vmax.f32 %v1832, 0.0
        %v1937 = vmax.f32 %v1833, 0.0
        %v1938 = vmax.f32 %v1834, 0.0
        %v1939 = vmax.f32 %v1835, 0.0
        %v1940 = vmax.f32 %v1836, 0.0
        %v1941 = vmax.f32 %v1837, 0.0
        %v1942 = vmax.f32 %v1838, %v1864
        %v1943 = vmax.f32 %v1839, %v1865
        %v1944 = vmax.f32 %v1840, %v1866
        %v1945 = vmax.f32 %v1841, %v1867
        %v1946 = vmax.f32 %v1842, %v1868
        %v1947 = vmax.f32 %v1843, %v1869
        %v1948 = vmax.f32 %v1844, %v1870
        %v1949 = vmax.f32 %v1845, %v1871
        %v1950 = vmax.f32 %v1846, %v1872
        %v1951 = vmax.f32 %v1847, %v1873
        %v1952 = vmax.f32 %v1848, %v1874
        %v1953 = vmax.f32 %v1849, %v1875
        %v1954 = vmax.f32 %v1850, %v1876
        %v1955 = vmax.f32 %v1851, %v1877
        %v1956 = vmax.f32 %v1852, %v1878
        %v1957 = vmax.f32 %v1853, %v1879
        %v1958 = vmax.f32 %v1854, %v1880
        %v1959 = vmax.f32 %v1855, %v1881
        %v1960 = vmax.f32 %v1856, %v1882
        %v1961 = vmax.f32 %v1857, %v1883
        %v1962 = vmax.f32 %v1858, %v1884
        %v1963 = vmax.f32 %v1859, %v1885
        %v1964 = vmax.f32 %v1860, %v1886
        %v1965 = vmax.f32 %v1861, %v1887
        %v1966 = vmax.f32 %v1862, %v1888
        %v1967 = vmax.f32 %v1863, %v1889
        %v1968 = vmax.f32 %v1890, %v1916
        %v1969 = vmax.f32 %v1891, %v1917
        %v1970 = vmax.f32 %v1892, %v1918
        %v1971 = vmax.f32 %v1893, %v1919
        %v1972 = vmax.f32 %v1894, %v1920
        %v1973 = vmax.f32 %v1895, %v1921
        %v1974 = vmax.f32 %v1896, %v1922
        %v1975 = vmax.f32 %v1897, %v1923
        %v1976 = vmax.f32 %v1898, %v1924
        %v1977 = vmax.f32 %v1899, %v1925
        %v1978 = vmax.f32 %v1900, %v1926
        %v1979 = vmax.f32 %v1901, %v1927
        %v1980 = vmax.f32 %v1902, %v1928
        %v1981 = vmax.f32 %v1903, %v1929
        %v1982 = vmax.f32 %v1904, %v1930
        %v1983 = vmax.f32 %v1905, %v1931
        %v1984 = vmax.f32 %v1906, %v1932
        %v1985 = vmax.f32 %v1907, %v1933
        %v1986 = vmax.f32 %v1908, %v1934
        %v1987 = vmax.f32 %v1909, %v1935
        %v1988 = vmax.f32 %v1910, %v1936
        %v1989 = vmax.f32 %v1911, %v1937
        %v1990 = vmax.f32 %v1912, %v1938
        %v1991 = vmax.f32 %v1913, %v1939
        %v1992 = vmax.f32 %v1914, %v1940
        %v1993 = vmax.f32 %v1915, %v1941
        %v1994 = vmax.f32 %v1942, %v1968
        %v1995 = vmax.f32 %v1943, %v1969
        %v1996 = vmax.f32 %v1944, %v1970
        %v1997 = vmax.f32 %v1945, %v1971
        %v1998 = vmax.f32 %v1946, %v1972
        %v1999 = vmax.f32 %v1947, %v1973
        %v2000 = vmax.f32 %v1948, %v1974
        %v2001 = vmax.f32 %v1949, %v1975
        %v2002 = vmax.f32 %v1950, %v1976
        %v2003 = vmax.f32 %v1951, %v1977
        %v2004 = vmax.f32 %v1952, %v1978
        %v2005 = vmax.f32 %v1953, %v1979
        %v2006 = vmax.f32 %v1954, %v1980
        %v2007 = vmax.f32 %v1955, %v1981
        %v2008 = vmax.f32 %v1956, %v1982
        %v2009 = vmax.f32 %v1957, %v1983
        %v2010 = vmax.f32 %v1958, %v1984
        %v2011 = vmax.f32 %v1959, %v1985
        %v2012 = vmax.f32 %v1960, %v1986
        %v2013 = vmax.f32 %v1961, %v1987
        %v2014 = vmax.f32 %v1962, %v1988
        %v2015 = vmax.f32 %v1963, %v1989
        %v2016 = vmax.f32 %v1964, %v1990
        %v2017 = vmax.f32 %v1965, %v1991
        %v2018 = vmax.f32 %v1966, %v1992
        %v2019 = vmax.f32 %v1967, %v1993
        %2020 = vst [vmem:[%s625] sm:$0xff] %v1994
        %2021 = vst [vmem:[%s625 + $0x8] sm:$0xff] %v1995
        %2022 = vst [vmem:[%s625 + $0x10] sm:$0xff] %v1996
        %2023 = vst [vmem:[%s625 + $0x18] sm:$0xff] %v1997
        %2024 = vst [vmem:[%s625 + $0x20] sm:$0xff] %v1998
        %2025 = vst [vmem:[%s625 + $0x28] sm:$0xff] %v1999
        %2026 = vst [vmem:[%s625 + $0x30] sm:$0xff] %v2000
        %2027 = vst [vmem:[%s625 + $0x38] sm:$0xff] %v2001
        %2028 = vst [vmem:[%s625 + $0x40] sm:$0xff] %v2002
        %2029 = vst [vmem:[%s625 + $0x48] sm:$0xff] %v2003
        %2030 = vst [vmem:[%s625 + $0x50] sm:$0xff] %v2004
        %2031 = vst [vmem:[%s625 + $0x58] sm:$0xff] %v2005
        %2032 = vst [vmem:[%s625 + $0x60] sm:$0xff] %v2006
        %2033 = vst [vmem:[%s625 + $0x68] sm:$0xff] %v2007
        %2034 = vst [vmem:[%s625 + $0x70] sm:$0xff] %v2008
        %2035 = vst [vmem:[%s625 + $0x78] sm:$0xff] %v2009
        %2036 = vst [vmem:[%s625 + $0x80] sm:$0xff] %v2010
        %2037 = vst [vmem:[%s625 + $0x88] sm:$0xff] %v2011
        %2038 = vst [vmem:[%s625 + $0x90] sm:$0xff] %v2012
        %2039 = vst [vmem:[%s625 + $0x98] sm:$0xff] %v2013
        %2040 = vst [vmem:[%s625 + $0xa0] sm:$0xff] %v2014
        %2041 = vst [vmem:[%s625 + $0xa8] sm:$0xff] %v2015
        %2042 = vst [vmem:[%s625 + $0xb0] sm:$0xff] %v2016
        %2043 = vst [vmem:[%s625 + $0xb8] sm:$0xff] %v2017
        %2044 = vst [vmem:[%s625 + $0xc0] sm:$0xff] %v2018
        %2045 = vst [vmem:[%s625 + $0xc8] sm:$0xff] %v2019
        %s2046 = smul.u32 26, %s14
        %p2047 = scmp.lt.s32.totalorder %s2046, 51
        %s2048 = scalar_select %p2047, %s2046, 51
        %s2049 = smul.addr %s2048, 8
        %s2050 = scalar_lea.vmem %s3, %s2049
        // Predicated region
        $region74: #{lenet5_bn_forward.6} parent=68 // pred_check
          %p2051 = pneg %p100
        $region75: #{lenet5_bn_forward.6} parent=68 // pred_check_branch
          %2053 = sbr.rel (%p2051) target = $region77
        $region76: #{lenet5_bn_forward.6} parent=68 // pred_region
          %s2054 = smul.u32 26, %s14
        $region77: #{lenet5_bn_forward.6} parent=68 // pred_fallthru
          _
      $region69: #{lenet5_bn_forward.6} parent=5 // pred_fallthru
        _
      %p2055 = scmp.le.s32.totalorder 2, %s9
      // Predicated region
      $region78: #{lenet5_bn_forward.6} parent=5 // pred_check
        %p2056 = pneg %p2055
      $region79: #{lenet5_bn_forward.6} parent=5 // pred_check_branch
        %2058 = sbr.rel (%p2056) target = $region81
      $region80: #{lenet5_bn_forward.6} parent=5 // pred_region
        %s2059 = ssub.s32 %s9, 2
        // Predicated region
        $region82: #{lenet5_bn_forward.6} parent=80 // pred_check
          %p2060 = pneg %p106
        $region83: #{lenet5_bn_forward.6} parent=80 // pred_check_branch
          %2062 = sbr.rel (%p2060) target = $region85
        $region84: #{lenet5_bn_forward.6} parent=80 // pred_region
          %s2063 = smul.u32 26, %s15
          %p2064 = scmp.lt.s32.totalorder %s2063, 51
          %s2065 = scalar_select %p2064, %s2063, 51
          %s2066 = smul.addr %s2065, 8
          %s2067 = scalar_lea.vmem %s3, %s2066
        $region85: #{lenet5_bn_forward.6} parent=80 // pred_fallthru
          _
      $region81: #{lenet5_bn_forward.6} parent=5 // pred_fallthru
        _
    $region6: #{lenet5_bn_forward.6} parent=1 // loop_footer
      %s13 = sadd.s32 1, %s9
    $region7: #{lenet5_bn_forward.6} parent=1 // loop_footer_branch
      %8 = sbr.rel target = $region3
    $region8: #{lenet5_bn_forward.6} parent=1 // loop_exit
      _

// kernel: lenet5_bn_forward.7
$region0: #{lenet5_bn_forward.7}
  #allocation0 [shape = 'u32[]', space=smem, size = 0x4, offset = 0x4, fixed_abs, tag = 'smem constant byte address 0x4 - core index']
  #allocation1 [shape = 'u32[144,128]{1,0:T(1,128)}', space=vmem, size = 0x12000, scoped, tag = 'internal scratch']
  %s0 = inlined_call_operand.vmem [shape: bf16[4,64,150], index: 0, kind: input, shape index: {}]
  %s1 = inlined_call_operand.vmem [shape: bf16[150,128], index: 1, kind: input, shape index: {}]
  %s2 = inlined_call_operand.vmem [shape: f32[16,128], index: 2, kind: output, shape index: {}]
  %s3 = sld [smem:[#allocation0]]
  $region79: #{lenet5_bn_forward.7} parent=0
    _
  %s5 = ssub.s32 1, %s3
  %s6 = scalar_select 0, %s5, %s3
  $region1: #{lenet5_bn_forward.7} parent=0
    #allocation2 [shape = 'u8[131072]{0}', space=vmem, size = 0x20000, scoped, tag = 'input window, operand 0']
    loop: start=0, step=1, limit=4
    $region2: #{lenet5_bn_forward.7} parent=1 // loop_pre_header
      _
    $region3: #{lenet5_bn_forward.7} parent=1 // loop_header
      %s8 = sphi 0, %s12
      %p9 = scmp.ge.s32.totalorder %s8, 4
      %s18 = sphi 0, %s20
      %s21 = sphi 0, %s18
      %s22 = sphi 0, %s21
      %s38 = sphi 0, %s22
      %s42 = sphi 0, %s42
      %s44 = sphi 0, %s42
      %s45 = sphi 0, %s44
      %s59 = sphi 0, %s45
      %s65 = sphi 0, %s67
      %s68 = sphi 0, %s65
      %s69 = sphi 0, %s68
      %s85 = sphi 0, %s69
    $region4: #{lenet5_bn_forward.7} parent=1 // loop_header_branch
      %11 = sbr.rel (%p9) target = $region8
    $region5: #{lenet5_bn_forward.7} parent=1 // loop_body
      %s13 = ssub.s32 %s8, 1
      %s14 = ssub.s32 %s8, 2
      %s15 = sadd.s32 %s8, 1
      %s16 = ssub.s32 %s8, %s15
      %p17 = scmp.eq.s32.totalorder %s16, 0
      %s19 = sadd.s32 %s18, 1
      %s20 = scalar_select %p17, %s18, %s19
      %p23 = pneg %p17
      %p24 = scmp.eq.s32.totalorder %s8, 1
      %p25 = por %p23, %p24
      %p26 = scmp.ne.s32.totalorder %s18, %s21
      %p27 = scmp.eq.s32.totalorder %s8, 0
      %p28 = por %p26, %p27
      %p29 = scmp.ne.s32.totalorder %s18, %s21
      %p30 = scmp.eq.s32.totalorder %s13, 1
      %p31 = por %p29, %p30
      %p32 = scmp.ne.s32.totalorder %s21, %s22
      %p33 = scmp.eq.s32.totalorder %s13, 0
      %p34 = por %p32, %p33
      %p35 = scmp.ne.s32.totalorder %s21, %s22
      %p36 = scmp.eq.s32.totalorder %s14, 1
      %p37 = por %p35, %p36
      %p39 = scmp.ne.s32.totalorder %s22, %s38
      %p40 = scmp.eq.s32.totalorder %s14, 0
      %p41 = por %p39, %p40
      %s43 = sadd.s32 %s42, 1
      %p46 = scmp.eq.s32.totalorder %s8, 1
      %p47 = scmp.ne.s32.totalorder %s42, %s44
      %p48 = scmp.eq.s32.totalorder %s8, 0
      %p49 = por %p47, %p48
      %p50 = scmp.ne.s32.totalorder %s42, %s44
      %p51 = scmp.eq.s32.totalorder %s13, 1
      %p52 = por %p50, %p51
      %p53 = scmp.ne.s32.totalorder %s44, %s45
      %p54 = scmp.eq.s32.totalorder %s13, 0
      %p55 = por %p53, %p54
      %p56 = scmp.ne.s32.totalorder %s44, %s45
      %p57 = scmp.eq.s32.totalorder %s14, 1
      %p58 = por %p56, %p57
      %p60 = scmp.ne.s32.totalorder %s45, %s59
      %p61 = scmp.eq.s32.totalorder %s14, 0
      %p62 = por %p60, %p61
      %s63 = ssub.s32 %s8, %s15
      %p64 = scmp.eq.s32.totalorder %s63, 0
      %s66 = sadd.s32 %s65, 1
      %s67 = scalar_select %p64, %s65, %s66
      %p70 = pneg %p64
      %p71 = scmp.eq.s32.totalorder %s8, 1
      %p72 = por %p70, %p71
      %p73 = scmp.ne.s32.totalorder %s65, %s68
      %p74 = scmp.eq.s32.totalorder %s8, 0
      %p75 = por %p73, %p74
      %p76 = scmp.ne.s32.totalorder %s65, %s68
      %p77 = scmp.eq.s32.totalorder %s13, 1
      %p78 = por %p76, %p77
      %p79 = scmp.ne.s32.totalorder %s68, %s69
      %p80 = scmp.eq.s32.totalorder %s13, 0
      %p81 = por %p79, %p80
      %p82 = scmp.ne.s32.totalorder %s68, %s69
      %p83 = scmp.eq.s32.totalorder %s14, 1
      %p84 = por %p82, %p83
      %p86 = scmp.ne.s32.totalorder %s69, %s85
      %p87 = scmp.eq.s32.totalorder %s14, 0
      %p88 = por %p86, %p87
      %p89 = scmp.le.s32.totalorder 1, %s8
      %p90 = scmp.lt.s32.totalorder %s8, 3
      %p91 = pnand %p89, %p90
      %p92 = pneg %p91
      // Predicated region
      $region9: #{lenet5_bn_forward.7} parent=5 // pred_check
        _
      $region10: #{lenet5_bn_forward.7} parent=5 // pred_check_branch
        %94 = sbr.rel (%p91) target = $region12
      $region11: #{lenet5_bn_forward.7} parent=5 // pred_region
        %s95 = ssub.s32 %s8, 1
        // Predicated region
        $region13: #{lenet5_bn_forward.7} parent=11 // pred_check
          %p96 = pneg %p55
        $region14: #{lenet5_bn_forward.7} parent=11 // pred_check_branch
          %98 = sbr.rel (%p96) target = $region16
        $region15: #{lenet5_bn_forward.7} parent=11 // pred_region
          _
        $region16: #{lenet5_bn_forward.7} parent=11 // pred_fallthru
          _
      $region12: #{lenet5_bn_forward.7} parent=5 // pred_fallthru
        _
      %p99 = scmp.lt.s32.totalorder %s8, 2
      // Predicated region
      $region17: #{lenet5_bn_forward.7} parent=5 // pred_check
        %p100 = pneg %p99
      $region18: #{lenet5_bn_forward.7} parent=5 // pred_check_branch
        %102 = sbr.rel (%p100) target = $region20
      $region19: #{lenet5_bn_forward.7} parent=5 // pred_region
        // Predicated region
        $region21: #{lenet5_bn_forward.7} parent=19 // pred_check
          %p103 = pneg %p28
        $region22: #{lenet5_bn_forward.7} parent=19 // pred_check_branch
          %105 = sbr.rel (%p103) target = $region24
        $region23: #{lenet5_bn_forward.7} parent=19 // pred_region
          %s106 = sand.u32 %s18, 1
          %s107 = sand.u32 %s18, 1
          %s108 = smul.addr %s107, 128
          %s109 = scalar_lea.vmem [#allocation2], %s108
          %s110 = smul.u32 4, %s8
          %s111 = smul.addr %s110, 2
          %s112 = smul.addr %s111, 4
          %s113 = scalar_lea.vmem %s0, %s112
          // Predicated region
          $region25: #{lenet5_bn_forward.7} parent=23 // pred_check
            _
          $region26: #{lenet5_bn_forward.7} parent=23 // pred_check_branch
            %115 = sbr.rel (0) target = $region28
          $region27: #{lenet5_bn_forward.7} parent=23 // pred_region
            // Predicated region
            $region29: #{lenet5_bn_forward.7} parent=27 // pred_check
              _
            $region30: #{lenet5_bn_forward.7} parent=27 // pred_check_branch
              %117 = sbr.rel (0) target = $region32
            $region31: #{lenet5_bn_forward.7} parent=27 // pred_region
              // Predicated region
              $region44: #{lenet5_bn_forward.7} parent=31 // pred_check
                _
              $region45: #{lenet5_bn_forward.7} parent=31 // pred_check_branch
                %162 = sbr.rel (0) target = $region47
              $region46: #{lenet5_bn_forward.7} parent=31 // pred_region
                loop: start=0, step=1, limit=1
                $region48: #{lenet5_bn_forward.7} parent=46 // loop_pre_header
                  _
                $region49: #{lenet5_bn_forward.7} parent=46 // loop_header
                  %s164 = sphi 0, %s168
                  %p165 = scmp.ge.s32.totalorder %s164, 1
                  %s169 = sphi %s113, %s113
                  %s170 = sphi %s109, %s109
                $region50: #{lenet5_bn_forward.7} parent=46 // loop_header_branch
                  %167 = sbr.rel (%p165) target = $region54
                $region51: #{lenet5_bn_forward.7} parent=46 // loop_body
                  %v171 = vld [vmem:[%s169] sm:$0xff]
                  %172 = vst [vmem:[%s170] sm:$0xff] %v171
                  %v173 = vld [vmem:[%s169 + $0x8] sm:$0xff]
                  %174 = vst [vmem:[%s170 + $0x8] sm:$0xff] %v173
                  %v175 = vld [vmem:[%s169 + $0x10] sm:$0xff]
                  %176 = vst [vmem:[%s170 + $0x10] sm:$0xff] %v175
                  %v177 = vld [vmem:[%s169 + $0x18] sm:$0xff]
                  %178 = vst [vmem:[%s170 + $0x18] sm:$0xff] %v177
                  %v179 = vld [vmem:[%s169 + $0x40] sm:$0xff]
                  %180 = vst [vmem:[%s170 + $0x20] sm:$0xff] %v179
                  %v181 = vld [vmem:[%s169 + $0x48] sm:$0xff]
                  %182 = vst [vmem:[%s170 + $0x28] sm:$0xff] %v181
                  %v183 = vld [vmem:[%s169 + $0x50] sm:$0xff]
                  %184 = vst [vmem:[%s170 + $0x30] sm:$0xff] %v183
                  %v185 = vld [vmem:[%s169 + $0x58] sm:$0xff]
                  %186 = vst [vmem:[%s170 + $0x38] sm:$0xff] %v185
                  %v187 = vld [vmem:[%s169 + $0x80] sm:$0xff]
                  %188 = vst [vmem:[%s170 + $0x40] sm:$0xff] %v187
                  %v189 = vld [vmem:[%s169 + $0x88] sm:$0xff]
                  %190 = vst [vmem:[%s170 + $0x48] sm:$0xff] %v189
                  %v191 = vld [vmem:[%s169 + $0x90] sm:$0xff]
                  %192 = vst [vmem:[%s170 + $0x50] sm:$0xff] %v191
                  %v193 = vld [vmem:[%s169 + $0x98] sm:$0xff]
                  %194 = vst [vmem:[%s170 + $0x58] sm:$0xff] %v193
                  %v195 = vld [vmem:[%s169 + $0xc0] sm:$0xff]
                  %196 = vst [vmem:[%s170 + $0x60] sm:$0xff] %v195
                  %v197 = vld [vmem:[%s169 + $0xc8] sm:$0xff]
                  %198 = vst [vmem:[%s170 + $0x68] sm:$0xff] %v197
                  %v199 = vld [vmem:[%s169 + $0xd0] sm:$0xff]
                  %200 = vst [vmem:[%s170 + $0x70] sm:$0xff] %v199
                  %v201 = vld [vmem:[%s169 + $0xd8] sm:$0xff]
                  %202 = vst [vmem:[%s170 + $0x78] sm:$0xff] %v201
                $region52: #{lenet5_bn_forward.7} parent=46 // loop_footer
                  %s168 = sadd.s32 1, %s164
                $region53: #{lenet5_bn_forward.7} parent=46 // loop_footer_branch
                  %163 = sbr.rel target = $region49
                $region54: #{lenet5_bn_forward.7} parent=46 // loop_exit
                  _
              $region47: #{lenet5_bn_forward.7} parent=31 // pred_fallthru
                _
              // Predicated region
              $region55: #{lenet5_bn_forward.7} parent=31 // pred_check
                _
              $region56: #{lenet5_bn_forward.7} parent=31 // pred_check_branch
                %204 = sbr.rel target = $region58
              $region57: #{lenet5_bn_forward.7} parent=31 // pred_region
                _
              $region58: #{lenet5_bn_forward.7} parent=31 // pred_fallthru
                _
            $region32: #{lenet5_bn_forward.7} parent=27 // pred_fallthru
              _
            // Predicated region
            $region33: #{lenet5_bn_forward.7} parent=27 // pred_check
              _
            $region34: #{lenet5_bn_forward.7} parent=27 // pred_check_branch
              %119 = sbr.rel target = $region36
            $region35: #{lenet5_bn_forward.7} parent=27 // pred_region
              loop: start=0, step=1, limit=1
              $region37: #{lenet5_bn_forward.7} parent=35 // loop_pre_header
                _
              $region38: #{lenet5_bn_forward.7} parent=35 // loop_header
                %s122 = sphi 0, %s126
                %p123 = scmp.ge.s32.totalorder %s122, 1
                %s127 = sphi %s113, %s113
                %s128 = sphi %s109, %s109
              $region39: #{lenet5_bn_forward.7} parent=35 // loop_header_branch
                %125 = sbr.rel (%p123) target = $region43
              $region40: #{lenet5_bn_forward.7} parent=35 // loop_body
                %v129 = vld [vmem:[%s127] sm:$0xff]
                %130 = vst [vmem:[%s128] sm:$0xff] %v129
                %v131 = vld [vmem:[%s127 + $0x8] sm:$0xff]
                %132 = vst [vmem:[%s128 + $0x8] sm:$0xff] %v131
                %v133 = vld [vmem:[%s127 + $0x10] sm:$0xff]
                %134 = vst [vmem:[%s128 + $0x10] sm:$0xff] %v133
                %v135 = vld [vmem:[%s127 + $0x18] sm:$0xff]
                %136 = vst [vmem:[%s128 + $0x18] sm:$0xff] %v135
                %v137 = vld [vmem:[%s127 + $0x40] sm:$0xff]
                %138 = vst [vmem:[%s128 + $0x20] sm:$0xff] %v137
                %v139 = vld [vmem:[%s127 + $0x48] sm:$0xff]
                %140 = vst [vmem:[%s128 + $0x28] sm:$0xff] %v139
                %v141 = vld [vmem:[%s127 + $0x50] sm:$0xff]
                %142 = vst [vmem:[%s128 + $0x30] sm:$0xff] %v141
                %v143 = vld [vmem:[%s127 + $0x58] sm:$0xff]
                %144 = vst [vmem:[%s128 + $0x38] sm:$0xff] %v143
                %v145 = vld [vmem:[%s127 + $0x80] sm:$0xff]
                %146 = vst [vmem:[%s128 + $0x40] sm:$0xff] %v145
                %v147 = vld [vmem:[%s127 + $0x88] sm:$0xff]
                %148 = vst [vmem:[%s128 + $0x48] sm:$0xff] %v147
                %v149 = vld [vmem:[%s127 + $0x90] sm:$0xff]
                %150 = vst [vmem:[%s128 + $0x50] sm:$0xff] %v149
                %v151 = vld [vmem:[%s127 + $0x98] sm:$0xff]
                %152 = vst [vmem:[%s128 + $0x58] sm:$0xff] %v151
                %v153 = vld [vmem:[%s127 + $0xc0] sm:$0xff]
                %154 = vst [vmem:[%s128 + $0x60] sm:$0xff] %v153
                %v155 = vld [vmem:[%s127 + $0xc8] sm:$0xff]
                %156 = vst [vmem:[%s128 + $0x68] sm:$0xff] %v155
                %v157 = vld [vmem:[%s127 + $0xd0] sm:$0xff]
                %158 = vst [vmem:[%s128 + $0x70] sm:$0xff] %v157
                %v159 = vld [vmem:[%s127 + $0xd8] sm:$0xff]
                %160 = vst [vmem:[%s128 + $0x78] sm:$0xff] %v159
              $region41: #{lenet5_bn_forward.7} parent=35 // loop_footer
                %s126 = sadd.s32 1, %s122
              $region42: #{lenet5_bn_forward.7} parent=35 // loop_footer_branch
                %121 = sbr.rel target = $region38
              $region43: #{lenet5_bn_forward.7} parent=35 // loop_exit
                _
            $region36: #{lenet5_bn_forward.7} parent=27 // pred_fallthru
              _
          $region28: #{lenet5_bn_forward.7} parent=23 // pred_fallthru
            _
          %205 = vnop
        $region24: #{lenet5_bn_forward.7} parent=19 // pred_fallthru
          _
      $region20: #{lenet5_bn_forward.7} parent=5 // pred_fallthru
        _
      %p206 = scmp.le.s32.totalorder 1, %s8
      %p207 = scmp.lt.s32.totalorder %s8, 3
      %p208 = pnand %p206, %p207
      %p209 = pneg %p208
      // Predicated region
      $region59: #{lenet5_bn_forward.7} parent=5 // pred_check
        _
      $region60: #{lenet5_bn_forward.7} parent=5 // pred_check_branch
        %211 = sbr.rel (%p208) target = $region62
      $region61: #{lenet5_bn_forward.7} parent=5 // pred_region
        %s212 = ssub.s32 %s8, 1
        %s213 = sand.u32 %s21, 1
        %s214 = sand.u32 %s21, 1
        %s215 = smul.addr %s214, 128
        %s216 = scalar_lea.vmem [#allocation2], %s215
        // Predicated region
        $region63: #{lenet5_bn_forward.7} parent=61 // pred_check
          %p217 = pneg %p34
        $region64: #{lenet5_bn_forward.7} parent=61 // pred_check_branch
          %219 = sbr.rel (%p217) target = $region66
        $region65: #{lenet5_bn_forward.7} parent=61 // pred_region
          _
        $region66: #{lenet5_bn_forward.7} parent=61 // pred_fallthru
          _
        %s220 = sand.u32 %s21, 1
        %s221 = sand.u32 %s21, 1
        %s222 = smul.addr %s221, 128
        %s223 = scalar_lea.vmem [#allocation2], %s222
        %p224 = pneg %p34
        %p225 = pneg %p31
        %p226 = pneg %p55
        %p227 = pneg %p52
        %p228 = pneg %p81
        %p229 = pneg %p78
        %p230 = scmp.lt.s32.totalorder %s13, 1
        %s231 = scalar_select %p230, %s13, 1
        %s232 = smul.addr %s231, 8
        %s233 = scalar_lea.vmem %s2, %s232
        %s234 = smul.u32 4, %s13
        %p235 = scmp.lt.s32.totalorder %s13, 1
        %s236 = scalar_select %p235, %s13, 1
        %s237 = smul.addr %s236, 8
        %s238 = scalar_lea.vmem %s2, %s237
        %v240 = vld [vmem:[%s216] sm:$0xff]
        %v241 = vld [vmem:[%s216 + $0x8] sm:$0xff]
        %v242 = vld [vmem:[%s216 + $0x10] sm:$0xff]
        %v243 = vld [vmem:[%s216 + $0x18] sm:$0xff]
        %v244 = vld [vmem:[%s216 + $0x20] sm:$0xff]
        %v245 = vld [vmem:[%s216 + $0x28] sm:$0xff]
        %v246 = vld [vmem:[%s216 + $0x30] sm:$0xff]
        %v247 = vld [vmem:[%s216 + $0x38] sm:$0xff]
        %v248 = vld [vmem:[%s216 + $0x40] sm:$0xff]
        %v249 = vld [vmem:[%s216 + $0x48] sm:$0xff]
        %v250 = vld [vmem:[%s216 + $0x50] sm:$0xff]
        %v251 = vld [vmem:[%s216 + $0x58] sm:$0xff]
        %v252 = vld [vmem:[%s216 + $0x60] sm:$0xff]
        %v253 = vld [vmem:[%s216 + $0x68] sm:$0xff]
        %v254 = vld [vmem:[%s216 + $0x70] sm:$0xff]
        %v255 = vld [vmem:[%s216 + $0x78] sm:$0xff]
        %v256 = vld [vmem:[%s1] sm:$0xf]
        %v257 = vld [vmem:[%s1 + $0x4] sm:$0xf]
        %v258 = vld [vmem:[%s1 + $0x8] sm:$0xf]
        %v259 = vld [vmem:[%s1 + $0xc] sm:$0xf]
        %v260 = vld [vmem:[%s1 + $0x10] sm:$0xf]
        %v261 = vld [vmem:[%s1 + $0x14] sm:$0xf]
        %v262 = vld [vmem:[%s1 + $0x18] sm:$0xf]
        %v263 = vld [vmem:[%s1 + $0x1c] sm:$0xf]
        %v264 = vld [vmem:[%s1 + $0x20] sm:$0xf]
        %v265 = vld [vmem:[%s1 + $0x24] sm:$0xf]
        %v266 = vld [vmem:[%s1 + $0x28] sm:$0xf]
        %v267 = vld [vmem:[%s1 + $0x2c] sm:$0xf]
        %v268 = vld [vmem:[%s1 + $0x30] sm:$0xf]
        %v269 = vld [vmem:[%s1 + $0x34] sm:$0xf]
        %v270 = vld [vmem:[%s1 + $0x38] sm:$0xf]
        %v271 = vld [vmem:[%s1 + $0x3c] sm:$0xf]
        %v272 = vld [vmem:[%s1 + $0x40] sm:$0xf]
        %v273 = vld [vmem:[%s1 + $0x44] sm:$0xf]
        %v274 = vld [vmem:[%s1 + $0x48] sm:$0x7]
        %v291 = vunpack.c.l.b16 %v240
        %v292 = vunpack.c.h.b16 %v240
        %v293 = vunpack.c.l.b16 %v241
        %v294 = vunpack.c.h.b16 %v241
        %v295 = vunpack.c.l.b16 %v242
        %v296 = vunpack.c.h.b16 %v242
        %v297 = vunpack.c.l.b16 %v243
        %v298 = vunpack.c.h.b16 %v243
        %v299 = vunpack.c.l.b16 %v244
        %v300 = vunpack.c.h.b16 %v244
        %v301 = vunpack.c.l.b16 %v245
        %v302 = vunpack.c.h.b16 %v245
        %v303 = vunpack.c.l.b16 %v246
        %v304 = vunpack.c.h.b16 %v246
        %v305 = vunpack.c.l.b16 %v247
        %v306 = vunpack.c.h.b16 %v247
        %v307 = vunpack.c.l.b16 %v248
        %v308 = vunpack.c.h.b16 %v248
        %v309 = vunpack.c.l.b16 %v249
        %v310 = vunpack.c.h.b16 %v249
        %v311 = vunpack.c.l.b16 %v250
        %v312 = vunpack.c.h.b16 %v250
        %v313 = vunpack.c.l.b16 %v251
        %v314 = vunpack.c.h.b16 %v251
        %v315 = vunpack.c.l.b16 %v252
        %v316 = vunpack.c.h.b16 %v252
        %v317 = vunpack.c.l.b16 %v253
        %v318 = vunpack.c.h.b16 %v253
        %v319 = vunpack.c.l.b16 %v254
        %v320 = vunpack.c.h.b16 %v254
        %v321 = vunpack.c.l.b16 %v255
        %v322 = vunpack.c.h.b16 %v255
        %v323 = vpack.c.b16 %v293, %v291
        %v324 = vpack.c.b16 %v294, %v292
        %v325 = vpack.c.b16 %v297, %v295
        %v326 = vpack.c.b16 %v298, %v296
        %v327 = vpack.c.b16 %v301, %v299
        %v328 = vpack.c.b16 %v302, %v300
        %v329 = vpack.c.b16 %v305, %v303
        %v330 = vpack.c.b16 %v306, %v304
        %v331 = vpack.c.b16 %v309, %v307
        %v332 = vpack.c.b16 %v310, %v308
        %v333 = vpack.c.b16 %v313, %v311
        %v334 = vpack.c.b16 %v314, %v312
        %v335 = vpack.c.b16 %v317, %v315
        %v336 = vpack.c.b16 %v318, %v316
        %v337 = vpack.c.b16 %v321, %v319
        %v338 = vpack.c.b16 %v322, %v320
        %v366 = vunpack.c.l.b16 %v256
        %v367 = vunpack.c.l.b16 %v257
        %v368 = vunpack.c.l.b16 %v258
        %v369 = vunpack.c.l.b16 %v259
        %v370 = vunpack.c.l.b16 %v260
        %v371 = vunpack.c.l.b16 %v261
        %v372 = vunpack.c.l.b16 %v262
        %v373 = vunpack.c.l.b16 %v263
        %v374 = vunpack.c.l.b16 %v264
        %v375 = vunpack.c.l.b16 %v265
        %v376 = vunpack.c.l.b16 %v266
        %v377 = vunpack.c.l.b16 %v267
        %v378 = vunpack.c.l.b16 %v268
        %v379 = vunpack.c.l.b16 %v269
        %v380 = vunpack.c.l.b16 %v270
        %v381 = vunpack.c.l.b16 %v271
        %v382 = vunpack.c.l.b16 %v272
        %v383 = vunpack.c.l.b16 %v273
        %v384 = vunpack.c.l.b16 %v274
        %v385 = vpack.c.b16 %v367, %v366
        %v386 = vpack.c.b16 %v369, %v368
        %v387 = vpack.c.b16 %v371, %v370
        %v388 = vpack.c.b16 %v373, %v372
        %v389 = vpack.c.b16 %v375, %v374
        %v390 = vpack.c.b16 %v377, %v376
        %v391 = vpack.c.b16 %v379, %v378
        %v392 = vpack.c.b16 %v381, %v380
        %v393 = vpack.c.b16 %v383, %v382
        %v394 = vpack.c.b16 %v384, %v384
        %vm404 = vcmask 179200
        %v406 = vsel %vm404, %v324, 0
        %v409 = vsel %vm404, %v326, 0
        %v412 = vsel %vm404, %v328, 0
        %v415 = vsel %vm404, %v330, 0
        %v418 = vsel %vm404, %v332, 0
        %v421 = vsel %vm404, %v334, 0
        %v424 = vsel %vm404, %v336, 0
        %v427 = vsel %vm404, %v338, 0
        %vm429 = vcmask 1042432
        %v431 = vsel %vm429, %v394, 0
        %433 = vmatprep.subr.bf16.mxu0 0
        %434 = vmatpush1.bf16.msra.mxu0 %v385
        %435 = vmatprep.subr.bf16.mxu0 0
        %436 = vmatpush1.bf16.msra.mxu0 %v386
        %437 = vmatprep.subr.bf16.mxu0 0
        %438 = vmatpush1.bf16.msra.mxu0 %v387
        %439 = vmatprep.subr.bf16.mxu0 0
        %440 = vmatpush1.bf16.msra.mxu0 %v388
        %441 = vmatprep.subr.bf16.mxu0 0
        %442 = vmatpush1.bf16.msra.mxu0 %v389
        %443 = vmatprep.subr.bf16.mxu0 0
        %444 = vmatpush1.bf16.msra.mxu0 %v390
        %445 = vmatprep.subr.bf16.mxu0 0
        %446 = vmatpush1.bf16.msra.mxu0 %v391
        %447 = vmatprep.subr.bf16.mxu0 0
        %448 = vmatpush1.bf16.msra.mxu0 %v392
        %449 = vmatprep.subr.bf16.mxu0 0
        %450 = vmatpush1.bf16.msra.mxu0 %v393
        %451 = vmatprep.subr.bf16.mxu0 0
        %452 = vmatpush1.bf16.msra.mxu0 %v431
        %453 = vmatprep.subr.bf16.mxu0 0
        %454 = vmatpush1.bf16.msra.mxu0 0
        %455 = vmatprep.subr.bf16.mxu0 0
        %456 = vmatpush1.bf16.msra.mxu0 0
        %457 = vmatprep.subr.bf16.mxu0 0
        %458 = vmatpush1.bf16.msra.mxu0 0
        %459 = vmatprep.subr.bf16.mxu0 0
        %460 = vmatpush1.bf16.msra.mxu0 0
        %461 = vmatprep.subr.bf16.mxu0 0
        %462 = vmatpush1.bf16.msra.mxu0 0
        %463 = vmatprep.subr.bf16.mxu0 0
        %464 = vmatpush1.bf16.msra.mxu0 0
        %465 = vmatprep.mubr.bf16.mxu0 %v406
        %466 = vmatmul.mubr.bf16.gmra.mrb[0].mxu0 %v323
        %v467 = vpop.f32.mrb[0].mxu0
        %v468 = vadd.f32 0.0, %v467
        %v469 = vpop.f32.mrb[0].mxu0
        %v470 = vpop.f32.mrb[0].mxu0
        %v471 = vadd.f32 0.0, %v470
        %v472 = vpop.f32.mrb[0].mxu0
        %473 = vmatprep.mubr.bf16.mxu0 %v409
        %474 = vmatmul.mubr.bf16.gmra.mrb[0].mxu0 %v325
        %v475 = vpop.f32.mrb[0].mxu0
        %v476 = vadd.f32 0.0, %v475
        %v477 = vpop.f32.mrb[0].mxu0
        %v478 = vpop.f32.mrb[0].mxu0
        %v479 = vadd.f32 0.0, %v478
        %v480 = vpop.f32.mrb[0].mxu0
        %481 = vmatprep.mubr.bf16.mxu0 %v412
        %482 = vmatmul.mubr.bf16.gmra.mrb[0].mxu0 %v327
        %v483 = vpop.f32.mrb[0].mxu0
        %v484 = vadd.f32 0.0, %v483
        %v485 = vpop.f32.mrb[0].mxu0
        %v486 = vpop.f32.mrb[0].mxu0
        %v487 = vadd.f32 0.0, %v486
        %v488 = vpop.f32.mrb[0].mxu0
        %489 = vmatprep.mubr.bf16.mxu0 %v415
        %490 = vmatmul.mubr.bf16.gmra.mrb[0].mxu0 %v329
        %v491 = vpop.f32.mrb[0].mxu0
        %v492 = vadd.f32 0.0, %v491
        %v493 = vpop.f32.mrb[0].mxu0
        %v494 = vpop.f32.mrb[0].mxu0
        %v495 = vadd.f32 0.0, %v494
        %v496 = vpop.f32.mrb[0].mxu0
        %497 = vmatprep.mubr.bf16.mxu0 %v418
        %498 = vmatmul.mubr.bf16.gmra.mrb[0].mxu0 %v331
        %v499 = vpop.f32.mrb[0].mxu0
        %v500 = vadd.f32 0.0, %v499
        %v501 = vpop.f32.mrb[0].mxu0
        %v502 = vpop.f32.mrb[0].mxu0
        %v503 = vadd.f32 0.0, %v502
        %v504 = vpop.f32.mrb[0].mxu0
        %505 = vmatprep.mubr.bf16.mxu0 %v421
        %506 = vmatmul.mubr.bf16.gmra.mrb[0].mxu0 %v333
        %v507 = vpop.f32.mrb[0].mxu0
        %v508 = vadd.f32 0.0, %v507
        %v509 = vpop.f32.mrb[0].mxu0
        %v510 = vpop.f32.mrb[0].mxu0
        %v511 = vadd.f32 0.0, %v510
        %v512 = vpop.f32.mrb[0].mxu0
        %513 = vmatprep.mubr.bf16.mxu0 %v424
        %514 = vmatmul.mubr.bf16.gmra.mrb[0].mxu0 %v335
        %v515 = vpop.f32.mrb[0].mxu0
        %v516 = vadd.f32 0.0, %v515
        %v517 = vpop.f32.mrb[0].mxu0
        %v518 = vpop.f32.mrb[0].mxu0
        %v519 = vadd.f32 0.0, %v518
        %v520 = vpop.f32.mrb[0].mxu0
        %521 = vmatprep.mubr.bf16.mxu0 %v427
        %522 = vmatmul.mubr.bf16.gmra.mrb[0].mxu0 %v337
        %v523 = vpop.f32.mrb[0].mxu0
        %v524 = vadd.f32 0.0, %v523
        %v525 = vpop.f32.mrb[0].mxu0
        %v526 = vpop.f32.mrb[0].mxu0
        %v527 = vadd.f32 0.0, %v526
        %v528 = vpop.f32.mrb[0].mxu0
        %529 = vdwg.mxu0
        %v530 = vadd.f32 %v468, %v471
        %v531 = vadd.f32 %v530, %v476
        %v532 = vadd.f32 %v531, %v479
        %v533 = vadd.f32 %v532, %v484
        %v534 = vadd.f32 %v533, %v487
        %v535 = vadd.f32 %v534, %v492
        %v536 = vadd.f32 %v535, %v495
        %v537 = vadd.f32 %v536, %v500
        %v538 = vadd.f32 %v537, %v503
        %v539 = vadd.f32 %v538, %v508
        %v540 = vadd.f32 %v539, %v511
        %v541 = vadd.f32 %v540, %v516
        %v542 = vadd.f32 %v541, %v519
        %v543 = vadd.f32 %v542, %v524
        %v544 = vadd.f32 %v543, %v527
        %v545 = vrot.slane %v544, 4
        %v546 = vadd.f32 %v544, %v545
        %v547 = vrot.slane %v546, 2
        %v548 = vadd.f32 %v546, %v547
        %v549 = vrot.slane %v548, 1
        %v550 = vadd.f32 %v548, %v549
        %v551 = vmul.f32 %v468, %v468
        %v552 = vmul.f32 %v471, %v471
        %v553 = vmul.f32 %v476, %v476
        %v554 = vmul.f32 %v479, %v479
        %v555 = vmul.f32 %v484, %v484
        %v556 = vmul.f32 %v487, %v487
        %v557 = vmul.f32 %v492, %v492
        %v558 = vmul.f32 %v495, %v495
        %v559 = vmul.f32 %v500, %v500
        %v560 = vmul.f32 %v503, %v503
        %v561 = vmul.f32 %v508, %v508
        %v562 = vmul.f32 %v511, %v511
        %v563 = vmul.f32 %v516, %v516
        %v564 = vmul.f32 %v519, %v519
        %v565 = vmul.f32 %v524, %v524
        %v566 = vmul.f32 %v527, %v527
        %v567 = vadd.f32 %v551, %v552
        %v568 = vadd.f32 %v567, %v553
        %v569 = vadd.f32 %v568, %v554
        %v570 = vadd.f32 %v569, %v555
        %v571 = vadd.f32 %v570, %v556
        %v572 = vadd.f32 %v571, %v557
        %v573 = vadd.f32 %v572, %v558
        %v574 = vadd.f32 %v573, %v559
        %v575 = vadd.f32 %v574, %v560
        %v576 = vadd.f32 %v575, %v561
        %v577 = vadd.f32 %v576, %v562
        %v578 = vadd.f32 %v577, %v563
        %v579 = vadd.f32 %v578, %v564
        %v580 = vadd.f32 %v579, %v565
        %v581 = vadd.f32 %v580, %v566
        %v582 = vrot.slane %v581, 4
        %v583 = vadd.f32 %v581, %v582
        %v584 = vrot.slane %v583, 2
        %v585 = vadd.f32 %v583, %v584
        %v586 = vrot.slane %v585, 1
        %v587 = vadd.f32 %v585, %v586
        %vm588 = vcmask 1040384
        %v589 = vsel %vm588, %v550, %v587
        %vm590 = vcmask 1041408
        %v591 = vsel %vm590, %v589, 0.0
        %592 = vst [vmem:[%s238] sm:$0xff] %v591
        %p593 = scmp.lt.s32.totalorder %s13, 1
        %s594 = scalar_select %p593, %s13, 1
        %s595 = smul.addr %s594, 8
        %s596 = scalar_lea.vmem %s2, %s595
        // Predicated region
        $region67: #{lenet5_bn_forward.7} parent=61 // pred_check
          %p597 = pneg %p78
        $region68: #{lenet5_bn_forward.7} parent=61 // pred_check_branch
          %599 = sbr.rel (%p597) target = $region70
        $region69: #{lenet5_bn_forward.7} parent=61 // pred_region
          _
        $region70: #{lenet5_bn_forward.7} parent=61 // pred_fallthru
          _
      $region62: #{lenet5_bn_forward.7} parent=5 // pred_fallthru
        _
      %p600 = scmp.le.s32.totalorder 2, %s8
      // Predicated region
      $region71: #{lenet5_bn_forward.7} parent=5 // pred_check
        %p601 = pneg %p600
      $region72: #{lenet5_bn_forward.7} parent=5 // pred_check_branch
        %603 = sbr.rel (%p601) target = $region74
      $region73: #{lenet5_bn_forward.7} parent=5 // pred_region
        %s604 = ssub.s32 %s8, 2
        // Predicated region
        $region75: #{lenet5_bn_forward.7} parent=73 // pred_check
          %p605 = pneg %p84
        $region76: #{lenet5_bn_forward.7} parent=73 // pred_check_branch
          %607 = sbr.rel (%p605) target = $region78
        $region77: #{lenet5_bn_forward.7} parent=73 // pred_region
          %p608 = scmp.lt.s32.totalorder %s14, 1
          %s609 = scalar_select %p608, %s14, 1
          %s610 = smul.addr %s609, 8
          %s611 = scalar_lea.vmem %s2, %s610
        $region78: #{lenet5_bn_forward.7} parent=73 // pred_fallthru
          _
      $region74: #{lenet5_bn_forward.7} parent=5 // pred_fallthru
        _
    $region6: #{lenet5_bn_forward.7} parent=1 // loop_footer
      %s12 = sadd.s32 1, %s8
    $region7: #{lenet5_bn_forward.7} parent=1 // loop_footer_branch
      %7 = sbr.rel target = $region3
    $region8: #{lenet5_bn_forward.7} parent=1 // loop_exit
      _

// kernel: lenet5_bn_forward.8
$region0: #{lenet5_bn_forward.8}
  #allocation0 [shape = 'u32[]', space=smem, size = 0x4, offset = 0x4, fixed_abs, tag = 'smem constant byte address 0x4 - core index']
  #allocation1 [shape = 'u32[144,128]{1,0:T(1,128)}', space=vmem, size = 0x12000, scoped, tag = 'internal scratch']
  %s0 = inlined_call_operand.vmem [shape: bf16[4,64,150], index: 0, kind: input, shape index: {}]
  %s1 = inlined_call_operand.vmem [shape: bf16[150,128], index: 1, kind: input, shape index: {}]
  %s2 = inlined_call_operand.vmem [shape: f32[2,128], index: 2, kind: input, shape index: {}]
  %s3 = inlined_call_operand.vmem [shape: f32[64,128], index: 3, kind: output, shape index: {}]
  %s4 = sld [smem:[#allocation0]]
  $region83: #{lenet5_bn_forward.8} parent=0
    _
  %s6 = ssub.s32 1, %s4
  %s7 = scalar_select 0, %s6, %s4
  $region1: #{lenet5_bn_forward.8} parent=0
    #allocation2 [shape = 'u8[131072]{0}', space=vmem, size = 0x20000, scoped, tag = 'input window, operand 0']
    loop: start=0, step=1, limit=4
    $region2: #{lenet5_bn_forward.8} parent=1 // loop_pre_header
      _
    $region3: #{lenet5_bn_forward.8} parent=1 // loop_header
      %s9 = sphi 0, %s13
      %p10 = scmp.ge.s32.totalorder %s9, 4
      %s19 = sphi 0, %s21
      %s22 = sphi 0, %s19
      %s23 = sphi 0, %s22
      %s39 = sphi 0, %s23
      %s43 = sphi 0, %s43
      %s45 = sphi 0, %s43
      %s46 = sphi 0, %s45
      %s60 = sphi 0, %s46
      %s64 = sphi 0, %s64
      %s66 = sphi 0, %s64
      %s67 = sphi 0, %s66
      %s81 = sphi 0, %s67
      %s87 = sphi 0, %s89
      %s90 = sphi 0, %s87
      %s91 = sphi 0, %s90
      %s107 = sphi 0, %s91
    $region4: #{lenet5_bn_forward.8} parent=1 // loop_header_branch
      %12 = sbr.rel (%p10) target = $region8
    $region5: #{lenet5_bn_forward.8} parent=1 // loop_body
      %s14 = ssub.s32 %s9, 1
      %s15 = ssub.s32 %s9, 2
      %s16 = sadd.s32 %s9, 1
      %s17 = ssub.s32 %s9, %s16
      %p18 = scmp.eq.s32.totalorder %s17, 0
      %s20 = sadd.s32 %s19, 1
      %s21 = scalar_select %p18, %s19, %s20
      %p24 = pneg %p18
      %p25 = scmp.eq.s32.totalorder %s9, 1
      %p26 = por %p24, %p25
      %p27 = scmp.ne.s32.totalorder %s19, %s22
      %p28 = scmp.eq.s32.totalorder %s9, 0
      %p29 = por %p27, %p28
      %p30 = scmp.ne.s32.totalorder %s19, %s22
      %p31 = scmp.eq.s32.totalorder %s14, 1
      %p32 = por %p30, %p31
      %p33 = scmp.ne.s32.totalorder %s22, %s23
      %p34 = scmp.eq.s32.totalorder %s14, 0
      %p35 = por %p33, %p34
      %p36 = scmp.ne.s32.totalorder %s22, %s23
      %p37 = scmp.eq.s32.totalorder %s15, 1
      %p38 = por %p36, %p37
      %p40 = scmp.ne.s32.totalorder %s23, %s39
      %p41 = scmp.eq.s32.totalorder %s15, 0
      %p42 = por %p40, %p41
      %s44 = sadd.s32 %s43, 1
      %p47 = scmp.eq.s32.totalorder %s9, 1
      %p48 = scmp.ne.s32.totalorder %s43, %s45
      %p49 = scmp.eq.s32.totalorder %s9, 0
      %p50 = por %p48, %p49
      %p51 = scmp.ne.s32.totalorder %s43, %s45
      %p52 = scmp.eq.s32.totalorder %s14, 1
      %p53 = por %p51, %p52
      %p54 = scmp.ne.s32.totalorder %s45, %s46
      %p55 = scmp.eq.s32.totalorder %s14, 0
      %p56 = por %p54, %p55
      %p57 = scmp.ne.s32.totalorder %s45, %s46
      %p58 = scmp.eq.s32.totalorder %s15, 1
      %p59 = por %p57, %p58
      %p61 = scmp.ne.s32.totalorder %s46, %s60
      %p62 = scmp.eq.s32.totalorder %s15, 0
      %p63 = por %p61, %p62
      %s65 = sadd.s32 %s64, 1
      %p68 = scmp.eq.s32.totalorder %s9, 1
      %p69 = scmp.ne.s32.totalorder %s64, %s66
      %p70 = scmp.eq.s32.totalorder %s9, 0
      %p71 = por %p69, %p70
      %p72 = scmp.ne.s32.totalorder %s64, %s66
      %p73 = scmp.eq.s32.totalorder %s14, 1
      %p74 = por %p72, %p73
      %p75 = scmp.ne.s32.totalorder %s66, %s67
      %p76 = scmp.eq.s32.totalorder %s14, 0
      %p77 = por %p75, %p76
      %p78 = scmp.ne.s32.totalorder %s66, %s67
      %p79 = scmp.eq.s32.totalorder %s15, 1
      %p80 = por %p78, %p79
      %p82 = scmp.ne.s32.totalorder %s67, %s81
      %p83 = scmp.eq.s32.totalorder %s15, 0
      %p84 = por %p82, %p83
      %s85 = ssub.s32 %s9, %s16
      %p86 = scmp.eq.s32.totalorder %s85, 0
      %s88 = sadd.s32 %s87, 1
      %s89 = scalar_select %p86, %s87, %s88
      %p92 = pneg %p86
      %p93 = scmp.eq.s32.totalorder %s9, 1
      %p94 = por %p92, %p93
      %p95 = scmp.ne.s32.totalorder %s87, %s90
      %p96 = scmp.eq.s32.totalorder %s9, 0
      %p97 = por %p95, %p96
      %p98 = scmp.ne.s32.totalorder %s87, %s90
      %p99 = scmp.eq.s32.totalorder %s14, 1
      %p100 = por %p98, %p99
      %p101 = scmp.ne.s32.totalorder %s90, %s91
      %p102 = scmp.eq.s32.totalorder %s14, 0
      %p103 = por %p101, %p102
      %p104 = scmp.ne.s32.totalorder %s90, %s91
      %p105 = scmp.eq.s32.totalorder %s15, 1
      %p106 = por %p104, %p105
      %p108 = scmp.ne.s32.totalorder %s91, %s107
      %p109 = scmp.eq.s32.totalorder %s15, 0
      %p110 = por %p108, %p109
      %p111 = scmp.le.s32.totalorder 1, %s9
      %p112 = scmp.lt.s32.totalorder %s9, 3
      %p113 = pnand %p111, %p112
      %p114 = pneg %p113
      // Predicated region
      $region9: #{lenet5_bn_forward.8} parent=5 // pred_check
        _
      $region10: #{lenet5_bn_forward.8} parent=5 // pred_check_branch
        %116 = sbr.rel (%p113) target = $region12
      $region11: #{lenet5_bn_forward.8} parent=5 // pred_region
        %s117 = ssub.s32 %s9, 1
        // Predicated region
        $region13: #{lenet5_bn_forward.8} parent=11 // pred_check
          %p118 = pneg %p56
        $region14: #{lenet5_bn_forward.8} parent=11 // pred_check_branch
          %120 = sbr.rel (%p118) target = $region16
        $region15: #{lenet5_bn_forward.8} parent=11 // pred_region
          _
        $region16: #{lenet5_bn_forward.8} parent=11 // pred_fallthru
          _
        // Predicated region
        $region17: #{lenet5_bn_forward.8} parent=11 // pred_check
          %p121 = pneg %p77
        $region18: #{lenet5_bn_forward.8} parent=11 // pred_check_branch
          %123 = sbr.rel (%p121) target = $region20
        $region19: #{lenet5_bn_forward.8} parent=11 // pred_region
          _
        $region20: #{lenet5_bn_forward.8} parent=11 // pred_fallthru
          _
      $region12: #{lenet5_bn_forward.8} parent=5 // pred_fallthru
        _
      %p124 = scmp.lt.s32.totalorder %s9, 2
      // Predicated region
      $region21: #{lenet5_bn_forward.8} parent=5 // pred_check
        %p125 = pneg %p124
      $region22: #{lenet5_bn_forward.8} parent=5 // pred_check_branch
        %127 = sbr.rel (%p125) target = $region24
      $region23: #{lenet5_bn_forward.8} parent=5 // pred_region
        // Predicated region
        $region25: #{lenet5_bn_forward.8} parent=23 // pred_check
          %p128 = pneg %p29
        $region26: #{lenet5_bn_forward.8} parent=23 // pred_check_branch
          %130 = sbr.rel (%p128) target = $region28
        $region27: #{lenet5_bn_forward.8} parent=23 // pred_region
          %s131 = sand.u32 %s19, 1
          %s132 = sand.u32 %s19, 1
          %s133 = smul.addr %s132, 128
          %s134 = scalar_lea.vmem [#allocation2], %s133
          %s135 = smul.u32 4, %s9
          %s136 = smul.addr %s135, 2
          %s137 = smul.addr %s136, 4
          %s138 = scalar_lea.vmem %s0, %s137
          // Predicated region
          $region29: #{lenet5_bn_forward.8} parent=27 // pred_check
            _
          $region30: #{lenet5_bn_forward.8} parent=27 // pred_check_branch
            %140 = sbr.rel (0) target = $region32
          $region31: #{lenet5_bn_forward.8} parent=27 // pred_region
            // Predicated region
            $region33: #{lenet5_bn_forward.8} parent=31 // pred_check
              _
            $region34: #{lenet5_bn_forward.8} parent=31 // pred_check_branch
              %142 = sbr.rel (0) target = $region36
            $region35: #{lenet5_bn_forward.8} parent=31 // pred_region
              // Predicated region
              $region48: #{lenet5_bn_forward.8} parent=35 // pred_check
                _
              $region49: #{lenet5_bn_forward.8} parent=35 // pred_check_branch
                %187 = sbr.rel (0) target = $region51
              $region50: #{lenet5_bn_forward.8} parent=35 // pred_region
                loop: start=0, step=1, limit=1
                $region52: #{lenet5_bn_forward.8} parent=50 // loop_pre_header
                  _
                $region53: #{lenet5_bn_forward.8} parent=50 // loop_header
                  %s189 = sphi 0, %s193
                  %p190 = scmp.ge.s32.totalorder %s189, 1
                  %s194 = sphi %s138, %s138
                  %s195 = sphi %s134, %s134
                $region54: #{lenet5_bn_forward.8} parent=50 // loop_header_branch
                  %192 = sbr.rel (%p190) target = $region58
                $region55: #{lenet5_bn_forward.8} parent=50 // loop_body
                  %v196 = vld [vmem:[%s194] sm:$0xff]
                  %197 = vst [vmem:[%s195] sm:$0xff] %v196
                  %v198 = vld [vmem:[%s194 + $0x8] sm:$0xff]
                  %199 = vst [vmem:[%s195 + $0x8] sm:$0xff] %v198
                  %v200 = vld [vmem:[%s194 + $0x10] sm:$0xff]
                  %201 = vst [vmem:[%s195 + $0x10] sm:$0xff] %v200
                  %v202 = vld [vmem:[%s194 + $0x18] sm:$0xff]
                  %203 = vst [vmem:[%s195 + $0x18] sm:$0xff] %v202
                  %v204 = vld [vmem:[%s194 + $0x40] sm:$0xff]
                  %205 = vst [vmem:[%s195 + $0x20] sm:$0xff] %v204
                  %v206 = vld [vmem:[%s194 + $0x48] sm:$0xff]
                  %207 = vst [vmem:[%s195 + $0x28] sm:$0xff] %v206
                  %v208 = vld [vmem:[%s194 + $0x50] sm:$0xff]
                  %209 = vst [vmem:[%s195 + $0x30] sm:$0xff] %v208
                  %v210 = vld [vmem:[%s194 + $0x58] sm:$0xff]
                  %211 = vst [vmem:[%s195 + $0x38] sm:$0xff] %v210
                  %v212 = vld [vmem:[%s194 + $0x80] sm:$0xff]
                  %213 = vst [vmem:[%s195 + $0x40] sm:$0xff] %v212
                  %v214 = vld [vmem:[%s194 + $0x88] sm:$0xff]
                  %215 = vst [vmem:[%s195 + $0x48] sm:$0xff] %v214
                  %v216 = vld [vmem:[%s194 + $0x90] sm:$0xff]
                  %217 = vst [vmem:[%s195 + $0x50] sm:$0xff] %v216
                  %v218 = vld [vmem:[%s194 + $0x98] sm:$0xff]
                  %219 = vst [vmem:[%s195 + $0x58] sm:$0xff] %v218
                  %v220 = vld [vmem:[%s194 + $0xc0] sm:$0xff]
                  %221 = vst [vmem:[%s195 + $0x60] sm:$0xff] %v220
                  %v222 = vld [vmem:[%s194 + $0xc8] sm:$0xff]
                  %223 = vst [vmem:[%s195 + $0x68] sm:$0xff] %v222
                  %v224 = vld [vmem:[%s194 + $0xd0] sm:$0xff]
                  %225 = vst [vmem:[%s195 + $0x70] sm:$0xff] %v224
                  %v226 = vld [vmem:[%s194 + $0xd8] sm:$0xff]
                  %227 = vst [vmem:[%s195 + $0x78] sm:$0xff] %v226
                $region56: #{lenet5_bn_forward.8} parent=50 // loop_footer
                  %s193 = sadd.s32 1, %s189
                $region57: #{lenet5_bn_forward.8} parent=50 // loop_footer_branch
                  %188 = sbr.rel target = $region53
                $region58: #{lenet5_bn_forward.8} parent=50 // loop_exit
                  _
              $region51: #{lenet5_bn_forward.8} parent=35 // pred_fallthru
                _
              // Predicated region
              $region59: #{lenet5_bn_forward.8} parent=35 // pred_check
                _
              $region60: #{lenet5_bn_forward.8} parent=35 // pred_check_branch
                %229 = sbr.rel target = $region62
              $region61: #{lenet5_bn_forward.8} parent=35 // pred_region
                _
              $region62: #{lenet5_bn_forward.8} parent=35 // pred_fallthru
                _
            $region36: #{lenet5_bn_forward.8} parent=31 // pred_fallthru
              _
            // Predicated region
            $region37: #{lenet5_bn_forward.8} parent=31 // pred_check
              _
            $region38: #{lenet5_bn_forward.8} parent=31 // pred_check_branch
              %144 = sbr.rel target = $region40
            $region39: #{lenet5_bn_forward.8} parent=31 // pred_region
              loop: start=0, step=1, limit=1
              $region41: #{lenet5_bn_forward.8} parent=39 // loop_pre_header
                _
              $region42: #{lenet5_bn_forward.8} parent=39 // loop_header
                %s147 = sphi 0, %s151
                %p148 = scmp.ge.s32.totalorder %s147, 1
                %s152 = sphi %s138, %s138
                %s153 = sphi %s134, %s134
              $region43: #{lenet5_bn_forward.8} parent=39 // loop_header_branch
                %150 = sbr.rel (%p148) target = $region47
              $region44: #{lenet5_bn_forward.8} parent=39 // loop_body
                %v154 = vld [vmem:[%s152] sm:$0xff]
                %155 = vst [vmem:[%s153] sm:$0xff] %v154
                %v156 = vld [vmem:[%s152 + $0x8] sm:$0xff]
                %157 = vst [vmem:[%s153 + $0x8] sm:$0xff] %v156
                %v158 = vld [vmem:[%s152 + $0x10] sm:$0xff]
                %159 = vst [vmem:[%s153 + $0x10] sm:$0xff] %v158
                %v160 = vld [vmem:[%s152 + $0x18] sm:$0xff]
                %161 = vst [vmem:[%s153 + $0x18] sm:$0xff] %v160
                %v162 = vld [vmem:[%s152 + $0x40] sm:$0xff]
                %163 = vst [vmem:[%s153 + $0x20] sm:$0xff] %v162
                %v164 = vld [vmem:[%s152 + $0x48] sm:$0xff]
                %165 = vst [vmem:[%s153 + $0x28] sm:$0xff] %v164
                %v166 = vld [vmem:[%s152 + $0x50] sm:$0xff]
                %167 = vst [vmem:[%s153 + $0x30] sm:$0xff] %v166
                %v168 = vld [vmem:[%s152 + $0x58] sm:$0xff]
                %169 = vst [vmem:[%s153 + $0x38] sm:$0xff] %v168
                %v170 = vld [vmem:[%s152 + $0x80] sm:$0xff]
                %171 = vst [vmem:[%s153 + $0x40] sm:$0xff] %v170
                %v172 = vld [vmem:[%s152 + $0x88] sm:$0xff]
                %173 = vst [vmem:[%s153 + $0x48] sm:$0xff] %v172
                %v174 = vld [vmem:[%s152 + $0x90] sm:$0xff]
                %175 = vst [vmem:[%s153 + $0x50] sm:$0xff] %v174
                %v176 = vld [vmem:[%s152 + $0x98] sm:$0xff]
                %177 = vst [vmem:[%s153 + $0x58] sm:$0xff] %v176
                %v178 = vld [vmem:[%s152 + $0xc0] sm:$0xff]
                %179 = vst [vmem:[%s153 + $0x60] sm:$0xff] %v178
                %v180 = vld [vmem:[%s152 + $0xc8] sm:$0xff]
                %181 = vst [vmem:[%s153 + $0x68] sm:$0xff] %v180
                %v182 = vld [vmem:[%s152 + $0xd0] sm:$0xff]
                %183 = vst [vmem:[%s153 + $0x70] sm:$0xff] %v182
                %v184 = vld [vmem:[%s152 + $0xd8] sm:$0xff]
                %185 = vst [vmem:[%s153 + $0x78] sm:$0xff] %v184
              $region45: #{lenet5_bn_forward.8} parent=39 // loop_footer
                %s151 = sadd.s32 1, %s147
              $region46: #{lenet5_bn_forward.8} parent=39 // loop_footer_branch
                %146 = sbr.rel target = $region42
              $region47: #{lenet5_bn_forward.8} parent=39 // loop_exit
                _
            $region40: #{lenet5_bn_forward.8} parent=31 // pred_fallthru
              _
          $region32: #{lenet5_bn_forward.8} parent=27 // pred_fallthru
            _
          %230 = vnop
        $region28: #{lenet5_bn_forward.8} parent=23 // pred_fallthru
          _
      $region24: #{lenet5_bn_forward.8} parent=5 // pred_fallthru
        _
      %p231 = scmp.le.s32.totalorder 1, %s9
      %p232 = scmp.lt.s32.totalorder %s9, 3
      %p233 = pnand %p231, %p232
      %p234 = pneg %p233
      // Predicated region
      $region63: #{lenet5_bn_forward.8} parent=5 // pred_check
        _
      $region64: #{lenet5_bn_forward.8} parent=5 // pred_check_branch
        %236 = sbr.rel (%p233) target = $region66
      $region65: #{lenet5_bn_forward.8} parent=5 // pred_region
        %s237 = ssub.s32 %s9, 1
        %s238 = sand.u32 %s22, 1
        %s239 = sand.u32 %s22, 1
        %s240 = smul.addr %s239, 128
        %s241 = scalar_lea.vmem [#allocation2], %s240
        // Predicated region
        $region67: #{lenet5_bn_forward.8} parent=65 // pred_check
          %p242 = pneg %p35
        $region68: #{lenet5_bn_forward.8} parent=65 // pred_check_branch
          %244 = sbr.rel (%p242) target = $region70
        $region69: #{lenet5_bn_forward.8} parent=65 // pred_region
          _
        $region70: #{lenet5_bn_forward.8} parent=65 // pred_fallthru
          _
        %s245 = sand.u32 %s22, 1
        %s246 = sand.u32 %s22, 1
        %s247 = smul.addr %s246, 128
        %s248 = scalar_lea.vmem [#allocation2], %s247
        %p249 = pneg %p35
        %p250 = pneg %p32
        %p251 = pneg %p56
        %p252 = pneg %p53
        %p253 = pneg %p77
        %p254 = pneg %p74
        %p255 = pneg %p103
        %p256 = pneg %p100
        %s257 = smul.u32 4, %s14
        %p258 = scmp.lt.s32.totalorder %s257, 7
        %s259 = scalar_select %p258, %s257, 7
        %s260 = smul.addr %s259, 8
        %s261 = scalar_lea.vmem %s3, %s260
        %s262 = smul.u32 4, %s14
        %s263 = smul.u32 4, %s14
        %p264 = scmp.lt.s32.totalorder %s263, 7
        %s265 = scalar_select %p264, %s263, 7
        %s266 = smul.addr %s265, 8
        %s267 = scalar_lea.vmem %s3, %s266
        %s268 = smul.u32 4, %s14
        %v270 = vld [vmem:[%s241] sm:$0xff]
        %v271 = vld [vmem:[%s241 + $0x8] sm:$0xff]
        %v272 = vld [vmem:[%s241 + $0x10] sm:$0xff]
        %v273 = vld [vmem:[%s241 + $0x18] sm:$0xff]
        %v274 = vld [vmem:[%s241 + $0x20] sm:$0xff]
        %v275 = vld [vmem:[%s241 + $0x28] sm:$0xff]
        %v276 = vld [vmem:[%s241 + $0x30] sm:$0xff]
        %v277 = vld [vmem:[%s241 + $0x38] sm:$0xff]
        %v278 = vld [vmem:[%s241 + $0x40] sm:$0xff]
        %v279 = vld [vmem:[%s241 + $0x48] sm:$0xff]
        %v280 = vld [vmem:[%s241 + $0x50] sm:$0xff]
        %v281 = vld [vmem:[%s241 + $0x58] sm:$0xff]
        %v282 = vld [vmem:[%s241 + $0x60] sm:$0xff]
        %v283 = vld [vmem:[%s241 + $0x68] sm:$0xff]
        %v284 = vld [vmem:[%s241 + $0x70] sm:$0xff]
        %v285 = vld [vmem:[%s241 + $0x78] sm:$0xff]
        %v286 = vld [vmem:[%s1] sm:$0xf]
        %v287 = vld [vmem:[%s1 + $0x4] sm:$0xf]
        %v288 = vld [vmem:[%s1 + $0x8] sm:$0xf]
        %v289 = vld [vmem:[%s1 + $0xc] sm:$0xf]
        %v290 = vld [vmem:[%s1 + $0x10] sm:$0xf]
        %v291 = vld [vmem:[%s1 + $0x14] sm:$0xf]
        %v292 = vld [vmem:[%s1 + $0x18] sm:$0xf]
        %v293 = vld [vmem:[%s1 + $0x1c] sm:$0xf]
        %v294 = vld [vmem:[%s1 + $0x20] sm:$0xf]
        %v295 = vld [vmem:[%s1 + $0x24] sm:$0xf]
        %v296 = vld [vmem:[%s1 + $0x28] sm:$0xf]
        %v297 = vld [vmem:[%s1 + $0x2c] sm:$0xf]
        %v298 = vld [vmem:[%s1 + $0x30] sm:$0xf]
        %v299 = vld [vmem:[%s1 + $0x34] sm:$0xf]
        %v300 = vld [vmem:[%s1 + $0x38] sm:$0xf]
        %v301 = vld [vmem:[%s1 + $0x3c] sm:$0xf]
        %v302 = vld [vmem:[%s1 + $0x40] sm:$0xf]
        %v303 = vld [vmem:[%s1 + $0x44] sm:$0xf]
        %v304 = vld [vmem:[%s1 + $0x48] sm:$0x7]
        %v321 = vunpack.c.l.b16 %v270
        %v322 = vunpack.c.h.b16 %v270
        %v323 = vunpack.c.l.b16 %v271
        %v324 = vunpack.c.h.b16 %v271
        %v325 = vunpack.c.l.b16 %v272
        %v326 = vunpack.c.h.b16 %v272
        %v327 = vunpack.c.l.b16 %v273
        %v328 = vunpack.c.h.b16 %v273
        %v329 = vunpack.c.l.b16 %v274
        %v330 = vunpack.c.h.b16 %v274
        %v331 = vunpack.c.l.b16 %v275
        %v332 = vunpack.c.h.b16 %v275
        %v333 = vunpack.c.l.b16 %v276
        %v334 = vunpack.c.h.b16 %v276
        %v335 = vunpack.c.l.b16 %v277
        %v336 = vunpack.c.h.b16 %v277
        %v337 = vunpack.c.l.b16 %v278
        %v338 = vunpack.c.h.b16 %v278
        %v339 = vunpack.c.l.b16 %v279
        %v340 = vunpack.c.h.b16 %v279
        %v341 = vunpack.c.l.b16 %v280
        %v342 = vunpack.c.h.b16 %v280
        %v343 = vunpack.c.l.b16 %v281
        %v344 = vunpack.c.h.b16 %v281
        %v345 = vunpack.c.l.b16 %v282
        %v346 = vunpack.c.h.b16 %v282
        %v347 = vunpack.c.l.b16 %v283
        %v348 = vunpack.c.h.b16 %v283
        %v349 = vunpack.c.l.b16 %v284
        %v350 = vunpack.c.h.b16 %v284
        %v351 = vunpack.c.l.b16 %v285
        %v352 = vunpack.c.h.b16 %v285
        %v353 = vpack.c.b16 %v323, %v321
        %v354 = vpack.c.b16 %v324, %v322
        %v355 = vpack.c.b16 %v327, %v325
        %v356 = vpack.c.b16 %v328, %v326
        %v357 = vpack.c.b16 %v331, %v329
        %v358 = vpack.c.b16 %v332, %v330
        %v359 = vpack.c.b16 %v335, %v333
        %v360 = vpack.c.b16 %v336, %v334
        %v361 = vpack.c.b16 %v339, %v337
        %v362 = vpack.c.b16 %v340, %v338
        %v363 = vpack.c.b16 %v343, %v341
        %v364 = vpack.c.b16 %v344, %v342
        %v365 = vpack.c.b16 %v347, %v345
        %v366 = vpack.c.b16 %v348, %v346
        %v367 = vpack.c.b16 %v351, %v349
        %v368 = vpack.c.b16 %v352, %v350
        %v396 = vunpack.c.l.b16 %v286
        %v397 = vunpack.c.l.b16 %v287
        %v398 = vunpack.c.l.b16 %v288
        %v399 = vunpack.c.l.b16 %v289
        %v400 = vunpack.c.l.b16 %v290
        %v401 = vunpack.c.l.b16 %v291
        %v402 = vunpack.c.l.b16 %v292
        %v403 = vunpack.c.l.b16 %v293
        %v404 = vunpack.c.l.b16 %v294
        %v405 = vunpack.c.l.b16 %v295
        %v406 = vunpack.c.l.b16 %v296
        %v407 = vunpack.c.l.b16 %v297
        %v408 = vunpack.c.l.b16 %v298
        %v409 = vunpack.c.l.b16 %v299
        %v410 = vunpack.c.l.b16 %v300
        %v411 = vunpack.c.l.b16 %v301
        %v412 = vunpack.c.l.b16 %v302
        %v413 = vunpack.c.l.b16 %v303
        %v414 = vunpack.c.l.b16 %v304
        %v415 = vpack.c.b16 %v397, %v396
        %v416 = vpack.c.b16 %v399, %v398
        %v417 = vpack.c.b16 %v401, %v400
        %v418 = vpack.c.b16 %v403, %v402
        %v419 = vpack.c.b16 %v405, %v404
        %v420 = vpack.c.b16 %v407, %v406
        %v421 = vpack.c.b16 %v409, %v408
        %v422 = vpack.c.b16 %v411, %v410
        %v423 = vpack.c.b16 %v413, %v412
        %v424 = vpack.c.b16 %v414, %v414
        %vm434 = vcmask 179200
        %v436 = vsel %vm434, %v354, 0
        %v439 = vsel %vm434, %v356, 0
        %v442 = vsel %vm434, %v358, 0
        %v445 = vsel %vm434, %v360, 0
        %v448 = vsel %vm434, %v362, 0
        %v451 = vsel %vm434, %v364, 0
        %v454 = vsel %vm434, %v366, 0
        %v457 = vsel %vm434, %v368, 0
        %vm459 = vcmask 1042432
        %v461 = vsel %vm459, %v424, 0
        %463 = vmatprep.subr.bf16.mxu0 0
        %464 = vmatpush1.bf16.msra.mxu0 %v415
        %465 = vmatprep.subr.bf16.mxu0 0
        %466 = vmatpush1.bf16.msra.mxu0 %v416
        %467 = vmatprep.subr.bf16.mxu0 0
        %468 = vmatpush1.bf16.msra.mxu0 %v417
        %469 = vmatprep.subr.bf16.mxu0 0
        %470 = vmatpush1.bf16.msra.mxu0 %v418
        %471 = vmatprep.subr.bf16.mxu0 0
        %472 = vmatpush1.bf16.msra.mxu0 %v419
        %473 = vmatprep.subr.bf16.mxu0 0
        %474 = vmatpush1.bf16.msra.mxu0 %v420
        %475 = vmatprep.subr.bf16.mxu0 0
        %476 = vmatpush1.bf16.msra.mxu0 %v421
        %477 = vmatprep.subr.bf16.mxu0 0
        %478 = vmatpush1.bf16.msra.mxu0 %v422
        %479 = vmatprep.subr.bf16.mxu0 0
        %480 = vmatpush1.bf16.msra.mxu0 %v423
        %481 = vmatprep.subr.bf16.mxu0 0
        %482 = vmatpush1.bf16.msra.mxu0 %v461
        %483 = vmatprep.subr.bf16.mxu0 0
        %484 = vmatpush1.bf16.msra.mxu0 0
        %485 = vmatprep.subr.bf16.mxu0 0
        %486 = vmatpush1.bf16.msra.mxu0 0
        %487 = vmatprep.subr.bf16.mxu0 0
        %488 = vmatpush1.bf16.msra.mxu0 0
        %489 = vmatprep.subr.bf16.mxu0 0
        %490 = vmatpush1.bf16.msra.mxu0 0
        %491 = vmatprep.subr.bf16.mxu0 0
        %492 = vmatpush1.bf16.msra.mxu0 0
        %493 = vmatprep.subr.bf16.mxu0 0
        %494 = vmatpush1.bf16.msra.mxu0 0
        %495 = vmatprep.mubr.bf16.mxu0 %v436
        %496 = vmatmul.mubr.bf16.gmra.mrb[0].mxu0 %v353
        %v497 = vpop.f32.mrb[0].mxu0
        %v498 = vadd.f32 0.0, %v497
        %v499 = vpop.f32.mrb[0].mxu0
        %v500 = vpop.f32.mrb[0].mxu0
        %v501 = vadd.f32 0.0, %v500
        %v502 = vpop.f32.mrb[0].mxu0
        %503 = vmatprep.mubr.bf16.mxu0 %v439
        %504 = vmatmul.mubr.bf16.gmra.mrb[0].mxu0 %v355
        %v505 = vpop.f32.mrb[0].mxu0
        %v506 = vadd.f32 0.0, %v505
        %v507 = vpop.f32.mrb[0].mxu0
        %v508 = vpop.f32.mrb[0].mxu0
        %v509 = vadd.f32 0.0, %v508
        %v510 = vpop.f32.mrb[0].mxu0
        %511 = vmatprep.mubr.bf16.mxu0 %v442
        %512 = vmatmul.mubr.bf16.gmra.mrb[0].mxu0 %v357
        %v513 = vpop.f32.mrb[0].mxu0
        %v514 = vadd.f32 0.0, %v513
        %v515 = vpop.f32.mrb[0].mxu0
        %v516 = vpop.f32.mrb[0].mxu0
        %v517 = vadd.f32 0.0, %v516
        %v518 = vpop.f32.mrb[0].mxu0
        %519 = vmatprep.mubr.bf16.mxu0 %v445
        %520 = vmatmul.mubr.bf16.gmra.mrb[0].mxu0 %v359
        %v521 = vpop.f32.mrb[0].mxu0
        %v522 = vadd.f32 0.0, %v521
        %v523 = vpop.f32.mrb[0].mxu0
        %v524 = vpop.f32.mrb[0].mxu0
        %v525 = vadd.f32 0.0, %v524
        %v526 = vpop.f32.mrb[0].mxu0
        %527 = vmatprep.mubr.bf16.mxu0 %v448
        %528 = vmatmul.mubr.bf16.gmra.mrb[0].mxu0 %v361
        %v529 = vpop.f32.mrb[0].mxu0
        %v530 = vadd.f32 0.0, %v529
        %v531 = vpop.f32.mrb[0].mxu0
        %v532 = vpop.f32.mrb[0].mxu0
        %v533 = vadd.f32 0.0, %v532
        %v534 = vpop.f32.mrb[0].mxu0
        %535 = vmatprep.mubr.bf16.mxu0 %v451
        %536 = vmatmul.mubr.bf16.gmra.mrb[0].mxu0 %v363
        %v537 = vpop.f32.mrb[0].mxu0
        %v538 = vadd.f32 0.0, %v537
        %v539 = vpop.f32.mrb[0].mxu0
        %v540 = vpop.f32.mrb[0].mxu0
        %v541 = vadd.f32 0.0, %v540
        %v542 = vpop.f32.mrb[0].mxu0
        %543 = vmatprep.mubr.bf16.mxu0 %v454
        %544 = vmatmul.mubr.bf16.gmra.mrb[0].mxu0 %v365
        %v545 = vpop.f32.mrb[0].mxu0
        %v546 = vadd.f32 0.0, %v545
        %v547 = vpop.f32.mrb[0].mxu0
        %v548 = vpop.f32.mrb[0].mxu0
        %v549 = vadd.f32 0.0, %v548
        %v550 = vpop.f32.mrb[0].mxu0
        %551 = vmatprep.mubr.bf16.mxu0 %v457
        %552 = vmatmul.mubr.bf16.gmra.mrb[0].mxu0 %v367
        %v553 = vpop.f32.mrb[0].mxu0
        %v554 = vadd.f32 0.0, %v553
        %v555 = vpop.f32.mrb[0].mxu0
        %v556 = vpop.f32.mrb[0].mxu0
        %v557 = vadd.f32 0.0, %v556
        %v558 = vpop.f32.mrb[0].mxu0
        %559 = vdwg.mxu0
        %v560 = vld [vmem:[%s2] sm:$0x1]
        %v561 = vlaneseq
        %v562 = vshrl.u32 %v561, 7
        %v563 = vsub.s32 0, %v562
        %v564 = vrot.slane %v560, %v563
        %v565 = vmul.f32 %v498, %v564
        %v566 = vmul.f32 %v501, %v564
        %v567 = vmul.f32 %v506, %v564
        %v568 = vmul.f32 %v509, %v564
        %v569 = vmul.f32 %v514, %v564
        %v570 = vmul.f32 %v517, %v564
        %v571 = vmul.f32 %v522, %v564
        %v572 = vmul.f32 %v525, %v564
        %v573 = vmul.f32 %v530, %v564
        %v574 = vmul.f32 %v533, %v564
        %v575 = vmul.f32 %v538, %v564
        %v576 = vmul.f32 %v541, %v564
        %v577 = vmul.f32 %v546, %v564
        %v578 = vmul.f32 %v549, %v564
        %v579 = vmul.f32 %v554, %v564
        %v580 = vmul.f32 %v557, %v564
        %v581 = vld [vmem:[%s2 + $0x1] sm:$0x1]
        %v582 = vlaneseq
        %v583 = vshrl.u32 %v582, 7
        %v584 = vsub.s32 0, %v583
        %v585 = vrot.slane %v581, %v584
        %v586 = vadd.f32 %v565, %v585
        %v587 = vadd.f32 %v566, %v585
        %v588 = vadd.f32 %v567, %v585
        %v589 = vadd.f32 %v568, %v585
        %v590 = vadd.f32 %v569, %v585
        %v591 = vadd.f32 %v570, %v585
        %v592 = vadd.f32 %v571, %v585
        %v593 = vadd.f32 %v572, %v585
        %v594 = vadd.f32 %v573, %v585
        %v595 = vadd.f32 %v574, %v585
        %v596 = vadd.f32 %v575, %v585
        %v597 = vadd.f32 %v576, %v585
        %v598 = vadd.f32 %v577, %v585
        %v599 = vadd.f32 %v578, %v585
        %v600 = vadd.f32 %v579, %v585
        %v601 = vadd.f32 %v580, %v585
        %v602 = vmax.f32 %v586, 0.0
        %v603 = vmax.f32 %v587, 0.0
        %v604 = vmax.f32 %v588, 0.0
        %v605 = vmax.f32 %v589, 0.0
        %v606 = vmax.f32 %v590, 0.0
        %v607 = vmax.f32 %v591, 0.0
        %v608 = vmax.f32 %v592, 0.0
        %v609 = vmax.f32 %v593, 0.0
        %v610 = vmax.f32 %v594, 0.0
        %v611 = vmax.f32 %v595, 0.0
        %v612 = vmax.f32 %v596, 0.0
        %v613 = vmax.f32 %v597, 0.0
        %v614 = vmax.f32 %v598, 0.0
        %v615 = vmax.f32 %v599, 0.0
        %v616 = vmax.f32 %v600, 0.0
        %v617 = vmax.f32 %v601, 0.0
        %v618 = vmax.f32 %v602, %v606
        %v619 = vmax.f32 %v603, %v607
        %v620 = vmax.f32 %v604, %v608
        %v621 = vmax.f32 %v605, %v609
        %v622 = vmax.f32 %v610, %v614
        %v623 = vmax.f32 %v611, %v615
        %v624 = vmax.f32 %v612, %v616
        %v625 = vmax.f32 %v613, %v617
        %v626 = vmax.f32 %v618, %v622
        %v627 = vmax.f32 %v619, %v623
        %v628 = vmax.f32 %v620, %v624
        %v629 = vmax.f32 %v621, %v625
        %630 = vst [vmem:[%s267] sm:$0xff] %v626
        %631 = vst [vmem:[%s267 + $0x8] sm:$0xff] %v627
        %632 = vst [vmem:[%s267 + $0x10] sm:$0xff] %v628
        %633 = vst [vmem:[%s267 + $0x18] sm:$0xff] %v629
        %s634 = smul.u32 4, %s14
        %p635 = scmp.lt.s32.totalorder %s634, 7
        %s636 = scalar_select %p635, %s634, 7
        %s637 = smul.addr %s636, 8
        %s638 = scalar_lea.vmem %s3, %s637
        // Predicated region
        $region71: #{lenet5_bn_forward.8} parent=65 // pred_check
          %p639 = pneg %p100
        $region72: #{lenet5_bn_forward.8} parent=65 // pred_check_branch
          %641 = sbr.rel (%p639) target = $region74
        $region73: #{lenet5_bn_forward.8} parent=65 // pred_region
          %s642 = smul.u32 4, %s14
        $region74: #{lenet5_bn_forward.8} parent=65 // pred_fallthru
          _
      $region66: #{lenet5_bn_forward.8} parent=5 // pred_fallthru
        _
      %p643 = scmp.le.s32.totalorder 2, %s9
      // Predicated region
      $region75: #{lenet5_bn_forward.8} parent=5 // pred_check
        %p644 = pneg %p643
      $region76: #{lenet5_bn_forward.8} parent=5 // pred_check_branch
        %646 = sbr.rel (%p644) target = $region78
      $region77: #{lenet5_bn_forward.8} parent=5 // pred_region
        %s647 = ssub.s32 %s9, 2
        // Predicated region
        $region79: #{lenet5_bn_forward.8} parent=77 // pred_check
          %p648 = pneg %p106
        $region80: #{lenet5_bn_forward.8} parent=77 // pred_check_branch
          %650 = sbr.rel (%p648) target = $region82
        $region81: #{lenet5_bn_forward.8} parent=77 // pred_region
          %s651 = smul.u32 4, %s15
          %p652 = scmp.lt.s32.totalorder %s651, 7
          %s653 = scalar_select %p652, %s651, 7
          %s654 = smul.addr %s653, 8
          %s655 = scalar_lea.vmem %s3, %s654
        $region82: #{lenet5_bn_forward.8} parent=77 // pred_fallthru
          _
      $region78: #{lenet5_bn_forward.8} parent=5 // pred_fallthru
        _
    $region6: #{lenet5_bn_forward.8} parent=1 // loop_footer
      %s13 = sadd.s32 1, %s9
    $region7: #{lenet5_bn_forward.8} parent=1 // loop_footer_branch
      %8 = sbr.rel target = $region3
    $region8: #{lenet5_bn_forward.8} parent=1 // loop_exit
      _

// kernel: lenet5_bn_forward.9
$region0: #{lenet5_bn_forward.9}
  #allocation0 [shape = 'u32[]', space=smem, size = 0x4, offset = 0x4, fixed_abs, tag = 'smem constant byte address 0x4 - core index']
  #allocation1 [shape = 'u32[144,128]{1,0:T(1,128)}', space=vmem, size = 0x12000, scoped, tag = 'internal scratch']
  %s0 = inlined_call_operand.vmem [shape: bf16[32,512], index: 0, kind: input, shape index: {}]
  %s1 = inlined_call_operand.vmem [shape: bf16[512,128], index: 1, kind: input, shape index: {}]
  %s2 = inlined_call_operand.vmem [shape: f32[1,128], index: 2, kind: input, shape index: {}]
  %s3 = inlined_call_operand.vmem [shape: bf16[128,128], index: 3, kind: input, shape index: {}]
  %s4 = inlined_call_operand.vmem [shape: f32[1,128], index: 4, kind: input, shape index: {}]
  %s5 = inlined_call_operand.vmem [shape: bf16[128,128], index: 5, kind: input, shape index: {}]
  %s6 = inlined_call_operand.vmem [shape: f32[1,128], index: 6, kind: input, shape index: {}]
  %s7 = inlined_call_operand.vmem [shape: f32[32,128], index: 7, kind: output, shape index: {}]
  %s8 = sld [smem:[#allocation0]]
  $region61: #{lenet5_bn_forward.9} parent=0
    _
  %s10 = ssub.s32 1, %s8
  %s11 = scalar_select 0, %s10, %s8
  loop: start=0, step=1, limit=4
  $region2: #{lenet5_bn_forward.9} parent=0 // loop_pre_header
    _
  $region3: #{lenet5_bn_forward.9} parent=0 // loop_header
    %s13 = sphi 0, %s17
    %p14 = scmp.ge.s32.totalorder %s13, 4
    %s23 = sphi 0, %s25
    %s26 = sphi 0, %s23
    %s27 = sphi 0, %s26
    %s43 = sphi 0, %s27
    %s47 = sphi 0, %s47
    %s49 = sphi 0, %s47
    %s50 = sphi 0, %s49
    %s64 = sphi 0, %s50
    %s68 = sphi 0, %s68
    %s70 = sphi 0, %s68
    %s71 = sphi 0, %s70
    %s85 = sphi 0, %s71
    %s89 = sphi 0, %s89
    %s91 = sphi 0, %s89
    %s92 = sphi 0, %s91
    %s106 = sphi 0, %s92
    %s110 = sphi 0, %s110
    %s112 = sphi 0, %s110
    %s113 = sphi 0, %s112
    %s127 = sphi 0, %s113
    %s131 = sphi 0, %s131
    %s133 = sphi 0, %s131
    %s134 = sphi 0, %s133
    %s148 = sphi 0, %s134
    %s152 = sphi 0, %s152
    %s154 = sphi 0, %s152
    %s155 = sphi 0, %s154
    %s169 = sphi 0, %s155
    %s175 = sphi 0, %s177
    %s178 = sphi 0, %s175
    %s179 = sphi 0, %s178
    %s195 = sphi 0, %s179
  $region4: #{lenet5_bn_forward.9} parent=0 // loop_header_branch
    %16 = sbr.rel (%p14) target = $region8
  $region5: #{lenet5_bn_forward.9} parent=0 // loop_body
    %s18 = ssub.s32 %s13, 1
    %s19 = ssub.s32 %s13, 2
    %s20 = sadd.s32 %s13, 1
    %s21 = ssub.s32 %s13, %s20
    %p22 = scmp.eq.s32.totalorder %s21, 0
    %s24 = sadd.s32 %s23, 1
    %s25 = scalar_select %p22, %s23, %s24
    %p28 = pneg %p22
    %p29 = scmp.eq.s32.totalorder %s13, 1
    %p30 = por %p28, %p29
    %p31 = scmp.ne.s32.totalorder %s23, %s26
    %p32 = scmp.eq.s32.totalorder %s13, 0
    %p33 = por %p31, %p32
    %p34 = scmp.ne.s32.totalorder %s23, %s26
    %p35 = scmp.eq.s32.totalorder %s18, 1
    %p36 = por %p34, %p35
    %p37 = scmp.ne.s32.totalorder %s26, %s27
    %p38 = scmp.eq.s32.totalorder %s18, 0
    %p39 = por %p37, %p38
    %p40 = scmp.ne.s32.totalorder %s26, %s27
    %p41 = scmp.eq.s32.totalorder %s19, 1
    %p42 = por %p40, %p41
    %p44 = scmp.ne.s32.totalorder %s27, %s43
    %p45 = scmp.eq.s32.totalorder %s19, 0
    %p46 = por %p44, %p45
    %s48 = sadd.s32 %s47, 1
    %p51 = scmp.eq.s32.totalorder %s13, 1
    %p52 = scmp.ne.s32.totalorder %s47, %s49
    %p53 = scmp.eq.s32.totalorder %s13, 0
    %p54 = por %p52, %p53
    %p55 = scmp.ne.s32.totalorder %s47, %s49
    %p56 = scmp.eq.s32.totalorder %s18, 1
    %p57 = por %p55, %p56
    %p58 = scmp.ne.s32.totalorder %s49, %s50
    %p59 = scmp.eq.s32.totalorder %s18, 0
    %p60 = por %p58, %p59
    %p61 = scmp.ne.s32.totalorder %s49, %s50
    %p62 = scmp.eq.s32.totalorder %s19, 1
    %p63 = por %p61, %p62
    %p65 = scmp.ne.s32.totalorder %s50, %s64
    %p66 = scmp.eq.s32.totalorder %s19, 0
    %p67 = por %p65, %p66
    %s69 = sadd.s32 %s68, 1
    %p72 = scmp.eq.s32.totalorder %s13, 1
    %p73 = scmp.ne.s32.totalorder %s68, %s70
    %p74 = scmp.eq.s32.totalorder %s13, 0
    %p75 = por %p73, %p74
    %p76 = scmp.ne.s32.totalorder %s68, %s70
    %p77 = scmp.eq.s32.totalorder %s18, 1
    %p78 = por %p76, %p77
    %p79 = scmp.ne.s32.totalorder %s70, %s71
    %p80 = scmp.eq.s32.totalorder %s18, 0
    %p81 = por %p79, %p80
    %p82 = scmp.ne.s32.totalorder %s70, %s71
    %p83 = scmp.eq.s32.totalorder %s19, 1
    %p84 = por %p82, %p83
    %p86 = scmp.ne.s32.totalorder %s71, %s85
    %p87 = scmp.eq.s32.totalorder %s19, 0
    %p88 = por %p86, %p87
    %s90 = sadd.s32 %s89, 1
    %p93 = scmp.eq.s32.totalorder %s13, 1
    %p94 = scmp.ne.s32.totalorder %s89, %s91
    %p95 = scmp.eq.s32.totalorder %s13, 0
    %p96 = por %p94, %p95
    %p97 = scmp.ne.s32.totalorder %s89, %s91
    %p98 = scmp.eq.s32.totalorder %s18, 1
    %p99 = por %p97, %p98
    %p100 = scmp.ne.s32.totalorder %s91, %s92
    %p101 = scmp.eq.s32.totalorder %s18, 0
    %p102 = por %p100, %p101
    %p103 = scmp.ne.s32.totalorder %s91, %s92
    %p104 = scmp.eq.s32.totalorder %s19, 1
    %p105 = por %p103, %p104
    %p107 = scmp.ne.s32.totalorder %s92, %s106
    %p108 = scmp.eq.s32.totalorder %s19, 0
    %p109 = por %p107, %p108
    %s111 = sadd.s32 %s110, 1
    %p114 = scmp.eq.s32.totalorder %s13, 1
    %p115 = scmp.ne.s32.totalorder %s110, %s112
    %p116 = scmp.eq.s32.totalorder %s13, 0
    %p117 = por %p115, %p116
    %p118 = scmp.ne.s32.totalorder %s110, %s112
    %p119 = scmp.eq.s32.totalorder %s18, 1
    %p120 = por %p118, %p119
    %p121 = scmp.ne.s32.totalorder %s112, %s113
    %p122 = scmp.eq.s32.totalorder %s18, 0
    %p123 = por %p121, %p122
    %p124 = scmp.ne.s32.totalorder %s112, %s113
    %p125 = scmp.eq.s32.totalorder %s19, 1
    %p126 = por %p124, %p125
    %p128 = scmp.ne.s32.totalorder %s113, %s127
    %p129 = scmp.eq.s32.totalorder %s19, 0
    %p130 = por %p128, %p129
    %s132 = sadd.s32 %s131, 1
    %p135 = scmp.eq.s32.totalorder %s13, 1
    %p136 = scmp.ne.s32.totalorder %s131, %s133
    %p137 = scmp.eq.s32.totalorder %s13, 0
    %p138 = por %p136, %p137
    %p139 = scmp.ne.s32.totalorder %s131, %s133
    %p140 = scmp.eq.s32.totalorder %s18, 1
    %p141 = por %p139, %p140
    %p142 = scmp.ne.s32.totalorder %s133, %s134
    %p143 = scmp.eq.s32.totalorder %s18, 0
    %p144 = por %p142, %p143
    %p145 = scmp.ne.s32.totalorder %s133, %s134
    %p146 = scmp.eq.s32.totalorder %s19, 1
    %p147 = por %p145, %p146
    %p149 = scmp.ne.s32.totalorder %s134, %s148
    %p150 = scmp.eq.s32.totalorder %s19, 0
    %p151 = por %p149, %p150
    %s153 = sadd.s32 %s152, 1
    %p156 = scmp.eq.s32.totalorder %s13, 1
    %p157 = scmp.ne.s32.totalorder %s152, %s154
    %p158 = scmp.eq.s32.totalorder %s13, 0
    %p159 = por %p157, %p158
    %p160 = scmp.ne.s32.totalorder %s152, %s154
    %p161 = scmp.eq.s32.totalorder %s18, 1
    %p162 = por %p160, %p161
    %p163 = scmp.ne.s32.totalorder %s154, %s155
    %p164 = scmp.eq.s32.totalorder %s18, 0
    %p165 = por %p163, %p164
    %p166 = scmp.ne.s32.totalorder %s154, %s155
    %p167 = scmp.eq.s32.totalorder %s19, 1
    %p168 = por %p166, %p167
    %p170 = scmp.ne.s32.totalorder %s155, %s169
    %p171 = scmp.eq.s32.totalorder %s19, 0
    %p172 = por %p170, %p171
    %s173 = ssub.s32 %s13, %s20
    %p174 = scmp.eq.s32.totalorder %s173, 0
    %s176 = sadd.s32 %s175, 1
    %s177 = scalar_select %p174, %s175, %s176
    %p180 = pneg %p174
    %p181 = scmp.eq.s32.totalorder %s13, 1
    %p182 = por %p180, %p181
    %p183 = scmp.ne.s32.totalorder %s175, %s178
    %p184 = scmp.eq.s32.totalorder %s13, 0
    %p185 = por %p183, %p184
    %p186 = scmp.ne.s32.totalorder %s175, %s178
    %p187 = scmp.eq.s32.totalorder %s18, 1
    %p188 = por %p186, %p187
    %p189 = scmp.ne.s32.totalorder %s178, %s179
    %p190 = scmp.eq.s32.totalorder %s18, 0
    %p191 = por %p189, %p190
    %p192 = scmp.ne.s32.totalorder %s178, %s179
    %p193 = scmp.eq.s32.totalorder %s19, 1
    %p194 = por %p192, %p193
    %p196 = scmp.ne.s32.totalorder %s179, %s195
    %p197 = scmp.eq.s32.totalorder %s19, 0
    %p198 = por %p196, %p197
    %p199 = scmp.le.s32.totalorder 1, %s13
    %p200 = scmp.lt.s32.totalorder %s13, 3
    %p201 = pnand %p199, %p200
    %p202 = pneg %p201
    // Predicated region
    $region9: #{lenet5_bn_forward.9} parent=5 // pred_check
      _
    $region10: #{lenet5_bn_forward.9} parent=5 // pred_check_branch
      %204 = sbr.rel (%p201) target = $region12
    $region11: #{lenet5_bn_forward.9} parent=5 // pred_region
      %s205 = ssub.s32 %s13, 1
      // Predicated region
      $region13: #{lenet5_bn_forward.9} parent=11 // pred_check
        %p206 = pneg %p60
      $region14: #{lenet5_bn_forward.9} parent=11 // pred_check_branch
        %208 = sbr.rel (%p206) target = $region16
      $region15: #{lenet5_bn_forward.9} parent=11 // pred_region
        _
      $region16: #{lenet5_bn_forward.9} parent=11 // pred_fallthru
        _
      // Predicated region
      $region17: #{lenet5_bn_forward.9} parent=11 // pred_check
        %p209 = pneg %p81
      $region18: #{lenet5_bn_forward.9} parent=11 // pred_check_branch
        %211 = sbr.rel (%p209) target = $region20
      $region19: #{lenet5_bn_forward.9} parent=11 // pred_region
        _
      $region20: #{lenet5_bn_forward.9} parent=11 // pred_fallthru
        _
      // Predicated region
      $region21: #{lenet5_bn_forward.9} parent=11 // pred_check
        %p212 = pneg %p102
      $region22: #{lenet5_bn_forward.9} parent=11 // pred_check_branch
        %214 = sbr.rel (%p212) target = $region24
      $region23: #{lenet5_bn_forward.9} parent=11 // pred_region
        _
      $region24: #{lenet5_bn_forward.9} parent=11 // pred_fallthru
        _
      // Predicated region
      $region25: #{lenet5_bn_forward.9} parent=11 // pred_check
        %p215 = pneg %p123
      $region26: #{lenet5_bn_forward.9} parent=11 // pred_check_branch
        %217 = sbr.rel (%p215) target = $region28
      $region27: #{lenet5_bn_forward.9} parent=11 // pred_region
        _
      $region28: #{lenet5_bn_forward.9} parent=11 // pred_fallthru
        _
      // Predicated region
      $region29: #{lenet5_bn_forward.9} parent=11 // pred_check
        %p218 = pneg %p144
      $region30: #{lenet5_bn_forward.9} parent=11 // pred_check_branch
        %220 = sbr.rel (%p218) target = $region32
      $region31: #{lenet5_bn_forward.9} parent=11 // pred_region
        _
      $region32: #{lenet5_bn_forward.9} parent=11 // pred_fallthru
        _
      // Predicated region
      $region33: #{lenet5_bn_forward.9} parent=11 // pred_check
        %p221 = pneg %p165
      $region34: #{lenet5_bn_forward.9} parent=11 // pred_check_branch
        %223 = sbr.rel (%p221) target = $region36
      $region35: #{lenet5_bn_forward.9} parent=11 // pred_region
        _
      $region36: #{lenet5_bn_forward.9} parent=11 // pred_fallthru
        _
    $region12: #{lenet5_bn_forward.9} parent=5 // pred_fallthru
      _
    %p224 = scmp.lt.s32.totalorder %s13, 2
    // Predicated region
    $region37: #{lenet5_bn_forward.9} parent=5 // pred_check
      %p225 = pneg %p224
    $region38: #{lenet5_bn_forward.9} parent=5 // pred_check_branch
      %227 = sbr.rel (%p225) target = $region40
    $region39: #{lenet5_bn_forward.9} parent=5 // pred_region
      // Predicated region
      $region41: #{lenet5_bn_forward.9} parent=39 // pred_check
        %p228 = pneg %p33
      $region42: #{lenet5_bn_forward.9} parent=39 // pred_check_branch
        %230 = sbr.rel (%p228) target = $region44
      $region43: #{lenet5_bn_forward.9} parent=39 // pred_region
        %s231 = smul.u32 2, %s13
        %p232 = scmp.lt.s32.totalorder %s231, 3
        %s233 = scalar_select %p232, %s231, 3
        %s234 = smul.addr %s233, 4
        %s235 = smul.addr %s234, 4
        %s236 = scalar_lea.vmem %s0, %s235
        %s237 = smul.u32 2, %s13
      $region44: #{lenet5_bn_forward.9} parent=39 // pred_fallthru
        _
    $region40: #{lenet5_bn_forward.9} parent=5 // pred_fallthru
      _
    %p238 = scmp.le.s32.totalorder 1, %s13
    %p239 = scmp.lt.s32.totalorder %s13, 3
    %p240 = pnand %p238, %p239
    %p241 = pneg %p240
    // Predicated region
    $region45: #{lenet5_bn_forward.9} parent=5 // pred_check
      _
    $region46: #{lenet5_bn_forward.9} parent=5 // pred_check_branch
      %243 = sbr.rel (%p240) target = $region48
    $region47: #{lenet5_bn_forward.9} parent=5 // pred_region
      %s244 = ssub.s32 %s13, 1
      %s245 = smul.u32 2, %s18
      %p246 = scmp.lt.s32.totalorder %s245, 3
      %s247 = scalar_select %p246, %s245, 3
      %s248 = smul.addr %s247, 4
      %s249 = smul.addr %s248, 4
      %s250 = scalar_lea.vmem %s0, %s249
      %p251 = pneg %p39
      %p252 = pneg %p36
      %p253 = pneg %p60
      %p254 = pneg %p57
      %p255 = pneg %p81
      %p256 = pneg %p78
      %p257 = pneg %p102
      %p258 = pneg %p99
      %p259 = pneg %p123
      %p260 = pneg %p120
      %p261 = pneg %p144
      %p262 = pneg %p141
      %p263 = pneg %p165
      %p264 = pneg %p162
      %p265 = pneg %p191
      %p266 = pneg %p188
      %s267 = smul.u32 2, %s18
      %p268 = scmp.lt.s32.totalorder %s267, 3
      %s269 = scalar_select %p268, %s267, 3
      %s270 = smul.addr %s269, 8
      %s271 = scalar_lea.vmem %s7, %s270
      %s272 = smul.u32 2, %s18
      %p273 = scmp.lt.s32.totalorder %s272, 3
      %s274 = scalar_select %p273, %s272, 3
      %s275 = smul.addr %s274, 4
      %s276 = smul.addr %s275, 4
      %s277 = scalar_lea.vmem %s0, %s276
      %s278 = smul.u32 2, %s18
      %s279 = smul.u32 2, %s18
      %p280 = scmp.lt.s32.totalorder %s279, 3
      %s281 = scalar_select %p280, %s279, 3
      %s282 = smul.addr %s281, 8
      %s283 = scalar_lea.vmem %s7, %s282
      %s284 = smul.u32 2, %s18
      %v286 = vld [vmem:[%s277] sm:$0xff]
      %v287 = vld [vmem:[%s277 + $0x8] sm:$0xff]
      %v288 = vld [vmem:[%s277 + $0x10] sm:$0xff]
      %v289 = vld [vmem:[%s277 + $0x18] sm:$0xff]
      %v290 = vld [vmem:[%s1] sm:$0xf]
      %v291 = vld [vmem:[%s1 + $0x4] sm:$0xf]
      %v292 = vld [vmem:[%s1 + $0x8] sm:$0xf]
      %v293 = vld [vmem:[%s1 + $0xc] sm:$0xf]
      %v294 = vld [vmem:[%s1 + $0x10] sm:$0xf]
      %v295 = vld [vmem:[%s1 + $0x14] sm:$0xf]
      %v296 = vld [vmem:[%s1 + $0x18] sm:$0xf]
      %v297 = vld [vmem:[%s1 + $0x1c] sm:$0xf]
      %v298 = vld [vmem:[%s1 + $0x20] sm:$0xf]
      %v299 = vld [vmem:[%s1 + $0x24] sm:$0xf]
      %v300 = vld [vmem:[%s1 + $0x28] sm:$0xf]
      %v301 = vld [vmem:[%s1 + $0x2c] sm:$0xf]
      %v302 = vld [vmem:[%s1 + $0x30] sm:$0xf]
      %v303 = vld [vmem:[%s1 + $0x34] sm:$0xf]
      %v304 = vld [vmem:[%s1 + $0x38] sm:$0xf]
      %v305 = vld [vmem:[%s1 + $0x3c] sm:$0xf]
      %v306 = vld [vmem:[%s1 + $0x40] sm:$0xf]
      %v307 = vld [vmem:[%s1 + $0x44] sm:$0xf]
      %v308 = vld [vmem:[%s1 + $0x48] sm:$0xf]
      %v309 = vld [vmem:[%s1 + $0x4c] sm:$0xf]
      %v310 = vld [vmem:[%s1 + $0x50] sm:$0xf]
      %v311 = vld [vmem:[%s1 + $0x54] sm:$0xf]
      %v312 = vld [vmem:[%s1 + $0x58] sm:$0xf]
      %v313 = vld [vmem:[%s1 + $0x5c] sm:$0xf]
      %v314 = vld [vmem:[%s1 + $0x60] sm:$0xf]
      %v315 = vld [vmem:[%s1 + $0x64] sm:$0xf]
      %v316 = vld [vmem:[%s1 + $0x68] sm:$0xf]
      %v317 = vld [vmem:[%s1 + $0x6c] sm:$0xf]
      %v318 = vld [vmem:[%s1 + $0x70] sm:$0xf]
      %v319 = vld [vmem:[%s1 + $0x74] sm:$0xf]
      %v320 = vld [vmem:[%s1 + $0x78] sm:$0xf]
      %v321 = vld [vmem:[%s1 + $0x7c] sm:$0xf]
      %v322 = vld [vmem:[%s1 + $0x80] sm:$0xf]
      %v323 = vld [vmem:[%s1 + $0x84] sm:$0xf]
      %v324 = vld [vmem:[%s1 + $0x88] sm:$0xf]
      %v325 = vld [vmem:[%s1 + $0x8c] sm:$0xf]
      %v326 = vld [vmem:[%s1 + $0x90] sm:$0xf]
      %v327 = vld [vmem:[%s1 + $0x94] sm:$0xf]
      %v328 = vld [vmem:[%s1 + $0x98] sm:$0xf]
      %v329 = vld [vmem:[%s1 + $0x9c] sm:$0xf]
      %v330 = vld [vmem:[%s1 + $0xa0] sm:$0xf]
      %v331 = vld [vmem:[%s1 + $0xa4] sm:$0xf]
      %v332 = vld [vmem:[%s1 + $0xa8] sm:$0xf]
      %v333 = vld [vmem:[%s1 + $0xac] sm:$0xf]
      %v334 = vld [vmem:[%s1 + $0xb0] sm:$0xf]
      %v335 = vld [vmem:[%s1 + $0xb4] sm:$0xf]
      %v336 = vld [vmem:[%s1 + $0xb8] sm:$0xf]
      %v337 = vld [vmem:[%s1 + $0xbc] sm:$0xf]
      %v338 = vld [vmem:[%s1 + $0xc0] sm:$0xf]
      %v339 = vld [vmem:[%s1 + $0xc4] sm:$0xf]
      %v340 = vld [vmem:[%s1 + $0xc8] sm:$0xf]
      %v341 = vld [vmem:[%s1 + $0xcc] sm:$0xf]
      %v342 = vld [vmem:[%s1 + $0xd0] sm:$0xf]
      %v343 = vld [vmem:[%s1 + $0xd4] sm:$0xf]
      %v344 = vld [vmem:[%s1 + $0xd8] sm:$0xf]
      %v345 = vld [vmem:[%s1 + $0xdc] sm:$0xf]
      %v346 = vld [vmem:[%s1 + $0xe0] sm:$0xf]
      %v347 = vld [vmem:[%s1 + $0xe4] sm:$0xf]
      %v348 = vld [vmem:[%s1 + $0xe8] sm:$0xf]
      %v349 = vld [vmem:[%s1 + $0xec] sm:$0xf]
      %v350 = vld [vmem:[%s1 + $0xf0] sm:$0xf]
      %v351 = vld [vmem:[%s1 + $0xf4] sm:$0xf]
      %v352 = vld [vmem:[%s1 + $0xf8] sm:$0xf]
      %v353 = vld [vmem:[%s1 + $0xfc] sm:$0xf]
      %v354 = vld [vmem:[%s2] sm:$0x1]
      %v356 = vlaneseq
      %v357 = vshrl.u32 %v356, 7
      %v358 = vsub.s32 0, %v357
      %v359 = vrot.slane %v354, %v358
      %v365 = vunpack.c.l.b16 %v286
      %v366 = vunpack.c.h.b16 %v286
      %v367 = vunpack.c.l.b16 %v287
      %v368 = vunpack.c.h.b16 %v287
      %v369 = vunpack.c.l.b16 %v288
      %v370 = vunpack.c.h.b16 %v288
      %v371 = vunpack.c.l.b16 %v289
      %v372 = vunpack.c.h.b16 %v289
      %v373 = vpack.c.b16 %v369, %v365
      %v374 = vpack.c.b16 %v370, %v366
      %v375 = vpack.c.b16 %v371, %v367
      %v376 = vpack.c.b16 %v372, %v368
      %v445 = vunpack.c.l.b16 %v290
      %v446 = vunpack.c.l.b16 %v291
      %v447 = vunpack.c.l.b16 %v292
      %v448 = vunpack.c.l.b16 %v293
      %v449 = vunpack.c.l.b16 %v294
      %v450 = vunpack.c.l.b16 %v295
      %v451 = vunpack.c.l.b16 %v296
      %v452 = vunpack.c.l.b16 %v297
      %v453 = vunpack.c.l.b16 %v298
      %v454 = vunpack.c.l.b16 %v299
      %v455 = vunpack.c.l.b16 %v300
      %v456 = vunpack.c.l.b16 %v301
      %v457 = vunpack.c.l.b16 %v302
      %v458 = vunpack.c.l.b16 %v303
      %v459 = vunpack.c.l.b16 %v304
      %v460 = vunpack.c.l.b16 %v305
      %v461 = vunpack.c.l.b16 %v306
      %v462 = vunpack.c.l.b16 %v307
      %v463 = vunpack.c.l.b16 %v308
      %v464 = vunpack.c.l.b16 %v309
      %v465 = vunpack.c.l.b16 %v310
      %v466 = vunpack.c.l.b16 %v311
      %v467 = vunpack.c.l.b16 %v312
      %v468 = vunpack.c.l.b16 %v313
      %v469 = vunpack.c.l.b16 %v314
      %v470 = vunpack.c.l.b16 %v315
      %v471 = vunpack.c.l.b16 %v316
      %v472 = vunpack.c.l.b16 %v317
      %v473 = vunpack.c.l.b16 %v318
      %v474 = vunpack.c.l.b16 %v319
      %v475 = vunpack.c.l.b16 %v320
      %v476 = vunpack.c.l.b16 %v321
      %v477 = vunpack.c.l.b16 %v322
      %v478 = vunpack.c.l.b16 %v323
      %v479 = vunpack.c.l.b16 %v324
      %v480 = vunpack.c.l.b16 %v325
      %v481 = vunpack.c.l.b16 %v326
      %v482 = vunpack.c.l.b16 %v327
      %v483 = vunpack.c.l.b16 %v328
      %v484 = vunpack.c.l.b16 %v329
      %v485 = vunpack.c.l.b16 %v330
      %v486 = vunpack.c.l.b16 %v331
      %v487 = vunpack.c.l.b16 %v332
      %v488 = vunpack.c.l.b16 %v333
      %v489 = vunpack.c.l.b16 %v334
      %v490 = vunpack.c.l.b16 %v335
      %v491 = vunpack.c.l.b16 %v336
      %v492 = vunpack.c.l.b16 %v337
      %v493 = vunpack.c.l.b16 %v338
      %v494 = vunpack.c.l.b16 %v339
      %v495 = vunpack.c.l.b16 %v340
      %v496 = vunpack.c.l.b16 %v341
      %v497 = vunpack.c.l.b16 %v342
      %v498 = vunpack.c.l.b16 %v343
      %v499 = vunpack.c.l.b16 %v344
      %v500 = vunpack.c.l.b16 %v345
      %v501 = vunpack.c.l.b16 %v346
      %v502 = vunpack.c.l.b16 %v347
      %v503 = vunpack.c.l.b16 %v348
      %v504 = vunpack.c.l.b16 %v349
      %v505 = vunpack.c.l.b16 %v350
      %v506 = vunpack.c.l.b16 %v351
      %v507 = vunpack.c.l.b16 %v352
      %v508 = vunpack.c.l.b16 %v353
      %v509 = vpack.c.b16 %v446, %v445
      %v510 = vpack.c.b16 %v448, %v447
      %v511 = vpack.c.b16 %v450, %v449
      %v512 = vpack.c.b16 %v452, %v451
      %v513 = vpack.c.b16 %v454, %v453
      %v514 = vpack.c.b16 %v456, %v455
      %v515 = vpack.c.b16 %v458, %v457
      %v516 = vpack.c.b16 %v460, %v459
      %v517 = vpack.c.b16 %v462, %v461
      %v518 = vpack.c.b16 %v464, %v463
      %v519 = vpack.c.b16 %v466, %v465
      %v520 = vpack.c.b16 %v468, %v467
      %v521 = vpack.c.b16 %v470, %v469
      %v522 = vpack.c.b16 %v472, %v471
      %v523 = vpack.c.b16 %v474, %v473
      %v524 = vpack.c.b16 %v476, %v475
      %v525 = vpack.c.b16 %v478, %v477
      %v526 = vpack.c.b16 %v480, %v479
      %v527 = vpack.c.b16 %v482, %v481
      %v528 = vpack.c.b16 %v484, %v483
      %v529 = vpack.c.b16 %v486, %v485
      %v530 = vpack.c.b16 %v488, %v487
      %v531 = vpack.c.b16 %v490, %v489
      %v532 = vpack.c.b16 %v492, %v491
      %v533 = vpack.c.b16 %v494, %v493
      %v534 = vpack.c.b16 %v496, %v495
      %v535 = vpack.c.b16 %v498, %v497
      %v536 = vpack.c.b16 %v500, %v499
      %v537 = vpack.c.b16 %v502, %v501
      %v538 = vpack.c.b16 %v504, %v503
      %v539 = vpack.c.b16 %v506, %v505
      %v540 = vpack.c.b16 %v508, %v507
      %573 = vmatprep.subr.bf16.mxu0 0
      %574 = vmatpush1.bf16.msra.mxu0 %v509
      %575 = vmatprep.subr.bf16.mxu0 0
      %576 = vmatpush1.bf16.msra.mxu0 %v510
      %577 = vmatprep.subr.bf16.mxu0 0
      %578 = vmatpush1.bf16.msra.mxu0 %v511
      %579 = vmatprep.subr.bf16.mxu0 0
      %580 = vmatpush1.bf16.msra.mxu0 %v512
      %581 = vmatprep.subr.bf16.mxu0 0
      %582 = vmatpush1.bf16.msra.mxu0 %v513
      %583 = vmatprep.subr.bf16.mxu0 0
      %584 = vmatpush1.bf16.msra.mxu0 %v514
      %585 = vmatprep.subr.bf16.mxu0 0
      %586 = vmatpush1.bf16.msra.mxu0 %v515
      %587 = vmatprep.subr.bf16.mxu0 0
      %588 = vmatpush1.bf16.msra.mxu0 %v516
      %589 = vmatprep.subr.bf16.mxu0 0
      %590 = vmatpush1.bf16.msra.mxu0 %v517
      %591 = vmatprep.subr.bf16.mxu0 0
      %592 = vmatpush1.bf16.msra.mxu0 %v518
      %593 = vmatprep.subr.bf16.mxu0 0
      %594 = vmatpush1.bf16.msra.mxu0 %v519
      %595 = vmatprep.subr.bf16.mxu0 0
      %596 = vmatpush1.bf16.msra.mxu0 %v520
      %597 = vmatprep.subr.bf16.mxu0 0
      %598 = vmatpush1.bf16.msra.mxu0 %v521
      %599 = vmatprep.subr.bf16.mxu0 0
      %600 = vmatpush1.bf16.msra.mxu0 %v522
      %601 = vmatprep.subr.bf16.mxu0 0
      %602 = vmatpush1.bf16.msra.mxu0 %v523
      %603 = vmatprep.subr.bf16.mxu0 0
      %604 = vmatpush1.bf16.msra.mxu0 %v524
      %605 = vmatprep.mubr.bf16.mxu0 %v374
      %606 = vmatmul.mubr.bf16.gmra.mrb[0].mxu0 %v373
      %v607 = vpop.f32.mrb[0].mxu0
      %v608 = vadd.f32 %v359, %v607
      %v609 = vpop.f32.mrb[0].mxu0
      %v610 = vpop.f32.mrb[0].mxu0
      %v611 = vadd.f32 %v359, %v610
      %v612 = vpop.f32.mrb[0].mxu0
      %613 = vdwg.mxu0
      %614 = vmatprep.subr.bf16.mxu0 0
      %615 = vmatpush1.bf16.msra.mxu0 %v525
      %616 = vmatprep.subr.bf16.mxu0 0
      %617 = vmatpush1.bf16.msra.mxu0 %v526
      %618 = vmatprep.subr.bf16.mxu0 0
      %619 = vmatpush1.bf16.msra.mxu0 %v527
      %620 = vmatprep.subr.bf16.mxu0 0
      %621 = vmatpush1.bf16.msra.mxu0 %v528
      %622 = vmatprep.subr.bf16.mxu0 0
      %623 = vmatpush1.bf16.msra.mxu0 %v529
      %624 = vmatprep.subr.bf16.mxu0 0
      %625 = vmatpush1.bf16.msra.mxu0 %v530
      %626 = vmatprep.subr.bf16.mxu0 0
      %627 = vmatpush1.bf16.msra.mxu0 %v531
      %628 = vmatprep.subr.bf16.mxu0 0
      %629 = vmatpush1.bf16.msra.mxu0 %v532
      %630 = vmatprep.subr.bf16.mxu0 0
      %631 = vmatpush1.bf16.msra.mxu0 %v533
      %632 = vmatprep.subr.bf16.mxu0 0
      %633 = vmatpush1.bf16.msra.mxu0 %v534
      %634 = vmatprep.subr.bf16.mxu0 0
      %635 = vmatpush1.bf16.msra.mxu0 %v535
      %636 = vmatprep.subr.bf16.mxu0 0
      %637 = vmatpush1.bf16.msra.mxu0 %v536
      %638 = vmatprep.subr.bf16.mxu0 0
      %639 = vmatpush1.bf16.msra.mxu0 %v537
      %640 = vmatprep.subr.bf16.mxu0 0
      %641 = vmatpush1.bf16.msra.mxu0 %v538
      %642 = vmatprep.subr.bf16.mxu0 0
      %643 = vmatpush1.bf16.msra.mxu0 %v539
      %644 = vmatprep.subr.bf16.mxu0 0
      %645 = vmatpush1.bf16.msra.mxu0 %v540
      %646 = vmatprep.mubr.bf16.mxu0 %v376
      %647 = vmatmul.mubr.bf16.gmra.mrb[0].mxu0 %v375
      %v648 = vpop.f32.mrb[0].mxu0
      %v649 = vadd.f32 %v608, %v648
      %v650 = vpop.f32.mrb[0].mxu0
      %v651 = vpop.f32.mrb[0].mxu0
      %v652 = vadd.f32 %v611, %v651
      %v653 = vpop.f32.mrb[0].mxu0
      %654 = vdwg.mxu0
      %v655 = vmax.f32 %v649, 0.0
      %v656 = vmax.f32 %v652, 0.0
      %v657 = vpack.c.bf16 %v656, %v655
      %v658 = vld [vmem:[%s3] sm:$0xf]
      %v659 = vld [vmem:[%s3 + $0x4] sm:$0xf]
      %v660 = vld [vmem:[%s3 + $0x8] sm:$0xf]
      %v661 = vld [vmem:[%s3 + $0xc] sm:$0xf]
      %v662 = vld [vmem:[%s3 + $0x10] sm:$0xf]
      %v663 = vld [vmem:[%s3 + $0x14] sm:$0xf]
      %v664 = vld [vmem:[%s3 + $0x18] sm:$0xf]
      %v665 = vld [vmem:[%s3 + $0x1c] sm:$0xf]
      %v666 = vld [vmem:[%s3 + $0x20] sm:$0xf]
      %v667 = vld [vmem:[%s3 + $0x24] sm:$0xf]
      %v668 = vld [vmem:[%s3 + $0x28] sm:$0xf]
      %v669 = vld [vmem:[%s3 + $0x2c] sm:$0xf]
      %v670 = vld [vmem:[%s3 + $0x30] sm:$0xf]
      %v671 = vld [vmem:[%s3 + $0x34] sm:$0xf]
      %v672 = vld [vmem:[%s3 + $0x38] sm:$0xf]
      %v673 = vld [vmem:[%s3 + $0x3c] sm:$0xf]
      %v674 = vld [vmem:[%s4] sm:$0x1]
      %v676 = vlaneseq
      %v677 = vshrl.u32 %v676, 7
      %v678 = vsub.s32 0, %v677
      %v679 = vrot.slane %v674, %v678
      %v697 = vunpack.c.l.b16 %v658
      %v698 = vunpack.c.l.b16 %v659
      %v699 = vunpack.c.l.b16 %v660
      %v700 = vunpack.c.l.b16 %v661
      %v701 = vunpack.c.l.b16 %v662
      %v702 = vunpack.c.l.b16 %v663
      %v703 = vunpack.c.l.b16 %v664
      %v704 = vunpack.c.l.b16 %v665
      %v705 = vunpack.c.l.b16 %v666
      %v706 = vunpack.c.l.b16 %v667
      %v707 = vunpack.c.l.b16 %v668
      %v708 = vunpack.c.l.b16 %v669
      %v709 = vunpack.c.l.b16 %v670
      %v710 = vunpack.c.l.b16 %v671
      %v711 = vunpack.c.l.b16 %v672
      %v712 = vunpack.c.l.b16 %v673
      %v713 = vpack.c.b16 %v698, %v697
      %v714 = vpack.c.b16 %v700, %v699
      %v715 = vpack.c.b16 %v702, %v701
      %v716 = vpack.c.b16 %v704, %v703
      %v717 = vpack.c.b16 %v706, %v705
      %v718 = vpack.c.b16 %v708, %v707
      %v719 = vpack.c.b16 %v710, %v709
      %v720 = vpack.c.b16 %v712, %v711
      %729 = vmatprep.subr.bf16.mxu0 0
      %730 = vmatpush1.bf16.msra.mxu0 %v713
      %731 = vmatprep.subr.bf16.mxu0 0
      %732 = vmatpush1.bf16.msra.mxu0 %v714
      %733 = vmatprep.subr.bf16.mxu0 0
      %734 = vmatpush1.bf16.msra.mxu0 %v715
      %735 = vmatprep.subr.bf16.mxu0 0
      %736 = vmatpush1.bf16.msra.mxu0 %v716
      %737 = vmatprep.subr.bf16.mxu0 0
      %738 = vmatpush1.bf16.msra.mxu0 %v717
      %739 = vmatprep.subr.bf16.mxu0 0
      %740 = vmatpush1.bf16.msra.mxu0 %v718
      %741 = vmatprep.subr.bf16.mxu0 0
      %742 = vmatpush1.bf16.msra.mxu0 %v719
      %743 = vmatprep.subr.bf16.mxu0 0
      %744 = vmatpush1.bf16.msra.mxu0 %v720
      %745 = vmatprep.subr.bf16.mxu0 0
      %746 = vmatpush1.bf16.msra.mxu0 0
      %747 = vmatprep.subr.bf16.mxu0 0
      %748 = vmatpush1.bf16.msra.mxu0 0
      %749 = vmatprep.subr.bf16.mxu0 0
      %750 = vmatpush1.bf16.msra.mxu0 0
      %751 = vmatprep.subr.bf16.mxu0 0
      %752 = vmatpush1.bf16.msra.mxu0 0
      %753 = vmatprep.subr.bf16.mxu0 0
      %754 = vmatpush1.bf16.msra.mxu0 0
      %755 = vmatprep.subr.bf16.mxu0 0
      %756 = vmatpush1.bf16.msra.mxu0 0
      %757 = vmatprep.subr.bf16.mxu0 0
      %758 = vmatpush1.bf16.msra.mxu0 0
      %759 = vmatprep.subr.bf16.mxu0 0
      %760 = vmatpush1.bf16.msra.mxu0 0
      %761 = vmatprep.mubr.bf16.mxu0 0
      %762 = vmatmul.mubr.bf16.gmra.mrb[0].mxu0 %v657
      %v763 = vpop.f32.mrb[0].mxu0
      %v764 = vadd.f32 %v679, %v763
      %v765 = vpop.f32.mrb[0].mxu0
      %v766 = vpop.f32.mrb[0].mxu0
      %v767 = vadd.f32 %v679, %v766
      %v768 = vpop.f32.mrb[0].mxu0
      %769 = vdwg.mxu0
      %v770 = vmax.f32 %v764, 0.0
      %v771 = vmax.f32 %v767, 0.0
      %v772 = vpack.c.bf16 %v771, %v770
      %v773 = vld [vmem:[%s5] sm:$0xf]
      %v774 = vld [vmem:[%s5 + $0x4] sm:$0xf]
      %v775 = vld [vmem:[%s5 + $0x8] sm:$0xf]
      %v776 = vld [vmem:[%s5 + $0xc] sm:$0xf]
      %v777 = vld [vmem:[%s5 + $0x10] sm:$0xf]
      %v778 = vld [vmem:[%s5 + $0x14] sm:$0xf]
      %v779 = vld [vmem:[%s5 + $0x18] sm:$0xf]
      %v780 = vld [vmem:[%s5 + $0x1c] sm:$0xf]
      %v781 = vld [vmem:[%s5 + $0x20] sm:$0xf]
      %v782 = vld [vmem:[%s5 + $0x24] sm:$0xf]
      %v783 = vld [vmem:[%s5 + $0x28] sm:$0xf]
      %v784 = vld [vmem:[%s5 + $0x2c] sm:$0xf]
      %v785 = vld [vmem:[%s5 + $0x30] sm:$0xf]
      %v786 = vld [vmem:[%s5 + $0x34] sm:$0xf]
      %v787 = vld [vmem:[%s5 + $0x38] sm:$0xf]
      %v788 = vld [vmem:[%s5 + $0x3c] sm:$0xf]
      %v789 = vld [vmem:[%s6] sm:$0x1]
      %v791 = vlaneseq
      %v792 = vshrl.u32 %v791, 7
      %v793 = vsub.s32 0, %v792
      %v794 = vrot.slane %v789, %v793
      %v812 = vunpack.c.l.b16 %v773
      %v813 = vunpack.c.l.b16 %v774
      %v814 = vunpack.c.l.b16 %v775
      %v815 = vunpack.c.l.b16 %v776
      %v816 = vunpack.c.l.b16 %v777
      %v817 = vunpack.c.l.b16 %v778
      %v818 = vunpack.c.l.b16 %v779
      %v819 = vunpack.c.l.b16 %v780
      %v820 = vunpack.c.l.b16 %v781
      %v821 = vunpack.c.l.b16 %v782
      %v822 = vunpack.c.l.b16 %v783
      %v823 = vunpack.c.l.b16 %v784
      %v824 = vunpack.c.l.b16 %v785
      %v825 = vunpack.c.l.b16 %v786
      %v826 = vunpack.c.l.b16 %v787
      %v827 = vunpack.c.l.b16 %v788
      %v828 = vpack.c.b16 %v813, %v812
      %v829 = vpack.c.b16 %v815, %v814
      %v830 = vpack.c.b16 %v817, %v816
      %v831 = vpack.c.b16 %v819, %v818
      %v832 = vpack.c.b16 %v821, %v820
      %v833 = vpack.c.b16 %v823, %v822
      %v834 = vpack.c.b16 %v825, %v824
      %v835 = vpack.c.b16 %v827, %v826
      %844 = vmatprep.subr.bf16.mxu0 0
      %845 = vmatpush1.bf16.msra.mxu0 %v828
      %846 = vmatprep.subr.bf16.mxu0 0
      %847 = vmatpush1.bf16.msra.mxu0 %v829
      %848 = vmatprep.subr.bf16.mxu0 0
      %849 = vmatpush1.bf16.msra.mxu0 %v830
      %850 = vmatprep.subr.bf16.mxu0 0
      %851 = vmatpush1.bf16.msra.mxu0 %v831
      %852 = vmatprep.subr.bf16.mxu0 0
      %853 = vmatpush1.bf16.msra.mxu0 %v832
      %854 = vmatprep.subr.bf16.mxu0 0
      %855 = vmatpush1.bf16.msra.mxu0 %v833
      %856 = vmatprep.subr.bf16.mxu0 0
      %857 = vmatpush1.bf16.msra.mxu0 %v834
      %858 = vmatprep.subr.bf16.mxu0 0
      %859 = vmatpush1.bf16.msra.mxu0 %v835
      %860 = vmatprep.subr.bf16.mxu0 0
      %861 = vmatpush1.bf16.msra.mxu0 0
      %862 = vmatprep.subr.bf16.mxu0 0
      %863 = vmatpush1.bf16.msra.mxu0 0
      %864 = vmatprep.subr.bf16.mxu0 0
      %865 = vmatpush1.bf16.msra.mxu0 0
      %866 = vmatprep.subr.bf16.mxu0 0
      %867 = vmatpush1.bf16.msra.mxu0 0
      %868 = vmatprep.subr.bf16.mxu0 0
      %869 = vmatpush1.bf16.msra.mxu0 0
      %870 = vmatprep.subr.bf16.mxu0 0
      %871 = vmatpush1.bf16.msra.mxu0 0
      %872 = vmatprep.subr.bf16.mxu0 0
      %873 = vmatpush1.bf16.msra.mxu0 0
      %874 = vmatprep.subr.bf16.mxu0 0
      %875 = vmatpush1.bf16.msra.mxu0 0
      %876 = vmatprep.mubr.bf16.mxu0 0
      %877 = vmatmul.mubr.bf16.gmra.mrb[0].mxu0 %v772
      %v878 = vpop.f32.mrb[0].mxu0
      %v879 = vadd.f32 %v794, %v878
      %v880 = vpop.f32.mrb[0].mxu0
      %v881 = vpop.f32.mrb[0].mxu0
      %v882 = vadd.f32 %v794, %v881
      %v883 = vpop.f32.mrb[0].mxu0
      %884 = vdwg.mxu0
      %885 = vst [vmem:[%s283] sm:$0xff] %v879
      %886 = vst [vmem:[%s283 + $0x8] sm:$0xff] %v882
      %s887 = smul.u32 2, %s18
      %p888 = scmp.lt.s32.totalorder %s887, 3
      %s889 = scalar_select %p888, %s887, 3
      %s890 = smul.addr %s889, 8
      %s891 = scalar_lea.vmem %s7, %s890
      // Predicated region
      $region49: #{lenet5_bn_forward.9} parent=47 // pred_check
        %p892 = pneg %p188
      $region50: #{lenet5_bn_forward.9} parent=47 // pred_check_branch
        %894 = sbr.rel (%p892) target = $region52
      $region51: #{lenet5_bn_forward.9} parent=47 // pred_region
        %s895 = smul.u32 2, %s18
      $region52: #{lenet5_bn_forward.9} parent=47 // pred_fallthru
        _
    $region48: #{lenet5_bn_forward.9} parent=5 // pred_fallthru
      _
    %p896 = scmp.le.s32.totalorder 2, %s13
    // Predicated region
    $region53: #{lenet5_bn_forward.9} parent=5 // pred_check
      %p897 = pneg %p896
    $region54: #{lenet5_bn_forward.9} parent=5 // pred_check_branch
      %899 = sbr.rel (%p897) target = $region56
    $region55: #{lenet5_bn_forward.9} parent=5 // pred_region
      %s900 = ssub.s32 %s13, 2
      // Predicated region
      $region57: #{lenet5_bn_forward.9} parent=55 // pred_check
        %p901 = pneg %p194
      $region58: #{lenet5_bn_forward.9} parent=55 // pred_check_branch
        %903 = sbr.rel (%p901) target = $region60
      $region59: #{lenet5_bn_forward.9} parent=55 // pred_region
        %s904 = smul.u32 2, %s19
        %p905 = scmp.lt.s32.totalorder %s904, 3
        %s906 = scalar_select %p905, %s904, 3
        %s907 = smul.addr %s906, 8
        %s908 = scalar_lea.vmem %s7, %s907
      $region60: #{lenet5_bn_forward.9} parent=55 // pred_fallthru
        _
    $region56: #{lenet5_bn_forward.9} parent=5 // pred_fallthru
      _
  $region6: #{lenet5_bn_forward.9} parent=0 // loop_footer
    %s17 = sadd.s32 1, %s13
  $region7: #{lenet5_bn_forward.9} parent=0 // loop_footer_branch
    %12 = sbr.rel target = $region3
  $region8: #{lenet5_bn_forward.9} parent=0 // loop_exit
    _

</llo_original>
